<compile_context>
chip_gen: v7x
topology: tpu7x:2x2x1
jax: 0.10.0
libtpu: 0.0.40
codegen_flags: <defaults>
</compile_context>

<pallas_src>
import functools

import jax
import jax.numpy as jnp
from jax import lax
from jax.experimental import pallas as pl
from jax.experimental.pallas import tpu as pltpu

EPS = 1e-5          # PyTorch BatchNorm2d default eps
LANE = 128          # TPU lane width
_WPAD = 8           # left/right zero-pad along W in the conv scratch (8-aligned store)

# On v6e/v7x set this to jnp.bfloat16 for ~2-4x MXU throughput (fp32 accumulate
# is kept via preferred_element_type); fp32 here so the 1e-3 self-test passes.
MATMUL_DTYPE = jnp.float32


def _round_up(x, m):
    return (x + m - 1) // m * m


def _pick_tile_m(m, target=256):
    if m <= target:
        return m
    for t in range(target, 7, -8):
        if m % t == 0:
            return t
    return m


# ----------------------------------------------------------------------------
# Kernel A: fused (folded-BN scale/shift) + ReLU + 1x1 conv as a tiled matmul.
# grid = (M_tiles, K_blocks); K (input-channel) axis last / "arbitrary".
# ----------------------------------------------------------------------------
def _bn_relu_matmul_kernel(x_ref, s_ref, t_ref, w_ref, o_ref, acc_ref):
    @pl.when(pl.program_id(1) == 0)
    def _init():
        acc_ref[...] = jnp.zeros_like(acc_ref)

    a = jnp.maximum(x_ref[...] * s_ref[...] + t_ref[...], 0.0)
    acc_ref[...] += jnp.dot(a.astype(MATMUL_DTYPE),
                            w_ref[...].astype(MATMUL_DTYPE),
                            preferred_element_type=jnp.float32)

    @pl.when(pl.program_id(1) == pl.num_programs(1) - 1)
    def _store():
        o_ref[...] = acc_ref[...]


def bn_relu_conv1x1(x2d, scale, shift, w, *, tile_m):
    M = x2d.shape[0]
    k_total, cout_p = w.shape          # k_total = live (lane-padded) input width
    grid = (M // tile_m, k_total // LANE)
    return pl.pallas_call(
        _bn_relu_matmul_kernel,
        out_shape=jax.ShapeDtypeStruct((M, cout_p), jnp.float32),
        grid_spec=pltpu.PrefetchScalarGridSpec(
            num_scalar_prefetch=0,
            grid=grid,
            in_specs=[
                pl.BlockSpec((tile_m, LANE), lambda m, k: (m, k)),
                pl.BlockSpec((1, LANE), lambda m, k: (0, k)),
                pl.BlockSpec((1, LANE), lambda m, k: (0, k)),
                pl.BlockSpec((LANE, cout_p), lambda m, k: (k, 0)),
            ],
            out_specs=pl.BlockSpec((tile_m, cout_p), lambda m, k: (m, 0)),
            scratch_shapes=[pltpu.VMEM((tile_m, cout_p), jnp.float32)],
        ),
        compiler_params=pltpu.CompilerParams(
            dimension_semantics=("parallel", "arbitrary")),
    )(x2d, scale.reshape(1, -1), shift.reshape(1, -1), w)


# ----------------------------------------------------------------------------
# Kernel B: fused BN2 scale/shift + ReLU + zero-pad (VMEM only) + 3x3 conv,
# written directly into the preallocated concat buffer's channel segment.
# grid = (N,), parallel over images.
# ----------------------------------------------------------------------------
def _make_conv3x3_kernel(H, W, cmid_p, g_p):
    def kernel(y_ref, s_ref, t_ref, w_ref, feat_ref, o_ref, apad_ref):
        del feat_ref  # aliased to the output; untouched channel slices persist
        # zero border every step (scratch persists across grid steps / cores)
        apad_ref[...] = jnp.zeros_like(apad_ref)
        # fused BN2 (folded) + ReLU; pad lives only in VMEM scratch
        a = jnp.maximum(y_ref[0] * s_ref[...] + t_ref[...], 0.0)   # (H, W, cmid_p)
        apad_ref[1:H + 1, _WPAD:_WPAD + W, :] = a                  # aligned store
        acc = jnp.zeros((H * W, g_p), jnp.float32)
        for dy in range(3):
            for dx in range(3):
                win = apad_ref[dy:dy + H, _WPAD - 1 + dx:_WPAD - 1 + dx + W, :]
                acc = acc + jnp.dot(
                    win.reshape(H * W, cmid_p).astype(MATMUL_DTYPE),
                    w_ref[dy * 3 + dx].astype(MATMUL_DTYPE),
                    preferred_element_type=jnp.float32)
        o_ref[0] = acc.reshape(H, W, g_p)
    return kernel


def conv3x3_into_buffer(y4, scale, shift, w9, feat, *, seg_block):
    N, H, W, cmid_p = y4.shape
    g_p = w9.shape[-1]
    kernel = _make_conv3x3_kernel(H, W, cmid_p, g_p)
    return pl.pallas_call(
        kernel,
        out_shape=jax.ShapeDtypeStruct(feat.shape, feat.dtype),
        grid_spec=pltpu.PrefetchScalarGridSpec(
            num_scalar_prefetch=0,
            grid=(N,),
            in_specs=[
                pl.BlockSpec((1, H, W, cmid_p), lambda n: (n, 0, 0, 0)),
                pl.BlockSpec((1, cmid_p), lambda n: (0, 0)),
                pl.BlockSpec((1, cmid_p), lambda n: (0, 0)),
                pl.BlockSpec((9, cmid_p, g_p), lambda n: (0, 0, 0)),
                pl.BlockSpec(memory_space=pl.ANY),   # concat buffer (aliased)
            ],
            out_specs=pl.BlockSpec((1, H, W, g_p),
                                   lambda n: (n, 0, 0, seg_block)),
            scratch_shapes=[
                pltpu.VMEM((H + 2, W + 2 * _WPAD, cmid_p), jnp.float32)],
        ),
        input_output_aliases={4: 0},
        compiler_params=pltpu.CompilerParams(
            dimension_semantics=("parallel",)),
    )(y4, scale.reshape(1, -1), shift.reshape(1, -1), w9, feat)


# ----------------------------------------------------------------------------
# _DenseBlock forward
# ----------------------------------------------------------------------------
def dense_block_forward(x_nchw, params, cfg):
    num_layers = cfg["num_layers"]
    c0 = cfg["num_input_features"]
    growth = cfg["growth_rate"]
    cmid = cfg["bn_size"] * growth

    in_pad = _round_up(c0, LANE)
    g_pad = _round_up(growth, LANE)
    cmid_pad = _round_up(cmid, LANE)
    c_buf = in_pad + num_layers * g_pad

    x_nhwc = jnp.transpose(x_nchw, (0, 2, 3, 1)).astype(jnp.float32)
    N, H, W, _ = x_nhwc.shape
    M = N * H * W
    tile_m = _pick_tile_m(M)

    # Preallocated, lane-padded concat buffer: [seg0: in_pad | seg1: g_pad | ...]
    feat = jnp.zeros((N, H, W, c_buf), jnp.float32)
    feat = feat.at[..., :c0].set(x_nhwc)

    for i, p in enumerate(params):
        c_live = in_pad + i * g_pad            # 128-aligned live prefix width
        feat2d = feat.reshape(M, c_buf)

        # BN1 batch statistics (global over M) folded into scale/shift
        xin = feat2d[:, :c_live]
        mean1 = jnp.mean(xin, axis=0)
        var1 = jnp.mean(jnp.square(xin - mean1), axis=0)     # biased (torch train)
        scale1 = p["g1p"] * lax.rsqrt(var1 + EPS)
        shift1 = p["b1p"] - mean1 * scale1

        # fused BN1 + ReLU + 1x1 conv (tiled matmul over M, K accumulated)
        y2d = bn_relu_conv1x1(feat2d, scale1, shift1, p["w1p"], tile_m=tile_m)

        # BN2 batch statistics over the real bottleneck channels
        yr = y2d[:, :cmid]
        mean2 = jnp.mean(yr, axis=0)
        var2 = jnp.mean(jnp.square(yr - mean2), axis=0)
        s2 = p["g2"] * lax.rsqrt(var2 + EPS)
        t2 = p["b2"] - mean2 * s2
        scale2 = jnp.zeros((cmid_pad,), jnp.float32).at[:cmid].set(s2)
        shift2 = jnp.zeros((cmid_pad,), jnp.float32).at[:cmid].set(t2)

        # fused BN2 + ReLU + pad + 3x3 conv, written into the concat buffer
        y4 = y2d.reshape(N, H, W, cmid_pad)
        seg_block = (in_pad + i * g_pad) // g_pad
        feat = conv3x3_into_buffer(y4, scale2, shift2, p["w2p"], feat,
                                   seg_block=seg_block)
        # TODO(synk): drop_rate > 0 (F.dropout in training mode) not implemented;
        # the example uses drop_rate = 0 so it is a no-op.

    # Gather the real channels out of the lane-padded segment layout (once).
    parts = [feat[..., :c0]]
    for i in range(num_layers):
        off = in_pad + i * g_pad
        parts.append(feat[..., off:off + growth])
    out_nhwc = jnp.concatenate(parts, axis=-1)
    return jnp.transpose(out_nhwc, (0, 3, 1, 2))


# ----------------------------------------------------------------------------
# Deterministic parameter construction (mirrors _DenseLayer __init__ shapes),
# plus lane-padded/segment-scattered copies for the kernels.
# ----------------------------------------------------------------------------
def make_params(key, num_layers, num_input_features, bn_size, growth_rate):
    in_pad = _round_up(num_input_features, LANE)
    g_pad = _round_up(growth_rate, LANE)
    cmid = bn_size * growth_rate
    cmid_pad = _round_up(cmid, LANE)

    params = []
    for i in range(num_layers):
        cin = num_input_features + i * growth_rate
        c_live = in_pad + i * g_pad
        keys = jax.random.split(jax.random.fold_in(key, i), 6)

        g1 = 1.0 + 0.1 * jax.random.normal(keys[0], (cin,), jnp.float32)
        b1 = 0.1 * jax.random.normal(keys[1], (cin,), jnp.float32)
        g2 = 1.0 + 0.1 * jax.random.normal(keys[2], (cmid,), jnp.float32)
        b2 = 0.1 * jax.random.normal(keys[3], (cmid,), jnp.float32)
        w1_torch = 0.1 * jax.random.normal(keys[4], (cmid, cin, 1, 1), jnp.float32)
        w2_torch = 0.1 * jax.random.normal(
            keys[5], (growth_rate, cmid, 3, 3), jnp.float32)

        # logical (concatenated) channel -> position in the padded segment layout
        pos = []
        for c in range(cin):
            if c < num_input_features:
                pos.append(c)
            else:
                j, r = divmod(c - num_input_features, growth_rate)
                pos.append(in_pad + j * g_pad + r)
        pos = jnp.asarray(pos, jnp.int32)

        g1p = jnp.zeros((c_live,), jnp.float32).at[pos].set(g1)
        b1p = jnp.zeros((c_live,), jnp.float32).at[pos].set(b1)

        w1_logical = jnp.transpose(w1_torch[:, :, 0, 0], (1, 0))       # (cin, cmid)
        w1_cols = jnp.zeros((cin, cmid_pad), jnp.float32).at[:, :cmid].set(w1_logical)
        w1p = jnp.zeros((c_live, cmid_pad), jnp.float32).at[pos].set(w1_cols)

        w2t = jnp.transpose(w2_torch, (2, 3, 1, 0)).reshape(9, cmid, growth_rate)
        w2p = jnp.zeros((9, cmid_pad, g_pad), jnp.float32
                        ).at[:, :cmid, :growth_rate].set(w2t)

        params.append(dict(g1p=g1p, b1p=b1p, g2=g2, b2=b2, w1p=w1p, w2p=w2p,
                           g1=g1, b1=b1, w1_torch=w1_torch, w2_torch=w2_torch))
    return params


# ----------------------------------------------------------------------------
# Pure-JAX reference (train-mode BN, NCHW convs) for correctness check
# ----------------------------------------------------------------------------
def _ref_bn_relu_nchw(x, gamma, beta):
    mean = jnp.mean(x, axis=(0, 2, 3), keepdims=True)
    var = jnp.mean((x - mean) ** 2, axis=(0, 2, 3), keepdims=True)
    xhat = (x - mean) * lax.rsqrt(var + EPS)
    return jnp.maximum(
        xhat * gamma[None, :, None, None] + beta[None, :, None, None], 0.0)


def ref_dense_block(x_nchw, params):
    x = x_nchw.astype(jnp.float32)
    dn = ("NCHW", "OIHW", "NCHW")
    for p in params:
        y = _ref_bn_relu_nchw(x, p["g1"], p["b1"])
        y = lax.conv_general_dilated(y, p["w1_torch"], (1, 1), "VALID",
                                     dimension_numbers=dn)
        y = _ref_bn_relu_nchw(y, p["g2"], p["b2"])
        y = lax.conv_general_dilated(y, p["w2_torch"], (1, 1), ((1, 1), (1, 1)),
                                     dimension_numbers=dn)
        x = jnp.concatenate([x, y], axis=1)
    return x


if __name__ == "__main__":
    # _DenseBlock(num_layers=2, num_input_features=4, bn_size=2, growth_rate=4,
    #             drop_rate=0.0, efficient=False)
    num_layers, num_input_features, bn_size, growth_rate = 2, 4, 2, 4
    cfg = dict(num_layers=num_layers, num_input_features=num_input_features,
               bn_size=bn_size, growth_rate=growth_rate)

    key = jax.random.PRNGKey(0)
    kx, kp = jax.random.split(key)
    x_nchw = jax.random.normal(kx, (2, num_input_features, 16, 16), jnp.float32)
    params = make_params(kp, num_layers, num_input_features, bn_size, growth_rate)

    fwd = jax.jit(functools.partial(dense_block_forward, cfg=cfg))
    out = jax.block_until_ready(fwd(x_nchw, params))

    expected_channels = num_input_features + num_layers * growth_rate
    assert out.shape == (2, expected_channels, 16, 16), out.shape

    ref = jax.block_until_ready(ref_dense_block(x_nchw, params))
    err = float(jnp.max(jnp.abs(out - ref)))
    assert jnp.allclose(out, ref, rtol=1e-3, atol=1e-3), err

    print("KERNEL_OK")
</pallas_src>

<mosaic_0001>
module attributes {stable_mosaic.version = 11 : i64} {
  func.func @_bn_relu_matmul_kernel(%arg0: i32, %arg1: i32, %arg2: memref<256x128xf32, #tpu.memory_space<vmem>>, %arg3: memref<1x128xf32, #tpu.memory_space<vmem>>, %arg4: memref<1x128xf32, #tpu.memory_space<vmem>>, %arg5: memref<128x128xf32, #tpu.memory_space<vmem>>, %arg6: memref<256x128xf32, #tpu.memory_space<vmem>>, %arg7: memref<256x128xf32, #tpu.memory_space<vmem>>) attributes {dimension_semantics = [#tpu.dimension_semantics<parallel>, #tpu.dimension_semantics<arbitrary>], iteration_bounds = array<i64: 2, 1>, scalar_prefetch = 0 : i64, scratch_operands = 1 : i64, tpu.core_type = #tpu.core_type<tc>, window_params = [{transform_indices = @transform_0, window_bounds = array<i64: 256, 128>}, {transform_indices = @transform_1, window_bounds = array<i64: 1, 128>}, {transform_indices = @transform_2, window_bounds = array<i64: 1, 128>}, {transform_indices = @transform_3, window_bounds = array<i64: 128, 128>}, {transform_indices = @transform_4, window_bounds = array<i64: 256, 128>}]} {
    %c0_i32 = arith.constant 0 : i32
    %0 = arith.cmpi eq, %arg1, %c0_i32 : i32
    %1 = arith.extui %0 : i1 to i32
    %c0_i32_0 = arith.constant 0 : i32
    %2 = arith.cmpi ne, %1, %c0_i32_0 : i32
    scf.if %2 {
      %cst_15 = arith.constant 0.000000e+00 : f32
      %20 = vector.broadcast %cst_15 : f32 to vector<256x128xf32>
      %c0_16 = arith.constant 0 : index
      %c0_17 = arith.constant 0 : index
      %21 = vector.load %arg7[%c0_16, %c0_17] : memref<256x128xf32, #tpu.memory_space<vmem>>, vector<256x128xf32>
      tpu.vector_store %arg7[%c0_16, %c0_17], %20 {strides = array<i32>} : memref<256x128xf32, #tpu.memory_space<vmem>>, vector<256x128xf32>,
    } else {
    }
    %c0 = arith.constant 0 : index
    %c0_1 = arith.constant 0 : index
    %3 = vector.load %arg2[%c0, %c0_1] : memref<256x128xf32, #tpu.memory_space<vmem>>, vector<256x128xf32>
    %c0_2 = arith.constant 0 : index
    %c0_3 = arith.constant 0 : index
    %4 = vector.load %arg3[%c0_2, %c0_3] : memref<1x128xf32, #tpu.memory_space<vmem>>, vector<1x128xf32>
    %5 = vector.broadcast %4 : vector<1x128xf32> to vector<256x128xf32>
    %6 = arith.mulf %3, %5 : vector<256x128xf32>
    %c0_4 = arith.constant 0 : index
    %c0_5 = arith.constant 0 : index
    %7 = vector.load %arg4[%c0_4, %c0_5] : memref<1x128xf32, #tpu.memory_space<vmem>>, vector<1x128xf32>
    %8 = vector.broadcast %7 : vector<1x128xf32> to vector<256x128xf32>
    %9 = arith.addf %6, %8 : vector<256x128xf32>
    %cst = arith.constant 0.000000e+00 : f32
    %10 = vector.broadcast %cst : f32 to vector<256x128xf32>
    %11 = arith.maximumf %9, %10 : vector<256x128xf32>
    %c0_6 = arith.constant 0 : index
    %c0_7 = arith.constant 0 : index
    %12 = vector.load %arg7[%c0_6, %c0_7] : memref<256x128xf32, #tpu.memory_space<vmem>>, vector<256x128xf32>
    %c0_8 = arith.constant 0 : index
    %c0_9 = arith.constant 0 : index
    %13 = vector.load %arg5[%c0_8, %c0_9] : memref<128x128xf32, #tpu.memory_space<vmem>>, vector<128x128xf32>
    %cst_10 = arith.constant dense<0.000000e+00> : vector<256x128xf32>
    %14 = tpu.matmul %11, %13, %cst_10 {dimension_numbers = #tpu.dot_dimension_numbers<[1], [0], [0], [1], [0, 0, 1, 1], [], []>} : vector<256x128xf32>, vector<128x128xf32>, vector<256x128xf32> -> vector<256x128xf32>
    %15 = arith.addf %12, %14 : vector<256x128xf32>
    %c0_11 = arith.constant 0 : index
    %c0_12 = arith.constant 0 : index
    %16 = vector.load %arg7[%c0_11, %c0_12] : memref<256x128xf32, #tpu.memory_space<vmem>>, vector<256x128xf32>
    tpu.vector_store %arg7[%c0_11, %c0_12], %15 {strides = array<i32>} : memref<256x128xf32, #tpu.memory_space<vmem>>, vector<256x128xf32>,
    %c0_i32_13 = arith.constant 0 : i32
    %17 = arith.cmpi eq, %arg1, %c0_i32_13 : i32
    %18 = arith.extui %17 : i1 to i32
    %c0_i32_14 = arith.constant 0 : i32
    %19 = arith.cmpi ne, %18, %c0_i32_14 : i32
    scf.if %19 {
      %c0_15 = arith.constant 0 : index
      %c0_16 = arith.constant 0 : index
      %20 = vector.load %arg7[%c0_15, %c0_16] : memref<256x128xf32, #tpu.memory_space<vmem>>, vector<256x128xf32>
      %c0_17 = arith.constant 0 : index
      %c0_18 = arith.constant 0 : index
      %21 = vector.load %arg6[%c0_17, %c0_18] : memref<256x128xf32, #tpu.memory_space<vmem>>, vector<256x128xf32>
      tpu.vector_store %arg6[%c0_17, %c0_18], %20 {strides = array<i32>} : memref<256x128xf32, #tpu.memory_space<vmem>>, vector<256x128xf32>,
    } else {
    }
    return
  }
  func.func @transform_0(%arg0: i32, %arg1: i32) -> (i32, i32) {
    %c0_i32 = arith.constant 0 : i32
    return %arg0, %arg1 : i32, i32
  }
  func.func @transform_1(%arg0: i32, %arg1: i32) -> (i32, i32) {
    %c0_i32 = arith.constant 0 : i32
    %c0_i32_0 = arith.constant 0 : i32
    return %c0_i32, %arg1 : i32, i32
  }
  func.func @transform_2(%arg0: i32, %arg1: i32) -> (i32, i32) {
    %c0_i32 = arith.constant 0 : i32
    %c0_i32_0 = arith.constant 0 : i32
    return %c0_i32, %arg1 : i32, i32
  }
  func.func @transform_3(%arg0: i32, %arg1: i32) -> (i32, i32) {
    %c0_i32 = arith.constant 0 : i32
    %c0_i32_0 = arith.constant 0 : i32
    return %arg1, %c0_i32 : i32, i32
  }
  func.func @transform_4(%arg0: i32, %arg1: i32) -> (i32, i32) {
    %c0_i32 = arith.constant 0 : i32
    %c0_i32_0 = arith.constant 0 : i32
    return %arg0, %c0_i32 : i32, i32
  }
}

module attributes {stable_mosaic.version = 11 : i64} {
  func.func @kernel(%arg0: i32, %arg1: memref<1x16x16x128xf32, #tpu.memory_space<vmem>>, %arg2: memref<1x128xf32, #tpu.memory_space<vmem>>, %arg3: memref<1x128xf32, #tpu.memory_space<vmem>>, %arg4: memref<9x128x128xf32, #tpu.memory_space<vmem>>, %arg5: memref<2x16x16x384xf32, #tpu.memory_space<any>>, %arg6: memref<1x16x16x128xf32, #tpu.memory_space<vmem>>, %arg7: memref<18x32x128xf32, #tpu.memory_space<vmem>>) attributes {dimension_semantics = [#tpu.dimension_semantics<parallel>], iteration_bounds = array<i64: 2>, scalar_prefetch = 0 : i64, scratch_operands = 1 : i64, tpu.core_type = #tpu.core_type<tc>, window_params = [{transform_indices = @transform_0, window_bounds = array<i64: 1, 16, 16, 128>}, {pipeline_mode = #tpu.pipeline_mode<synchronous>, transform_indices = @transform_1, window_bounds = array<i64: 1, 128>}, {pipeline_mode = #tpu.pipeline_mode<synchronous>, transform_indices = @transform_2, window_bounds = array<i64: 1, 128>}, {pipeline_mode = #tpu.pipeline_mode<synchronous>, transform_indices = @transform_3, window_bounds = array<i64: 9, 128, 128>}, {}, {transform_indices = @transform_5, window_bounds = array<i64: 1, 16, 16, 128>}]} {
    %cst = arith.constant 0.000000e+00 : f32
    %0 = vector.broadcast %cst : f32 to vector<18x32x128xf32>
    %c0 = arith.constant 0 : index
    %c0_0 = arith.constant 0 : index
    %c0_1 = arith.constant 0 : index
    %1 = vector.load %arg7[%c0, %c0_0, %c0_1] : memref<18x32x128xf32, #tpu.memory_space<vmem>>, vector<18x32x128xf32>
    tpu.vector_store %arg7[%c0, %c0_0, %c0_1], %0 {strides = array<i32>} : memref<18x32x128xf32, #tpu.memory_space<vmem>>, vector<18x32x128xf32>,
    %c0_2 = arith.constant 0 : index
    %c0_3 = arith.constant 0 : index
    %c0_4 = arith.constant 0 : index
    %c0_5 = arith.constant 0 : index
    %2 = vector.load %arg1[%c0_2, %c0_3, %c0_4, %c0_5] : memref<1x16x16x128xf32, #tpu.memory_space<vmem>>, vector<1x16x16x128xf32>
    %3 = vector.shape_cast %2 : vector<1x16x16x128xf32> to vector<16x16x128xf32>
    %c0_6 = arith.constant 0 : index
    %c0_7 = arith.constant 0 : index
    %4 = vector.load %arg2[%c0_6, %c0_7] : memref<1x128xf32, #tpu.memory_space<vmem>>, vector<1x128xf32>
    %5 = vector.shape_cast %4 : vector<1x128xf32> to vector<1x1x128xf32>
    %6 = vector.broadcast %5 : vector<1x1x128xf32> to vector<16x16x128xf32>
    %7 = arith.mulf %3, %6 : vector<16x16x128xf32>
    %c0_8 = arith.constant 0 : index
    %c0_9 = arith.constant 0 : index
    %8 = vector.load %arg3[%c0_8, %c0_9] : memref<1x128xf32, #tpu.memory_space<vmem>>, vector<1x128xf32>
    %9 = vector.shape_cast %8 : vector<1x128xf32> to vector<1x1x128xf32>
    %10 = vector.broadcast %9 : vector<1x1x128xf32> to vector<16x16x128xf32>
    %11 = arith.addf %7, %10 : vector<16x16x128xf32>
    %cst_10 = arith.constant 0.000000e+00 : f32
    %12 = vector.broadcast %cst_10 : f32 to vector<16x16x128xf32>
    %13 = arith.maximumf %11, %12 : vector<16x16x128xf32>
    %c1 = arith.constant 1 : index
    %c8 = arith.constant 8 : index
    %c0_11 = arith.constant 0 : index
    %14 = vector.load %arg7[%c1, %c8, %c0_11] : memref<18x32x128xf32, #tpu.memory_space<vmem>>, vector<16x16x128xf32>
    tpu.vector_store %arg7[%c1, %c8, %c0_11], %13 {strides = array<i32>} : memref<18x32x128xf32, #tpu.memory_space<vmem>>, vector<16x16x128xf32>,
    %cst_12 = arith.constant 0.000000e+00 : f32
    %15 = vector.broadcast %cst_12 : f32 to vector<256x128xf32>
    %c0_13 = arith.constant 0 : index
    %c7 = arith.constant 7 : index
    %c0_14 = arith.constant 0 : index
    %16 = vector.load %arg7[%c0_13, %c7, %c0_14] : memref<18x32x128xf32, #tpu.memory_space<vmem>>, vector<16x16x128xf32>
    %17 = vector.shape_cast %16 : vector<16x16x128xf32> to vector<256x128xf32>
    %c0_15 = arith.constant 0 : index
    %c0_16 = arith.constant 0 : index
    %c0_17 = arith.constant 0 : index
    %18 = vector.load %arg4[%c0_15, %c0_16, %c0_17] : memref<9x128x128xf32, #tpu.memory_space<vmem>>, vector<1x128x128xf32>
    %19 = vector.shape_cast %18 : vector<1x128x128xf32> to vector<128x128xf32>
    %cst_18 = arith.constant dense<0.000000e+00> : vector<256x128xf32>
    %20 = tpu.matmul %17, %19, %cst_18 {dimension_numbers = #tpu.dot_dimension_numbers<[1], [0], [0], [1], [0, 0, 1, 1], [], []>} : vector<256x128xf32>, vector<128x128xf32>, vector<256x128xf32> -> vector<256x128xf32>
    %21 = arith.addf %15, %20 : vector<256x128xf32>
    %c0_19 = arith.constant 0 : index
    %c8_20 = arith.constant 8 : index
    %c0_21 = arith.constant 0 : index
    %22 = vector.load %arg7[%c0_19, %c8_20, %c0_21] : memref<18x32x128xf32, #tpu.memory_space<vmem>>, vector<16x16x128xf32>
    %23 = vector.shape_cast %22 : vector<16x16x128xf32> to vector<256x128xf32>
    %c1_22 = arith.constant 1 : index
    %c0_23 = arith.constant 0 : index
    %c0_24 = arith.constant 0 : index
    %24 = vector.load %arg4[%c1_22, %c0_23, %c0_24] : memref<9x128x128xf32, #tpu.memory_space<vmem>>, vector<1x128x128xf32>
    %25 = vector.shape_cast %24 : vector<1x128x128xf32> to vector<128x128xf32>
    %cst_25 = arith.constant dense<0.000000e+00> : vector<256x128xf32>
    %26 = tpu.matmul %23, %25, %cst_25 {dimension_numbers = #tpu.dot_dimension_numbers<[1], [0], [0], [1], [0, 0, 1, 1], [], []>} : vector<256x128xf32>, vector<128x128xf32>, vector<256x128xf32> -> vector<256x128xf32>
    %27 = arith.addf %21, %26 : vector<256x128xf32>
    %c0_26 = arith.constant 0 : index
    %c9 = arith.constant 9 : index
    %c0_27 = arith.constant 0 : index
    %28 = vector.load %arg7[%c0_26, %c9, %c0_27] : memref<18x32x128xf32, #tpu.memory_space<vmem>>, vector<16x16x128xf32>
    %29 = vector.shape_cast %28 : vector<16x16x128xf32> to vector<256x128xf32>
    %c2 = arith.constant 2 : index
    %c0_28 = arith.constant 0 : index
    %c0_29 = arith.constant 0 : index
    %30 = vector.load %arg4[%c2, %c0_28, %c0_29] : memref<9x128x128xf32, #tpu.memory_space<vmem>>, vector<1x128x128xf32>
    %31 = vector.shape_cast %30 : vector<1x128x128xf32> to vector<128x128xf32>
    %cst_30 = arith.constant dense<0.000000e+00> : vector<256x128xf32>
    %32 = tpu.matmul %29, %31, %cst_30 {dimension_numbers = #tpu.dot_dimension_numbers<[1], [0], [0], [1], [0, 0, 1, 1], [], []>} : vector<256x128xf32>, vector<128x128xf32>, vector<256x128xf32> -> vector<256x128xf32>
    %33 = arith.addf %27, %32 : vector<256x128xf32>
    %c1_31 = arith.constant 1 : index
    %c7_32 = arith.constant 7 : index
    %c0_33 = arith.constant 0 : index
    %34 = vector.load %arg7[%c1_31, %c7_32, %c0_33] : memref<18x32x128xf32, #tpu.memory_space<vmem>>, vector<16x16x128xf32>
    %35 = vector.shape_cast %34 : vector<16x16x128xf32> to vector<256x128xf32>
    %c3 = arith.constant 3 : index
    %c0_34 = arith.constant 0 : index
    %c0_35 = arith.constant 0 : index
    %36 = vector.load %arg4[%c3, %c0_34, %c0_35] : memref<9x128x128xf32, #tpu.memory_space<vmem>>, vector<1x128x128xf32>
    %37 = vector.shape_cast %36 : vector<1x128x128xf32> to vector<128x128xf32>
    %cst_36 = arith.constant dense<0.000000e+00> : vector<256x128xf32>
    %38 = tpu.matmul %35, %37, %cst_36 {dimension_numbers = #tpu.dot_dimension_numbers<[1], [0], [0], [1], [0, 0, 1, 1], [], []>} : vector<256x128xf32>, vector<128x128xf32>, vector<256x128xf32> -> vector<256x128xf32>
    %39 = arith.addf %33, %38 : vector<256x128xf32>
    %c1_37 = arith.constant 1 : index
    %c8_38 = arith.constant 8 : index
    %c0_39 = arith.constant 0 : index
    %40 = vector.load %arg7[%c1_37, %c8_38, %c0_39] : memref<18x32x128xf32, #tpu.memory_space<vmem>>, vector<16x16x128xf32>
    %41 = vector.shape_cast %40 : vector<16x16x128xf32> to vector<256x128xf32>
    %c4 = arith.constant 4 : index
    %c0_40 = arith.constant 0 : index
    %c0_41 = arith.constant 0 : index
    %42 = vector.load %arg4[%c4, %c0_40, %c0_41] : memref<9x128x128xf32, #tpu.memory_space<vmem>>, vector<1x128x128xf32>
    %43 = vector.shape_cast %42 : vector<1x128x128xf32> to vector<128x128xf32>
    %cst_42 = arith.constant dense<0.000000e+00> : vector<256x128xf32>
    %44 = tpu.matmul %41, %43, %cst_42 {dimension_numbers = #tpu.dot_dimension_numbers<[1], [0], [0], [1], [0, 0, 1, 1], [], []>} : vector<256x128xf32>, vector<128x128xf32>, vector<256x128xf32> -> vector<256x128xf32>
    %45 = arith.addf %39, %44 : vector<256x128xf32>
    %c1_43 = arith.constant 1 : index
    %c9_44 = arith.constant 9 : index
    %c0_45 = arith.constant 0 : index
    %46 = vector.load %arg7[%c1_43, %c9_44, %c0_45] : memref<18x32x128xf32, #tpu.memory_space<vmem>>, vector<16x16x128xf32>
    %47 = vector.shape_cast %46 : vector<16x16x128xf32> to vector<256x128xf32>
    %c5 = arith.constant 5 : index
    %c0_46 = arith.constant 0 : index
    %c0_47 = arith.constant 0 : index
    %48 = vector.load %arg4[%c5, %c0_46, %c0_47] : memref<9x128x128xf32, #tpu.memory_space<vmem>>, vector<1x128x128xf32>
    %49 = vector.shape_cast %48 : vector<1x128x128xf32> to vector<128x128xf32>
    %cst_48 = arith.constant dense<0.000000e+00> : vector<256x128xf32>
    %50 = tpu.matmul %47, %49, %cst_48 {dimension_numbers = #tpu.dot_dimension_numbers<[1], [0], [0], [1], [0, 0, 1, 1], [], []>} : vector<256x128xf32>, vector<128x128xf32>, vector<256x128xf32> -> vector<256x128xf32>
    %51 = arith.addf %45, %50 : vector<256x128xf32>
    %c2_49 = arith.constant 2 : index
    %c7_50 = arith.constant 7 : index
    %c0_51 = arith.constant 0 : index
    %52 = vector.load %arg7[%c2_49, %c7_50, %c0_51] : memref<18x32x128xf32, #tpu.memory_space<vmem>>, vector<16x16x128xf32>
    %53 = vector.shape_cast %52 : vector<16x16x128xf32> to vector<256x128xf32>
    %c6 = arith.constant 6 : index
    %c0_52 = arith.constant 0 : index
    %c0_53 = arith.constant 0 : index
    %54 = vector.load %arg4[%c6, %c0_52, %c0_53] : memref<9x128x128xf32, #tpu.memory_space<vmem>>, vector<1x128x128xf32>
    %55 = vector.shape_cast %54 : vector<1x128x128xf32> to vector<128x128xf32>
    %cst_54 = arith.constant dense<0.000000e+00> : vector<256x128xf32>
    %56 = tpu.matmul %53, %55, %cst_54 {dimension_numbers = #tpu.dot_dimension_numbers<[1], [0], [0], [1], [0, 0, 1, 1], [], []>} : vector<256x128xf32>, vector<128x128xf32>, vector<256x128xf32> -> vector<256x128xf32>
    %57 = arith.addf %51, %56 : vector<256x128xf32>
    %c2_55 = arith.constant 2 : index
    %c8_56 = arith.constant 8 : index
    %c0_57 = arith.constant 0 : index
    %58 = vector.load %arg7[%c2_55, %c8_56, %c0_57] : memref<18x32x128xf32, #tpu.memory_space<vmem>>, vector<16x16x128xf32>
    %59 = vector.shape_cast %58 : vector<16x16x128xf32> to vector<256x128xf32>
    %c7_58 = arith.constant 7 : index
    %c0_59 = arith.constant 0 : index
    %c0_60 = arith.constant 0 : index
    %60 = vector.load %arg4[%c7_58, %c0_59, %c0_60] : memref<9x128x128xf32, #tpu.memory_space<vmem>>, vector<1x128x128xf32>
    %61 = vector.shape_cast %60 : vector<1x128x128xf32> to vector<128x128xf32>
    %cst_61 = arith.constant dense<0.000000e+00> : vector<256x128xf32>
    %62 = tpu.matmul %59, %61, %cst_61 {dimension_numbers = #tpu.dot_dimension_numbers<[1], [0], [0], [1], [0, 0, 1, 1], [], []>} : vector<256x128xf32>, vector<128x128xf32>, vector<256x128xf32> -> vector<256x128xf32>
    %63 = arith.addf %57, %62 : vector<256x128xf32>
    %c2_62 = arith.constant 2 : index
    %c9_63 = arith.constant 9 : index
    %c0_64 = arith.constant 0 : index
    %64 = vector.load %arg7[%c2_62, %c9_63, %c0_64] : memref<18x32x128xf32, #tpu.memory_space<vmem>>, vector<16x16x128xf32>
    %65 = vector.shape_cast %64 : vector<16x16x128xf32> to vector<256x128xf32>
    %c8_65 = arith.constant 8 : index
    %c0_66 = arith.constant 0 : index
    %c0_67 = arith.constant 0 : index
    %66 = vector.load %arg4[%c8_65, %c0_66, %c0_67] : memref<9x128x128xf32, #tpu.memory_space<vmem>>, vector<1x128x128xf32>
    %67 = vector.shape_cast %66 : vector<1x128x128xf32> to vector<128x128xf32>
    %cst_68 = arith.constant dense<0.000000e+00> : vector<256x128xf32>
    %68 = tpu.matmul %65, %67, %cst_68 {dimension_numbers = #tpu.dot_dimension_numbers<[1], [0], [0], [1], [0, 0, 1, 1], [], []>} : vector<256x128xf32>, vector<128x128xf32>, vector<256x128xf32> -> vector<256x128xf32>
    %69 = arith.addf %63, %68 : vector<256x128xf32>
    %70 = vector.shape_cast %69 : vector<256x128xf32> to vector<16x16x128xf32>
    %c0_69 = arith.constant 0 : index
    %c0_70 = arith.constant 0 : index
    %c0_71 = arith.constant 0 : index
    %c0_72 = arith.constant 0 : index
    %71 = vector.load %arg6[%c0_69, %c0_70, %c0_71, %c0_72] : memref<1x16x16x128xf32, #tpu.memory_space<vmem>>, vector<1x16x16x128xf32>
    %72 = vector.shape_cast %71 : vector<1x16x16x128xf32> to vector<16x16x128xf32>
    %73 = vector.shape_cast %70 : vector<16x16x128xf32> to vector<1x16x16x128xf32>
    tpu.vector_store %arg6[%c0_69, %c0_70, %c0_71, %c0_72], %73 {strides = array<i32>} : memref<1x16x16x128xf32, #tpu.memory_space<vmem>>, vector<1x16x16x128xf32>,
    return
  }
  func.func @transform_0(%arg0: i32) -> (i32, i32, i32, i32) {
    %c0_i32 = arith.constant 0 : i32
    %c0_i32_0 = arith.constant 0 : i32
    %c0_i32_1 = arith.constant 0 : i32
    %c0_i32_2 = arith.constant 0 : i32
    return %arg0, %c0_i32, %c0_i32_0, %c0_i32_1 : i32, i32, i32, i32
  }
  func.func @transform_1(%arg0: i32) -> (i32, i32) {
    %c0_i32 = arith.constant 0 : i32
    %c0_i32_0 = arith.constant 0 : i32
    %c0_i32_1 = arith.constant 0 : i32
    return %c0_i32, %c0_i32_0 : i32, i32
  }
  func.func @transform_2(%arg0: i32) -> (i32, i32) {
    %c0_i32 = arith.constant 0 : i32
    %c0_i32_0 = arith.constant 0 : i32
    %c0_i32_1 = arith.constant 0 : i32
    return %c0_i32, %c0_i32_0 : i32, i32
  }
  func.func @transform_3(%arg0: i32) -> (i32, i32, i32) {
    %c0_i32 = arith.constant 0 : i32
    %c0_i32_0 = arith.constant 0 : i32
    %c0_i32_1 = arith.constant 0 : i32
    %c0_i32_2 = arith.constant 0 : i32
    return %c0_i32, %c0_i32_0, %c0_i32_1 : i32, i32, i32
  }
  func.func @transform_5(%arg0: i32) -> (i32, i32, i32, i32) {
    %c0_i32 = arith.constant 0 : i32
    %c0_i32_0 = arith.constant 0 : i32
    %c1_i32 = arith.constant 1 : i32
    %c0_i32_1 = arith.constant 0 : i32
    return %arg0, %c0_i32, %c0_i32_0, %c1_i32 : i32, i32, i32, i32
  }
}

module attributes {stable_mosaic.version = 11 : i64} {
  func.func @_bn_relu_matmul_kernel(%arg0: i32, %arg1: i32, %arg2: memref<256x128xf32, #tpu.memory_space<vmem>>, %arg3: memref<1x128xf32, #tpu.memory_space<vmem>>, %arg4: memref<1x128xf32, #tpu.memory_space<vmem>>, %arg5: memref<128x128xf32, #tpu.memory_space<vmem>>, %arg6: memref<256x128xf32, #tpu.memory_space<vmem>>, %arg7: memref<256x128xf32, #tpu.memory_space<vmem>>) attributes {dimension_semantics = [#tpu.dimension_semantics<parallel>, #tpu.dimension_semantics<arbitrary>], iteration_bounds = array<i64: 2, 2>, scalar_prefetch = 0 : i64, scratch_operands = 1 : i64, tpu.core_type = #tpu.core_type<tc>, window_params = [{transform_indices = @transform_0, window_bounds = array<i64: 256, 128>}, {transform_indices = @transform_1, window_bounds = array<i64: 1, 128>}, {transform_indices = @transform_2, window_bounds = array<i64: 1, 128>}, {transform_indices = @transform_3, window_bounds = array<i64: 128, 128>}, {transform_indices = @transform_4, window_bounds = array<i64: 256, 128>}]} {
    %c0_i32 = arith.constant 0 : i32
    %0 = arith.cmpi eq, %arg1, %c0_i32 : i32
    %1 = arith.extui %0 : i1 to i32
    %c0_i32_0 = arith.constant 0 : i32
    %2 = arith.cmpi ne, %1, %c0_i32_0 : i32
    scf.if %2 {
      %cst_14 = arith.constant 0.000000e+00 : f32
      %20 = vector.broadcast %cst_14 : f32 to vector<256x128xf32>
      %c0_15 = arith.constant 0 : index
      %c0_16 = arith.constant 0 : index
      %21 = vector.load %arg7[%c0_15, %c0_16] : memref<256x128xf32, #tpu.memory_space<vmem>>, vector<256x128xf32>
      tpu.vector_store %arg7[%c0_15, %c0_16], %20 {strides = array<i32>} : memref<256x128xf32, #tpu.memory_space<vmem>>, vector<256x128xf32>,
    } else {
    }
    %c0 = arith.constant 0 : index
    %c0_1 = arith.constant 0 : index
    %3 = vector.load %arg2[%c0, %c0_1] : memref<256x128xf32, #tpu.memory_space<vmem>>, vector<256x128xf32>
    %c0_2 = arith.constant 0 : index
    %c0_3 = arith.constant 0 : index
    %4 = vector.load %arg3[%c0_2, %c0_3] : memref<1x128xf32, #tpu.memory_space<vmem>>, vector<1x128xf32>
    %5 = vector.broadcast %4 : vector<1x128xf32> to vector<256x128xf32>
    %6 = arith.mulf %3, %5 : vector<256x128xf32>
    %c0_4 = arith.constant 0 : index
    %c0_5 = arith.constant 0 : index
    %7 = vector.load %arg4[%c0_4, %c0_5] : memref<1x128xf32, #tpu.memory_space<vmem>>, vector<1x128xf32>
    %8 = vector.broadcast %7 : vector<1x128xf32> to vector<256x128xf32>
    %9 = arith.addf %6, %8 : vector<256x128xf32>
    %cst = arith.constant 0.000000e+00 : f32
    %10 = vector.broadcast %cst : f32 to vector<256x128xf32>
    %11 = arith.maximumf %9, %10 : vector<256x128xf32>
    %c0_6 = arith.constant 0 : index
    %c0_7 = arith.constant 0 : index
    %12 = vector.load %arg7[%c0_6, %c0_7] : memref<256x128xf32, #tpu.memory_space<vmem>>, vector<256x128xf32>
    %c0_8 = arith.constant 0 : index
    %c0_9 = arith.constant 0 : index
    %13 = vector.load %arg5[%c0_8, %c0_9] : memref<128x128xf32, #tpu.memory_space<vmem>>, vector<128x128xf32>
    %cst_10 = arith.constant dense<0.000000e+00> : vector<256x128xf32>
    %14 = tpu.matmul %11, %13, %cst_10 {dimension_numbers = #tpu.dot_dimension_numbers<[1], [0], [0], [1], [0, 0, 1, 1], [], []>} : vector<256x128xf32>, vector<128x128xf32>, vector<256x128xf32> -> vector<256x128xf32>
    %15 = arith.addf %12, %14 : vector<256x128xf32>
    %c0_11 = arith.constant 0 : index
    %c0_12 = arith.constant 0 : index
    %16 = vector.load %arg7[%c0_11, %c0_12] : memref<256x128xf32, #tpu.memory_space<vmem>>, vector<256x128xf32>
    tpu.vector_store %arg7[%c0_11, %c0_12], %15 {strides = array<i32>} : memref<256x128xf32, #tpu.memory_space<vmem>>, vector<256x128xf32>,
    %c1_i32 = arith.constant 1 : i32
    %17 = arith.cmpi eq, %arg1, %c1_i32 : i32
    %18 = arith.extui %17 : i1 to i32
    %c0_i32_13 = arith.constant 0 : i32
    %19 = arith.cmpi ne, %18, %c0_i32_13 : i32
    scf.if %19 {
      %c0_14 = arith.constant 0 : index
      %c0_15 = arith.constant 0 : index
      %20 = vector.load %arg7[%c0_14, %c0_15] : memref<256x128xf32, #tpu.memory_space<vmem>>, vector<256x128xf32>
      %c0_16 = arith.constant 0 : index
      %c0_17 = arith.constant 0 : index
      %21 = vector.load %arg6[%c0_16, %c0_17] : memref<256x128xf32, #tpu.memory_space<vmem>>, vector<256x128xf32>
      tpu.vector_store %arg6[%c0_16, %c0_17], %20 {strides = array<i32>} : memref<256x128xf32, #tpu.memory_space<vmem>>, vector<256x128xf32>,
    } else {
    }
    return
  }
  func.func @transform_0(%arg0: i32, %arg1: i32) -> (i32, i32) {
    %c0_i32 = arith.constant 0 : i32
    return %arg0, %arg1 : i32, i32
  }
  func.func @transform_1(%arg0: i32, %arg1: i32) -> (i32, i32) {
    %c0_i32 = arith.constant 0 : i32
    %c0_i32_0 = arith.constant 0 : i32
    return %c0_i32, %arg1 : i32, i32
  }
  func.func @transform_2(%arg0: i32, %arg1: i32) -> (i32, i32) {
    %c0_i32 = arith.constant 0 : i32
    %c0_i32_0 = arith.constant 0 : i32
    return %c0_i32, %arg1 : i32, i32
  }
  func.func @transform_3(%arg0: i32, %arg1: i32) -> (i32, i32) {
    %c0_i32 = arith.constant 0 : i32
    %c0_i32_0 = arith.constant 0 : i32
    return %arg1, %c0_i32 : i32, i32
  }
  func.func @transform_4(%arg0: i32, %arg1: i32) -> (i32, i32) {
    %c0_i32 = arith.constant 0 : i32
    %c0_i32_0 = arith.constant 0 : i32
    return %arg0, %c0_i32 : i32, i32
  }
}

module attributes {stable_mosaic.version = 11 : i64} {
  func.func @kernel(%arg0: i32, %arg1: memref<1x16x16x128xf32, #tpu.memory_space<vmem>>, %arg2: memref<1x128xf32, #tpu.memory_space<vmem>>, %arg3: memref<1x128xf32, #tpu.memory_space<vmem>>, %arg4: memref<9x128x128xf32, #tpu.memory_space<vmem>>, %arg5: memref<2x16x16x384xf32, #tpu.memory_space<any>>, %arg6: memref<1x16x16x128xf32, #tpu.memory_space<vmem>>, %arg7: memref<18x32x128xf32, #tpu.memory_space<vmem>>) attributes {dimension_semantics = [#tpu.dimension_semantics<parallel>], iteration_bounds = array<i64: 2>, scalar_prefetch = 0 : i64, scratch_operands = 1 : i64, tpu.core_type = #tpu.core_type<tc>, window_params = [{transform_indices = @transform_0, window_bounds = array<i64: 1, 16, 16, 128>}, {pipeline_mode = #tpu.pipeline_mode<synchronous>, transform_indices = @transform_1, window_bounds = array<i64: 1, 128>}, {pipeline_mode = #tpu.pipeline_mode<synchronous>, transform_indices = @transform_2, window_bounds = array<i64: 1, 128>}, {pipeline_mode = #tpu.pipeline_mode<synchronous>, transform_indices = @transform_3, window_bounds = array<i64: 9, 128, 128>}, {}, {transform_indices = @transform_5, window_bounds = array<i64: 1, 16, 16, 128>}]} {
    %cst = arith.constant 0.000000e+00 : f32
    %0 = vector.broadcast %cst : f32 to vector<18x32x128xf32>
    %c0 = arith.constant 0 : index
    %c0_0 = arith.constant 0 : index
    %c0_1 = arith.constant 0 : index
    %1 = vector.load %arg7[%c0, %c0_0, %c0_1] : memref<18x32x128xf32, #tpu.memory_space<vmem>>, vector<18x32x128xf32>
    tpu.vector_store %arg7[%c0, %c0_0, %c0_1], %0 {strides = array<i32>} : memref<18x32x128xf32, #tpu.memory_space<vmem>>, vector<18x32x128xf32>,
    %c0_2 = arith.constant 0 : index
    %c0_3 = arith.constant 0 : index
    %c0_4 = arith.constant 0 : index
    %c0_5 = arith.constant 0 : index
    %2 = vector.load %arg1[%c0_2, %c0_3, %c0_4, %c0_5] : memref<1x16x16x128xf32, #tpu.memory_space<vmem>>, vector<1x16x16x128xf32>
    %3 = vector.shape_cast %2 : vector<1x16x16x128xf32> to vector<16x16x128xf32>
    %c0_6 = arith.constant 0 : index
    %c0_7 = arith.constant 0 : index
    %4 = vector.load %arg2[%c0_6, %c0_7] : memref<1x128xf32, #tpu.memory_space<vmem>>, vector<1x128xf32>
    %5 = vector.shape_cast %4 : vector<1x128xf32> to vector<1x1x128xf32>
    %6 = vector.broadcast %5 : vector<1x1x128xf32> to vector<16x16x128xf32>
    %7 = arith.mulf %3, %6 : vector<16x16x128xf32>
    %c0_8 = arith.constant 0 : index
    %c0_9 = arith.constant 0 : index
    %8 = vector.load %arg3[%c0_8, %c0_9] : memref<1x128xf32, #tpu.memory_space<vmem>>, vector<1x128xf32>
    %9 = vector.shape_cast %8 : vector<1x128xf32> to vector<1x1x128xf32>
    %10 = vector.broadcast %9 : vector<1x1x128xf32> to vector<16x16x128xf32>
    %11 = arith.addf %7, %10 : vector<16x16x128xf32>
    %cst_10 = arith.constant 0.000000e+00 : f32
    %12 = vector.broadcast %cst_10 : f32 to vector<16x16x128xf32>
    %13 = arith.maximumf %11, %12 : vector<16x16x128xf32>
    %c1 = arith.constant 1 : index
    %c8 = arith.constant 8 : index
    %c0_11 = arith.constant 0 : index
    %14 = vector.load %arg7[%c1, %c8, %c0_11] : memref<18x32x128xf32, #tpu.memory_space<vmem>>, vector<16x16x128xf32>
    tpu.vector_store %arg7[%c1, %c8, %c0_11], %13 {strides = array<i32>} : memref<18x32x128xf32, #tpu.memory_space<vmem>>, vector<16x16x128xf32>,
    %cst_12 = arith.constant 0.000000e+00 : f32
    %15 = vector.broadcast %cst_12 : f32 to vector<256x128xf32>
    %c0_13 = arith.constant 0 : index
    %c7 = arith.constant 7 : index
    %c0_14 = arith.constant 0 : index
    %16 = vector.load %arg7[%c0_13, %c7, %c0_14] : memref<18x32x128xf32, #tpu.memory_space<vmem>>, vector<16x16x128xf32>
    %17 = vector.shape_cast %16 : vector<16x16x128xf32> to vector<256x128xf32>
    %c0_15 = arith.constant 0 : index
    %c0_16 = arith.constant 0 : index
    %c0_17 = arith.constant 0 : index
    %18 = vector.load %arg4[%c0_15, %c0_16, %c0_17] : memref<9x128x128xf32, #tpu.memory_space<vmem>>, vector<1x128x128xf32>
    %19 = vector.shape_cast %18 : vector<1x128x128xf32> to vector<128x128xf32>
    %cst_18 = arith.constant dense<0.000000e+00> : vector<256x128xf32>
    %20 = tpu.matmul %17, %19, %cst_18 {dimension_numbers = #tpu.dot_dimension_numbers<[1], [0], [0], [1], [0, 0, 1, 1], [], []>} : vector<256x128xf32>, vector<128x128xf32>, vector<256x128xf32> -> vector<256x128xf32>
    %21 = arith.addf %15, %20 : vector<256x128xf32>
    %c0_19 = arith.constant 0 : index
    %c8_20 = arith.constant 8 : index
    %c0_21 = arith.constant 0 : index
    %22 = vector.load %arg7[%c0_19, %c8_20, %c0_21] : memref<18x32x128xf32, #tpu.memory_space<vmem>>, vector<16x16x128xf32>
    %23 = vector.shape_cast %22 : vector<16x16x128xf32> to vector<256x128xf32>
    %c1_22 = arith.constant 1 : index
    %c0_23 = arith.constant 0 : index
    %c0_24 = arith.constant 0 : index
    %24 = vector.load %arg4[%c1_22, %c0_23, %c0_24] : memref<9x128x128xf32, #tpu.memory_space<vmem>>, vector<1x128x128xf32>
    %25 = vector.shape_cast %24 : vector<1x128x128xf32> to vector<128x128xf32>
    %cst_25 = arith.constant dense<0.000000e+00> : vector<256x128xf32>
    %26 = tpu.matmul %23, %25, %cst_25 {dimension_numbers = #tpu.dot_dimension_numbers<[1], [0], [0], [1], [0, 0, 1, 1], [], []>} : vector<256x128xf32>, vector<128x128xf32>, vector<256x128xf32> -> vector<256x128xf32>
    %27 = arith.addf %21, %26 : vector<256x128xf32>
    %c0_26 = arith.constant 0 : index
    %c9 = arith.constant 9 : index
    %c0_27 = arith.constant 0 : index
    %28 = vector.load %arg7[%c0_26, %c9, %c0_27] : memref<18x32x128xf32, #tpu.memory_space<vmem>>, vector<16x16x128xf32>
    %29 = vector.shape_cast %28 : vector<16x16x128xf32> to vector<256x128xf32>
    %c2 = arith.constant 2 : index
    %c0_28 = arith.constant 0 : index
    %c0_29 = arith.constant 0 : index
    %30 = vector.load %arg4[%c2, %c0_28, %c0_29] : memref<9x128x128xf32, #tpu.memory_space<vmem>>, vector<1x128x128xf32>
    %31 = vector.shape_cast %30 : vector<1x128x128xf32> to vector<128x128xf32>
    %cst_30 = arith.constant dense<0.000000e+00> : vector<256x128xf32>
    %32 = tpu.matmul %29, %31, %cst_30 {dimension_numbers = #tpu.dot_dimension_numbers<[1], [0], [0], [1], [0, 0, 1, 1], [], []>} : vector<256x128xf32>, vector<128x128xf32>, vector<256x128xf32> -> vector<256x128xf32>
    %33 = arith.addf %27, %32 : vector<256x128xf32>
    %c1_31 = arith.constant 1 : index
    %c7_32 = arith.constant 7 : index
    %c0_33 = arith.constant 0 : index
    %34 = vector.load %arg7[%c1_31, %c7_32, %c0_33] : memref<18x32x128xf32, #tpu.memory_space<vmem>>, vector<16x16x128xf32>
    %35 = vector.shape_cast %34 : vector<16x16x128xf32> to vector<256x128xf32>
    %c3 = arith.constant 3 : index
    %c0_34 = arith.constant 0 : index
    %c0_35 = arith.constant 0 : index
    %36 = vector.load %arg4[%c3, %c0_34, %c0_35] : memref<9x128x128xf32, #tpu.memory_space<vmem>>, vector<1x128x128xf32>
    %37 = vector.shape_cast %36 : vector<1x128x128xf32> to vector<128x128xf32>
    %cst_36 = arith.constant dense<0.000000e+00> : vector<256x128xf32>
    %38 = tpu.matmul %35, %37, %cst_36 {dimension_numbers = #tpu.dot_dimension_numbers<[1], [0], [0], [1], [0, 0, 1, 1], [], []>} : vector<256x128xf32>, vector<128x128xf32>, vector<256x128xf32> -> vector<256x128xf32>
    %39 = arith.addf %33, %38 : vector<256x128xf32>
    %c1_37 = arith.constant 1 : index
    %c8_38 = arith.constant 8 : index
    %c0_39 = arith.constant 0 : index
    %40 = vector.load %arg7[%c1_37, %c8_38, %c0_39] : memref<18x32x128xf32, #tpu.memory_space<vmem>>, vector<16x16x128xf32>
    %41 = vector.shape_cast %40 : vector<16x16x128xf32> to vector<256x128xf32>
    %c4 = arith.constant 4 : index
    %c0_40 = arith.constant 0 : index
    %c0_41 = arith.constant 0 : index
    %42 = vector.load %arg4[%c4, %c0_40, %c0_41] : memref<9x128x128xf32, #tpu.memory_space<vmem>>, vector<1x128x128xf32>
    %43 = vector.shape_cast %42 : vector<1x128x128xf32> to vector<128x128xf32>
    %cst_42 = arith.constant dense<0.000000e+00> : vector<256x128xf32>
    %44 = tpu.matmul %41, %43, %cst_42 {dimension_numbers = #tpu.dot_dimension_numbers<[1], [0], [0], [1], [0, 0, 1, 1], [], []>} : vector<256x128xf32>, vector<128x128xf32>, vector<256x128xf32> -> vector<256x128xf32>
    %45 = arith.addf %39, %44 : vector<256x128xf32>
    %c1_43 = arith.constant 1 : index
    %c9_44 = arith.constant 9 : index
    %c0_45 = arith.constant 0 : index
    %46 = vector.load %arg7[%c1_43, %c9_44, %c0_45] : memref<18x32x128xf32, #tpu.memory_space<vmem>>, vector<16x16x128xf32>
    %47 = vector.shape_cast %46 : vector<16x16x128xf32> to vector<256x128xf32>
    %c5 = arith.constant 5 : index
    %c0_46 = arith.constant 0 : index
    %c0_47 = arith.constant 0 : index
    %48 = vector.load %arg4[%c5, %c0_46, %c0_47] : memref<9x128x128xf32, #tpu.memory_space<vmem>>, vector<1x128x128xf32>
    %49 = vector.shape_cast %48 : vector<1x128x128xf32> to vector<128x128xf32>
    %cst_48 = arith.constant dense<0.000000e+00> : vector<256x128xf32>
    %50 = tpu.matmul %47, %49, %cst_48 {dimension_numbers = #tpu.dot_dimension_numbers<[1], [0], [0], [1], [0, 0, 1, 1], [], []>} : vector<256x128xf32>, vector<128x128xf32>, vector<256x128xf32> -> vector<256x128xf32>
    %51 = arith.addf %45, %50 : vector<256x128xf32>
    %c2_49 = arith.constant 2 : index
    %c7_50 = arith.constant 7 : index
    %c0_51 = arith.constant 0 : index
    %52 = vector.load %arg7[%c2_49, %c7_50, %c0_51] : memref<18x32x128xf32, #tpu.memory_space<vmem>>, vector<16x16x128xf32>
    %53 = vector.shape_cast %52 : vector<16x16x128xf32> to vector<256x128xf32>
    %c6 = arith.constant 6 : index
    %c0_52 = arith.constant 0 : index
    %c0_53 = arith.constant 0 : index
    %54 = vector.load %arg4[%c6, %c0_52, %c0_53] : memref<9x128x128xf32, #tpu.memory_space<vmem>>, vector<1x128x128xf32>
    %55 = vector.shape_cast %54 : vector<1x128x128xf32> to vector<128x128xf32>
    %cst_54 = arith.constant dense<0.000000e+00> : vector<256x128xf32>
    %56 = tpu.matmul %53, %55, %cst_54 {dimension_numbers = #tpu.dot_dimension_numbers<[1], [0], [0], [1], [0, 0, 1, 1], [], []>} : vector<256x128xf32>, vector<128x128xf32>, vector<256x128xf32> -> vector<256x128xf32>
    %57 = arith.addf %51, %56 : vector<256x128xf32>
    %c2_55 = arith.constant 2 : index
    %c8_56 = arith.constant 8 : index
    %c0_57 = arith.constant 0 : index
    %58 = vector.load %arg7[%c2_55, %c8_56, %c0_57] : memref<18x32x128xf32, #tpu.memory_space<vmem>>, vector<16x16x128xf32>
    %59 = vector.shape_cast %58 : vector<16x16x128xf32> to vector<256x128xf32>
    %c7_58 = arith.constant 7 : index
    %c0_59 = arith.constant 0 : index
    %c0_60 = arith.constant 0 : index
    %60 = vector.load %arg4[%c7_58, %c0_59, %c0_60] : memref<9x128x128xf32, #tpu.memory_space<vmem>>, vector<1x128x128xf32>
    %61 = vector.shape_cast %60 : vector<1x128x128xf32> to vector<128x128xf32>
    %cst_61 = arith.constant dense<0.000000e+00> : vector<256x128xf32>
    %62 = tpu.matmul %59, %61, %cst_61 {dimension_numbers = #tpu.dot_dimension_numbers<[1], [0], [0], [1], [0, 0, 1, 1], [], []>} : vector<256x128xf32>, vector<128x128xf32>, vector<256x128xf32> -> vector<256x128xf32>
    %63 = arith.addf %57, %62 : vector<256x128xf32>
    %c2_62 = arith.constant 2 : index
    %c9_63 = arith.constant 9 : index
    %c0_64 = arith.constant 0 : index
    %64 = vector.load %arg7[%c2_62, %c9_63, %c0_64] : memref<18x32x128xf32, #tpu.memory_space<vmem>>, vector<16x16x128xf32>
    %65 = vector.shape_cast %64 : vector<16x16x128xf32> to vector<256x128xf32>
    %c8_65 = arith.constant 8 : index
    %c0_66 = arith.constant 0 : index
    %c0_67 = arith.constant 0 : index
    %66 = vector.load %arg4[%c8_65, %c0_66, %c0_67] : memref<9x128x128xf32, #tpu.memory_space<vmem>>, vector<1x128x128xf32>
    %67 = vector.shape_cast %66 : vector<1x128x128xf32> to vector<128x128xf32>
    %cst_68 = arith.constant dense<0.000000e+00> : vector<256x128xf32>
    %68 = tpu.matmul %65, %67, %cst_68 {dimension_numbers = #tpu.dot_dimension_numbers<[1], [0], [0], [1], [0, 0, 1, 1], [], []>} : vector<256x128xf32>, vector<128x128xf32>, vector<256x128xf32> -> vector<256x128xf32>
    %69 = arith.addf %63, %68 : vector<256x128xf32>
    %70 = vector.shape_cast %69 : vector<256x128xf32> to vector<16x16x128xf32>
    %c0_69 = arith.constant 0 : index
    %c0_70 = arith.constant 0 : index
    %c0_71 = arith.constant 0 : index
    %c0_72 = arith.constant 0 : index
    %71 = vector.load %arg6[%c0_69, %c0_70, %c0_71, %c0_72] : memref<1x16x16x128xf32, #tpu.memory_space<vmem>>, vector<1x16x16x128xf32>
    %72 = vector.shape_cast %71 : vector<1x16x16x128xf32> to vector<16x16x128xf32>
    %73 = vector.shape_cast %70 : vector<16x16x128xf32> to vector<1x16x16x128xf32>
    tpu.vector_store %arg6[%c0_69, %c0_70, %c0_71, %c0_72], %73 {strides = array<i32>} : memref<1x16x16x128xf32, #tpu.memory_space<vmem>>, vector<1x16x16x128xf32>,
    return
  }
  func.func @transform_0(%arg0: i32) -> (i32, i32, i32, i32) {
    %c0_i32 = arith.constant 0 : i32
    %c0_i32_0 = arith.constant 0 : i32
    %c0_i32_1 = arith.constant 0 : i32
    %c0_i32_2 = arith.constant 0 : i32
    return %arg0, %c0_i32, %c0_i32_0, %c0_i32_1 : i32, i32, i32, i32
  }
  func.func @transform_1(%arg0: i32) -> (i32, i32) {
    %c0_i32 = arith.constant 0 : i32
    %c0_i32_0 = arith.constant 0 : i32
    %c0_i32_1 = arith.constant 0 : i32
    return %c0_i32, %c0_i32_0 : i32, i32
  }
  func.func @transform_2(%arg0: i32) -> (i32, i32) {
    %c0_i32 = arith.constant 0 : i32
    %c0_i32_0 = arith.constant 0 : i32
    %c0_i32_1 = arith.constant 0 : i32
    return %c0_i32, %c0_i32_0 : i32, i32
  }
  func.func @transform_3(%arg0: i32) -> (i32, i32, i32) {
    %c0_i32 = arith.constant 0 : i32
    %c0_i32_0 = arith.constant 0 : i32
    %c0_i32_1 = arith.constant 0 : i32
    %c0_i32_2 = arith.constant 0 : i32
    return %c0_i32, %c0_i32_0, %c0_i32_1 : i32, i32, i32
  }
  func.func @transform_5(%arg0: i32) -> (i32, i32, i32, i32) {
    %c0_i32 = arith.constant 0 : i32
    %c0_i32_0 = arith.constant 0 : i32
    %c2_i32 = arith.constant 2 : i32
    %c0_i32_1 = arith.constant 0 : i32
    return %arg0, %c0_i32, %c0_i32_0, %c2_i32 : i32, i32, i32, i32
  }
}

</mosaic_0001>

<llo_original>
// kernel: dense_block_forward.4
$region0: #{dense_block_forward.4}
  #allocation0 [shape = 'u32[]', space=smem, size = 0x4, offset = 0x4, fixed_abs, tag = 'smem constant byte address 0x4 - core index']
  #allocation1 [shape = 'u32[144,128]{1,0:T(1,128)}', space=vmem, size = 0x12000, scoped, tag = 'internal scratch']
  #allocation2 [shape = 'f32[256,128]{1,0:T(8,128)}', space=vmem, size = 0x20000, scoped, tag = 'scratch operand']
  %s0 = inlined_call_operand.vmem [shape: f32[512,384], index: 0, kind: input, shape index: {}]
  %s1 = inlined_call_operand.vmem [shape: f32[1,128], index: 1, kind: input, shape index: {}]
  %s2 = inlined_call_operand.vmem [shape: f32[1,128], index: 2, kind: input, shape index: {}]
  %s3 = inlined_call_operand.vmem [shape: f32[128,128], index: 3, kind: input, shape index: {}]
  %s4 = inlined_call_operand.vmem [shape: f32[512,128], index: 4, kind: output, shape index: {}]
  %s5 = sld [smem:[#allocation0]]
  $region95: #{dense_block_forward.4} parent=0
    _
  %s7 = ssub.s32 1, %s5
  %s8 = scalar_select 0, %s7, %s5
  $region1: #{dense_block_forward.4} parent=0
    #allocation3 [shape = 'u8[262144]{0}', space=vmem, size = 0x40000, scoped, tag = 'input window, operand 0']
    loop: start=0, step=1, limit=4
    $region2: #{dense_block_forward.4} parent=1 // loop_pre_header
      _
    $region3: #{dense_block_forward.4} parent=1 // loop_header
      %s10 = sphi 0, %s14
      %p11 = scmp.ge.s32.totalorder %s10, 4
      %s17 = sphi 0, %s29
      %s18 = sphi 0, %s25
      %s19 = sphi 0, %s17
      %s20 = sphi 0, %s18
      %s21 = sphi 0, %s19
      %s22 = sphi 0, %s20
      %s34 = sphi 0, %s36
      %s37 = sphi 0, %s34
      %s38 = sphi 0, %s37
      %s54 = sphi 0, %s38
      %s60 = sphi 0, %s62
      %s63 = sphi 0, %s60
      %s64 = sphi 0, %s63
      %s80 = sphi 0, %s64
      %s86 = sphi 0, %s88
      %s89 = sphi 0, %s86
      %s90 = sphi 0, %s89
      %s106 = sphi 0, %s90
      %s112 = sphi 0, %s114
      %s115 = sphi 0, %s112
      %s116 = sphi 0, %s115
      %s132 = sphi 0, %s116
      %s138 = sphi 0, %s140
      %s141 = sphi 0, %s138
      %s142 = sphi 0, %s141
      %s158 = sphi 0, %s142
    $region4: #{dense_block_forward.4} parent=1 // loop_header_branch
      %13 = sbr.rel (%p11) target = $region8
    $region5: #{dense_block_forward.4} parent=1 // loop_body
      %s15 = ssub.s32 %s10, 1
      %s16 = ssub.s32 %s10, 2
      %s23 = sadd.s32 1, %s18
      %p24 = scmp.ge.s32.totalorder %s23, 1
      %s25 = scalar_select %p24, 0, %s23
      %s26 = sadd.s32 1, %s17
      %s27 = scalar_select %p24, %s26, %s17
      %p28 = scmp.ge.s32.totalorder %s27, 2
      %s29 = scalar_select %p28, 0, %s27
      %s30 = ssub.s32 %s17, %s29
      %s31 = ssub.s32 %s18, %s25
      %s32 = sor.u32 %s30, %s31
      %p33 = scmp.eq.s32.totalorder %s32, 0
      %s35 = sadd.s32 %s34, 1
      %s36 = scalar_select %p33, %s34, %s35
      %p39 = pneg %p33
      %p40 = scmp.eq.s32.totalorder %s10, 1
      %p41 = por %p39, %p40
      %p42 = scmp.ne.s32.totalorder %s34, %s37
      %p43 = scmp.eq.s32.totalorder %s10, 0
      %p44 = por %p42, %p43
      %p45 = scmp.ne.s32.totalorder %s34, %s37
      %p46 = scmp.eq.s32.totalorder %s15, 1
      %p47 = por %p45, %p46
      %p48 = scmp.ne.s32.totalorder %s37, %s38
      %p49 = scmp.eq.s32.totalorder %s15, 0
      %p50 = por %p48, %p49
      %p51 = scmp.ne.s32.totalorder %s37, %s38
      %p52 = scmp.eq.s32.totalorder %s16, 1
      %p53 = por %p51, %p52
      %p55 = scmp.ne.s32.totalorder %s38, %s54
      %p56 = scmp.eq.s32.totalorder %s16, 0
      %p57 = por %p55, %p56
      %s58 = ssub.s32 %s18, %s25
      %p59 = scmp.eq.s32.totalorder %s58, 0
      %s61 = sadd.s32 %s60, 1
      %s62 = scalar_select %p59, %s60, %s61
      %p65 = pneg %p59
      %p66 = scmp.eq.s32.totalorder %s10, 1
      %p67 = por %p65, %p66
      %p68 = scmp.ne.s32.totalorder %s60, %s63
      %p69 = scmp.eq.s32.totalorder %s10, 0
      %p70 = por %p68, %p69
      %p71 = scmp.ne.s32.totalorder %s60, %s63
      %p72 = scmp.eq.s32.totalorder %s15, 1
      %p73 = por %p71, %p72
      %p74 = scmp.ne.s32.totalorder %s63, %s64
      %p75 = scmp.eq.s32.totalorder %s15, 0
      %p76 = por %p74, %p75
      %p77 = scmp.ne.s32.totalorder %s63, %s64
      %p78 = scmp.eq.s32.totalorder %s16, 1
      %p79 = por %p77, %p78
      %p81 = scmp.ne.s32.totalorder %s64, %s80
      %p82 = scmp.eq.s32.totalorder %s16, 0
      %p83 = por %p81, %p82
      %s84 = ssub.s32 %s18, %s25
      %p85 = scmp.eq.s32.totalorder %s84, 0
      %s87 = sadd.s32 %s86, 1
      %s88 = scalar_select %p85, %s86, %s87
      %p91 = pneg %p85
      %p92 = scmp.eq.s32.totalorder %s10, 1
      %p93 = por %p91, %p92
      %p94 = scmp.ne.s32.totalorder %s86, %s89
      %p95 = scmp.eq.s32.totalorder %s10, 0
      %p96 = por %p94, %p95
      %p97 = scmp.ne.s32.totalorder %s86, %s89
      %p98 = scmp.eq.s32.totalorder %s15, 1
      %p99 = por %p97, %p98
      %p100 = scmp.ne.s32.totalorder %s89, %s90
      %p101 = scmp.eq.s32.totalorder %s15, 0
      %p102 = por %p100, %p101
      %p103 = scmp.ne.s32.totalorder %s89, %s90
      %p104 = scmp.eq.s32.totalorder %s16, 1
      %p105 = por %p103, %p104
      %p107 = scmp.ne.s32.totalorder %s90, %s106
      %p108 = scmp.eq.s32.totalorder %s16, 0
      %p109 = por %p107, %p108
      %s110 = ssub.s32 %s18, %s25
      %p111 = scmp.eq.s32.totalorder %s110, 0
      %s113 = sadd.s32 %s112, 1
      %s114 = scalar_select %p111, %s112, %s113
      %p117 = pneg %p111
      %p118 = scmp.eq.s32.totalorder %s10, 1
      %p119 = por %p117, %p118
      %p120 = scmp.ne.s32.totalorder %s112, %s115
      %p121 = scmp.eq.s32.totalorder %s10, 0
      %p122 = por %p120, %p121
      %p123 = scmp.ne.s32.totalorder %s112, %s115
      %p124 = scmp.eq.s32.totalorder %s15, 1
      %p125 = por %p123, %p124
      %p126 = scmp.ne.s32.totalorder %s115, %s116
      %p127 = scmp.eq.s32.totalorder %s15, 0
      %p128 = por %p126, %p127
      %p129 = scmp.ne.s32.totalorder %s115, %s116
      %p130 = scmp.eq.s32.totalorder %s16, 1
      %p131 = por %p129, %p130
      %p133 = scmp.ne.s32.totalorder %s116, %s132
      %p134 = scmp.eq.s32.totalorder %s16, 0
      %p135 = por %p133, %p134
      %s136 = ssub.s32 %s17, %s29
      %p137 = scmp.eq.s32.totalorder %s136, 0
      %s139 = sadd.s32 %s138, 1
      %s140 = scalar_select %p137, %s138, %s139
      %p143 = pneg %p137
      %p144 = scmp.eq.s32.totalorder %s10, 1
      %p145 = por %p143, %p144
      %p146 = scmp.ne.s32.totalorder %s138, %s141
      %p147 = scmp.eq.s32.totalorder %s10, 0
      %p148 = por %p146, %p147
      %p149 = scmp.ne.s32.totalorder %s138, %s141
      %p150 = scmp.eq.s32.totalorder %s15, 1
      %p151 = por %p149, %p150
      %p152 = scmp.ne.s32.totalorder %s141, %s142
      %p153 = scmp.eq.s32.totalorder %s15, 0
      %p154 = por %p152, %p153
      %p155 = scmp.ne.s32.totalorder %s141, %s142
      %p156 = scmp.eq.s32.totalorder %s16, 1
      %p157 = por %p155, %p156
      %p159 = scmp.ne.s32.totalorder %s142, %s158
      %p160 = scmp.eq.s32.totalorder %s16, 0
      %p161 = por %p159, %p160
      %p162 = scmp.le.s32.totalorder 1, %s10
      %p163 = scmp.lt.s32.totalorder %s10, 3
      %p164 = pnand %p162, %p163
      %p165 = pneg %p164
      // Predicated region
      $region9: #{dense_block_forward.4} parent=5 // pred_check
        _
      $region10: #{dense_block_forward.4} parent=5 // pred_check_branch
        %167 = sbr.rel (%p164) target = $region12
      $region11: #{dense_block_forward.4} parent=5 // pred_region
        %s168 = ssub.s32 %s10, 1
        // Predicated region
        $region13: #{dense_block_forward.4} parent=11 // pred_check
          %p169 = pneg %p76
        $region14: #{dense_block_forward.4} parent=11 // pred_check_branch
          %171 = sbr.rel (%p169) target = $region16
        $region15: #{dense_block_forward.4} parent=11 // pred_region
          %p172 = scmp.lt.s32.totalorder %s20, 0
          %s173 = scalar_select %p172, %s20, 0
          %s174 = scalar_lea.vmem %s1, %s173
        $region16: #{dense_block_forward.4} parent=11 // pred_fallthru
          _
        // Predicated region
        $region17: #{dense_block_forward.4} parent=11 // pred_check
          %p175 = pneg %p102
        $region18: #{dense_block_forward.4} parent=11 // pred_check_branch
          %177 = sbr.rel (%p175) target = $region20
        $region19: #{dense_block_forward.4} parent=11 // pred_region
          %p178 = scmp.lt.s32.totalorder %s20, 0
          %s179 = scalar_select %p178, %s20, 0
          %s180 = scalar_lea.vmem %s2, %s179
        $region20: #{dense_block_forward.4} parent=11 // pred_fallthru
          _
        // Predicated region
        $region21: #{dense_block_forward.4} parent=11 // pred_check
          %p181 = pneg %p128
        $region22: #{dense_block_forward.4} parent=11 // pred_check_branch
          %183 = sbr.rel (%p181) target = $region24
        $region23: #{dense_block_forward.4} parent=11 // pred_region
          %s184 = smul.u32 16, %s20
          %p185 = scmp.lt.s32.totalorder %s184, 15
          %s186 = scalar_select %p185, %s184, 15
          %s187 = smul.addr %s186, 8
          %s188 = scalar_lea.vmem %s3, %s187
          %s189 = smul.u32 16, %s20
        $region24: #{dense_block_forward.4} parent=11 // pred_fallthru
          _
      $region12: #{dense_block_forward.4} parent=5 // pred_fallthru
        _
      %p190 = scmp.lt.s32.totalorder %s10, 2
      // Predicated region
      $region25: #{dense_block_forward.4} parent=5 // pred_check
        %p191 = pneg %p190
      $region26: #{dense_block_forward.4} parent=5 // pred_check_branch
        %193 = sbr.rel (%p191) target = $region28
      $region27: #{dense_block_forward.4} parent=5 // pred_region
        // Predicated region
        $region29: #{dense_block_forward.4} parent=27 // pred_check
          %p194 = pneg %p44
        $region30: #{dense_block_forward.4} parent=27 // pred_check_branch
          %196 = sbr.rel (%p194) target = $region32
        $region31: #{dense_block_forward.4} parent=27 // pred_region
          %s197 = sand.u32 %s34, 1
          %s198 = sand.u32 %s34, 1
          %s199 = smul.addr %s198, 256
          %s200 = scalar_lea.vmem [#allocation3], %s199
          %s201 = smul.u32 32, %s17
          %s202 = smul.addr %s201, 3
          %s203 = sadd.s32 %s18, %s202
          %s204 = smul.addr %s203, 8
          %s205 = scalar_lea.vmem %s0, %s204
          // Predicated region
          $region33: #{dense_block_forward.4} parent=31 // pred_check
            _
          $region34: #{dense_block_forward.4} parent=31 // pred_check_branch
            %207 = sbr.rel (0) target = $region36
          $region35: #{dense_block_forward.4} parent=31 // pred_region
            // Predicated region
            $region37: #{dense_block_forward.4} parent=35 // pred_check
              _
            $region38: #{dense_block_forward.4} parent=35 // pred_check_branch
              %209 = sbr.rel (0) target = $region40
            $region39: #{dense_block_forward.4} parent=35 // pred_region
              // Predicated region
              $region52: #{dense_block_forward.4} parent=39 // pred_check
                _
              $region53: #{dense_block_forward.4} parent=39 // pred_check_branch
                %286 = sbr.rel (0) target = $region55
              $region54: #{dense_block_forward.4} parent=39 // pred_region
                loop: start=0, step=1, limit=1
                $region56: #{dense_block_forward.4} parent=54 // loop_pre_header
                  _
                $region57: #{dense_block_forward.4} parent=54 // loop_header
                  %s288 = sphi 0, %s292
                  %p289 = scmp.ge.s32.totalorder %s288, 1
                  %s293 = sphi %s205, %s205
                  %s294 = sphi %s200, %s200
                $region58: #{dense_block_forward.4} parent=54 // loop_header_branch
                  %291 = sbr.rel (%p289) target = $region62
                $region59: #{dense_block_forward.4} parent=54 // loop_body
                  %v295 = vld [vmem:[%s293] sm:$0xff]
                  %296 = vst [vmem:[%s294] sm:$0xff] %v295
                  %v297 = vld [vmem:[%s293 + $0x18] sm:$0xff]
                  %298 = vst [vmem:[%s294 + $0x8] sm:$0xff] %v297
                  %v299 = vld [vmem:[%s293 + $0x30] sm:$0xff]
                  %300 = vst [vmem:[%s294 + $0x10] sm:$0xff] %v299
                  %v301 = vld [vmem:[%s293 + $0x48] sm:$0xff]
                  %302 = vst [vmem:[%s294 + $0x18] sm:$0xff] %v301
                  %v303 = vld [vmem:[%s293 + $0x60] sm:$0xff]
                  %304 = vst [vmem:[%s294 + $0x20] sm:$0xff] %v303
                  %v305 = vld [vmem:[%s293 + $0x78] sm:$0xff]
                  %306 = vst [vmem:[%s294 + $0x28] sm:$0xff] %v305
                  %v307 = vld [vmem:[%s293 + $0x90] sm:$0xff]
                  %308 = vst [vmem:[%s294 + $0x30] sm:$0xff] %v307
                  %v309 = vld [vmem:[%s293 + $0xa8] sm:$0xff]
                  %310 = vst [vmem:[%s294 + $0x38] sm:$0xff] %v309
                  %v311 = vld [vmem:[%s293 + $0xc0] sm:$0xff]
                  %312 = vst [vmem:[%s294 + $0x40] sm:$0xff] %v311
                  %v313 = vld [vmem:[%s293 + $0xd8] sm:$0xff]
                  %314 = vst [vmem:[%s294 + $0x48] sm:$0xff] %v313
                  %v315 = vld [vmem:[%s293 + $0xf0] sm:$0xff]
                  %316 = vst [vmem:[%s294 + $0x50] sm:$0xff] %v315
                  %v317 = vld [vmem:[%s293 + $0x108] sm:$0xff]
                  %318 = vst [vmem:[%s294 + $0x58] sm:$0xff] %v317
                  %v319 = vld [vmem:[%s293 + $0x120] sm:$0xff]
                  %320 = vst [vmem:[%s294 + $0x60] sm:$0xff] %v319
                  %v321 = vld [vmem:[%s293 + $0x138] sm:$0xff]
                  %322 = vst [vmem:[%s294 + $0x68] sm:$0xff] %v321
                  %v323 = vld [vmem:[%s293 + $0x150] sm:$0xff]
                  %324 = vst [vmem:[%s294 + $0x70] sm:$0xff] %v323
                  %v325 = vld [vmem:[%s293 + $0x168] sm:$0xff]
                  %326 = vst [vmem:[%s294 + $0x78] sm:$0xff] %v325
                  %v327 = vld [vmem:[%s293 + $0x180] sm:$0xff]
                  %328 = vst [vmem:[%s294 + $0x80] sm:$0xff] %v327
                  %v329 = vld [vmem:[%s293 + $0x198] sm:$0xff]
                  %330 = vst [vmem:[%s294 + $0x88] sm:$0xff] %v329
                  %v331 = vld [vmem:[%s293 + $0x1b0] sm:$0xff]
                  %332 = vst [vmem:[%s294 + $0x90] sm:$0xff] %v331
                  %v333 = vld [vmem:[%s293 + $0x1c8] sm:$0xff]
                  %334 = vst [vmem:[%s294 + $0x98] sm:$0xff] %v333
                  %v335 = vld [vmem:[%s293 + $0x1e0] sm:$0xff]
                  %336 = vst [vmem:[%s294 + $0xa0] sm:$0xff] %v335
                  %v337 = vld [vmem:[%s293 + $0x1f8] sm:$0xff]
                  %338 = vst [vmem:[%s294 + $0xa8] sm:$0xff] %v337
                  %v339 = vld [vmem:[%s293 + $0x210] sm:$0xff]
                  %340 = vst [vmem:[%s294 + $0xb0] sm:$0xff] %v339
                  %v341 = vld [vmem:[%s293 + $0x228] sm:$0xff]
                  %342 = vst [vmem:[%s294 + $0xb8] sm:$0xff] %v341
                  %v343 = vld [vmem:[%s293 + $0x240] sm:$0xff]
                  %344 = vst [vmem:[%s294 + $0xc0] sm:$0xff] %v343
                  %v345 = vld [vmem:[%s293 + $0x258] sm:$0xff]
                  %346 = vst [vmem:[%s294 + $0xc8] sm:$0xff] %v345
                  %v347 = vld [vmem:[%s293 + $0x270] sm:$0xff]
                  %348 = vst [vmem:[%s294 + $0xd0] sm:$0xff] %v347
                  %v349 = vld [vmem:[%s293 + $0x288] sm:$0xff]
                  %350 = vst [vmem:[%s294 + $0xd8] sm:$0xff] %v349
                  %v351 = vld [vmem:[%s293 + $0x2a0] sm:$0xff]
                  %352 = vst [vmem:[%s294 + $0xe0] sm:$0xff] %v351
                  %v353 = vld [vmem:[%s293 + $0x2b8] sm:$0xff]
                  %354 = vst [vmem:[%s294 + $0xe8] sm:$0xff] %v353
                  %v355 = vld [vmem:[%s293 + $0x2d0] sm:$0xff]
                  %356 = vst [vmem:[%s294 + $0xf0] sm:$0xff] %v355
                  %v357 = vld [vmem:[%s293 + $0x2e8] sm:$0xff]
                  %358 = vst [vmem:[%s294 + $0xf8] sm:$0xff] %v357
                $region60: #{dense_block_forward.4} parent=54 // loop_footer
                  %s292 = sadd.s32 1, %s288
                $region61: #{dense_block_forward.4} parent=54 // loop_footer_branch
                  %287 = sbr.rel target = $region57
                $region62: #{dense_block_forward.4} parent=54 // loop_exit
                  _
              $region55: #{dense_block_forward.4} parent=39 // pred_fallthru
                _
              // Predicated region
              $region63: #{dense_block_forward.4} parent=39 // pred_check
                _
              $region64: #{dense_block_forward.4} parent=39 // pred_check_branch
                %360 = sbr.rel target = $region66
              $region65: #{dense_block_forward.4} parent=39 // pred_region
                _
              $region66: #{dense_block_forward.4} parent=39 // pred_fallthru
                _
            $region40: #{dense_block_forward.4} parent=35 // pred_fallthru
              _
            // Predicated region
            $region41: #{dense_block_forward.4} parent=35 // pred_check
              _
            $region42: #{dense_block_forward.4} parent=35 // pred_check_branch
              %211 = sbr.rel target = $region44
            $region43: #{dense_block_forward.4} parent=35 // pred_region
              loop: start=0, step=1, limit=1
              $region45: #{dense_block_forward.4} parent=43 // loop_pre_header
                _
              $region46: #{dense_block_forward.4} parent=43 // loop_header
                %s214 = sphi 0, %s218
                %p215 = scmp.ge.s32.totalorder %s214, 1
                %s219 = sphi %s205, %s205
                %s220 = sphi %s200, %s200
              $region47: #{dense_block_forward.4} parent=43 // loop_header_branch
                %217 = sbr.rel (%p215) target = $region51
              $region48: #{dense_block_forward.4} parent=43 // loop_body
                %v221 = vld [vmem:[%s219] sm:$0xff]
                %222 = vst [vmem:[%s220] sm:$0xff] %v221
                %v223 = vld [vmem:[%s219 + $0x18] sm:$0xff]
                %224 = vst [vmem:[%s220 + $0x8] sm:$0xff] %v223
                %v225 = vld [vmem:[%s219 + $0x30] sm:$0xff]
                %226 = vst [vmem:[%s220 + $0x10] sm:$0xff] %v225
                %v227 = vld [vmem:[%s219 + $0x48] sm:$0xff]
                %228 = vst [vmem:[%s220 + $0x18] sm:$0xff] %v227
                %v229 = vld [vmem:[%s219 + $0x60] sm:$0xff]
                %230 = vst [vmem:[%s220 + $0x20] sm:$0xff] %v229
                %v231 = vld [vmem:[%s219 + $0x78] sm:$0xff]
                %232 = vst [vmem:[%s220 + $0x28] sm:$0xff] %v231
                %v233 = vld [vmem:[%s219 + $0x90] sm:$0xff]
                %234 = vst [vmem:[%s220 + $0x30] sm:$0xff] %v233
                %v235 = vld [vmem:[%s219 + $0xa8] sm:$0xff]
                %236 = vst [vmem:[%s220 + $0x38] sm:$0xff] %v235
                %v237 = vld [vmem:[%s219 + $0xc0] sm:$0xff]
                %238 = vst [vmem:[%s220 + $0x40] sm:$0xff] %v237
                %v239 = vld [vmem:[%s219 + $0xd8] sm:$0xff]
                %240 = vst [vmem:[%s220 + $0x48] sm:$0xff] %v239
                %v241 = vld [vmem:[%s219 + $0xf0] sm:$0xff]
                %242 = vst [vmem:[%s220 + $0x50] sm:$0xff] %v241
                %v243 = vld [vmem:[%s219 + $0x108] sm:$0xff]
                %244 = vst [vmem:[%s220 + $0x58] sm:$0xff] %v243
                %v245 = vld [vmem:[%s219 + $0x120] sm:$0xff]
                %246 = vst [vmem:[%s220 + $0x60] sm:$0xff] %v245
                %v247 = vld [vmem:[%s219 + $0x138] sm:$0xff]
                %248 = vst [vmem:[%s220 + $0x68] sm:$0xff] %v247
                %v249 = vld [vmem:[%s219 + $0x150] sm:$0xff]
                %250 = vst [vmem:[%s220 + $0x70] sm:$0xff] %v249
                %v251 = vld [vmem:[%s219 + $0x168] sm:$0xff]
                %252 = vst [vmem:[%s220 + $0x78] sm:$0xff] %v251
                %v253 = vld [vmem:[%s219 + $0x180] sm:$0xff]
                %254 = vst [vmem:[%s220 + $0x80] sm:$0xff] %v253
                %v255 = vld [vmem:[%s219 + $0x198] sm:$0xff]
                %256 = vst [vmem:[%s220 + $0x88] sm:$0xff] %v255
                %v257 = vld [vmem:[%s219 + $0x1b0] sm:$0xff]
                %258 = vst [vmem:[%s220 + $0x90] sm:$0xff] %v257
                %v259 = vld [vmem:[%s219 + $0x1c8] sm:$0xff]
                %260 = vst [vmem:[%s220 + $0x98] sm:$0xff] %v259
                %v261 = vld [vmem:[%s219 + $0x1e0] sm:$0xff]
                %262 = vst [vmem:[%s220 + $0xa0] sm:$0xff] %v261
                %v263 = vld [vmem:[%s219 + $0x1f8] sm:$0xff]
                %264 = vst [vmem:[%s220 + $0xa8] sm:$0xff] %v263
                %v265 = vld [vmem:[%s219 + $0x210] sm:$0xff]
                %266 = vst [vmem:[%s220 + $0xb0] sm:$0xff] %v265
                %v267 = vld [vmem:[%s219 + $0x228] sm:$0xff]
                %268 = vst [vmem:[%s220 + $0xb8] sm:$0xff] %v267
                %v269 = vld [vmem:[%s219 + $0x240] sm:$0xff]
                %270 = vst [vmem:[%s220 + $0xc0] sm:$0xff] %v269
                %v271 = vld [vmem:[%s219 + $0x258] sm:$0xff]
                %272 = vst [vmem:[%s220 + $0xc8] sm:$0xff] %v271
                %v273 = vld [vmem:[%s219 + $0x270] sm:$0xff]
                %274 = vst [vmem:[%s220 + $0xd0] sm:$0xff] %v273
                %v275 = vld [vmem:[%s219 + $0x288] sm:$0xff]
                %276 = vst [vmem:[%s220 + $0xd8] sm:$0xff] %v275
                %v277 = vld [vmem:[%s219 + $0x2a0] sm:$0xff]
                %278 = vst [vmem:[%s220 + $0xe0] sm:$0xff] %v277
                %v279 = vld [vmem:[%s219 + $0x2b8] sm:$0xff]
                %280 = vst [vmem:[%s220 + $0xe8] sm:$0xff] %v279
                %v281 = vld [vmem:[%s219 + $0x2d0] sm:$0xff]
                %282 = vst [vmem:[%s220 + $0xf0] sm:$0xff] %v281
                %v283 = vld [vmem:[%s219 + $0x2e8] sm:$0xff]
                %284 = vst [vmem:[%s220 + $0xf8] sm:$0xff] %v283
              $region49: #{dense_block_forward.4} parent=43 // loop_footer
                %s218 = sadd.s32 1, %s214
              $region50: #{dense_block_forward.4} parent=43 // loop_footer_branch
                %213 = sbr.rel target = $region46
              $region51: #{dense_block_forward.4} parent=43 // loop_exit
                _
            $region44: #{dense_block_forward.4} parent=35 // pred_fallthru
              _
          $region36: #{dense_block_forward.4} parent=31 // pred_fallthru
            _
          %361 = vnop
        $region32: #{dense_block_forward.4} parent=27 // pred_fallthru
          _
      $region28: #{dense_block_forward.4} parent=5 // pred_fallthru
        _
      %p362 = scmp.le.s32.totalorder 1, %s10
      %p363 = scmp.lt.s32.totalorder %s10, 3
      %p364 = pnand %p362, %p363
      %p365 = pneg %p364
      // Predicated region
      $region67: #{dense_block_forward.4} parent=5 // pred_check
        _
      $region68: #{dense_block_forward.4} parent=5 // pred_check_branch
        %367 = sbr.rel (%p364) target = $region70
      $region69: #{dense_block_forward.4} parent=5 // pred_region
        %s368 = ssub.s32 %s10, 1
        %s369 = sand.u32 %s37, 1
        %s370 = sand.u32 %s37, 1
        %s371 = smul.addr %s370, 256
        %s372 = scalar_lea.vmem [#allocation3], %s371
        // Predicated region
        $region71: #{dense_block_forward.4} parent=69 // pred_check
          %p373 = pneg %p50
        $region72: #{dense_block_forward.4} parent=69 // pred_check_branch
          %375 = sbr.rel (%p373) target = $region74
        $region73: #{dense_block_forward.4} parent=69 // pred_region
          _
        $region74: #{dense_block_forward.4} parent=69 // pred_fallthru
          _
        %s376 = sand.u32 %s37, 1
        %s377 = sand.u32 %s37, 1
        %s378 = smul.addr %s377, 256
        %s379 = scalar_lea.vmem [#allocation3], %s378
        %p380 = pneg %p50
        %p381 = pneg %p47
        %p382 = scmp.lt.s32.totalorder %s20, 0
        %s383 = scalar_select %p382, %s20, 0
        %s384 = scalar_lea.vmem %s1, %s383
        %p385 = pneg %p76
        %p386 = pneg %p73
        %p387 = scmp.lt.s32.totalorder %s20, 0
        %s388 = scalar_select %p387, %s20, 0
        %s389 = scalar_lea.vmem %s2, %s388
        %p390 = pneg %p102
        %p391 = pneg %p99
        %s392 = smul.u32 16, %s20
        %p393 = scmp.lt.s32.totalorder %s392, 15
        %s394 = scalar_select %p393, %s392, 15
        %s395 = smul.addr %s394, 8
        %s396 = scalar_lea.vmem %s3, %s395
        %p397 = pneg %p128
        %p398 = pneg %p125
        %p399 = pneg %p154
        %p400 = pneg %p151
        %s401 = smul.u32 32, %s19
        %p402 = scmp.lt.s32.totalorder %s401, 63
        %s403 = scalar_select %p402, %s401, 63
        %s404 = smul.addr %s403, 8
        %s405 = scalar_lea.vmem %s4, %s404
        %s406 = smul.u32 32, %s19
        %p407 = scmp.lt.s32.totalorder %s20, 0
        %s408 = scalar_select %p407, %s20, 0
        %s409 = scalar_lea.vmem %s1, %s408
        %p410 = scmp.lt.s32.totalorder %s20, 0
        %s411 = scalar_select %p410, %s20, 0
        %s412 = scalar_lea.vmem %s2, %s411
        %s413 = smul.u32 16, %s20
        %p414 = scmp.lt.s32.totalorder %s413, 15
        %s415 = scalar_select %p414, %s413, 15
        %s416 = smul.addr %s415, 8
        %s417 = scalar_lea.vmem %s3, %s416
        %s418 = smul.u32 16, %s20
        %s419 = smul.u32 32, %s19
        %p420 = scmp.lt.s32.totalorder %s419, 63
        %s421 = scalar_select %p420, %s419, 63
        %s422 = smul.addr %s421, 8
        %s423 = scalar_lea.vmem %s4, %s422
        %s424 = smul.u32 32, %s19
        %p425 = scmp.eq.s32.totalorder %s20, 0
        // Predicated region
        $region75: #{dense_block_forward.4} parent=69 // pred_check
          %p426 = pneg %p425
        $region76: #{dense_block_forward.4} parent=69 // pred_check_branch
          %428 = sbr.rel (%p426) target = $region78
        $region77: #{dense_block_forward.4} parent=69 // pred_region
          %429 = vst [vmem:[#allocation2] sm:$0xff] 0.0
          %430 = vst [vmem:[#allocation2 + $0x8] sm:$0xff] 0.0
          %431 = vst [vmem:[#allocation2 + $0x10] sm:$0xff] 0.0
          %432 = vst [vmem:[#allocation2 + $0x18] sm:$0xff] 0.0
          %433 = vst [vmem:[#allocation2 + $0x20] sm:$0xff] 0.0
          %434 = vst [vmem:[#allocation2 + $0x28] sm:$0xff] 0.0
          %435 = vst [vmem:[#allocation2 + $0x30] sm:$0xff] 0.0
          %436 = vst [vmem:[#allocation2 + $0x38] sm:$0xff] 0.0
          %437 = vst [vmem:[#allocation2 + $0x40] sm:$0xff] 0.0
          %438 = vst [vmem:[#allocation2 + $0x48] sm:$0xff] 0.0
          %439 = vst [vmem:[#allocation2 + $0x50] sm:$0xff] 0.0
          %440 = vst [vmem:[#allocation2 + $0x58] sm:$0xff] 0.0
          %441 = vst [vmem:[#allocation2 + $0x60] sm:$0xff] 0.0
          %442 = vst [vmem:[#allocation2 + $0x68] sm:$0xff] 0.0
          %443 = vst [vmem:[#allocation2 + $0x70] sm:$0xff] 0.0
          %444 = vst [vmem:[#allocation2 + $0x78] sm:$0xff] 0.0
          %445 = vst [vmem:[#allocation2 + $0x80] sm:$0xff] 0.0
          %446 = vst [vmem:[#allocation2 + $0x88] sm:$0xff] 0.0
          %447 = vst [vmem:[#allocation2 + $0x90] sm:$0xff] 0.0
          %448 = vst [vmem:[#allocation2 + $0x98] sm:$0xff] 0.0
          %449 = vst [vmem:[#allocation2 + $0xa0] sm:$0xff] 0.0
          %450 = vst [vmem:[#allocation2 + $0xa8] sm:$0xff] 0.0
          %451 = vst [vmem:[#allocation2 + $0xb0] sm:$0xff] 0.0
          %452 = vst [vmem:[#allocation2 + $0xb8] sm:$0xff] 0.0
          %453 = vst [vmem:[#allocation2 + $0xc0] sm:$0xff] 0.0
          %454 = vst [vmem:[#allocation2 + $0xc8] sm:$0xff] 0.0
          %455 = vst [vmem:[#allocation2 + $0xd0] sm:$0xff] 0.0
          %456 = vst [vmem:[#allocation2 + $0xd8] sm:$0xff] 0.0
          %457 = vst [vmem:[#allocation2 + $0xe0] sm:$0xff] 0.0
          %458 = vst [vmem:[#allocation2 + $0xe8] sm:$0xff] 0.0
          %459 = vst [vmem:[#allocation2 + $0xf0] sm:$0xff] 0.0
          %460 = vst [vmem:[#allocation2 + $0xf8] sm:$0xff] 0.0
        $region78: #{dense_block_forward.4} parent=69 // pred_fallthru
          _
        %v461 = vld [vmem:[%s372] sm:$0xff]
        %v462 = vld [vmem:[%s372 + $0x8] sm:$0xff]
        %v463 = vld [vmem:[%s372 + $0x10] sm:$0xff]
        %v464 = vld [vmem:[%s372 + $0x18] sm:$0xff]
        %v465 = vld [vmem:[%s372 + $0x20] sm:$0xff]
        %v466 = vld [vmem:[%s372 + $0x28] sm:$0xff]
        %v467 = vld [vmem:[%s372 + $0x30] sm:$0xff]
        %v468 = vld [vmem:[%s372 + $0x38] sm:$0xff]
        %v469 = vld [vmem:[%s372 + $0x40] sm:$0xff]
        %v470 = vld [vmem:[%s372 + $0x48] sm:$0xff]
        %v471 = vld [vmem:[%s372 + $0x50] sm:$0xff]
        %v472 = vld [vmem:[%s372 + $0x58] sm:$0xff]
        %v473 = vld [vmem:[%s372 + $0x60] sm:$0xff]
        %v474 = vld [vmem:[%s372 + $0x68] sm:$0xff]
        %v475 = vld [vmem:[%s372 + $0x70] sm:$0xff]
        %v476 = vld [vmem:[%s372 + $0x78] sm:$0xff]
        %v477 = vld [vmem:[%s372 + $0x80] sm:$0xff]
        %v478 = vld [vmem:[%s372 + $0x88] sm:$0xff]
        %v479 = vld [vmem:[%s372 + $0x90] sm:$0xff]
        %v480 = vld [vmem:[%s372 + $0x98] sm:$0xff]
        %v481 = vld [vmem:[%s372 + $0xa0] sm:$0xff]
        %v482 = vld [vmem:[%s372 + $0xa8] sm:$0xff]
        %v483 = vld [vmem:[%s372 + $0xb0] sm:$0xff]
        %v484 = vld [vmem:[%s372 + $0xb8] sm:$0xff]
        %v485 = vld [vmem:[%s372 + $0xc0] sm:$0xff]
        %v486 = vld [vmem:[%s372 + $0xc8] sm:$0xff]
        %v487 = vld [vmem:[%s372 + $0xd0] sm:$0xff]
        %v488 = vld [vmem:[%s372 + $0xd8] sm:$0xff]
        %v489 = vld [vmem:[%s372 + $0xe0] sm:$0xff]
        %v490 = vld [vmem:[%s372 + $0xe8] sm:$0xff]
        %v491 = vld [vmem:[%s372 + $0xf0] sm:$0xff]
        %v492 = vld [vmem:[%s372 + $0xf8] sm:$0xff]
        %v493 = vld [vmem:[%s409] sm:$0x1]
        %v495 = vlaneseq
        %v496 = vshrl.u32 %v495, 7
        %v497 = vsub.s32 0, %v496
        %v498 = vrot.slane %v493, %v497
        %v500 = vmul.f32 %v461, %v498
        %v501 = vmul.f32 %v462, %v498
        %v502 = vmul.f32 %v463, %v498
        %v503 = vmul.f32 %v464, %v498
        %v504 = vmul.f32 %v465, %v498
        %v505 = vmul.f32 %v466, %v498
        %v506 = vmul.f32 %v467, %v498
        %v507 = vmul.f32 %v468, %v498
        %v508 = vmul.f32 %v469, %v498
        %v509 = vmul.f32 %v470, %v498
        %v510 = vmul.f32 %v471, %v498
        %v511 = vmul.f32 %v472, %v498
        %v512 = vmul.f32 %v473, %v498
        %v513 = vmul.f32 %v474, %v498
        %v514 = vmul.f32 %v475, %v498
        %v515 = vmul.f32 %v476, %v498
        %v516 = vmul.f32 %v477, %v498
        %v517 = vmul.f32 %v478, %v498
        %v518 = vmul.f32 %v479, %v498
        %v519 = vmul.f32 %v480, %v498
        %v520 = vmul.f32 %v481, %v498
        %v521 = vmul.f32 %v482, %v498
        %v522 = vmul.f32 %v483, %v498
        %v523 = vmul.f32 %v484, %v498
        %v524 = vmul.f32 %v485, %v498
        %v525 = vmul.f32 %v486, %v498
        %v526 = vmul.f32 %v487, %v498
        %v527 = vmul.f32 %v488, %v498
        %v528 = vmul.f32 %v489, %v498
        %v529 = vmul.f32 %v490, %v498
        %v530 = vmul.f32 %v491, %v498
        %v531 = vmul.f32 %v492, %v498
        %v532 = vld [vmem:[%s412] sm:$0x1]
        %v534 = vlaneseq
        %v535 = vshrl.u32 %v534, 7
        %v536 = vsub.s32 0, %v535
        %v537 = vrot.slane %v532, %v536
        %v539 = vadd.f32 %v500, %v537
        %v540 = vadd.f32 %v501, %v537
        %v541 = vadd.f32 %v502, %v537
        %v542 = vadd.f32 %v503, %v537
        %v543 = vadd.f32 %v504, %v537
        %v544 = vadd.f32 %v505, %v537
        %v545 = vadd.f32 %v506, %v537
        %v546 = vadd.f32 %v507, %v537
        %v547 = vadd.f32 %v508, %v537
        %v548 = vadd.f32 %v509, %v537
        %v549 = vadd.f32 %v510, %v537
        %v550 = vadd.f32 %v511, %v537
        %v551 = vadd.f32 %v512, %v537
        %v552 = vadd.f32 %v513, %v537
        %v553 = vadd.f32 %v514, %v537
        %v554 = vadd.f32 %v515, %v537
        %v555 = vadd.f32 %v516, %v537
        %v556 = vadd.f32 %v517, %v537
        %v557 = vadd.f32 %v518, %v537
        %v558 = vadd.f32 %v519, %v537
        %v559 = vadd.f32 %v520, %v537
        %v560 = vadd.f32 %v521, %v537
        %v561 = vadd.f32 %v522, %v537
        %v562 = vadd.f32 %v523, %v537
        %v563 = vadd.f32 %v524, %v537
        %v564 = vadd.f32 %v525, %v537
        %v565 = vadd.f32 %v526, %v537
        %v566 = vadd.f32 %v527, %v537
        %v567 = vadd.f32 %v528, %v537
        %v568 = vadd.f32 %v529, %v537
        %v569 = vadd.f32 %v530, %v537
        %v570 = vadd.f32 %v531, %v537
        %v571 = vmax.f32 %v539, 0.0
        %v572 = vmax.f32 %v540, 0.0
        %v573 = vmax.f32 %v541, 0.0
        %v574 = vmax.f32 %v542, 0.0
        %v575 = vmax.f32 %v543, 0.0
        %v576 = vmax.f32 %v544, 0.0
        %v577 = vmax.f32 %v545, 0.0
        %v578 = vmax.f32 %v546, 0.0
        %v579 = vmax.f32 %v547, 0.0
        %v580 = vmax.f32 %v548, 0.0
        %v581 = vmax.f32 %v549, 0.0
        %v582 = vmax.f32 %v550, 0.0
        %v583 = vmax.f32 %v551, 0.0
        %v584 = vmax.f32 %v552, 0.0
        %v585 = vmax.f32 %v553, 0.0
        %v586 = vmax.f32 %v554, 0.0
        %v587 = vmax.f32 %v555, 0.0
        %v588 = vmax.f32 %v556, 0.0
        %v589 = vmax.f32 %v557, 0.0
        %v590 = vmax.f32 %v558, 0.0
        %v591 = vmax.f32 %v559, 0.0
        %v592 = vmax.f32 %v560, 0.0
        %v593 = vmax.f32 %v561, 0.0
        %v594 = vmax.f32 %v562, 0.0
        %v595 = vmax.f32 %v563, 0.0
        %v596 = vmax.f32 %v564, 0.0
        %v597 = vmax.f32 %v565, 0.0
        %v598 = vmax.f32 %v566, 0.0
        %v599 = vmax.f32 %v567, 0.0
        %v600 = vmax.f32 %v568, 0.0
        %v601 = vmax.f32 %v569, 0.0
        %v602 = vmax.f32 %v570, 0.0
        %v603 = vld [vmem:[#allocation2] sm:$0xff]
        %v604 = vld [vmem:[#allocation2 + $0x8] sm:$0xff]
        %v605 = vld [vmem:[#allocation2 + $0x10] sm:$0xff]
        %v606 = vld [vmem:[#allocation2 + $0x18] sm:$0xff]
        %v607 = vld [vmem:[#allocation2 + $0x20] sm:$0xff]
        %v608 = vld [vmem:[#allocation2 + $0x28] sm:$0xff]
        %v609 = vld [vmem:[#allocation2 + $0x30] sm:$0xff]
        %v610 = vld [vmem:[#allocation2 + $0x38] sm:$0xff]
        %v611 = vld [vmem:[#allocation2 + $0x40] sm:$0xff]
        %v612 = vld [vmem:[#allocation2 + $0x48] sm:$0xff]
        %v613 = vld [vmem:[#allocation2 + $0x50] sm:$0xff]
        %v614 = vld [vmem:[#allocation2 + $0x58] sm:$0xff]
        %v615 = vld [vmem:[#allocation2 + $0x60] sm:$0xff]
        %v616 = vld [vmem:[#allocation2 + $0x68] sm:$0xff]
        %v617 = vld [vmem:[#allocation2 + $0x70] sm:$0xff]
        %v618 = vld [vmem:[#allocation2 + $0x78] sm:$0xff]
        %v619 = vld [vmem:[#allocation2 + $0x80] sm:$0xff]
        %v620 = vld [vmem:[#allocation2 + $0x88] sm:$0xff]
        %v621 = vld [vmem:[#allocation2 + $0x90] sm:$0xff]
        %v622 = vld [vmem:[#allocation2 + $0x98] sm:$0xff]
        %v623 = vld [vmem:[#allocation2 + $0xa0] sm:$0xff]
        %v624 = vld [vmem:[#allocation2 + $0xa8] sm:$0xff]
        %v625 = vld [vmem:[#allocation2 + $0xb0] sm:$0xff]
        %v626 = vld [vmem:[#allocation2 + $0xb8] sm:$0xff]
        %v627 = vld [vmem:[#allocation2 + $0xc0] sm:$0xff]
        %v628 = vld [vmem:[#allocation2 + $0xc8] sm:$0xff]
        %v629 = vld [vmem:[#allocation2 + $0xd0] sm:$0xff]
        %v630 = vld [vmem:[#allocation2 + $0xd8] sm:$0xff]
        %v631 = vld [vmem:[#allocation2 + $0xe0] sm:$0xff]
        %v632 = vld [vmem:[#allocation2 + $0xe8] sm:$0xff]
        %v633 = vld [vmem:[#allocation2 + $0xf0] sm:$0xff]
        %v634 = vld [vmem:[#allocation2 + $0xf8] sm:$0xff]
        %v635 = vld [vmem:[%s417] sm:$0xff]
        %v636 = vld [vmem:[%s417 + $0x8] sm:$0xff]
        %v637 = vld [vmem:[%s417 + $0x10] sm:$0xff]
        %v638 = vld [vmem:[%s417 + $0x18] sm:$0xff]
        %v639 = vld [vmem:[%s417 + $0x20] sm:$0xff]
        %v640 = vld [vmem:[%s417 + $0x28] sm:$0xff]
        %v641 = vld [vmem:[%s417 + $0x30] sm:$0xff]
        %v642 = vld [vmem:[%s417 + $0x38] sm:$0xff]
        %v643 = vld [vmem:[%s417 + $0x40] sm:$0xff]
        %v644 = vld [vmem:[%s417 + $0x48] sm:$0xff]
        %v645 = vld [vmem:[%s417 + $0x50] sm:$0xff]
        %v646 = vld [vmem:[%s417 + $0x58] sm:$0xff]
        %v647 = vld [vmem:[%s417 + $0x60] sm:$0xff]
        %v648 = vld [vmem:[%s417 + $0x68] sm:$0xff]
        %v649 = vld [vmem:[%s417 + $0x70] sm:$0xff]
        %v650 = vld [vmem:[%s417 + $0x78] sm:$0xff]
        %651 = vmatprep.subr.mxu0 0.0
        %652 = vmatpush1.msra.mxu0 %v635
        %653 = vmatprep.subr.mxu0 0.0
        %654 = vmatpush1.msra.mxu0 %v636
        %655 = vmatprep.subr.mxu0 0.0
        %656 = vmatpush1.msra.mxu0 %v637
        %657 = vmatprep.subr.mxu0 0.0
        %658 = vmatpush1.msra.mxu0 %v638
        %659 = vmatprep.subr.mxu0 0.0
        %660 = vmatpush1.msra.mxu0 %v639
        %661 = vmatprep.subr.mxu0 0.0
        %662 = vmatpush1.msra.mxu0 %v640
        %663 = vmatprep.subr.mxu0 0.0
        %664 = vmatpush1.msra.mxu0 %v641
        %665 = vmatprep.subr.mxu0 0.0
        %666 = vmatpush1.msra.mxu0 %v642
        %667 = vmatprep.subr.mxu0 0.0
        %668 = vmatpush1.msra.mxu0 %v643
        %669 = vmatprep.subr.mxu0 0.0
        %670 = vmatpush1.msra.mxu0 %v644
        %671 = vmatprep.subr.mxu0 0.0
        %672 = vmatpush1.msra.mxu0 %v645
        %673 = vmatprep.subr.mxu0 0.0
        %674 = vmatpush1.msra.mxu0 %v646
        %675 = vmatprep.subr.mxu0 0.0
        %676 = vmatpush1.msra.mxu0 %v647
        %677 = vmatprep.subr.mxu0 0.0
        %678 = vmatpush1.msra.mxu0 %v648
        %679 = vmatprep.subr.mxu0 0.0
        %680 = vmatpush1.msra.mxu0 %v649
        %681 = vmatprep.subr.mxu0 0.0
        %682 = vmatpush1.msra.mxu0 %v650
        %683 = vmatprep.subr.mxu0 0.0
        %684 = vmatpush1.msra.mxu0 0.0
        %685 = vmatprep.subr.mxu0 0.0
        %686 = vmatpush1.msra.mxu0 0.0
        %687 = vmatprep.subr.mxu0 0.0
        %688 = vmatpush1.msra.mxu0 0.0
        %689 = vmatprep.subr.mxu0 0.0
        %690 = vmatpush1.msra.mxu0 0.0
        %691 = vmatprep.subr.mxu0 0.0
        %692 = vmatpush1.msra.mxu0 0.0
        %693 = vmatprep.subr.mxu0 0.0
        %694 = vmatpush1.msra.mxu0 0.0
        %695 = vmatprep.subr.mxu0 0.0
        %696 = vmatpush1.msra.mxu0 0.0
        %697 = vmatprep.subr.mxu0 0.0
        %698 = vmatpush1.msra.mxu0 0.0
        %699 = vmatprep.subr.mxu0 0.0
        %700 = vmatpush1.msra.mxu0 0.0
        %701 = vmatprep.subr.mxu0 0.0
        %702 = vmatpush1.msra.mxu0 0.0
        %703 = vmatprep.subr.mxu0 0.0
        %704 = vmatpush1.msra.mxu0 0.0
        %705 = vmatprep.subr.mxu0 0.0
        %706 = vmatpush1.msra.mxu0 0.0
        %707 = vmatprep.subr.mxu0 0.0
        %708 = vmatpush1.msra.mxu0 0.0
        %709 = vmatprep.subr.mxu0 0.0
        %710 = vmatpush1.msra.mxu0 0.0
        %711 = vmatprep.subr.mxu0 0.0
        %712 = vmatpush1.msra.mxu0 0.0
        %713 = vmatprep.subr.mxu0 0.0
        %714 = vmatpush1.msra.mxu0 0.0
        %715 = vmatprep.mubr.f32.mxu0 0.0
        %716 = vmatmul.mubr.f32.gmra.mrb[0].mxu0 %v571
        %v717 = vpop.f32.mrb[0].mxu0
        %v718 = vadd.f32 0.0, %v717
        %v719 = vpop.f32.mrb[0].mxu0
        %720 = vmatprep.mubr.f32.mxu0 0.0
        %721 = vmatmul.mubr.f32.gmra.mrb[0].mxu0 %v572
        %v722 = vpop.f32.mrb[0].mxu0
        %v723 = vadd.f32 0.0, %v722
        %v724 = vpop.f32.mrb[0].mxu0
        %725 = vmatprep.mubr.f32.mxu0 0.0
        %726 = vmatmul.mubr.f32.gmra.mrb[0].mxu0 %v573
        %v727 = vpop.f32.mrb[0].mxu0
        %v728 = vadd.f32 0.0, %v727
        %v729 = vpop.f32.mrb[0].mxu0
        %730 = vmatprep.mubr.f32.mxu0 0.0
        %731 = vmatmul.mubr.f32.gmra.mrb[0].mxu0 %v574
        %v732 = vpop.f32.mrb[0].mxu0
        %v733 = vadd.f32 0.0, %v732
        %v734 = vpop.f32.mrb[0].mxu0
        %735 = vmatprep.mubr.f32.mxu0 0.0
        %736 = vmatmul.mubr.f32.gmra.mrb[0].mxu0 %v575
        %v737 = vpop.f32.mrb[0].mxu0
        %v738 = vadd.f32 0.0, %v737
        %v739 = vpop.f32.mrb[0].mxu0
        %740 = vmatprep.mubr.f32.mxu0 0.0
        %741 = vmatmul.mubr.f32.gmra.mrb[0].mxu0 %v576
        %v742 = vpop.f32.mrb[0].mxu0
        %v743 = vadd.f32 0.0, %v742
        %v744 = vpop.f32.mrb[0].mxu0
        %745 = vmatprep.mubr.f32.mxu0 0.0
        %746 = vmatmul.mubr.f32.gmra.mrb[0].mxu0 %v577
        %v747 = vpop.f32.mrb[0].mxu0
        %v748 = vadd.f32 0.0, %v747
        %v749 = vpop.f32.mrb[0].mxu0
        %750 = vmatprep.mubr.f32.mxu0 0.0
        %751 = vmatmul.mubr.f32.gmra.mrb[0].mxu0 %v578
        %v752 = vpop.f32.mrb[0].mxu0
        %v753 = vadd.f32 0.0, %v752
        %v754 = vpop.f32.mrb[0].mxu0
        %755 = vmatprep.mubr.f32.mxu0 0.0
        %756 = vmatmul.mubr.f32.gmra.mrb[0].mxu0 %v579
        %v757 = vpop.f32.mrb[0].mxu0
        %v758 = vadd.f32 0.0, %v757
        %v759 = vpop.f32.mrb[0].mxu0
        %760 = vmatprep.mubr.f32.mxu0 0.0
        %761 = vmatmul.mubr.f32.gmra.mrb[0].mxu0 %v580
        %v762 = vpop.f32.mrb[0].mxu0
        %v763 = vadd.f32 0.0, %v762
        %v764 = vpop.f32.mrb[0].mxu0
        %765 = vmatprep.mubr.f32.mxu0 0.0
        %766 = vmatmul.mubr.f32.gmra.mrb[0].mxu0 %v581
        %v767 = vpop.f32.mrb[0].mxu0
        %v768 = vadd.f32 0.0, %v767
        %v769 = vpop.f32.mrb[0].mxu0
        %770 = vmatprep.mubr.f32.mxu0 0.0
        %771 = vmatmul.mubr.f32.gmra.mrb[0].mxu0 %v582
        %v772 = vpop.f32.mrb[0].mxu0
        %v773 = vadd.f32 0.0, %v772
        %v774 = vpop.f32.mrb[0].mxu0
        %775 = vmatprep.mubr.f32.mxu0 0.0
        %776 = vmatmul.mubr.f32.gmra.mrb[0].mxu0 %v583
        %v777 = vpop.f32.mrb[0].mxu0
        %v778 = vadd.f32 0.0, %v777
        %v779 = vpop.f32.mrb[0].mxu0
        %780 = vmatprep.mubr.f32.mxu0 0.0
        %781 = vmatmul.mubr.f32.gmra.mrb[0].mxu0 %v584
        %v782 = vpop.f32.mrb[0].mxu0
        %v783 = vadd.f32 0.0, %v782
        %v784 = vpop.f32.mrb[0].mxu0
        %785 = vmatprep.mubr.f32.mxu0 0.0
        %786 = vmatmul.mubr.f32.gmra.mrb[0].mxu0 %v585
        %v787 = vpop.f32.mrb[0].mxu0
        %v788 = vadd.f32 0.0, %v787
        %v789 = vpop.f32.mrb[0].mxu0
        %790 = vmatprep.mubr.f32.mxu0 0.0
        %791 = vmatmul.mubr.f32.gmra.mrb[0].mxu0 %v586
        %v792 = vpop.f32.mrb[0].mxu0
        %v793 = vadd.f32 0.0, %v792
        %v794 = vpop.f32.mrb[0].mxu0
        %795 = vmatprep.mubr.f32.mxu0 0.0
        %796 = vmatmul.mubr.f32.gmra.mrb[0].mxu0 %v587
        %v797 = vpop.f32.mrb[0].mxu0
        %v798 = vadd.f32 0.0, %v797
        %v799 = vpop.f32.mrb[0].mxu0
        %800 = vmatprep.mubr.f32.mxu0 0.0
        %801 = vmatmul.mubr.f32.gmra.mrb[0].mxu0 %v588
        %v802 = vpop.f32.mrb[0].mxu0
        %v803 = vadd.f32 0.0, %v802
        %v804 = vpop.f32.mrb[0].mxu0
        %805 = vmatprep.mubr.f32.mxu0 0.0
        %806 = vmatmul.mubr.f32.gmra.mrb[0].mxu0 %v589
        %v807 = vpop.f32.mrb[0].mxu0
        %v808 = vadd.f32 0.0, %v807
        %v809 = vpop.f32.mrb[0].mxu0
        %810 = vmatprep.mubr.f32.mxu0 0.0
        %811 = vmatmul.mubr.f32.gmra.mrb[0].mxu0 %v590
        %v812 = vpop.f32.mrb[0].mxu0
        %v813 = vadd.f32 0.0, %v812
        %v814 = vpop.f32.mrb[0].mxu0
        %815 = vmatprep.mubr.f32.mxu0 0.0
        %816 = vmatmul.mubr.f32.gmra.mrb[0].mxu0 %v591
        %v817 = vpop.f32.mrb[0].mxu0
        %v818 = vadd.f32 0.0, %v817
        %v819 = vpop.f32.mrb[0].mxu0
        %820 = vmatprep.mubr.f32.mxu0 0.0
        %821 = vmatmul.mubr.f32.gmra.mrb[0].mxu0 %v592
        %v822 = vpop.f32.mrb[0].mxu0
        %v823 = vadd.f32 0.0, %v822
        %v824 = vpop.f32.mrb[0].mxu0
        %825 = vmatprep.mubr.f32.mxu0 0.0
        %826 = vmatmul.mubr.f32.gmra.mrb[0].mxu0 %v593
        %v827 = vpop.f32.mrb[0].mxu0
        %v828 = vadd.f32 0.0, %v827
        %v829 = vpop.f32.mrb[0].mxu0
        %830 = vmatprep.mubr.f32.mxu0 0.0
        %831 = vmatmul.mubr.f32.gmra.mrb[0].mxu0 %v594
        %v832 = vpop.f32.mrb[0].mxu0
        %v833 = vadd.f32 0.0, %v832
        %v834 = vpop.f32.mrb[0].mxu0
        %835 = vmatprep.mubr.f32.mxu0 0.0
        %836 = vmatmul.mubr.f32.gmra.mrb[0].mxu0 %v595
        %v837 = vpop.f32.mrb[0].mxu0
        %v838 = vadd.f32 0.0, %v837
        %v839 = vpop.f32.mrb[0].mxu0
        %840 = vmatprep.mubr.f32.mxu0 0.0
        %841 = vmatmul.mubr.f32.gmra.mrb[0].mxu0 %v596
        %v842 = vpop.f32.mrb[0].mxu0
        %v843 = vadd.f32 0.0, %v842
        %v844 = vpop.f32.mrb[0].mxu0
        %845 = vmatprep.mubr.f32.mxu0 0.0
        %846 = vmatmul.mubr.f32.gmra.mrb[0].mxu0 %v597
        %v847 = vpop.f32.mrb[0].mxu0
        %v848 = vadd.f32 0.0, %v847
        %v849 = vpop.f32.mrb[0].mxu0
        %850 = vmatprep.mubr.f32.mxu0 0.0
        %851 = vmatmul.mubr.f32.gmra.mrb[0].mxu0 %v598
        %v852 = vpop.f32.mrb[0].mxu0
        %v853 = vadd.f32 0.0, %v852
        %v854 = vpop.f32.mrb[0].mxu0
        %855 = vmatprep.mubr.f32.mxu0 0.0
        %856 = vmatmul.mubr.f32.gmra.mrb[0].mxu0 %v599
        %v857 = vpop.f32.mrb[0].mxu0
        %v858 = vadd.f32 0.0, %v857
        %v859 = vpop.f32.mrb[0].mxu0
        %860 = vmatprep.mubr.f32.mxu0 0.0
        %861 = vmatmul.mubr.f32.gmra.mrb[0].mxu0 %v600
        %v862 = vpop.f32.mrb[0].mxu0
        %v863 = vadd.f32 0.0, %v862
        %v864 = vpop.f32.mrb[0].mxu0
        %865 = vmatprep.mubr.f32.mxu0 0.0
        %866 = vmatmul.mubr.f32.gmra.mrb[0].mxu0 %v601
        %v867 = vpop.f32.mrb[0].mxu0
        %v868 = vadd.f32 0.0, %v867
        %v869 = vpop.f32.mrb[0].mxu0
        %870 = vmatprep.mubr.f32.mxu0 0.0
        %871 = vmatmul.mubr.f32.gmra.mrb[0].mxu0 %v602
        %v872 = vpop.f32.mrb[0].mxu0
        %v873 = vadd.f32 0.0, %v872
        %v874 = vpop.f32.mrb[0].mxu0
        %875 = vdwg.mxu0
        %v876 = vadd.f32 %v603, %v718
        %v877 = vadd.f32 %v604, %v723
        %v878 = vadd.f32 %v605, %v728
        %v879 = vadd.f32 %v606, %v733
        %v880 = vadd.f32 %v607, %v738
        %v881 = vadd.f32 %v608, %v743
        %v882 = vadd.f32 %v609, %v748
        %v883 = vadd.f32 %v610, %v753
        %v884 = vadd.f32 %v611, %v758
        %v885 = vadd.f32 %v612, %v763
        %v886 = vadd.f32 %v613, %v768
        %v887 = vadd.f32 %v614, %v773
        %v888 = vadd.f32 %v615, %v778
        %v889 = vadd.f32 %v616, %v783
        %v890 = vadd.f32 %v617, %v788
        %v891 = vadd.f32 %v618, %v793
        %v892 = vadd.f32 %v619, %v798
        %v893 = vadd.f32 %v620, %v803
        %v894 = vadd.f32 %v621, %v808
        %v895 = vadd.f32 %v622, %v813
        %v896 = vadd.f32 %v623, %v818
        %v897 = vadd.f32 %v624, %v823
        %v898 = vadd.f32 %v625, %v828
        %v899 = vadd.f32 %v626, %v833
        %v900 = vadd.f32 %v627, %v838
        %v901 = vadd.f32 %v628, %v843
        %v902 = vadd.f32 %v629, %v848
        %v903 = vadd.f32 %v630, %v853
        %v904 = vadd.f32 %v631, %v858
        %v905 = vadd.f32 %v632, %v863
        %v906 = vadd.f32 %v633, %v868
        %v907 = vadd.f32 %v634, %v873
        %908 = vst [vmem:[#allocation2] sm:$0xff] %v876
        %909 = vst [vmem:[#allocation2 + $0x8] sm:$0xff] %v877
        %910 = vst [vmem:[#allocation2 + $0x10] sm:$0xff] %v878
        %911 = vst [vmem:[#allocation2 + $0x18] sm:$0xff] %v879
        %912 = vst [vmem:[#allocation2 + $0x20] sm:$0xff] %v880
        %913 = vst [vmem:[#allocation2 + $0x28] sm:$0xff] %v881
        %914 = vst [vmem:[#allocation2 + $0x30] sm:$0xff] %v882
        %915 = vst [vmem:[#allocation2 + $0x38] sm:$0xff] %v883
        %916 = vst [vmem:[#allocation2 + $0x40] sm:$0xff] %v884
        %917 = vst [vmem:[#allocation2 + $0x48] sm:$0xff] %v885
        %918 = vst [vmem:[#allocation2 + $0x50] sm:$0xff] %v886
        %919 = vst [vmem:[#allocation2 + $0x58] sm:$0xff] %v887
        %920 = vst [vmem:[#allocation2 + $0x60] sm:$0xff] %v888
        %921 = vst [vmem:[#allocation2 + $0x68] sm:$0xff] %v889
        %922 = vst [vmem:[#allocation2 + $0x70] sm:$0xff] %v890
        %923 = vst [vmem:[#allocation2 + $0x78] sm:$0xff] %v891
        %924 = vst [vmem:[#allocation2 + $0x80] sm:$0xff] %v892
        %925 = vst [vmem:[#allocation2 + $0x88] sm:$0xff] %v893
        %926 = vst [vmem:[#allocation2 + $0x90] sm:$0xff] %v894
        %927 = vst [vmem:[#allocation2 + $0x98] sm:$0xff] %v895
        %928 = vst [vmem:[#allocation2 + $0xa0] sm:$0xff] %v896
        %929 = vst [vmem:[#allocation2 + $0xa8] sm:$0xff] %v897
        %930 = vst [vmem:[#allocation2 + $0xb0] sm:$0xff] %v898
        %931 = vst [vmem:[#allocation2 + $0xb8] sm:$0xff] %v899
        %932 = vst [vmem:[#allocation2 + $0xc0] sm:$0xff] %v900
        %933 = vst [vmem:[#allocation2 + $0xc8] sm:$0xff] %v901
        %934 = vst [vmem:[#allocation2 + $0xd0] sm:$0xff] %v902
        %935 = vst [vmem:[#allocation2 + $0xd8] sm:$0xff] %v903
        %936 = vst [vmem:[#allocation2 + $0xe0] sm:$0xff] %v904
        %937 = vst [vmem:[#allocation2 + $0xe8] sm:$0xff] %v905
        %938 = vst [vmem:[#allocation2 + $0xf0] sm:$0xff] %v906
        %939 = vst [vmem:[#allocation2 + $0xf8] sm:$0xff] %v907
        // Predicated region
        $region79: #{dense_block_forward.4} parent=69 // pred_check
          %p940 = pneg %p425
        $region80: #{dense_block_forward.4} parent=69 // pred_check_branch
          %942 = sbr.rel (%p940) target = $region82
        $region81: #{dense_block_forward.4} parent=69 // pred_region
          %v943 = vld [vmem:[#allocation2] sm:$0xff]
          %v944 = vld [vmem:[#allocation2 + $0x8] sm:$0xff]
          %v945 = vld [vmem:[#allocation2 + $0x10] sm:$0xff]
          %v946 = vld [vmem:[#allocation2 + $0x18] sm:$0xff]
          %v947 = vld [vmem:[#allocation2 + $0x20] sm:$0xff]
          %v948 = vld [vmem:[#allocation2 + $0x28] sm:$0xff]
          %v949 = vld [vmem:[#allocation2 + $0x30] sm:$0xff]
          %v950 = vld [vmem:[#allocation2 + $0x38] sm:$0xff]
          %v951 = vld [vmem:[#allocation2 + $0x40] sm:$0xff]
          %v952 = vld [vmem:[#allocation2 + $0x48] sm:$0xff]
          %v953 = vld [vmem:[#allocation2 + $0x50] sm:$0xff]
          %v954 = vld [vmem:[#allocation2 + $0x58] sm:$0xff]
          %v955 = vld [vmem:[#allocation2 + $0x60] sm:$0xff]
          %v956 = vld [vmem:[#allocation2 + $0x68] sm:$0xff]
          %v957 = vld [vmem:[#allocation2 + $0x70] sm:$0xff]
          %v958 = vld [vmem:[#allocation2 + $0x78] sm:$0xff]
          %v959 = vld [vmem:[#allocation2 + $0x80] sm:$0xff]
          %v960 = vld [vmem:[#allocation2 + $0x88] sm:$0xff]
          %v961 = vld [vmem:[#allocation2 + $0x90] sm:$0xff]
          %v962 = vld [vmem:[#allocation2 + $0x98] sm:$0xff]
          %v963 = vld [vmem:[#allocation2 + $0xa0] sm:$0xff]
          %v964 = vld [vmem:[#allocation2 + $0xa8] sm:$0xff]
          %v965 = vld [vmem:[#allocation2 + $0xb0] sm:$0xff]
          %v966 = vld [vmem:[#allocation2 + $0xb8] sm:$0xff]
          %v967 = vld [vmem:[#allocation2 + $0xc0] sm:$0xff]
          %v968 = vld [vmem:[#allocation2 + $0xc8] sm:$0xff]
          %v969 = vld [vmem:[#allocation2 + $0xd0] sm:$0xff]
          %v970 = vld [vmem:[#allocation2 + $0xd8] sm:$0xff]
          %v971 = vld [vmem:[#allocation2 + $0xe0] sm:$0xff]
          %v972 = vld [vmem:[#allocation2 + $0xe8] sm:$0xff]
          %v973 = vld [vmem:[#allocation2 + $0xf0] sm:$0xff]
          %v974 = vld [vmem:[#allocation2 + $0xf8] sm:$0xff]
          %975 = vst [vmem:[%s423] sm:$0xff] %v943
          %976 = vst [vmem:[%s423 + $0x8] sm:$0xff] %v944
          %977 = vst [vmem:[%s423 + $0x10] sm:$0xff] %v945
          %978 = vst [vmem:[%s423 + $0x18] sm:$0xff] %v946
          %979 = vst [vmem:[%s423 + $0x20] sm:$0xff] %v947
          %980 = vst [vmem:[%s423 + $0x28] sm:$0xff] %v948
          %981 = vst [vmem:[%s423 + $0x30] sm:$0xff] %v949
          %982 = vst [vmem:[%s423 + $0x38] sm:$0xff] %v950
          %983 = vst [vmem:[%s423 + $0x40] sm:$0xff] %v951
          %984 = vst [vmem:[%s423 + $0x48] sm:$0xff] %v952
          %985 = vst [vmem:[%s423 + $0x50] sm:$0xff] %v953
          %986 = vst [vmem:[%s423 + $0x58] sm:$0xff] %v954
          %987 = vst [vmem:[%s423 + $0x60] sm:$0xff] %v955
          %988 = vst [vmem:[%s423 + $0x68] sm:$0xff] %v956
          %989 = vst [vmem:[%s423 + $0x70] sm:$0xff] %v957
          %990 = vst [vmem:[%s423 + $0x78] sm:$0xff] %v958
          %991 = vst [vmem:[%s423 + $0x80] sm:$0xff] %v959
          %992 = vst [vmem:[%s423 + $0x88] sm:$0xff] %v960
          %993 = vst [vmem:[%s423 + $0x90] sm:$0xff] %v961
          %994 = vst [vmem:[%s423 + $0x98] sm:$0xff] %v962
          %995 = vst [vmem:[%s423 + $0xa0] sm:$0xff] %v963
          %996 = vst [vmem:[%s423 + $0xa8] sm:$0xff] %v964
          %997 = vst [vmem:[%s423 + $0xb0] sm:$0xff] %v965
          %998 = vst [vmem:[%s423 + $0xb8] sm:$0xff] %v966
          %999 = vst [vmem:[%s423 + $0xc0] sm:$0xff] %v967
          %1000 = vst [vmem:[%s423 + $0xc8] sm:$0xff] %v968
          %1001 = vst [vmem:[%s423 + $0xd0] sm:$0xff] %v969
          %1002 = vst [vmem:[%s423 + $0xd8] sm:$0xff] %v970
          %1003 = vst [vmem:[%s423 + $0xe0] sm:$0xff] %v971
          %1004 = vst [vmem:[%s423 + $0xe8] sm:$0xff] %v972
          %1005 = vst [vmem:[%s423 + $0xf0] sm:$0xff] %v973
          %1006 = vst [vmem:[%s423 + $0xf8] sm:$0xff] %v974
        $region82: #{dense_block_forward.4} parent=69 // pred_fallthru
          _
        %s1007 = smul.u32 32, %s19
        %p1008 = scmp.lt.s32.totalorder %s1007, 63
        %s1009 = scalar_select %p1008, %s1007, 63
        %s1010 = smul.addr %s1009, 8
        %s1011 = scalar_lea.vmem %s4, %s1010
        // Predicated region
        $region83: #{dense_block_forward.4} parent=69 // pred_check
          %p1012 = pneg %p151
        $region84: #{dense_block_forward.4} parent=69 // pred_check_branch
          %1014 = sbr.rel (%p1012) target = $region86
        $region85: #{dense_block_forward.4} parent=69 // pred_region
          %s1015 = smul.u32 32, %s19
        $region86: #{dense_block_forward.4} parent=69 // pred_fallthru
          _
      $region70: #{dense_block_forward.4} parent=5 // pred_fallthru
        _
      %p1016 = scmp.le.s32.totalorder 2, %s10
      // Predicated region
      $region87: #{dense_block_forward.4} parent=5 // pred_check
        %p1017 = pneg %p1016
      $region88: #{dense_block_forward.4} parent=5 // pred_check_branch
        %1019 = sbr.rel (%p1017) target = $region90
      $region89: #{dense_block_forward.4} parent=5 // pred_region
        %s1020 = ssub.s32 %s10, 2
        // Predicated region
        $region91: #{dense_block_forward.4} parent=89 // pred_check
          %p1021 = pneg %p157
        $region92: #{dense_block_forward.4} parent=89 // pred_check_branch
          %1023 = sbr.rel (%p1021) target = $region94
        $region93: #{dense_block_forward.4} parent=89 // pred_region
          %s1024 = smul.u32 32, %s21
          %p1025 = scmp.lt.s32.totalorder %s1024, 63
          %s1026 = scalar_select %p1025, %s1024, 63
          %s1027 = smul.addr %s1026, 8
          %s1028 = scalar_lea.vmem %s4, %s1027
        $region94: #{dense_block_forward.4} parent=89 // pred_fallthru
          _
      $region90: #{dense_block_forward.4} parent=5 // pred_fallthru
        _
    $region6: #{dense_block_forward.4} parent=1 // loop_footer
      %s14 = sadd.s32 1, %s10
    $region7: #{dense_block_forward.4} parent=1 // loop_footer_branch
      %9 = sbr.rel target = $region3
    $region8: #{dense_block_forward.4} parent=1 // loop_exit
      _

// kernel: dense_block_forward.6
$region0: #{dense_block_forward.6}
  #allocation0 [shape = 'u32[]', space=smem, size = 0x4, offset = 0x4, fixed_abs, tag = 'smem constant byte address 0x4 - core index']
  #allocation1 [shape = 'u32[144,128]{1,0:T(1,128)}', space=vmem, size = 0x12000, scoped, tag = 'internal scratch']
  #allocation2 [shape = 'f32[256,128]{1,0:T(8,128)}', space=vmem, size = 0x20000, scoped, tag = 'scratch operand']
  %s0 = inlined_call_operand.vmem [shape: f32[512,384], index: 0, kind: input, shape index: {}]
  %s1 = inlined_call_operand.vmem [shape: f32[1,256], index: 1, kind: input, shape index: {}]
  %s2 = inlined_call_operand.vmem [shape: f32[1,256], index: 2, kind: input, shape index: {}]
  %s3 = inlined_call_operand.vmem [shape: f32[256,128], index: 3, kind: input, shape index: {}]
  %s4 = inlined_call_operand.vmem [shape: f32[512,128], index: 4, kind: output, shape index: {}]
  %s5 = sld [smem:[#allocation0]]
  $region95: #{dense_block_forward.6} parent=0
    _
  %s7 = ssub.s32 1, %s5
  %s8 = scalar_select 0, %s7, %s5
  $region1: #{dense_block_forward.6} parent=0
    #allocation3 [shape = 'u8[262144]{0}', space=vmem, size = 0x40000, scoped, tag = 'input window, operand 0']
    loop: start=0, step=1, limit=6
    $region2: #{dense_block_forward.6} parent=1 // loop_pre_header
      _
    $region3: #{dense_block_forward.6} parent=1 // loop_header
      %s10 = sphi 0, %s14
      %p11 = scmp.ge.s32.totalorder %s10, 6
      %s17 = sphi 0, %s29
      %s18 = sphi 0, %s25
      %s19 = sphi 0, %s17
      %s20 = sphi 0, %s18
      %s21 = sphi 0, %s19
      %s22 = sphi 0, %s20
      %s34 = sphi 0, %s36
      %s37 = sphi 0, %s34
      %s38 = sphi 0, %s37
      %s54 = sphi 0, %s38
      %s60 = sphi 0, %s62
      %s63 = sphi 0, %s60
      %s64 = sphi 0, %s63
      %s80 = sphi 0, %s64
      %s86 = sphi 0, %s88
      %s89 = sphi 0, %s86
      %s90 = sphi 0, %s89
      %s106 = sphi 0, %s90
      %s112 = sphi 0, %s114
      %s115 = sphi 0, %s112
      %s116 = sphi 0, %s115
      %s132 = sphi 0, %s116
      %s138 = sphi 0, %s140
      %s141 = sphi 0, %s138
      %s142 = sphi 0, %s141
      %s158 = sphi 0, %s142
    $region4: #{dense_block_forward.6} parent=1 // loop_header_branch
      %13 = sbr.rel (%p11) target = $region8
    $region5: #{dense_block_forward.6} parent=1 // loop_body
      %s15 = ssub.s32 %s10, 1
      %s16 = ssub.s32 %s10, 2
      %s23 = sadd.s32 1, %s18
      %p24 = scmp.ge.s32.totalorder %s23, 2
      %s25 = scalar_select %p24, 0, %s23
      %s26 = sadd.s32 1, %s17
      %s27 = scalar_select %p24, %s26, %s17
      %p28 = scmp.ge.s32.totalorder %s27, 2
      %s29 = scalar_select %p28, 0, %s27
      %s30 = ssub.s32 %s17, %s29
      %s31 = ssub.s32 %s18, %s25
      %s32 = sor.u32 %s30, %s31
      %p33 = scmp.eq.s32.totalorder %s32, 0
      %s35 = sadd.s32 %s34, 1
      %s36 = scalar_select %p33, %s34, %s35
      %p39 = pneg %p33
      %p40 = scmp.eq.s32.totalorder %s10, 3
      %p41 = por %p39, %p40
      %p42 = scmp.ne.s32.totalorder %s34, %s37
      %p43 = scmp.eq.s32.totalorder %s10, 0
      %p44 = por %p42, %p43
      %p45 = scmp.ne.s32.totalorder %s34, %s37
      %p46 = scmp.eq.s32.totalorder %s15, 3
      %p47 = por %p45, %p46
      %p48 = scmp.ne.s32.totalorder %s37, %s38
      %p49 = scmp.eq.s32.totalorder %s15, 0
      %p50 = por %p48, %p49
      %p51 = scmp.ne.s32.totalorder %s37, %s38
      %p52 = scmp.eq.s32.totalorder %s16, 3
      %p53 = por %p51, %p52
      %p55 = scmp.ne.s32.totalorder %s38, %s54
      %p56 = scmp.eq.s32.totalorder %s16, 0
      %p57 = por %p55, %p56
      %s58 = ssub.s32 %s18, %s25
      %p59 = scmp.eq.s32.totalorder %s58, 0
      %s61 = sadd.s32 %s60, 1
      %s62 = scalar_select %p59, %s60, %s61
      %p65 = pneg %p59
      %p66 = scmp.eq.s32.totalorder %s10, 3
      %p67 = por %p65, %p66
      %p68 = scmp.ne.s32.totalorder %s60, %s63
      %p69 = scmp.eq.s32.totalorder %s10, 0
      %p70 = por %p68, %p69
      %p71 = scmp.ne.s32.totalorder %s60, %s63
      %p72 = scmp.eq.s32.totalorder %s15, 3
      %p73 = por %p71, %p72
      %p74 = scmp.ne.s32.totalorder %s63, %s64
      %p75 = scmp.eq.s32.totalorder %s15, 0
      %p76 = por %p74, %p75
      %p77 = scmp.ne.s32.totalorder %s63, %s64
      %p78 = scmp.eq.s32.totalorder %s16, 3
      %p79 = por %p77, %p78
      %p81 = scmp.ne.s32.totalorder %s64, %s80
      %p82 = scmp.eq.s32.totalorder %s16, 0
      %p83 = por %p81, %p82
      %s84 = ssub.s32 %s18, %s25
      %p85 = scmp.eq.s32.totalorder %s84, 0
      %s87 = sadd.s32 %s86, 1
      %s88 = scalar_select %p85, %s86, %s87
      %p91 = pneg %p85
      %p92 = scmp.eq.s32.totalorder %s10, 3
      %p93 = por %p91, %p92
      %p94 = scmp.ne.s32.totalorder %s86, %s89
      %p95 = scmp.eq.s32.totalorder %s10, 0
      %p96 = por %p94, %p95
      %p97 = scmp.ne.s32.totalorder %s86, %s89
      %p98 = scmp.eq.s32.totalorder %s15, 3
      %p99 = por %p97, %p98
      %p100 = scmp.ne.s32.totalorder %s89, %s90
      %p101 = scmp.eq.s32.totalorder %s15, 0
      %p102 = por %p100, %p101
      %p103 = scmp.ne.s32.totalorder %s89, %s90
      %p104 = scmp.eq.s32.totalorder %s16, 3
      %p105 = por %p103, %p104
      %p107 = scmp.ne.s32.totalorder %s90, %s106
      %p108 = scmp.eq.s32.totalorder %s16, 0
      %p109 = por %p107, %p108
      %s110 = ssub.s32 %s18, %s25
      %p111 = scmp.eq.s32.totalorder %s110, 0
      %s113 = sadd.s32 %s112, 1
      %s114 = scalar_select %p111, %s112, %s113
      %p117 = pneg %p111
      %p118 = scmp.eq.s32.totalorder %s10, 3
      %p119 = por %p117, %p118
      %p120 = scmp.ne.s32.totalorder %s112, %s115
      %p121 = scmp.eq.s32.totalorder %s10, 0
      %p122 = por %p120, %p121
      %p123 = scmp.ne.s32.totalorder %s112, %s115
      %p124 = scmp.eq.s32.totalorder %s15, 3
      %p125 = por %p123, %p124
      %p126 = scmp.ne.s32.totalorder %s115, %s116
      %p127 = scmp.eq.s32.totalorder %s15, 0
      %p128 = por %p126, %p127
      %p129 = scmp.ne.s32.totalorder %s115, %s116
      %p130 = scmp.eq.s32.totalorder %s16, 3
      %p131 = por %p129, %p130
      %p133 = scmp.ne.s32.totalorder %s116, %s132
      %p134 = scmp.eq.s32.totalorder %s16, 0
      %p135 = por %p133, %p134
      %s136 = ssub.s32 %s17, %s29
      %p137 = scmp.eq.s32.totalorder %s136, 0
      %s139 = sadd.s32 %s138, 1
      %s140 = scalar_select %p137, %s138, %s139
      %p143 = pneg %p137
      %p144 = scmp.eq.s32.totalorder %s10, 3
      %p145 = por %p143, %p144
      %p146 = scmp.ne.s32.totalorder %s138, %s141
      %p147 = scmp.eq.s32.totalorder %s10, 0
      %p148 = por %p146, %p147
      %p149 = scmp.ne.s32.totalorder %s138, %s141
      %p150 = scmp.eq.s32.totalorder %s15, 3
      %p151 = por %p149, %p150
      %p152 = scmp.ne.s32.totalorder %s141, %s142
      %p153 = scmp.eq.s32.totalorder %s15, 0
      %p154 = por %p152, %p153
      %p155 = scmp.ne.s32.totalorder %s141, %s142
      %p156 = scmp.eq.s32.totalorder %s16, 3
      %p157 = por %p155, %p156
      %p159 = scmp.ne.s32.totalorder %s142, %s158
      %p160 = scmp.eq.s32.totalorder %s16, 0
      %p161 = por %p159, %p160
      %p162 = scmp.le.s32.totalorder 1, %s10
      %p163 = scmp.lt.s32.totalorder %s10, 5
      %p164 = pnand %p162, %p163
      %p165 = pneg %p164
      // Predicated region
      $region9: #{dense_block_forward.6} parent=5 // pred_check
        _
      $region10: #{dense_block_forward.6} parent=5 // pred_check_branch
        %167 = sbr.rel (%p164) target = $region12
      $region11: #{dense_block_forward.6} parent=5 // pred_region
        %s168 = ssub.s32 %s10, 1
      $region12: #{dense_block_forward.6} parent=5 // pred_fallthru
        _
      %p169 = scmp.lt.s32.totalorder %s10, 4
      // Predicated region
      $region13: #{dense_block_forward.6} parent=5 // pred_check
        %p170 = pneg %p169
      $region14: #{dense_block_forward.6} parent=5 // pred_check_branch
        %172 = sbr.rel (%p170) target = $region16
      $region15: #{dense_block_forward.6} parent=5 // pred_region
        // Predicated region
        $region17: #{dense_block_forward.6} parent=15 // pred_check
          %p173 = pneg %p44
        $region18: #{dense_block_forward.6} parent=15 // pred_check_branch
          %175 = sbr.rel (%p173) target = $region20
        $region19: #{dense_block_forward.6} parent=15 // pred_region
          %s176 = sand.u32 %s34, 1
          %s177 = sand.u32 %s34, 1
          %s178 = smul.addr %s177, 256
          %s179 = scalar_lea.vmem [#allocation3], %s178
          %s180 = smul.u32 32, %s17
          %s181 = smul.addr %s180, 3
          %s182 = sadd.s32 %s18, %s181
          %s183 = smul.addr %s182, 8
          %s184 = scalar_lea.vmem %s0, %s183
          // Predicated region
          $region21: #{dense_block_forward.6} parent=19 // pred_check
            _
          $region22: #{dense_block_forward.6} parent=19 // pred_check_branch
            %186 = sbr.rel (0) target = $region24
          $region23: #{dense_block_forward.6} parent=19 // pred_region
            // Predicated region
            $region25: #{dense_block_forward.6} parent=23 // pred_check
              _
            $region26: #{dense_block_forward.6} parent=23 // pred_check_branch
              %188 = sbr.rel (0) target = $region28
            $region27: #{dense_block_forward.6} parent=23 // pred_region
              // Predicated region
              $region40: #{dense_block_forward.6} parent=27 // pred_check
                _
              $region41: #{dense_block_forward.6} parent=27 // pred_check_branch
                %265 = sbr.rel (0) target = $region43
              $region42: #{dense_block_forward.6} parent=27 // pred_region
                loop: start=0, step=1, limit=1
                $region44: #{dense_block_forward.6} parent=42 // loop_pre_header
                  _
                $region45: #{dense_block_forward.6} parent=42 // loop_header
                  %s267 = sphi 0, %s271
                  %p268 = scmp.ge.s32.totalorder %s267, 1
                  %s272 = sphi %s184, %s184
                  %s273 = sphi %s179, %s179
                $region46: #{dense_block_forward.6} parent=42 // loop_header_branch
                  %270 = sbr.rel (%p268) target = $region50
                $region47: #{dense_block_forward.6} parent=42 // loop_body
                  %v274 = vld [vmem:[%s272] sm:$0xff]
                  %275 = vst [vmem:[%s273] sm:$0xff] %v274
                  %v276 = vld [vmem:[%s272 + $0x18] sm:$0xff]
                  %277 = vst [vmem:[%s273 + $0x8] sm:$0xff] %v276
                  %v278 = vld [vmem:[%s272 + $0x30] sm:$0xff]
                  %279 = vst [vmem:[%s273 + $0x10] sm:$0xff] %v278
                  %v280 = vld [vmem:[%s272 + $0x48] sm:$0xff]
                  %281 = vst [vmem:[%s273 + $0x18] sm:$0xff] %v280
                  %v282 = vld [vmem:[%s272 + $0x60] sm:$0xff]
                  %283 = vst [vmem:[%s273 + $0x20] sm:$0xff] %v282
                  %v284 = vld [vmem:[%s272 + $0x78] sm:$0xff]
                  %285 = vst [vmem:[%s273 + $0x28] sm:$0xff] %v284
                  %v286 = vld [vmem:[%s272 + $0x90] sm:$0xff]
                  %287 = vst [vmem:[%s273 + $0x30] sm:$0xff] %v286
                  %v288 = vld [vmem:[%s272 + $0xa8] sm:$0xff]
                  %289 = vst [vmem:[%s273 + $0x38] sm:$0xff] %v288
                  %v290 = vld [vmem:[%s272 + $0xc0] sm:$0xff]
                  %291 = vst [vmem:[%s273 + $0x40] sm:$0xff] %v290
                  %v292 = vld [vmem:[%s272 + $0xd8] sm:$0xff]
                  %293 = vst [vmem:[%s273 + $0x48] sm:$0xff] %v292
                  %v294 = vld [vmem:[%s272 + $0xf0] sm:$0xff]
                  %295 = vst [vmem:[%s273 + $0x50] sm:$0xff] %v294
                  %v296 = vld [vmem:[%s272 + $0x108] sm:$0xff]
                  %297 = vst [vmem:[%s273 + $0x58] sm:$0xff] %v296
                  %v298 = vld [vmem:[%s272 + $0x120] sm:$0xff]
                  %299 = vst [vmem:[%s273 + $0x60] sm:$0xff] %v298
                  %v300 = vld [vmem:[%s272 + $0x138] sm:$0xff]
                  %301 = vst [vmem:[%s273 + $0x68] sm:$0xff] %v300
                  %v302 = vld [vmem:[%s272 + $0x150] sm:$0xff]
                  %303 = vst [vmem:[%s273 + $0x70] sm:$0xff] %v302
                  %v304 = vld [vmem:[%s272 + $0x168] sm:$0xff]
                  %305 = vst [vmem:[%s273 + $0x78] sm:$0xff] %v304
                  %v306 = vld [vmem:[%s272 + $0x180] sm:$0xff]
                  %307 = vst [vmem:[%s273 + $0x80] sm:$0xff] %v306
                  %v308 = vld [vmem:[%s272 + $0x198] sm:$0xff]
                  %309 = vst [vmem:[%s273 + $0x88] sm:$0xff] %v308
                  %v310 = vld [vmem:[%s272 + $0x1b0] sm:$0xff]
                  %311 = vst [vmem:[%s273 + $0x90] sm:$0xff] %v310
                  %v312 = vld [vmem:[%s272 + $0x1c8] sm:$0xff]
                  %313 = vst [vmem:[%s273 + $0x98] sm:$0xff] %v312
                  %v314 = vld [vmem:[%s272 + $0x1e0] sm:$0xff]
                  %315 = vst [vmem:[%s273 + $0xa0] sm:$0xff] %v314
                  %v316 = vld [vmem:[%s272 + $0x1f8] sm:$0xff]
                  %317 = vst [vmem:[%s273 + $0xa8] sm:$0xff] %v316
                  %v318 = vld [vmem:[%s272 + $0x210] sm:$0xff]
                  %319 = vst [vmem:[%s273 + $0xb0] sm:$0xff] %v318
                  %v320 = vld [vmem:[%s272 + $0x228] sm:$0xff]
                  %321 = vst [vmem:[%s273 + $0xb8] sm:$0xff] %v320
                  %v322 = vld [vmem:[%s272 + $0x240] sm:$0xff]
                  %323 = vst [vmem:[%s273 + $0xc0] sm:$0xff] %v322
                  %v324 = vld [vmem:[%s272 + $0x258] sm:$0xff]
                  %325 = vst [vmem:[%s273 + $0xc8] sm:$0xff] %v324
                  %v326 = vld [vmem:[%s272 + $0x270] sm:$0xff]
                  %327 = vst [vmem:[%s273 + $0xd0] sm:$0xff] %v326
                  %v328 = vld [vmem:[%s272 + $0x288] sm:$0xff]
                  %329 = vst [vmem:[%s273 + $0xd8] sm:$0xff] %v328
                  %v330 = vld [vmem:[%s272 + $0x2a0] sm:$0xff]
                  %331 = vst [vmem:[%s273 + $0xe0] sm:$0xff] %v330
                  %v332 = vld [vmem:[%s272 + $0x2b8] sm:$0xff]
                  %333 = vst [vmem:[%s273 + $0xe8] sm:$0xff] %v332
                  %v334 = vld [vmem:[%s272 + $0x2d0] sm:$0xff]
                  %335 = vst [vmem:[%s273 + $0xf0] sm:$0xff] %v334
                  %v336 = vld [vmem:[%s272 + $0x2e8] sm:$0xff]
                  %337 = vst [vmem:[%s273 + $0xf8] sm:$0xff] %v336
                $region48: #{dense_block_forward.6} parent=42 // loop_footer
                  %s271 = sadd.s32 1, %s267
                $region49: #{dense_block_forward.6} parent=42 // loop_footer_branch
                  %266 = sbr.rel target = $region45
                $region50: #{dense_block_forward.6} parent=42 // loop_exit
                  _
              $region43: #{dense_block_forward.6} parent=27 // pred_fallthru
                _
              // Predicated region
              $region51: #{dense_block_forward.6} parent=27 // pred_check
                _
              $region52: #{dense_block_forward.6} parent=27 // pred_check_branch
                %339 = sbr.rel target = $region54
              $region53: #{dense_block_forward.6} parent=27 // pred_region
                _
              $region54: #{dense_block_forward.6} parent=27 // pred_fallthru
                _
            $region28: #{dense_block_forward.6} parent=23 // pred_fallthru
              _
            // Predicated region
            $region29: #{dense_block_forward.6} parent=23 // pred_check
              _
            $region30: #{dense_block_forward.6} parent=23 // pred_check_branch
              %190 = sbr.rel target = $region32
            $region31: #{dense_block_forward.6} parent=23 // pred_region
              loop: start=0, step=1, limit=1
              $region33: #{dense_block_forward.6} parent=31 // loop_pre_header
                _
              $region34: #{dense_block_forward.6} parent=31 // loop_header
                %s193 = sphi 0, %s197
                %p194 = scmp.ge.s32.totalorder %s193, 1
                %s198 = sphi %s184, %s184
                %s199 = sphi %s179, %s179
              $region35: #{dense_block_forward.6} parent=31 // loop_header_branch
                %196 = sbr.rel (%p194) target = $region39
              $region36: #{dense_block_forward.6} parent=31 // loop_body
                %v200 = vld [vmem:[%s198] sm:$0xff]
                %201 = vst [vmem:[%s199] sm:$0xff] %v200
                %v202 = vld [vmem:[%s198 + $0x18] sm:$0xff]
                %203 = vst [vmem:[%s199 + $0x8] sm:$0xff] %v202
                %v204 = vld [vmem:[%s198 + $0x30] sm:$0xff]
                %205 = vst [vmem:[%s199 + $0x10] sm:$0xff] %v204
                %v206 = vld [vmem:[%s198 + $0x48] sm:$0xff]
                %207 = vst [vmem:[%s199 + $0x18] sm:$0xff] %v206
                %v208 = vld [vmem:[%s198 + $0x60] sm:$0xff]
                %209 = vst [vmem:[%s199 + $0x20] sm:$0xff] %v208
                %v210 = vld [vmem:[%s198 + $0x78] sm:$0xff]
                %211 = vst [vmem:[%s199 + $0x28] sm:$0xff] %v210
                %v212 = vld [vmem:[%s198 + $0x90] sm:$0xff]
                %213 = vst [vmem:[%s199 + $0x30] sm:$0xff] %v212
                %v214 = vld [vmem:[%s198 + $0xa8] sm:$0xff]
                %215 = vst [vmem:[%s199 + $0x38] sm:$0xff] %v214
                %v216 = vld [vmem:[%s198 + $0xc0] sm:$0xff]
                %217 = vst [vmem:[%s199 + $0x40] sm:$0xff] %v216
                %v218 = vld [vmem:[%s198 + $0xd8] sm:$0xff]
                %219 = vst [vmem:[%s199 + $0x48] sm:$0xff] %v218
                %v220 = vld [vmem:[%s198 + $0xf0] sm:$0xff]
                %221 = vst [vmem:[%s199 + $0x50] sm:$0xff] %v220
                %v222 = vld [vmem:[%s198 + $0x108] sm:$0xff]
                %223 = vst [vmem:[%s199 + $0x58] sm:$0xff] %v222
                %v224 = vld [vmem:[%s198 + $0x120] sm:$0xff]
                %225 = vst [vmem:[%s199 + $0x60] sm:$0xff] %v224
                %v226 = vld [vmem:[%s198 + $0x138] sm:$0xff]
                %227 = vst [vmem:[%s199 + $0x68] sm:$0xff] %v226
                %v228 = vld [vmem:[%s198 + $0x150] sm:$0xff]
                %229 = vst [vmem:[%s199 + $0x70] sm:$0xff] %v228
                %v230 = vld [vmem:[%s198 + $0x168] sm:$0xff]
                %231 = vst [vmem:[%s199 + $0x78] sm:$0xff] %v230
                %v232 = vld [vmem:[%s198 + $0x180] sm:$0xff]
                %233 = vst [vmem:[%s199 + $0x80] sm:$0xff] %v232
                %v234 = vld [vmem:[%s198 + $0x198] sm:$0xff]
                %235 = vst [vmem:[%s199 + $0x88] sm:$0xff] %v234
                %v236 = vld [vmem:[%s198 + $0x1b0] sm:$0xff]
                %237 = vst [vmem:[%s199 + $0x90] sm:$0xff] %v236
                %v238 = vld [vmem:[%s198 + $0x1c8] sm:$0xff]
                %239 = vst [vmem:[%s199 + $0x98] sm:$0xff] %v238
                %v240 = vld [vmem:[%s198 + $0x1e0] sm:$0xff]
                %241 = vst [vmem:[%s199 + $0xa0] sm:$0xff] %v240
                %v242 = vld [vmem:[%s198 + $0x1f8] sm:$0xff]
                %243 = vst [vmem:[%s199 + $0xa8] sm:$0xff] %v242
                %v244 = vld [vmem:[%s198 + $0x210] sm:$0xff]
                %245 = vst [vmem:[%s199 + $0xb0] sm:$0xff] %v244
                %v246 = vld [vmem:[%s198 + $0x228] sm:$0xff]
                %247 = vst [vmem:[%s199 + $0xb8] sm:$0xff] %v246
                %v248 = vld [vmem:[%s198 + $0x240] sm:$0xff]
                %249 = vst [vmem:[%s199 + $0xc0] sm:$0xff] %v248
                %v250 = vld [vmem:[%s198 + $0x258] sm:$0xff]
                %251 = vst [vmem:[%s199 + $0xc8] sm:$0xff] %v250
                %v252 = vld [vmem:[%s198 + $0x270] sm:$0xff]
                %253 = vst [vmem:[%s199 + $0xd0] sm:$0xff] %v252
                %v254 = vld [vmem:[%s198 + $0x288] sm:$0xff]
                %255 = vst [vmem:[%s199 + $0xd8] sm:$0xff] %v254
                %v256 = vld [vmem:[%s198 + $0x2a0] sm:$0xff]
                %257 = vst [vmem:[%s199 + $0xe0] sm:$0xff] %v256
                %v258 = vld [vmem:[%s198 + $0x2b8] sm:$0xff]
                %259 = vst [vmem:[%s199 + $0xe8] sm:$0xff] %v258
                %v260 = vld [vmem:[%s198 + $0x2d0] sm:$0xff]
                %261 = vst [vmem:[%s199 + $0xf0] sm:$0xff] %v260
                %v262 = vld [vmem:[%s198 + $0x2e8] sm:$0xff]
                %263 = vst [vmem:[%s199 + $0xf8] sm:$0xff] %v262
              $region37: #{dense_block_forward.6} parent=31 // loop_footer
                %s197 = sadd.s32 1, %s193
              $region38: #{dense_block_forward.6} parent=31 // loop_footer_branch
                %192 = sbr.rel target = $region34
              $region39: #{dense_block_forward.6} parent=31 // loop_exit
                _
            $region32: #{dense_block_forward.6} parent=23 // pred_fallthru
              _
          $region24: #{dense_block_forward.6} parent=19 // pred_fallthru
            _
          %340 = vnop
        $region20: #{dense_block_forward.6} parent=15 // pred_fallthru
          _
        // Predicated region
        $region55: #{dense_block_forward.6} parent=15 // pred_check
          %p341 = pneg %p70
        $region56: #{dense_block_forward.6} parent=15 // pred_check_branch
          %343 = sbr.rel (%p341) target = $region58
        $region57: #{dense_block_forward.6} parent=15 // pred_region
          %p344 = scmp.lt.s32.totalorder %s18, 1
          %s345 = scalar_select %p344, %s18, 1
          %s346 = scalar_lea.vmem %s1, %s345
        $region58: #{dense_block_forward.6} parent=15 // pred_fallthru
          _
        // Predicated region
        $region59: #{dense_block_forward.6} parent=15 // pred_check
          %p347 = pneg %p96
        $region60: #{dense_block_forward.6} parent=15 // pred_check_branch
          %349 = sbr.rel (%p347) target = $region62
        $region61: #{dense_block_forward.6} parent=15 // pred_region
          %p350 = scmp.lt.s32.totalorder %s18, 1
          %s351 = scalar_select %p350, %s18, 1
          %s352 = scalar_lea.vmem %s2, %s351
        $region62: #{dense_block_forward.6} parent=15 // pred_fallthru
          _
        // Predicated region
        $region63: #{dense_block_forward.6} parent=15 // pred_check
          %p353 = pneg %p122
        $region64: #{dense_block_forward.6} parent=15 // pred_check_branch
          %355 = sbr.rel (%p353) target = $region66
        $region65: #{dense_block_forward.6} parent=15 // pred_region
          %s356 = smul.u32 16, %s18
          %p357 = scmp.lt.s32.totalorder %s356, 31
          %s358 = scalar_select %p357, %s356, 31
          %s359 = smul.addr %s358, 8
          %s360 = scalar_lea.vmem %s3, %s359
          %s361 = smul.u32 16, %s18
        $region66: #{dense_block_forward.6} parent=15 // pred_fallthru
          _
      $region16: #{dense_block_forward.6} parent=5 // pred_fallthru
        _
      %p362 = scmp.le.s32.totalorder 1, %s10
      %p363 = scmp.lt.s32.totalorder %s10, 5
      %p364 = pnand %p362, %p363
      %p365 = pneg %p364
      // Predicated region
      $region67: #{dense_block_forward.6} parent=5 // pred_check
        _
      $region68: #{dense_block_forward.6} parent=5 // pred_check_branch
        %367 = sbr.rel (%p364) target = $region70
      $region69: #{dense_block_forward.6} parent=5 // pred_region
        %s368 = ssub.s32 %s10, 1
        %s369 = sand.u32 %s37, 1
        %s370 = sand.u32 %s37, 1
        %s371 = smul.addr %s370, 256
        %s372 = scalar_lea.vmem [#allocation3], %s371
        // Predicated region
        $region71: #{dense_block_forward.6} parent=69 // pred_check
          %p373 = pneg %p50
        $region72: #{dense_block_forward.6} parent=69 // pred_check_branch
          %375 = sbr.rel (%p373) target = $region74
        $region73: #{dense_block_forward.6} parent=69 // pred_region
          _
        $region74: #{dense_block_forward.6} parent=69 // pred_fallthru
          _
        %s376 = sand.u32 %s37, 1
        %s377 = sand.u32 %s37, 1
        %s378 = smul.addr %s377, 256
        %s379 = scalar_lea.vmem [#allocation3], %s378
        %p380 = pneg %p50
        %p381 = pneg %p47
        %p382 = scmp.lt.s32.totalorder %s20, 1
        %s383 = scalar_select %p382, %s20, 1
        %s384 = scalar_lea.vmem %s1, %s383
        %p385 = pneg %p76
        %p386 = pneg %p73
        %p387 = scmp.lt.s32.totalorder %s20, 1
        %s388 = scalar_select %p387, %s20, 1
        %s389 = scalar_lea.vmem %s2, %s388
        %p390 = pneg %p102
        %p391 = pneg %p99
        %s392 = smul.u32 16, %s20
        %p393 = scmp.lt.s32.totalorder %s392, 31
        %s394 = scalar_select %p393, %s392, 31
        %s395 = smul.addr %s394, 8
        %s396 = scalar_lea.vmem %s3, %s395
        %p397 = pneg %p128
        %p398 = pneg %p125
        %p399 = pneg %p154
        %p400 = pneg %p151
        %s401 = smul.u32 32, %s19
        %p402 = scmp.lt.s32.totalorder %s401, 63
        %s403 = scalar_select %p402, %s401, 63
        %s404 = smul.addr %s403, 8
        %s405 = scalar_lea.vmem %s4, %s404
        %s406 = smul.u32 32, %s19
        %p407 = scmp.lt.s32.totalorder %s20, 1
        %s408 = scalar_select %p407, %s20, 1
        %s409 = scalar_lea.vmem %s1, %s408
        %p410 = scmp.lt.s32.totalorder %s20, 1
        %s411 = scalar_select %p410, %s20, 1
        %s412 = scalar_lea.vmem %s2, %s411
        %s413 = smul.u32 16, %s20
        %p414 = scmp.lt.s32.totalorder %s413, 31
        %s415 = scalar_select %p414, %s413, 31
        %s416 = smul.addr %s415, 8
        %s417 = scalar_lea.vmem %s3, %s416
        %s418 = smul.u32 16, %s20
        %s419 = smul.u32 32, %s19
        %p420 = scmp.lt.s32.totalorder %s419, 63
        %s421 = scalar_select %p420, %s419, 63
        %s422 = smul.addr %s421, 8
        %s423 = scalar_lea.vmem %s4, %s422
        %s424 = smul.u32 32, %s19
        %p425 = scmp.eq.s32.totalorder %s20, 0
        // Predicated region
        $region75: #{dense_block_forward.6} parent=69 // pred_check
          %p426 = pneg %p425
        $region76: #{dense_block_forward.6} parent=69 // pred_check_branch
          %428 = sbr.rel (%p426) target = $region78
        $region77: #{dense_block_forward.6} parent=69 // pred_region
          %429 = vst [vmem:[#allocation2] sm:$0xff] 0.0
          %430 = vst [vmem:[#allocation2 + $0x8] sm:$0xff] 0.0
          %431 = vst [vmem:[#allocation2 + $0x10] sm:$0xff] 0.0
          %432 = vst [vmem:[#allocation2 + $0x18] sm:$0xff] 0.0
          %433 = vst [vmem:[#allocation2 + $0x20] sm:$0xff] 0.0
          %434 = vst [vmem:[#allocation2 + $0x28] sm:$0xff] 0.0
          %435 = vst [vmem:[#allocation2 + $0x30] sm:$0xff] 0.0
          %436 = vst [vmem:[#allocation2 + $0x38] sm:$0xff] 0.0
          %437 = vst [vmem:[#allocation2 + $0x40] sm:$0xff] 0.0
          %438 = vst [vmem:[#allocation2 + $0x48] sm:$0xff] 0.0
          %439 = vst [vmem:[#allocation2 + $0x50] sm:$0xff] 0.0
          %440 = vst [vmem:[#allocation2 + $0x58] sm:$0xff] 0.0
          %441 = vst [vmem:[#allocation2 + $0x60] sm:$0xff] 0.0
          %442 = vst [vmem:[#allocation2 + $0x68] sm:$0xff] 0.0
          %443 = vst [vmem:[#allocation2 + $0x70] sm:$0xff] 0.0
          %444 = vst [vmem:[#allocation2 + $0x78] sm:$0xff] 0.0
          %445 = vst [vmem:[#allocation2 + $0x80] sm:$0xff] 0.0
          %446 = vst [vmem:[#allocation2 + $0x88] sm:$0xff] 0.0
          %447 = vst [vmem:[#allocation2 + $0x90] sm:$0xff] 0.0
          %448 = vst [vmem:[#allocation2 + $0x98] sm:$0xff] 0.0
          %449 = vst [vmem:[#allocation2 + $0xa0] sm:$0xff] 0.0
          %450 = vst [vmem:[#allocation2 + $0xa8] sm:$0xff] 0.0
          %451 = vst [vmem:[#allocation2 + $0xb0] sm:$0xff] 0.0
          %452 = vst [vmem:[#allocation2 + $0xb8] sm:$0xff] 0.0
          %453 = vst [vmem:[#allocation2 + $0xc0] sm:$0xff] 0.0
          %454 = vst [vmem:[#allocation2 + $0xc8] sm:$0xff] 0.0
          %455 = vst [vmem:[#allocation2 + $0xd0] sm:$0xff] 0.0
          %456 = vst [vmem:[#allocation2 + $0xd8] sm:$0xff] 0.0
          %457 = vst [vmem:[#allocation2 + $0xe0] sm:$0xff] 0.0
          %458 = vst [vmem:[#allocation2 + $0xe8] sm:$0xff] 0.0
          %459 = vst [vmem:[#allocation2 + $0xf0] sm:$0xff] 0.0
          %460 = vst [vmem:[#allocation2 + $0xf8] sm:$0xff] 0.0
        $region78: #{dense_block_forward.6} parent=69 // pred_fallthru
          _
        %v461 = vld [vmem:[%s372] sm:$0xff]
        %v462 = vld [vmem:[%s372 + $0x8] sm:$0xff]
        %v463 = vld [vmem:[%s372 + $0x10] sm:$0xff]
        %v464 = vld [vmem:[%s372 + $0x18] sm:$0xff]
        %v465 = vld [vmem:[%s372 + $0x20] sm:$0xff]
        %v466 = vld [vmem:[%s372 + $0x28] sm:$0xff]
        %v467 = vld [vmem:[%s372 + $0x30] sm:$0xff]
        %v468 = vld [vmem:[%s372 + $0x38] sm:$0xff]
        %v469 = vld [vmem:[%s372 + $0x40] sm:$0xff]
        %v470 = vld [vmem:[%s372 + $0x48] sm:$0xff]
        %v471 = vld [vmem:[%s372 + $0x50] sm:$0xff]
        %v472 = vld [vmem:[%s372 + $0x58] sm:$0xff]
        %v473 = vld [vmem:[%s372 + $0x60] sm:$0xff]
        %v474 = vld [vmem:[%s372 + $0x68] sm:$0xff]
        %v475 = vld [vmem:[%s372 + $0x70] sm:$0xff]
        %v476 = vld [vmem:[%s372 + $0x78] sm:$0xff]
        %v477 = vld [vmem:[%s372 + $0x80] sm:$0xff]
        %v478 = vld [vmem:[%s372 + $0x88] sm:$0xff]
        %v479 = vld [vmem:[%s372 + $0x90] sm:$0xff]
        %v480 = vld [vmem:[%s372 + $0x98] sm:$0xff]
        %v481 = vld [vmem:[%s372 + $0xa0] sm:$0xff]
        %v482 = vld [vmem:[%s372 + $0xa8] sm:$0xff]
        %v483 = vld [vmem:[%s372 + $0xb0] sm:$0xff]
        %v484 = vld [vmem:[%s372 + $0xb8] sm:$0xff]
        %v485 = vld [vmem:[%s372 + $0xc0] sm:$0xff]
        %v486 = vld [vmem:[%s372 + $0xc8] sm:$0xff]
        %v487 = vld [vmem:[%s372 + $0xd0] sm:$0xff]
        %v488 = vld [vmem:[%s372 + $0xd8] sm:$0xff]
        %v489 = vld [vmem:[%s372 + $0xe0] sm:$0xff]
        %v490 = vld [vmem:[%s372 + $0xe8] sm:$0xff]
        %v491 = vld [vmem:[%s372 + $0xf0] sm:$0xff]
        %v492 = vld [vmem:[%s372 + $0xf8] sm:$0xff]
        %v493 = vld [vmem:[%s409] sm:$0x1]
        %v495 = vlaneseq
        %v496 = vshrl.u32 %v495, 7
        %v497 = vsub.s32 0, %v496
        %v498 = vrot.slane %v493, %v497
        %v500 = vmul.f32 %v461, %v498
        %v501 = vmul.f32 %v462, %v498
        %v502 = vmul.f32 %v463, %v498
        %v503 = vmul.f32 %v464, %v498
        %v504 = vmul.f32 %v465, %v498
        %v505 = vmul.f32 %v466, %v498
        %v506 = vmul.f32 %v467, %v498
        %v507 = vmul.f32 %v468, %v498
        %v508 = vmul.f32 %v469, %v498
        %v509 = vmul.f32 %v470, %v498
        %v510 = vmul.f32 %v471, %v498
        %v511 = vmul.f32 %v472, %v498
        %v512 = vmul.f32 %v473, %v498
        %v513 = vmul.f32 %v474, %v498
        %v514 = vmul.f32 %v475, %v498
        %v515 = vmul.f32 %v476, %v498
        %v516 = vmul.f32 %v477, %v498
        %v517 = vmul.f32 %v478, %v498
        %v518 = vmul.f32 %v479, %v498
        %v519 = vmul.f32 %v480, %v498
        %v520 = vmul.f32 %v481, %v498
        %v521 = vmul.f32 %v482, %v498
        %v522 = vmul.f32 %v483, %v498
        %v523 = vmul.f32 %v484, %v498
        %v524 = vmul.f32 %v485, %v498
        %v525 = vmul.f32 %v486, %v498
        %v526 = vmul.f32 %v487, %v498
        %v527 = vmul.f32 %v488, %v498
        %v528 = vmul.f32 %v489, %v498
        %v529 = vmul.f32 %v490, %v498
        %v530 = vmul.f32 %v491, %v498
        %v531 = vmul.f32 %v492, %v498
        %v532 = vld [vmem:[%s412] sm:$0x1]
        %v534 = vlaneseq
        %v535 = vshrl.u32 %v534, 7
        %v536 = vsub.s32 0, %v535
        %v537 = vrot.slane %v532, %v536
        %v539 = vadd.f32 %v500, %v537
        %v540 = vadd.f32 %v501, %v537
        %v541 = vadd.f32 %v502, %v537
        %v542 = vadd.f32 %v503, %v537
        %v543 = vadd.f32 %v504, %v537
        %v544 = vadd.f32 %v505, %v537
        %v545 = vadd.f32 %v506, %v537
        %v546 = vadd.f32 %v507, %v537
        %v547 = vadd.f32 %v508, %v537
        %v548 = vadd.f32 %v509, %v537
        %v549 = vadd.f32 %v510, %v537
        %v550 = vadd.f32 %v511, %v537
        %v551 = vadd.f32 %v512, %v537
        %v552 = vadd.f32 %v513, %v537
        %v553 = vadd.f32 %v514, %v537
        %v554 = vadd.f32 %v515, %v537
        %v555 = vadd.f32 %v516, %v537
        %v556 = vadd.f32 %v517, %v537
        %v557 = vadd.f32 %v518, %v537
        %v558 = vadd.f32 %v519, %v537
        %v559 = vadd.f32 %v520, %v537
        %v560 = vadd.f32 %v521, %v537
        %v561 = vadd.f32 %v522, %v537
        %v562 = vadd.f32 %v523, %v537
        %v563 = vadd.f32 %v524, %v537
        %v564 = vadd.f32 %v525, %v537
        %v565 = vadd.f32 %v526, %v537
        %v566 = vadd.f32 %v527, %v537
        %v567 = vadd.f32 %v528, %v537
        %v568 = vadd.f32 %v529, %v537
        %v569 = vadd.f32 %v530, %v537
        %v570 = vadd.f32 %v531, %v537
        %v571 = vmax.f32 %v539, 0.0
        %v572 = vmax.f32 %v540, 0.0
        %v573 = vmax.f32 %v541, 0.0
        %v574 = vmax.f32 %v542, 0.0
        %v575 = vmax.f32 %v543, 0.0
        %v576 = vmax.f32 %v544, 0.0
        %v577 = vmax.f32 %v545, 0.0
        %v578 = vmax.f32 %v546, 0.0
        %v579 = vmax.f32 %v547, 0.0
        %v580 = vmax.f32 %v548, 0.0
        %v581 = vmax.f32 %v549, 0.0
        %v582 = vmax.f32 %v550, 0.0
        %v583 = vmax.f32 %v551, 0.0
        %v584 = vmax.f32 %v552, 0.0
        %v585 = vmax.f32 %v553, 0.0
        %v586 = vmax.f32 %v554, 0.0
        %v587 = vmax.f32 %v555, 0.0
        %v588 = vmax.f32 %v556, 0.0
        %v589 = vmax.f32 %v557, 0.0
        %v590 = vmax.f32 %v558, 0.0
        %v591 = vmax.f32 %v559, 0.0
        %v592 = vmax.f32 %v560, 0.0
        %v593 = vmax.f32 %v561, 0.0
        %v594 = vmax.f32 %v562, 0.0
        %v595 = vmax.f32 %v563, 0.0
        %v596 = vmax.f32 %v564, 0.0
        %v597 = vmax.f32 %v565, 0.0
        %v598 = vmax.f32 %v566, 0.0
        %v599 = vmax.f32 %v567, 0.0
        %v600 = vmax.f32 %v568, 0.0
        %v601 = vmax.f32 %v569, 0.0
        %v602 = vmax.f32 %v570, 0.0
        %v603 = vld [vmem:[#allocation2] sm:$0xff]
        %v604 = vld [vmem:[#allocation2 + $0x8] sm:$0xff]
        %v605 = vld [vmem:[#allocation2 + $0x10] sm:$0xff]
        %v606 = vld [vmem:[#allocation2 + $0x18] sm:$0xff]
        %v607 = vld [vmem:[#allocation2 + $0x20] sm:$0xff]
        %v608 = vld [vmem:[#allocation2 + $0x28] sm:$0xff]
        %v609 = vld [vmem:[#allocation2 + $0x30] sm:$0xff]
        %v610 = vld [vmem:[#allocation2 + $0x38] sm:$0xff]
        %v611 = vld [vmem:[#allocation2 + $0x40] sm:$0xff]
        %v612 = vld [vmem:[#allocation2 + $0x48] sm:$0xff]
        %v613 = vld [vmem:[#allocation2 + $0x50] sm:$0xff]
        %v614 = vld [vmem:[#allocation2 + $0x58] sm:$0xff]
        %v615 = vld [vmem:[#allocation2 + $0x60] sm:$0xff]
        %v616 = vld [vmem:[#allocation2 + $0x68] sm:$0xff]
        %v617 = vld [vmem:[#allocation2 + $0x70] sm:$0xff]
        %v618 = vld [vmem:[#allocation2 + $0x78] sm:$0xff]
        %v619 = vld [vmem:[#allocation2 + $0x80] sm:$0xff]
        %v620 = vld [vmem:[#allocation2 + $0x88] sm:$0xff]
        %v621 = vld [vmem:[#allocation2 + $0x90] sm:$0xff]
        %v622 = vld [vmem:[#allocation2 + $0x98] sm:$0xff]
        %v623 = vld [vmem:[#allocation2 + $0xa0] sm:$0xff]
        %v624 = vld [vmem:[#allocation2 + $0xa8] sm:$0xff]
        %v625 = vld [vmem:[#allocation2 + $0xb0] sm:$0xff]
        %v626 = vld [vmem:[#allocation2 + $0xb8] sm:$0xff]
        %v627 = vld [vmem:[#allocation2 + $0xc0] sm:$0xff]
        %v628 = vld [vmem:[#allocation2 + $0xc8] sm:$0xff]
        %v629 = vld [vmem:[#allocation2 + $0xd0] sm:$0xff]
        %v630 = vld [vmem:[#allocation2 + $0xd8] sm:$0xff]
        %v631 = vld [vmem:[#allocation2 + $0xe0] sm:$0xff]
        %v632 = vld [vmem:[#allocation2 + $0xe8] sm:$0xff]
        %v633 = vld [vmem:[#allocation2 + $0xf0] sm:$0xff]
        %v634 = vld [vmem:[#allocation2 + $0xf8] sm:$0xff]
        %v635 = vld [vmem:[%s417] sm:$0xff]
        %v636 = vld [vmem:[%s417 + $0x8] sm:$0xff]
        %v637 = vld [vmem:[%s417 + $0x10] sm:$0xff]
        %v638 = vld [vmem:[%s417 + $0x18] sm:$0xff]
        %v639 = vld [vmem:[%s417 + $0x20] sm:$0xff]
        %v640 = vld [vmem:[%s417 + $0x28] sm:$0xff]
        %v641 = vld [vmem:[%s417 + $0x30] sm:$0xff]
        %v642 = vld [vmem:[%s417 + $0x38] sm:$0xff]
        %v643 = vld [vmem:[%s417 + $0x40] sm:$0xff]
        %v644 = vld [vmem:[%s417 + $0x48] sm:$0xff]
        %v645 = vld [vmem:[%s417 + $0x50] sm:$0xff]
        %v646 = vld [vmem:[%s417 + $0x58] sm:$0xff]
        %v647 = vld [vmem:[%s417 + $0x60] sm:$0xff]
        %v648 = vld [vmem:[%s417 + $0x68] sm:$0xff]
        %v649 = vld [vmem:[%s417 + $0x70] sm:$0xff]
        %v650 = vld [vmem:[%s417 + $0x78] sm:$0xff]
        %651 = vmatprep.subr.mxu0 0.0
        %652 = vmatpush1.msra.mxu0 %v635
        %653 = vmatprep.subr.mxu0 0.0
        %654 = vmatpush1.msra.mxu0 %v636
        %655 = vmatprep.subr.mxu0 0.0
        %656 = vmatpush1.msra.mxu0 %v637
        %657 = vmatprep.subr.mxu0 0.0
        %658 = vmatpush1.msra.mxu0 %v638
        %659 = vmatprep.subr.mxu0 0.0
        %660 = vmatpush1.msra.mxu0 %v639
        %661 = vmatprep.subr.mxu0 0.0
        %662 = vmatpush1.msra.mxu0 %v640
        %663 = vmatprep.subr.mxu0 0.0
        %664 = vmatpush1.msra.mxu0 %v641
        %665 = vmatprep.subr.mxu0 0.0
        %666 = vmatpush1.msra.mxu0 %v642
        %667 = vmatprep.subr.mxu0 0.0
        %668 = vmatpush1.msra.mxu0 %v643
        %669 = vmatprep.subr.mxu0 0.0
        %670 = vmatpush1.msra.mxu0 %v644
        %671 = vmatprep.subr.mxu0 0.0
        %672 = vmatpush1.msra.mxu0 %v645
        %673 = vmatprep.subr.mxu0 0.0
        %674 = vmatpush1.msra.mxu0 %v646
        %675 = vmatprep.subr.mxu0 0.0
        %676 = vmatpush1.msra.mxu0 %v647
        %677 = vmatprep.subr.mxu0 0.0
        %678 = vmatpush1.msra.mxu0 %v648
        %679 = vmatprep.subr.mxu0 0.0
        %680 = vmatpush1.msra.mxu0 %v649
        %681 = vmatprep.subr.mxu0 0.0
        %682 = vmatpush1.msra.mxu0 %v650
        %683 = vmatprep.subr.mxu0 0.0
        %684 = vmatpush1.msra.mxu0 0.0
        %685 = vmatprep.subr.mxu0 0.0
        %686 = vmatpush1.msra.mxu0 0.0
        %687 = vmatprep.subr.mxu0 0.0
        %688 = vmatpush1.msra.mxu0 0.0
        %689 = vmatprep.subr.mxu0 0.0
        %690 = vmatpush1.msra.mxu0 0.0
        %691 = vmatprep.subr.mxu0 0.0
        %692 = vmatpush1.msra.mxu0 0.0
        %693 = vmatprep.subr.mxu0 0.0
        %694 = vmatpush1.msra.mxu0 0.0
        %695 = vmatprep.subr.mxu0 0.0
        %696 = vmatpush1.msra.mxu0 0.0
        %697 = vmatprep.subr.mxu0 0.0
        %698 = vmatpush1.msra.mxu0 0.0
        %699 = vmatprep.subr.mxu0 0.0
        %700 = vmatpush1.msra.mxu0 0.0
        %701 = vmatprep.subr.mxu0 0.0
        %702 = vmatpush1.msra.mxu0 0.0
        %703 = vmatprep.subr.mxu0 0.0
        %704 = vmatpush1.msra.mxu0 0.0
        %705 = vmatprep.subr.mxu0 0.0
        %706 = vmatpush1.msra.mxu0 0.0
        %707 = vmatprep.subr.mxu0 0.0
        %708 = vmatpush1.msra.mxu0 0.0
        %709 = vmatprep.subr.mxu0 0.0
        %710 = vmatpush1.msra.mxu0 0.0
        %711 = vmatprep.subr.mxu0 0.0
        %712 = vmatpush1.msra.mxu0 0.0
        %713 = vmatprep.subr.mxu0 0.0
        %714 = vmatpush1.msra.mxu0 0.0
        %715 = vmatprep.mubr.f32.mxu0 0.0
        %716 = vmatmul.mubr.f32.gmra.mrb[0].mxu0 %v571
        %v717 = vpop.f32.mrb[0].mxu0
        %v718 = vadd.f32 0.0, %v717
        %v719 = vpop.f32.mrb[0].mxu0
        %720 = vmatprep.mubr.f32.mxu0 0.0
        %721 = vmatmul.mubr.f32.gmra.mrb[0].mxu0 %v572
        %v722 = vpop.f32.mrb[0].mxu0
        %v723 = vadd.f32 0.0, %v722
        %v724 = vpop.f32.mrb[0].mxu0
        %725 = vmatprep.mubr.f32.mxu0 0.0
        %726 = vmatmul.mubr.f32.gmra.mrb[0].mxu0 %v573
        %v727 = vpop.f32.mrb[0].mxu0
        %v728 = vadd.f32 0.0, %v727
        %v729 = vpop.f32.mrb[0].mxu0
        %730 = vmatprep.mubr.f32.mxu0 0.0
        %731 = vmatmul.mubr.f32.gmra.mrb[0].mxu0 %v574
        %v732 = vpop.f32.mrb[0].mxu0
        %v733 = vadd.f32 0.0, %v732
        %v734 = vpop.f32.mrb[0].mxu0
        %735 = vmatprep.mubr.f32.mxu0 0.0
        %736 = vmatmul.mubr.f32.gmra.mrb[0].mxu0 %v575
        %v737 = vpop.f32.mrb[0].mxu0
        %v738 = vadd.f32 0.0, %v737
        %v739 = vpop.f32.mrb[0].mxu0
        %740 = vmatprep.mubr.f32.mxu0 0.0
        %741 = vmatmul.mubr.f32.gmra.mrb[0].mxu0 %v576
        %v742 = vpop.f32.mrb[0].mxu0
        %v743 = vadd.f32 0.0, %v742
        %v744 = vpop.f32.mrb[0].mxu0
        %745 = vmatprep.mubr.f32.mxu0 0.0
        %746 = vmatmul.mubr.f32.gmra.mrb[0].mxu0 %v577
        %v747 = vpop.f32.mrb[0].mxu0
        %v748 = vadd.f32 0.0, %v747
        %v749 = vpop.f32.mrb[0].mxu0
        %750 = vmatprep.mubr.f32.mxu0 0.0
        %751 = vmatmul.mubr.f32.gmra.mrb[0].mxu0 %v578
        %v752 = vpop.f32.mrb[0].mxu0
        %v753 = vadd.f32 0.0, %v752
        %v754 = vpop.f32.mrb[0].mxu0
        %755 = vmatprep.mubr.f32.mxu0 0.0
        %756 = vmatmul.mubr.f32.gmra.mrb[0].mxu0 %v579
        %v757 = vpop.f32.mrb[0].mxu0
        %v758 = vadd.f32 0.0, %v757
        %v759 = vpop.f32.mrb[0].mxu0
        %760 = vmatprep.mubr.f32.mxu0 0.0
        %761 = vmatmul.mubr.f32.gmra.mrb[0].mxu0 %v580
        %v762 = vpop.f32.mrb[0].mxu0
        %v763 = vadd.f32 0.0, %v762
        %v764 = vpop.f32.mrb[0].mxu0
        %765 = vmatprep.mubr.f32.mxu0 0.0
        %766 = vmatmul.mubr.f32.gmra.mrb[0].mxu0 %v581
        %v767 = vpop.f32.mrb[0].mxu0
        %v768 = vadd.f32 0.0, %v767
        %v769 = vpop.f32.mrb[0].mxu0
        %770 = vmatprep.mubr.f32.mxu0 0.0
        %771 = vmatmul.mubr.f32.gmra.mrb[0].mxu0 %v582
        %v772 = vpop.f32.mrb[0].mxu0
        %v773 = vadd.f32 0.0, %v772
        %v774 = vpop.f32.mrb[0].mxu0
        %775 = vmatprep.mubr.f32.mxu0 0.0
        %776 = vmatmul.mubr.f32.gmra.mrb[0].mxu0 %v583
        %v777 = vpop.f32.mrb[0].mxu0
        %v778 = vadd.f32 0.0, %v777
        %v779 = vpop.f32.mrb[0].mxu0
        %780 = vmatprep.mubr.f32.mxu0 0.0
        %781 = vmatmul.mubr.f32.gmra.mrb[0].mxu0 %v584
        %v782 = vpop.f32.mrb[0].mxu0
        %v783 = vadd.f32 0.0, %v782
        %v784 = vpop.f32.mrb[0].mxu0
        %785 = vmatprep.mubr.f32.mxu0 0.0
        %786 = vmatmul.mubr.f32.gmra.mrb[0].mxu0 %v585
        %v787 = vpop.f32.mrb[0].mxu0
        %v788 = vadd.f32 0.0, %v787
        %v789 = vpop.f32.mrb[0].mxu0
        %790 = vmatprep.mubr.f32.mxu0 0.0
        %791 = vmatmul.mubr.f32.gmra.mrb[0].mxu0 %v586
        %v792 = vpop.f32.mrb[0].mxu0
        %v793 = vadd.f32 0.0, %v792
        %v794 = vpop.f32.mrb[0].mxu0
        %795 = vmatprep.mubr.f32.mxu0 0.0
        %796 = vmatmul.mubr.f32.gmra.mrb[0].mxu0 %v587
        %v797 = vpop.f32.mrb[0].mxu0
        %v798 = vadd.f32 0.0, %v797
        %v799 = vpop.f32.mrb[0].mxu0
        %800 = vmatprep.mubr.f32.mxu0 0.0
        %801 = vmatmul.mubr.f32.gmra.mrb[0].mxu0 %v588
        %v802 = vpop.f32.mrb[0].mxu0
        %v803 = vadd.f32 0.0, %v802
        %v804 = vpop.f32.mrb[0].mxu0
        %805 = vmatprep.mubr.f32.mxu0 0.0
        %806 = vmatmul.mubr.f32.gmra.mrb[0].mxu0 %v589
        %v807 = vpop.f32.mrb[0].mxu0
        %v808 = vadd.f32 0.0, %v807
        %v809 = vpop.f32.mrb[0].mxu0
        %810 = vmatprep.mubr.f32.mxu0 0.0
        %811 = vmatmul.mubr.f32.gmra.mrb[0].mxu0 %v590
        %v812 = vpop.f32.mrb[0].mxu0
        %v813 = vadd.f32 0.0, %v812
        %v814 = vpop.f32.mrb[0].mxu0
        %815 = vmatprep.mubr.f32.mxu0 0.0
        %816 = vmatmul.mubr.f32.gmra.mrb[0].mxu0 %v591
        %v817 = vpop.f32.mrb[0].mxu0
        %v818 = vadd.f32 0.0, %v817
        %v819 = vpop.f32.mrb[0].mxu0
        %820 = vmatprep.mubr.f32.mxu0 0.0
        %821 = vmatmul.mubr.f32.gmra.mrb[0].mxu0 %v592
        %v822 = vpop.f32.mrb[0].mxu0
        %v823 = vadd.f32 0.0, %v822
        %v824 = vpop.f32.mrb[0].mxu0
        %825 = vmatprep.mubr.f32.mxu0 0.0
        %826 = vmatmul.mubr.f32.gmra.mrb[0].mxu0 %v593
        %v827 = vpop.f32.mrb[0].mxu0
        %v828 = vadd.f32 0.0, %v827
        %v829 = vpop.f32.mrb[0].mxu0
        %830 = vmatprep.mubr.f32.mxu0 0.0
        %831 = vmatmul.mubr.f32.gmra.mrb[0].mxu0 %v594
        %v832 = vpop.f32.mrb[0].mxu0
        %v833 = vadd.f32 0.0, %v832
        %v834 = vpop.f32.mrb[0].mxu0
        %835 = vmatprep.mubr.f32.mxu0 0.0
        %836 = vmatmul.mubr.f32.gmra.mrb[0].mxu0 %v595
        %v837 = vpop.f32.mrb[0].mxu0
        %v838 = vadd.f32 0.0, %v837
        %v839 = vpop.f32.mrb[0].mxu0
        %840 = vmatprep.mubr.f32.mxu0 0.0
        %841 = vmatmul.mubr.f32.gmra.mrb[0].mxu0 %v596
        %v842 = vpop.f32.mrb[0].mxu0
        %v843 = vadd.f32 0.0, %v842
        %v844 = vpop.f32.mrb[0].mxu0
        %845 = vmatprep.mubr.f32.mxu0 0.0
        %846 = vmatmul.mubr.f32.gmra.mrb[0].mxu0 %v597
        %v847 = vpop.f32.mrb[0].mxu0
        %v848 = vadd.f32 0.0, %v847
        %v849 = vpop.f32.mrb[0].mxu0
        %850 = vmatprep.mubr.f32.mxu0 0.0
        %851 = vmatmul.mubr.f32.gmra.mrb[0].mxu0 %v598
        %v852 = vpop.f32.mrb[0].mxu0
        %v853 = vadd.f32 0.0, %v852
        %v854 = vpop.f32.mrb[0].mxu0
        %855 = vmatprep.mubr.f32.mxu0 0.0
        %856 = vmatmul.mubr.f32.gmra.mrb[0].mxu0 %v599
        %v857 = vpop.f32.mrb[0].mxu0
        %v858 = vadd.f32 0.0, %v857
        %v859 = vpop.f32.mrb[0].mxu0
        %860 = vmatprep.mubr.f32.mxu0 0.0
        %861 = vmatmul.mubr.f32.gmra.mrb[0].mxu0 %v600
        %v862 = vpop.f32.mrb[0].mxu0
        %v863 = vadd.f32 0.0, %v862
        %v864 = vpop.f32.mrb[0].mxu0
        %865 = vmatprep.mubr.f32.mxu0 0.0
        %866 = vmatmul.mubr.f32.gmra.mrb[0].mxu0 %v601
        %v867 = vpop.f32.mrb[0].mxu0
        %v868 = vadd.f32 0.0, %v867
        %v869 = vpop.f32.mrb[0].mxu0
        %870 = vmatprep.mubr.f32.mxu0 0.0
        %871 = vmatmul.mubr.f32.gmra.mrb[0].mxu0 %v602
        %v872 = vpop.f32.mrb[0].mxu0
        %v873 = vadd.f32 0.0, %v872
        %v874 = vpop.f32.mrb[0].mxu0
        %875 = vdwg.mxu0
        %v876 = vadd.f32 %v603, %v718
        %v877 = vadd.f32 %v604, %v723
        %v878 = vadd.f32 %v605, %v728
        %v879 = vadd.f32 %v606, %v733
        %v880 = vadd.f32 %v607, %v738
        %v881 = vadd.f32 %v608, %v743
        %v882 = vadd.f32 %v609, %v748
        %v883 = vadd.f32 %v610, %v753
        %v884 = vadd.f32 %v611, %v758
        %v885 = vadd.f32 %v612, %v763
        %v886 = vadd.f32 %v613, %v768
        %v887 = vadd.f32 %v614, %v773
        %v888 = vadd.f32 %v615, %v778
        %v889 = vadd.f32 %v616, %v783
        %v890 = vadd.f32 %v617, %v788
        %v891 = vadd.f32 %v618, %v793
        %v892 = vadd.f32 %v619, %v798
        %v893 = vadd.f32 %v620, %v803
        %v894 = vadd.f32 %v621, %v808
        %v895 = vadd.f32 %v622, %v813
        %v896 = vadd.f32 %v623, %v818
        %v897 = vadd.f32 %v624, %v823
        %v898 = vadd.f32 %v625, %v828
        %v899 = vadd.f32 %v626, %v833
        %v900 = vadd.f32 %v627, %v838
        %v901 = vadd.f32 %v628, %v843
        %v902 = vadd.f32 %v629, %v848
        %v903 = vadd.f32 %v630, %v853
        %v904 = vadd.f32 %v631, %v858
        %v905 = vadd.f32 %v632, %v863
        %v906 = vadd.f32 %v633, %v868
        %v907 = vadd.f32 %v634, %v873
        %908 = vst [vmem:[#allocation2] sm:$0xff] %v876
        %909 = vst [vmem:[#allocation2 + $0x8] sm:$0xff] %v877
        %910 = vst [vmem:[#allocation2 + $0x10] sm:$0xff] %v878
        %911 = vst [vmem:[#allocation2 + $0x18] sm:$0xff] %v879
        %912 = vst [vmem:[#allocation2 + $0x20] sm:$0xff] %v880
        %913 = vst [vmem:[#allocation2 + $0x28] sm:$0xff] %v881
        %914 = vst [vmem:[#allocation2 + $0x30] sm:$0xff] %v882
        %915 = vst [vmem:[#allocation2 + $0x38] sm:$0xff] %v883
        %916 = vst [vmem:[#allocation2 + $0x40] sm:$0xff] %v884
        %917 = vst [vmem:[#allocation2 + $0x48] sm:$0xff] %v885
        %918 = vst [vmem:[#allocation2 + $0x50] sm:$0xff] %v886
        %919 = vst [vmem:[#allocation2 + $0x58] sm:$0xff] %v887
        %920 = vst [vmem:[#allocation2 + $0x60] sm:$0xff] %v888
        %921 = vst [vmem:[#allocation2 + $0x68] sm:$0xff] %v889
        %922 = vst [vmem:[#allocation2 + $0x70] sm:$0xff] %v890
        %923 = vst [vmem:[#allocation2 + $0x78] sm:$0xff] %v891
        %924 = vst [vmem:[#allocation2 + $0x80] sm:$0xff] %v892
        %925 = vst [vmem:[#allocation2 + $0x88] sm:$0xff] %v893
        %926 = vst [vmem:[#allocation2 + $0x90] sm:$0xff] %v894
        %927 = vst [vmem:[#allocation2 + $0x98] sm:$0xff] %v895
        %928 = vst [vmem:[#allocation2 + $0xa0] sm:$0xff] %v896
        %929 = vst [vmem:[#allocation2 + $0xa8] sm:$0xff] %v897
        %930 = vst [vmem:[#allocation2 + $0xb0] sm:$0xff] %v898
        %931 = vst [vmem:[#allocation2 + $0xb8] sm:$0xff] %v899
        %932 = vst [vmem:[#allocation2 + $0xc0] sm:$0xff] %v900
        %933 = vst [vmem:[#allocation2 + $0xc8] sm:$0xff] %v901
        %934 = vst [vmem:[#allocation2 + $0xd0] sm:$0xff] %v902
        %935 = vst [vmem:[#allocation2 + $0xd8] sm:$0xff] %v903
        %936 = vst [vmem:[#allocation2 + $0xe0] sm:$0xff] %v904
        %937 = vst [vmem:[#allocation2 + $0xe8] sm:$0xff] %v905
        %938 = vst [vmem:[#allocation2 + $0xf0] sm:$0xff] %v906
        %939 = vst [vmem:[#allocation2 + $0xf8] sm:$0xff] %v907
        %p940 = scmp.eq.s32.totalorder %s20, 1
        // Predicated region
        $region79: #{dense_block_forward.6} parent=69 // pred_check
          %p941 = pneg %p940
        $region80: #{dense_block_forward.6} parent=69 // pred_check_branch
          %943 = sbr.rel (%p941) target = $region82
        $region81: #{dense_block_forward.6} parent=69 // pred_region
          %v944 = vld [vmem:[#allocation2] sm:$0xff]
          %v945 = vld [vmem:[#allocation2 + $0x8] sm:$0xff]
          %v946 = vld [vmem:[#allocation2 + $0x10] sm:$0xff]
          %v947 = vld [vmem:[#allocation2 + $0x18] sm:$0xff]
          %v948 = vld [vmem:[#allocation2 + $0x20] sm:$0xff]
          %v949 = vld [vmem:[#allocation2 + $0x28] sm:$0xff]
          %v950 = vld [vmem:[#allocation2 + $0x30] sm:$0xff]
          %v951 = vld [vmem:[#allocation2 + $0x38] sm:$0xff]
          %v952 = vld [vmem:[#allocation2 + $0x40] sm:$0xff]
          %v953 = vld [vmem:[#allocation2 + $0x48] sm:$0xff]
          %v954 = vld [vmem:[#allocation2 + $0x50] sm:$0xff]
          %v955 = vld [vmem:[#allocation2 + $0x58] sm:$0xff]
          %v956 = vld [vmem:[#allocation2 + $0x60] sm:$0xff]
          %v957 = vld [vmem:[#allocation2 + $0x68] sm:$0xff]
          %v958 = vld [vmem:[#allocation2 + $0x70] sm:$0xff]
          %v959 = vld [vmem:[#allocation2 + $0x78] sm:$0xff]
          %v960 = vld [vmem:[#allocation2 + $0x80] sm:$0xff]
          %v961 = vld [vmem:[#allocation2 + $0x88] sm:$0xff]
          %v962 = vld [vmem:[#allocation2 + $0x90] sm:$0xff]
          %v963 = vld [vmem:[#allocation2 + $0x98] sm:$0xff]
          %v964 = vld [vmem:[#allocation2 + $0xa0] sm:$0xff]
          %v965 = vld [vmem:[#allocation2 + $0xa8] sm:$0xff]
          %v966 = vld [vmem:[#allocation2 + $0xb0] sm:$0xff]
          %v967 = vld [vmem:[#allocation2 + $0xb8] sm:$0xff]
          %v968 = vld [vmem:[#allocation2 + $0xc0] sm:$0xff]
          %v969 = vld [vmem:[#allocation2 + $0xc8] sm:$0xff]
          %v970 = vld [vmem:[#allocation2 + $0xd0] sm:$0xff]
          %v971 = vld [vmem:[#allocation2 + $0xd8] sm:$0xff]
          %v972 = vld [vmem:[#allocation2 + $0xe0] sm:$0xff]
          %v973 = vld [vmem:[#allocation2 + $0xe8] sm:$0xff]
          %v974 = vld [vmem:[#allocation2 + $0xf0] sm:$0xff]
          %v975 = vld [vmem:[#allocation2 + $0xf8] sm:$0xff]
          %976 = vst [vmem:[%s423] sm:$0xff] %v944
          %977 = vst [vmem:[%s423 + $0x8] sm:$0xff] %v945
          %978 = vst [vmem:[%s423 + $0x10] sm:$0xff] %v946
          %979 = vst [vmem:[%s423 + $0x18] sm:$0xff] %v947
          %980 = vst [vmem:[%s423 + $0x20] sm:$0xff] %v948
          %981 = vst [vmem:[%s423 + $0x28] sm:$0xff] %v949
          %982 = vst [vmem:[%s423 + $0x30] sm:$0xff] %v950
          %983 = vst [vmem:[%s423 + $0x38] sm:$0xff] %v951
          %984 = vst [vmem:[%s423 + $0x40] sm:$0xff] %v952
          %985 = vst [vmem:[%s423 + $0x48] sm:$0xff] %v953
          %986 = vst [vmem:[%s423 + $0x50] sm:$0xff] %v954
          %987 = vst [vmem:[%s423 + $0x58] sm:$0xff] %v955
          %988 = vst [vmem:[%s423 + $0x60] sm:$0xff] %v956
          %989 = vst [vmem:[%s423 + $0x68] sm:$0xff] %v957
          %990 = vst [vmem:[%s423 + $0x70] sm:$0xff] %v958
          %991 = vst [vmem:[%s423 + $0x78] sm:$0xff] %v959
          %992 = vst [vmem:[%s423 + $0x80] sm:$0xff] %v960
          %993 = vst [vmem:[%s423 + $0x88] sm:$0xff] %v961
          %994 = vst [vmem:[%s423 + $0x90] sm:$0xff] %v962
          %995 = vst [vmem:[%s423 + $0x98] sm:$0xff] %v963
          %996 = vst [vmem:[%s423 + $0xa0] sm:$0xff] %v964
          %997 = vst [vmem:[%s423 + $0xa8] sm:$0xff] %v965
          %998 = vst [vmem:[%s423 + $0xb0] sm:$0xff] %v966
          %999 = vst [vmem:[%s423 + $0xb8] sm:$0xff] %v967
          %1000 = vst [vmem:[%s423 + $0xc0] sm:$0xff] %v968
          %1001 = vst [vmem:[%s423 + $0xc8] sm:$0xff] %v969
          %1002 = vst [vmem:[%s423 + $0xd0] sm:$0xff] %v970
          %1003 = vst [vmem:[%s423 + $0xd8] sm:$0xff] %v971
          %1004 = vst [vmem:[%s423 + $0xe0] sm:$0xff] %v972
          %1005 = vst [vmem:[%s423 + $0xe8] sm:$0xff] %v973
          %1006 = vst [vmem:[%s423 + $0xf0] sm:$0xff] %v974
          %1007 = vst [vmem:[%s423 + $0xf8] sm:$0xff] %v975
        $region82: #{dense_block_forward.6} parent=69 // pred_fallthru
          _
        %s1008 = smul.u32 32, %s19
        %p1009 = scmp.lt.s32.totalorder %s1008, 63
        %s1010 = scalar_select %p1009, %s1008, 63
        %s1011 = smul.addr %s1010, 8
        %s1012 = scalar_lea.vmem %s4, %s1011
        // Predicated region
        $region83: #{dense_block_forward.6} parent=69 // pred_check
          %p1013 = pneg %p151
        $region84: #{dense_block_forward.6} parent=69 // pred_check_branch
          %1015 = sbr.rel (%p1013) target = $region86
        $region85: #{dense_block_forward.6} parent=69 // pred_region
          %s1016 = smul.u32 32, %s19
        $region86: #{dense_block_forward.6} parent=69 // pred_fallthru
          _
      $region70: #{dense_block_forward.6} parent=5 // pred_fallthru
        _
      %p1017 = scmp.le.s32.totalorder 2, %s10
      // Predicated region
      $region87: #{dense_block_forward.6} parent=5 // pred_check
        %p1018 = pneg %p1017
      $region88: #{dense_block_forward.6} parent=5 // pred_check_branch
        %1020 = sbr.rel (%p1018) target = $region90
      $region89: #{dense_block_forward.6} parent=5 // pred_region
        %s1021 = ssub.s32 %s10, 2
        // Predicated region
        $region91: #{dense_block_forward.6} parent=89 // pred_check
          %p1022 = pneg %p157
        $region92: #{dense_block_forward.6} parent=89 // pred_check_branch
          %1024 = sbr.rel (%p1022) target = $region94
        $region93: #{dense_block_forward.6} parent=89 // pred_region
          %s1025 = smul.u32 32, %s21
          %p1026 = scmp.lt.s32.totalorder %s1025, 63
          %s1027 = scalar_select %p1026, %s1025, 63
          %s1028 = smul.addr %s1027, 8
          %s1029 = scalar_lea.vmem %s4, %s1028
        $region94: #{dense_block_forward.6} parent=89 // pred_fallthru
          _
      $region90: #{dense_block_forward.6} parent=5 // pred_fallthru
        _
    $region6: #{dense_block_forward.6} parent=1 // loop_footer
      %s14 = sadd.s32 1, %s10
    $region7: #{dense_block_forward.6} parent=1 // loop_footer_branch
      %9 = sbr.rel target = $region3
    $region8: #{dense_block_forward.6} parent=1 // loop_exit
      _

// kernel: dense_block_forward.5
$region0: #{dense_block_forward.5}
  #allocation0 [shape = 'u32[]', space=smem, size = 0x4, offset = 0x4, fixed_abs, tag = 'smem constant byte address 0x4 - core index']
  #allocation1 [shape = 'u32[144,128]{1,0:T(1,128)}', space=vmem, size = 0x12000, scoped, tag = 'internal scratch']
  #allocation2 [shape = 'f32[18,32,128]{2,1,0:T(8,128)}', space=vmem, size = 0x48000, scoped, tag = 'scratch operand']
  %s0 = inlined_call_operand.vmem [shape: f32[2,16,16,128], index: 0, kind: input, shape index: {}]
  %s1 = inlined_call_operand.vmem [shape: f32[1,128], index: 1, kind: input, shape index: {}]
  %s2 = inlined_call_operand.vmem [shape: f32[1,128], index: 2, kind: input, shape index: {}]
  %s3 = inlined_call_operand.vmem [shape: f32[9,128,128], index: 3, kind: input, shape index: {}]
  %s4 = inlined_call_operand.vmem [shape: f32[2,16,16,384], index: 4, kind: input, shape index: {}, may-alias: {4,5}]
  %s5 = inlined_call_operand.vmem [shape: f32[2,16,16,384], index: 5, kind: output, shape index: {}, may-alias: {4,5}]
  %s6 = sld [smem:[#allocation0]]
  $region83: #{dense_block_forward.5} parent=0
    _
  %s8 = ssub.s32 1, %s6
  %s9 = scalar_select 0, %s8, %s6
  $region1: #{dense_block_forward.5} parent=0
    #allocation3 [shape = 'u8[262144]{0}', space=vmem, size = 0x40000, scoped, tag = 'output window, operand 0']
    loop: start=0, step=1, limit=4
    $region2: #{dense_block_forward.5} parent=1 // loop_pre_header
      _
    $region3: #{dense_block_forward.5} parent=1 // loop_header
      %s11 = sphi 0, %s15
      %p12 = scmp.ge.s32.totalorder %s11, 4
      %s21 = sphi 0, %s23
      %s24 = sphi 0, %s21
      %s25 = sphi 0, %s24
      %s41 = sphi 0, %s25
      %s45 = sphi 0, %s45
      %s47 = sphi 0, %s45
      %s48 = sphi 0, %s47
      %s62 = sphi 0, %s48
      %s66 = sphi 0, %s66
      %s68 = sphi 0, %s66
      %s69 = sphi 0, %s68
      %s83 = sphi 0, %s69
      %s87 = sphi 0, %s87
      %s89 = sphi 0, %s87
      %s90 = sphi 0, %s89
      %s104 = sphi 0, %s90
      %s110 = sphi 0, %s112
      %s113 = sphi 0, %s110
      %s114 = sphi 0, %s113
      %s130 = sphi 0, %s114
    $region4: #{dense_block_forward.5} parent=1 // loop_header_branch
      %14 = sbr.rel (%p12) target = $region8
    $region5: #{dense_block_forward.5} parent=1 // loop_body
      %s16 = ssub.s32 %s11, 1
      %s17 = ssub.s32 %s11, 2
      %s18 = sadd.s32 %s11, 1
      %s19 = ssub.s32 %s11, %s18
      %p20 = scmp.eq.s32.totalorder %s19, 0
      %s22 = sadd.s32 %s21, 1
      %s23 = scalar_select %p20, %s21, %s22
      %p26 = pneg %p20
      %p27 = scmp.eq.s32.totalorder %s11, 1
      %p28 = por %p26, %p27
      %p29 = scmp.ne.s32.totalorder %s21, %s24
      %p30 = scmp.eq.s32.totalorder %s11, 0
      %p31 = por %p29, %p30
      %p32 = scmp.ne.s32.totalorder %s21, %s24
      %p33 = scmp.eq.s32.totalorder %s16, 1
      %p34 = por %p32, %p33
      %p35 = scmp.ne.s32.totalorder %s24, %s25
      %p36 = scmp.eq.s32.totalorder %s16, 0
      %p37 = por %p35, %p36
      %p38 = scmp.ne.s32.totalorder %s24, %s25
      %p39 = scmp.eq.s32.totalorder %s17, 1
      %p40 = por %p38, %p39
      %p42 = scmp.ne.s32.totalorder %s25, %s41
      %p43 = scmp.eq.s32.totalorder %s17, 0
      %p44 = por %p42, %p43
      %s46 = sadd.s32 %s45, 1
      %p49 = scmp.eq.s32.totalorder %s11, 1
      %p50 = scmp.ne.s32.totalorder %s45, %s47
      %p51 = scmp.eq.s32.totalorder %s11, 0
      %p52 = por %p50, %p51
      %p53 = scmp.ne.s32.totalorder %s45, %s47
      %p54 = scmp.eq.s32.totalorder %s16, 1
      %p55 = por %p53, %p54
      %p56 = scmp.ne.s32.totalorder %s47, %s48
      %p57 = scmp.eq.s32.totalorder %s16, 0
      %p58 = por %p56, %p57
      %p59 = scmp.ne.s32.totalorder %s47, %s48
      %p60 = scmp.eq.s32.totalorder %s17, 1
      %p61 = por %p59, %p60
      %p63 = scmp.ne.s32.totalorder %s48, %s62
      %p64 = scmp.eq.s32.totalorder %s17, 0
      %p65 = por %p63, %p64
      %s67 = sadd.s32 %s66, 1
      %p70 = scmp.eq.s32.totalorder %s11, 1
      %p71 = scmp.ne.s32.totalorder %s66, %s68
      %p72 = scmp.eq.s32.totalorder %s11, 0
      %p73 = por %p71, %p72
      %p74 = scmp.ne.s32.totalorder %s66, %s68
      %p75 = scmp.eq.s32.totalorder %s16, 1
      %p76 = por %p74, %p75
      %p77 = scmp.ne.s32.totalorder %s68, %s69
      %p78 = scmp.eq.s32.totalorder %s16, 0
      %p79 = por %p77, %p78
      %p80 = scmp.ne.s32.totalorder %s68, %s69
      %p81 = scmp.eq.s32.totalorder %s17, 1
      %p82 = por %p80, %p81
      %p84 = scmp.ne.s32.totalorder %s69, %s83
      %p85 = scmp.eq.s32.totalorder %s17, 0
      %p86 = por %p84, %p85
      %s88 = sadd.s32 %s87, 1
      %p91 = scmp.eq.s32.totalorder %s11, 1
      %p92 = scmp.ne.s32.totalorder %s87, %s89
      %p93 = scmp.eq.s32.totalorder %s11, 0
      %p94 = por %p92, %p93
      %p95 = scmp.ne.s32.totalorder %s87, %s89
      %p96 = scmp.eq.s32.totalorder %s16, 1
      %p97 = por %p95, %p96
      %p98 = scmp.ne.s32.totalorder %s89, %s90
      %p99 = scmp.eq.s32.totalorder %s16, 0
      %p100 = por %p98, %p99
      %p101 = scmp.ne.s32.totalorder %s89, %s90
      %p102 = scmp.eq.s32.totalorder %s17, 1
      %p103 = por %p101, %p102
      %p105 = scmp.ne.s32.totalorder %s90, %s104
      %p106 = scmp.eq.s32.totalorder %s17, 0
      %p107 = por %p105, %p106
      %s108 = ssub.s32 %s11, %s18
      %p109 = scmp.eq.s32.totalorder %s108, 0
      %s111 = sadd.s32 %s110, 1
      %s112 = scalar_select %p109, %s110, %s111
      %p115 = pneg %p109
      %p116 = scmp.eq.s32.totalorder %s11, 1
      %p117 = por %p115, %p116
      %p118 = scmp.ne.s32.totalorder %s110, %s113
      %p119 = scmp.eq.s32.totalorder %s11, 0
      %p120 = por %p118, %p119
      %p121 = scmp.ne.s32.totalorder %s110, %s113
      %p122 = scmp.eq.s32.totalorder %s16, 1
      %p123 = por %p121, %p122
      %p124 = scmp.ne.s32.totalorder %s113, %s114
      %p125 = scmp.eq.s32.totalorder %s16, 0
      %p126 = por %p124, %p125
      %p127 = scmp.ne.s32.totalorder %s113, %s114
      %p128 = scmp.eq.s32.totalorder %s17, 1
      %p129 = por %p127, %p128
      %p131 = scmp.ne.s32.totalorder %s114, %s130
      %p132 = scmp.eq.s32.totalorder %s17, 0
      %p133 = por %p131, %p132
      %p134 = scmp.le.s32.totalorder 1, %s11
      %p135 = scmp.lt.s32.totalorder %s11, 3
      %p136 = pnand %p134, %p135
      %p137 = pneg %p136
      // Predicated region
      $region9: #{dense_block_forward.5} parent=5 // pred_check
        _
      $region10: #{dense_block_forward.5} parent=5 // pred_check_branch
        %139 = sbr.rel (%p136) target = $region12
      $region11: #{dense_block_forward.5} parent=5 // pred_region
        %s140 = ssub.s32 %s11, 1
        // Predicated region
        $region13: #{dense_block_forward.5} parent=11 // pred_check
          %p141 = pneg %p58
        $region14: #{dense_block_forward.5} parent=11 // pred_check_branch
          %143 = sbr.rel (%p141) target = $region16
        $region15: #{dense_block_forward.5} parent=11 // pred_region
          _
        $region16: #{dense_block_forward.5} parent=11 // pred_fallthru
          _
        // Predicated region
        $region17: #{dense_block_forward.5} parent=11 // pred_check
          %p144 = pneg %p79
        $region18: #{dense_block_forward.5} parent=11 // pred_check_branch
          %146 = sbr.rel (%p144) target = $region20
        $region19: #{dense_block_forward.5} parent=11 // pred_region
          _
        $region20: #{dense_block_forward.5} parent=11 // pred_fallthru
          _
        // Predicated region
        $region21: #{dense_block_forward.5} parent=11 // pred_check
          %p147 = pneg %p100
        $region22: #{dense_block_forward.5} parent=11 // pred_check_branch
          %149 = sbr.rel (%p147) target = $region24
        $region23: #{dense_block_forward.5} parent=11 // pred_region
          _
        $region24: #{dense_block_forward.5} parent=11 // pred_fallthru
          _
      $region12: #{dense_block_forward.5} parent=5 // pred_fallthru
        _
      %p150 = scmp.lt.s32.totalorder %s11, 2
      // Predicated region
      $region25: #{dense_block_forward.5} parent=5 // pred_check
        %p151 = pneg %p150
      $region26: #{dense_block_forward.5} parent=5 // pred_check_branch
        %153 = sbr.rel (%p151) target = $region28
      $region27: #{dense_block_forward.5} parent=5 // pred_region
        // Predicated region
        $region29: #{dense_block_forward.5} parent=27 // pred_check
          %p154 = pneg %p31
        $region30: #{dense_block_forward.5} parent=27 // pred_check_branch
          %156 = sbr.rel (%p154) target = $region32
        $region31: #{dense_block_forward.5} parent=27 // pred_region
          %p157 = scmp.lt.s32.totalorder %s11, 1
          %s158 = scalar_select %p157, %s11, 1
          %s159 = smul.addr %s158, 32
          %s160 = smul.addr %s159, 8
          %s161 = scalar_lea.vmem %s0, %s160
        $region32: #{dense_block_forward.5} parent=27 // pred_fallthru
          _
      $region28: #{dense_block_forward.5} parent=5 // pred_fallthru
        _
      %p162 = scmp.le.s32.totalorder 1, %s11
      %p163 = scmp.lt.s32.totalorder %s11, 3
      %p164 = pnand %p162, %p163
      %p165 = pneg %p164
      // Predicated region
      $region33: #{dense_block_forward.5} parent=5 // pred_check
        _
      $region34: #{dense_block_forward.5} parent=5 // pred_check_branch
        %167 = sbr.rel (%p164) target = $region36
      $region35: #{dense_block_forward.5} parent=5 // pred_region
        %s168 = ssub.s32 %s11, 1
        %p169 = scmp.lt.s32.totalorder %s16, 1
        %s170 = scalar_select %p169, %s16, 1
        %s171 = smul.addr %s170, 32
        %s172 = smul.addr %s171, 8
        %s173 = scalar_lea.vmem %s0, %s172
        %p174 = pneg %p37
        %p175 = pneg %p34
        %p176 = pneg %p58
        %p177 = pneg %p55
        %p178 = pneg %p79
        %p179 = pneg %p76
        %p180 = pneg %p100
        %p181 = pneg %p97
        %p182 = pneg %p126
        %p183 = pneg %p123
        %s184 = sand.u32 %s113, 1
        %s185 = sand.u32 %s113, 1
        %s186 = smul.addr %s185, 256
        %s187 = scalar_lea.vmem [#allocation3], %s186
        %p188 = scmp.lt.s32.totalorder %s16, 1
        %s189 = scalar_select %p188, %s16, 1
        %s190 = smul.addr %s189, 32
        %s191 = smul.addr %s190, 8
        %s192 = scalar_lea.vmem %s0, %s191
        %193 = vst [vmem:[#allocation2] sm:$0xff] 0.0
        %194 = vst [vmem:[#allocation2 + $0x8] sm:$0xff] 0.0
        %195 = vst [vmem:[#allocation2 + $0x10] sm:$0xff] 0.0
        %196 = vst [vmem:[#allocation2 + $0x18] sm:$0xff] 0.0
        %197 = vst [vmem:[#allocation2 + $0x20] sm:$0xff] 0.0
        %198 = vst [vmem:[#allocation2 + $0x28] sm:$0xff] 0.0
        %199 = vst [vmem:[#allocation2 + $0x30] sm:$0xff] 0.0
        %200 = vst [vmem:[#allocation2 + $0x38] sm:$0xff] 0.0
        %201 = vst [vmem:[#allocation2 + $0x40] sm:$0xff] 0.0
        %202 = vst [vmem:[#allocation2 + $0x48] sm:$0xff] 0.0
        %203 = vst [vmem:[#allocation2 + $0x50] sm:$0xff] 0.0
        %204 = vst [vmem:[#allocation2 + $0x58] sm:$0xff] 0.0
        %205 = vst [vmem:[#allocation2 + $0x60] sm:$0xff] 0.0
        %206 = vst [vmem:[#allocation2 + $0x68] sm:$0xff] 0.0
        %207 = vst [vmem:[#allocation2 + $0x70] sm:$0xff] 0.0
        %208 = vst [vmem:[#allocation2 + $0x78] sm:$0xff] 0.0
        %209 = vst [vmem:[#allocation2 + $0x80] sm:$0xff] 0.0
        %210 = vst [vmem:[#allocation2 + $0x88] sm:$0xff] 0.0
        %211 = vst [vmem:[#allocation2 + $0x90] sm:$0xff] 0.0
        %212 = vst [vmem:[#allocation2 + $0x98] sm:$0xff] 0.0
        %213 = vst [vmem:[#allocation2 + $0xa0] sm:$0xff] 0.0
        %214 = vst [vmem:[#allocation2 + $0xa8] sm:$0xff] 0.0
        %215 = vst [vmem:[#allocation2 + $0xb0] sm:$0xff] 0.0
        %216 = vst [vmem:[#allocation2 + $0xb8] sm:$0xff] 0.0
        %217 = vst [vmem:[#allocation2 + $0xc0] sm:$0xff] 0.0
        %218 = vst [vmem:[#allocation2 + $0xc8] sm:$0xff] 0.0
        %219 = vst [vmem:[#allocation2 + $0xd0] sm:$0xff] 0.0
        %220 = vst [vmem:[#allocation2 + $0xd8] sm:$0xff] 0.0
        %221 = vst [vmem:[#allocation2 + $0xe0] sm:$0xff] 0.0
        %222 = vst [vmem:[#allocation2 + $0xe8] sm:$0xff] 0.0
        %223 = vst [vmem:[#allocation2 + $0xf0] sm:$0xff] 0.0
        %224 = vst [vmem:[#allocation2 + $0xf8] sm:$0xff] 0.0
        %225 = vst [vmem:[#allocation2 + $0x100] sm:$0xff] 0.0
        %226 = vst [vmem:[#allocation2 + $0x108] sm:$0xff] 0.0
        %227 = vst [vmem:[#allocation2 + $0x110] sm:$0xff] 0.0
        %228 = vst [vmem:[#allocation2 + $0x118] sm:$0xff] 0.0
        %229 = vst [vmem:[#allocation2 + $0x120] sm:$0xff] 0.0
        %230 = vst [vmem:[#allocation2 + $0x128] sm:$0xff] 0.0
        %231 = vst [vmem:[#allocation2 + $0x130] sm:$0xff] 0.0
        %232 = vst [vmem:[#allocation2 + $0x138] sm:$0xff] 0.0
        %233 = vst [vmem:[#allocation2 + $0x140] sm:$0xff] 0.0
        %234 = vst [vmem:[#allocation2 + $0x148] sm:$0xff] 0.0
        %235 = vst [vmem:[#allocation2 + $0x150] sm:$0xff] 0.0
        %236 = vst [vmem:[#allocation2 + $0x158] sm:$0xff] 0.0
        %237 = vst [vmem:[#allocation2 + $0x160] sm:$0xff] 0.0
        %238 = vst [vmem:[#allocation2 + $0x168] sm:$0xff] 0.0
        %239 = vst [vmem:[#allocation2 + $0x170] sm:$0xff] 0.0
        %240 = vst [vmem:[#allocation2 + $0x178] sm:$0xff] 0.0
        %241 = vst [vmem:[#allocation2 + $0x180] sm:$0xff] 0.0
        %242 = vst [vmem:[#allocation2 + $0x188] sm:$0xff] 0.0
        %243 = vst [vmem:[#allocation2 + $0x190] sm:$0xff] 0.0
        %244 = vst [vmem:[#allocation2 + $0x198] sm:$0xff] 0.0
        %245 = vst [vmem:[#allocation2 + $0x1a0] sm:$0xff] 0.0
        %246 = vst [vmem:[#allocation2 + $0x1a8] sm:$0xff] 0.0
        %247 = vst [vmem:[#allocation2 + $0x1b0] sm:$0xff] 0.0
        %248 = vst [vmem:[#allocation2 + $0x1b8] sm:$0xff] 0.0
        %249 = vst [vmem:[#allocation2 + $0x1c0] sm:$0xff] 0.0
        %250 = vst [vmem:[#allocation2 + $0x1c8] sm:$0xff] 0.0
        %251 = vst [vmem:[#allocation2 + $0x1d0] sm:$0xff] 0.0
        %252 = vst [vmem:[#allocation2 + $0x1d8] sm:$0xff] 0.0
        %253 = vst [vmem:[#allocation2 + $0x1e0] sm:$0xff] 0.0
        %254 = vst [vmem:[#allocation2 + $0x1e8] sm:$0xff] 0.0
        %255 = vst [vmem:[#allocation2 + $0x1f0] sm:$0xff] 0.0
        %256 = vst [vmem:[#allocation2 + $0x1f8] sm:$0xff] 0.0
        %257 = vst [vmem:[#allocation2 + $0x200] sm:$0xff] 0.0
        %258 = vst [vmem:[#allocation2 + $0x208] sm:$0xff] 0.0
        %259 = vst [vmem:[#allocation2 + $0x210] sm:$0xff] 0.0
        %260 = vst [vmem:[#allocation2 + $0x218] sm:$0xff] 0.0
        %261 = vst [vmem:[#allocation2 + $0x220] sm:$0xff] 0.0
        %262 = vst [vmem:[#allocation2 + $0x228] sm:$0xff] 0.0
        %263 = vst [vmem:[#allocation2 + $0x230] sm:$0xff] 0.0
        %264 = vst [vmem:[#allocation2 + $0x238] sm:$0xff] 0.0
        %v265 = vld [vmem:[%s192] sm:$0xff]
        %v266 = vld [vmem:[%s192 + $0x8] sm:$0xff]
        %v267 = vld [vmem:[%s192 + $0x10] sm:$0xff]
        %v268 = vld [vmem:[%s192 + $0x18] sm:$0xff]
        %v269 = vld [vmem:[%s192 + $0x20] sm:$0xff]
        %v270 = vld [vmem:[%s192 + $0x28] sm:$0xff]
        %v271 = vld [vmem:[%s192 + $0x30] sm:$0xff]
        %v272 = vld [vmem:[%s192 + $0x38] sm:$0xff]
        %v273 = vld [vmem:[%s192 + $0x40] sm:$0xff]
        %v274 = vld [vmem:[%s192 + $0x48] sm:$0xff]
        %v275 = vld [vmem:[%s192 + $0x50] sm:$0xff]
        %v276 = vld [vmem:[%s192 + $0x58] sm:$0xff]
        %v277 = vld [vmem:[%s192 + $0x60] sm:$0xff]
        %v278 = vld [vmem:[%s192 + $0x68] sm:$0xff]
        %v279 = vld [vmem:[%s192 + $0x70] sm:$0xff]
        %v280 = vld [vmem:[%s192 + $0x78] sm:$0xff]
        %v281 = vld [vmem:[%s192 + $0x80] sm:$0xff]
        %v282 = vld [vmem:[%s192 + $0x88] sm:$0xff]
        %v283 = vld [vmem:[%s192 + $0x90] sm:$0xff]
        %v284 = vld [vmem:[%s192 + $0x98] sm:$0xff]
        %v285 = vld [vmem:[%s192 + $0xa0] sm:$0xff]
        %v286 = vld [vmem:[%s192 + $0xa8] sm:$0xff]
        %v287 = vld [vmem:[%s192 + $0xb0] sm:$0xff]
        %v288 = vld [vmem:[%s192 + $0xb8] sm:$0xff]
        %v289 = vld [vmem:[%s192 + $0xc0] sm:$0xff]
        %v290 = vld [vmem:[%s192 + $0xc8] sm:$0xff]
        %v291 = vld [vmem:[%s192 + $0xd0] sm:$0xff]
        %v292 = vld [vmem:[%s192 + $0xd8] sm:$0xff]
        %v293 = vld [vmem:[%s192 + $0xe0] sm:$0xff]
        %v294 = vld [vmem:[%s192 + $0xe8] sm:$0xff]
        %v295 = vld [vmem:[%s192 + $0xf0] sm:$0xff]
        %v296 = vld [vmem:[%s192 + $0xf8] sm:$0xff]
        %v297 = vld [vmem:[%s1] sm:$0x1]
        %v299 = vlaneseq
        %v300 = vshrl.u32 %v299, 7
        %v301 = vsub.s32 0, %v300
        %v302 = vrot.slane %v297, %v301
        %v304 = vmul.f32 %v265, %v302
        %v305 = vmul.f32 %v266, %v302
        %v306 = vmul.f32 %v267, %v302
        %v307 = vmul.f32 %v268, %v302
        %v308 = vmul.f32 %v269, %v302
        %v309 = vmul.f32 %v270, %v302
        %v310 = vmul.f32 %v271, %v302
        %v311 = vmul.f32 %v272, %v302
        %v312 = vmul.f32 %v273, %v302
        %v313 = vmul.f32 %v274, %v302
        %v314 = vmul.f32 %v275, %v302
        %v315 = vmul.f32 %v276, %v302
        %v316 = vmul.f32 %v277, %v302
        %v317 = vmul.f32 %v278, %v302
        %v318 = vmul.f32 %v279, %v302
        %v319 = vmul.f32 %v280, %v302
        %v320 = vmul.f32 %v281, %v302
        %v321 = vmul.f32 %v282, %v302
        %v322 = vmul.f32 %v283, %v302
        %v323 = vmul.f32 %v284, %v302
        %v324 = vmul.f32 %v285, %v302
        %v325 = vmul.f32 %v286, %v302
        %v326 = vmul.f32 %v287, %v302
        %v327 = vmul.f32 %v288, %v302
        %v328 = vmul.f32 %v289, %v302
        %v329 = vmul.f32 %v290, %v302
        %v330 = vmul.f32 %v291, %v302
        %v331 = vmul.f32 %v292, %v302
        %v332 = vmul.f32 %v293, %v302
        %v333 = vmul.f32 %v294, %v302
        %v334 = vmul.f32 %v295, %v302
        %v335 = vmul.f32 %v296, %v302
        %v336 = vld [vmem:[%s2] sm:$0x1]
        %v338 = vlaneseq
        %v339 = vshrl.u32 %v338, 7
        %v340 = vsub.s32 0, %v339
        %v341 = vrot.slane %v336, %v340
        %v343 = vadd.f32 %v304, %v341
        %v344 = vadd.f32 %v305, %v341
        %v345 = vadd.f32 %v306, %v341
        %v346 = vadd.f32 %v307, %v341
        %v347 = vadd.f32 %v308, %v341
        %v348 = vadd.f32 %v309, %v341
        %v349 = vadd.f32 %v310, %v341
        %v350 = vadd.f32 %v311, %v341
        %v351 = vadd.f32 %v312, %v341
        %v352 = vadd.f32 %v313, %v341
        %v353 = vadd.f32 %v314, %v341
        %v354 = vadd.f32 %v315, %v341
        %v355 = vadd.f32 %v316, %v341
        %v356 = vadd.f32 %v317, %v341
        %v357 = vadd.f32 %v318, %v341
        %v358 = vadd.f32 %v319, %v341
        %v359 = vadd.f32 %v320, %v341
        %v360 = vadd.f32 %v321, %v341
        %v361 = vadd.f32 %v322, %v341
        %v362 = vadd.f32 %v323, %v341
        %v363 = vadd.f32 %v324, %v341
        %v364 = vadd.f32 %v325, %v341
        %v365 = vadd.f32 %v326, %v341
        %v366 = vadd.f32 %v327, %v341
        %v367 = vadd.f32 %v328, %v341
        %v368 = vadd.f32 %v329, %v341
        %v369 = vadd.f32 %v330, %v341
        %v370 = vadd.f32 %v331, %v341
        %v371 = vadd.f32 %v332, %v341
        %v372 = vadd.f32 %v333, %v341
        %v373 = vadd.f32 %v334, %v341
        %v374 = vadd.f32 %v335, %v341
        %v375 = vmax.f32 %v343, 0.0
        %v376 = vmax.f32 %v344, 0.0
        %v377 = vmax.f32 %v345, 0.0
        %v378 = vmax.f32 %v346, 0.0
        %v379 = vmax.f32 %v347, 0.0
        %v380 = vmax.f32 %v348, 0.0
        %v381 = vmax.f32 %v349, 0.0
        %v382 = vmax.f32 %v350, 0.0
        %v383 = vmax.f32 %v351, 0.0
        %v384 = vmax.f32 %v352, 0.0
        %v385 = vmax.f32 %v353, 0.0
        %v386 = vmax.f32 %v354, 0.0
        %v387 = vmax.f32 %v355, 0.0
        %v388 = vmax.f32 %v356, 0.0
        %v389 = vmax.f32 %v357, 0.0
        %v390 = vmax.f32 %v358, 0.0
        %v391 = vmax.f32 %v359, 0.0
        %v392 = vmax.f32 %v360, 0.0
        %v393 = vmax.f32 %v361, 0.0
        %v394 = vmax.f32 %v362, 0.0
        %v395 = vmax.f32 %v363, 0.0
        %v396 = vmax.f32 %v364, 0.0
        %v397 = vmax.f32 %v365, 0.0
        %v398 = vmax.f32 %v366, 0.0
        %v399 = vmax.f32 %v367, 0.0
        %v400 = vmax.f32 %v368, 0.0
        %v401 = vmax.f32 %v369, 0.0
        %v402 = vmax.f32 %v370, 0.0
        %v403 = vmax.f32 %v371, 0.0
        %v404 = vmax.f32 %v372, 0.0
        %v405 = vmax.f32 %v373, 0.0
        %v406 = vmax.f32 %v374, 0.0
        %s407 = scalar_lea.vmem [#allocation2], 32
        %408 = vst [vmem:[%s407 + $0x8] sm:$0xff] %v375
        %409 = vst [vmem:[%s407 + $0x10] sm:$0xff] %v376
        %410 = vst [vmem:[%s407 + $0x28] sm:$0xff] %v377
        %411 = vst [vmem:[%s407 + $0x30] sm:$0xff] %v378
        %412 = vst [vmem:[%s407 + $0x48] sm:$0xff] %v379
        %413 = vst [vmem:[%s407 + $0x50] sm:$0xff] %v380
        %414 = vst [vmem:[%s407 + $0x68] sm:$0xff] %v381
        %415 = vst [vmem:[%s407 + $0x70] sm:$0xff] %v382
        %416 = vst [vmem:[%s407 + $0x88] sm:$0xff] %v383
        %417 = vst [vmem:[%s407 + $0x90] sm:$0xff] %v384
        %418 = vst [vmem:[%s407 + $0xa8] sm:$0xff] %v385
        %419 = vst [vmem:[%s407 + $0xb0] sm:$0xff] %v386
        %420 = vst [vmem:[%s407 + $0xc8] sm:$0xff] %v387
        %421 = vst [vmem:[%s407 + $0xd0] sm:$0xff] %v388
        %422 = vst [vmem:[%s407 + $0xe8] sm:$0xff] %v389
        %423 = vst [vmem:[%s407 + $0xf0] sm:$0xff] %v390
        %424 = vst [vmem:[%s407 + $0x108] sm:$0xff] %v391
        %425 = vst [vmem:[%s407 + $0x110] sm:$0xff] %v392
        %426 = vst [vmem:[%s407 + $0x128] sm:$0xff] %v393
        %427 = vst [vmem:[%s407 + $0x130] sm:$0xff] %v394
        %428 = vst [vmem:[%s407 + $0x148] sm:$0xff] %v395
        %429 = vst [vmem:[%s407 + $0x150] sm:$0xff] %v396
        %430 = vst [vmem:[%s407 + $0x168] sm:$0xff] %v397
        %431 = vst [vmem:[%s407 + $0x170] sm:$0xff] %v398
        %432 = vst [vmem:[%s407 + $0x188] sm:$0xff] %v399
        %433 = vst [vmem:[%s407 + $0x190] sm:$0xff] %v400
        %434 = vst [vmem:[%s407 + $0x1a8] sm:$0xff] %v401
        %435 = vst [vmem:[%s407 + $0x1b0] sm:$0xff] %v402
        %436 = vst [vmem:[%s407 + $0x1c8] sm:$0xff] %v403
        %437 = vst [vmem:[%s407 + $0x1d0] sm:$0xff] %v404
        %438 = vst [vmem:[%s407 + $0x1e8] sm:$0xff] %v405
        %439 = vst [vmem:[%s407 + $0x1f0] sm:$0xff] %v406
        %v440 = vld [vmem:[#allocation2 + $0x7] sm:$0xff]
        %v441 = vld [vmem:[#allocation2 + $0xf] sm:$0xff]
        %v442 = vld [vmem:[#allocation2 + $0x27] sm:$0xff]
        %v443 = vld [vmem:[#allocation2 + $0x2f] sm:$0xff]
        %v444 = vld [vmem:[#allocation2 + $0x47] sm:$0xff]
        %v445 = vld [vmem:[#allocation2 + $0x4f] sm:$0xff]
        %v446 = vld [vmem:[#allocation2 + $0x67] sm:$0xff]
        %v447 = vld [vmem:[#allocation2 + $0x6f] sm:$0xff]
        %v448 = vld [vmem:[#allocation2 + $0x87] sm:$0xff]
        %v449 = vld [vmem:[#allocation2 + $0x8f] sm:$0xff]
        %v450 = vld [vmem:[#allocation2 + $0xa7] sm:$0xff]
        %v451 = vld [vmem:[#allocation2 + $0xaf] sm:$0xff]
        %v452 = vld [vmem:[#allocation2 + $0xc7] sm:$0xff]
        %v453 = vld [vmem:[#allocation2 + $0xcf] sm:$0xff]
        %v454 = vld [vmem:[#allocation2 + $0xe7] sm:$0xff]
        %v455 = vld [vmem:[#allocation2 + $0xef] sm:$0xff]
        %v456 = vld [vmem:[#allocation2 + $0x107] sm:$0xff]
        %v457 = vld [vmem:[#allocation2 + $0x10f] sm:$0xff]
        %v458 = vld [vmem:[#allocation2 + $0x127] sm:$0xff]
        %v459 = vld [vmem:[#allocation2 + $0x12f] sm:$0xff]
        %v460 = vld [vmem:[#allocation2 + $0x147] sm:$0xff]
        %v461 = vld [vmem:[#allocation2 + $0x14f] sm:$0xff]
        %v462 = vld [vmem:[#allocation2 + $0x167] sm:$0xff]
        %v463 = vld [vmem:[#allocation2 + $0x16f] sm:$0xff]
        %v464 = vld [vmem:[#allocation2 + $0x187] sm:$0xff]
        %v465 = vld [vmem:[#allocation2 + $0x18f] sm:$0xff]
        %v466 = vld [vmem:[#allocation2 + $0x1a7] sm:$0xff]
        %v467 = vld [vmem:[#allocation2 + $0x1af] sm:$0xff]
        %v468 = vld [vmem:[#allocation2 + $0x1c7] sm:$0xff]
        %v469 = vld [vmem:[#allocation2 + $0x1cf] sm:$0xff]
        %v470 = vld [vmem:[#allocation2 + $0x1e7] sm:$0xff]
        %v471 = vld [vmem:[#allocation2 + $0x1ef] sm:$0xff]
        %v472 = vld [vmem:[%s3] sm:$0xff]
        %v473 = vld [vmem:[%s3 + $0x8] sm:$0xff]
        %v474 = vld [vmem:[%s3 + $0x10] sm:$0xff]
        %v475 = vld [vmem:[%s3 + $0x18] sm:$0xff]
        %v476 = vld [vmem:[%s3 + $0x20] sm:$0xff]
        %v477 = vld [vmem:[%s3 + $0x28] sm:$0xff]
        %v478 = vld [vmem:[%s3 + $0x30] sm:$0xff]
        %v479 = vld [vmem:[%s3 + $0x38] sm:$0xff]
        %v480 = vld [vmem:[%s3 + $0x40] sm:$0xff]
        %v481 = vld [vmem:[%s3 + $0x48] sm:$0xff]
        %v482 = vld [vmem:[%s3 + $0x50] sm:$0xff]
        %v483 = vld [vmem:[%s3 + $0x58] sm:$0xff]
        %v484 = vld [vmem:[%s3 + $0x60] sm:$0xff]
        %v485 = vld [vmem:[%s3 + $0x68] sm:$0xff]
        %v486 = vld [vmem:[%s3 + $0x70] sm:$0xff]
        %v487 = vld [vmem:[%s3 + $0x78] sm:$0xff]
        %v488 = vld [vmem:[#allocation2 + $0x8] sm:$0xff]
        %v489 = vld [vmem:[#allocation2 + $0x10] sm:$0xff]
        %v490 = vld [vmem:[#allocation2 + $0x28] sm:$0xff]
        %v491 = vld [vmem:[#allocation2 + $0x30] sm:$0xff]
        %v492 = vld [vmem:[#allocation2 + $0x48] sm:$0xff]
        %v493 = vld [vmem:[#allocation2 + $0x50] sm:$0xff]
        %v494 = vld [vmem:[#allocation2 + $0x68] sm:$0xff]
        %v495 = vld [vmem:[#allocation2 + $0x70] sm:$0xff]
        %v496 = vld [vmem:[#allocation2 + $0x88] sm:$0xff]
        %v497 = vld [vmem:[#allocation2 + $0x90] sm:$0xff]
        %v498 = vld [vmem:[#allocation2 + $0xa8] sm:$0xff]
        %v499 = vld [vmem:[#allocation2 + $0xb0] sm:$0xff]
        %v500 = vld [vmem:[#allocation2 + $0xc8] sm:$0xff]
        %v501 = vld [vmem:[#allocation2 + $0xd0] sm:$0xff]
        %v502 = vld [vmem:[#allocation2 + $0xe8] sm:$0xff]
        %v503 = vld [vmem:[#allocation2 + $0xf0] sm:$0xff]
        %v504 = vld [vmem:[#allocation2 + $0x108] sm:$0xff]
        %v505 = vld [vmem:[#allocation2 + $0x110] sm:$0xff]
        %v506 = vld [vmem:[#allocation2 + $0x128] sm:$0xff]
        %v507 = vld [vmem:[#allocation2 + $0x130] sm:$0xff]
        %v508 = vld [vmem:[#allocation2 + $0x148] sm:$0xff]
        %v509 = vld [vmem:[#allocation2 + $0x150] sm:$0xff]
        %v510 = vld [vmem:[#allocation2 + $0x168] sm:$0xff]
        %v511 = vld [vmem:[#allocation2 + $0x170] sm:$0xff]
        %v512 = vld [vmem:[#allocation2 + $0x188] sm:$0xff]
        %v513 = vld [vmem:[#allocation2 + $0x190] sm:$0xff]
        %v514 = vld [vmem:[#allocation2 + $0x1a8] sm:$0xff]
        %v515 = vld [vmem:[#allocation2 + $0x1b0] sm:$0xff]
        %v516 = vld [vmem:[#allocation2 + $0x1c8] sm:$0xff]
        %v517 = vld [vmem:[#allocation2 + $0x1d0] sm:$0xff]
        %v518 = vld [vmem:[#allocation2 + $0x1e8] sm:$0xff]
        %v519 = vld [vmem:[#allocation2 + $0x1f0] sm:$0xff]
        %s520 = scalar_lea.vmem %s3, 128
        %v521 = vld [vmem:[%s520] sm:$0xff]
        %v522 = vld [vmem:[%s520 + $0x8] sm:$0xff]
        %v523 = vld [vmem:[%s520 + $0x10] sm:$0xff]
        %v524 = vld [vmem:[%s520 + $0x18] sm:$0xff]
        %v525 = vld [vmem:[%s520 + $0x20] sm:$0xff]
        %v526 = vld [vmem:[%s520 + $0x28] sm:$0xff]
        %v527 = vld [vmem:[%s520 + $0x30] sm:$0xff]
        %v528 = vld [vmem:[%s520 + $0x38] sm:$0xff]
        %v529 = vld [vmem:[%s520 + $0x40] sm:$0xff]
        %v530 = vld [vmem:[%s520 + $0x48] sm:$0xff]
        %v531 = vld [vmem:[%s520 + $0x50] sm:$0xff]
        %v532 = vld [vmem:[%s520 + $0x58] sm:$0xff]
        %v533 = vld [vmem:[%s520 + $0x60] sm:$0xff]
        %v534 = vld [vmem:[%s520 + $0x68] sm:$0xff]
        %v535 = vld [vmem:[%s520 + $0x70] sm:$0xff]
        %v536 = vld [vmem:[%s520 + $0x78] sm:$0xff]
        %537 = vmatprep.subr.mxu0 0.0
        %538 = vmatpush1.msra.mxu0 %v521
        %539 = vmatprep.subr.mxu0 0.0
        %540 = vmatpush1.msra.mxu0 %v522
        %541 = vmatprep.subr.mxu0 0.0
        %542 = vmatpush1.msra.mxu0 %v523
        %543 = vmatprep.subr.mxu0 0.0
        %544 = vmatpush1.msra.mxu0 %v524
        %545 = vmatprep.subr.mxu0 0.0
        %546 = vmatpush1.msra.mxu0 %v525
        %547 = vmatprep.subr.mxu0 0.0
        %548 = vmatpush1.msra.mxu0 %v526
        %549 = vmatprep.subr.mxu0 0.0
        %550 = vmatpush1.msra.mxu0 %v527
        %551 = vmatprep.subr.mxu0 0.0
        %552 = vmatpush1.msra.mxu0 %v528
        %553 = vmatprep.subr.mxu0 0.0
        %554 = vmatpush1.msra.mxu0 %v529
        %555 = vmatprep.subr.mxu0 0.0
        %556 = vmatpush1.msra.mxu0 %v530
        %557 = vmatprep.subr.mxu0 0.0
        %558 = vmatpush1.msra.mxu0 %v531
        %559 = vmatprep.subr.mxu0 0.0
        %560 = vmatpush1.msra.mxu0 %v532
        %561 = vmatprep.subr.mxu0 0.0
        %562 = vmatpush1.msra.mxu0 %v533
        %563 = vmatprep.subr.mxu0 0.0
        %564 = vmatpush1.msra.mxu0 %v534
        %565 = vmatprep.subr.mxu0 0.0
        %566 = vmatpush1.msra.mxu0 %v535
        %567 = vmatprep.subr.mxu0 0.0
        %568 = vmatpush1.msra.mxu0 %v536
        %569 = vmatprep.subr.mxu0 0.0
        %570 = vmatpush1.msra.mxu0 0.0
        %571 = vmatprep.subr.mxu0 0.0
        %572 = vmatpush1.msra.mxu0 0.0
        %573 = vmatprep.subr.mxu0 0.0
        %574 = vmatpush1.msra.mxu0 0.0
        %575 = vmatprep.subr.mxu0 0.0
        %576 = vmatpush1.msra.mxu0 0.0
        %577 = vmatprep.subr.mxu0 0.0
        %578 = vmatpush1.msra.mxu0 0.0
        %579 = vmatprep.subr.mxu0 0.0
        %580 = vmatpush1.msra.mxu0 0.0
        %581 = vmatprep.subr.mxu0 0.0
        %582 = vmatpush1.msra.mxu0 0.0
        %583 = vmatprep.subr.mxu0 0.0
        %584 = vmatpush1.msra.mxu0 0.0
        %585 = vmatprep.subr.mxu0 0.0
        %586 = vmatpush1.msra.mxu0 0.0
        %587 = vmatprep.subr.mxu0 0.0
        %588 = vmatpush1.msra.mxu0 0.0
        %589 = vmatprep.subr.mxu0 0.0
        %590 = vmatpush1.msra.mxu0 0.0
        %591 = vmatprep.subr.mxu0 0.0
        %592 = vmatpush1.msra.mxu0 0.0
        %593 = vmatprep.subr.mxu0 0.0
        %594 = vmatpush1.msra.mxu0 0.0
        %595 = vmatprep.subr.mxu0 0.0
        %596 = vmatpush1.msra.mxu0 0.0
        %597 = vmatprep.subr.mxu0 0.0
        %598 = vmatpush1.msra.mxu0 0.0
        %599 = vmatprep.subr.mxu0 0.0
        %600 = vmatpush1.msra.mxu0 0.0
        %601 = vmatprep.mubr.f32.mxu0 0.0
        %602 = vmatmul.mubr.f32.gmra.mrb[0].mxu0 %v488
        %v603 = vpop.f32.mrb[0].mxu0
        %v604 = vadd.f32 0.0, %v603
        %v605 = vpop.f32.mrb[0].mxu0
        %606 = vmatprep.mubr.f32.mxu0 0.0
        %607 = vmatmul.mubr.f32.gmra.mrb[0].mxu0 %v489
        %v608 = vpop.f32.mrb[0].mxu0
        %v609 = vadd.f32 0.0, %v608
        %v610 = vpop.f32.mrb[0].mxu0
        %611 = vmatprep.mubr.f32.mxu0 0.0
        %612 = vmatmul.mubr.f32.gmra.mrb[0].mxu0 %v490
        %v613 = vpop.f32.mrb[0].mxu0
        %v614 = vadd.f32 0.0, %v613
        %v615 = vpop.f32.mrb[0].mxu0
        %616 = vmatprep.mubr.f32.mxu0 0.0
        %617 = vmatmul.mubr.f32.gmra.mrb[0].mxu0 %v491
        %v618 = vpop.f32.mrb[0].mxu0
        %v619 = vadd.f32 0.0, %v618
        %v620 = vpop.f32.mrb[0].mxu0
        %621 = vmatprep.mubr.f32.mxu0 0.0
        %622 = vmatmul.mubr.f32.gmra.mrb[0].mxu0 %v492
        %v623 = vpop.f32.mrb[0].mxu0
        %v624 = vadd.f32 0.0, %v623
        %v625 = vpop.f32.mrb[0].mxu0
        %626 = vmatprep.mubr.f32.mxu0 0.0
        %627 = vmatmul.mubr.f32.gmra.mrb[0].mxu0 %v493
        %v628 = vpop.f32.mrb[0].mxu0
        %v629 = vadd.f32 0.0, %v628
        %v630 = vpop.f32.mrb[0].mxu0
        %631 = vmatprep.mubr.f32.mxu0 0.0
        %632 = vmatmul.mubr.f32.gmra.mrb[0].mxu0 %v494
        %v633 = vpop.f32.mrb[0].mxu0
        %v634 = vadd.f32 0.0, %v633
        %v635 = vpop.f32.mrb[0].mxu0
        %636 = vmatprep.mubr.f32.mxu0 0.0
        %637 = vmatmul.mubr.f32.gmra.mrb[0].mxu0 %v495
        %v638 = vpop.f32.mrb[0].mxu0
        %v639 = vadd.f32 0.0, %v638
        %v640 = vpop.f32.mrb[0].mxu0
        %641 = vmatprep.mubr.f32.mxu0 0.0
        %642 = vmatmul.mubr.f32.gmra.mrb[0].mxu0 %v496
        %v643 = vpop.f32.mrb[0].mxu0
        %v644 = vadd.f32 0.0, %v643
        %v645 = vpop.f32.mrb[0].mxu0
        %646 = vmatprep.mubr.f32.mxu0 0.0
        %647 = vmatmul.mubr.f32.gmra.mrb[0].mxu0 %v497
        %v648 = vpop.f32.mrb[0].mxu0
        %v649 = vadd.f32 0.0, %v648
        %v650 = vpop.f32.mrb[0].mxu0
        %651 = vmatprep.mubr.f32.mxu0 0.0
        %652 = vmatmul.mubr.f32.gmra.mrb[0].mxu0 %v498
        %v653 = vpop.f32.mrb[0].mxu0
        %v654 = vadd.f32 0.0, %v653
        %v655 = vpop.f32.mrb[0].mxu0
        %656 = vmatprep.mubr.f32.mxu0 0.0
        %657 = vmatmul.mubr.f32.gmra.mrb[0].mxu0 %v499
        %v658 = vpop.f32.mrb[0].mxu0
        %v659 = vadd.f32 0.0, %v658
        %v660 = vpop.f32.mrb[0].mxu0
        %661 = vmatprep.mubr.f32.mxu0 0.0
        %662 = vmatmul.mubr.f32.gmra.mrb[0].mxu0 %v500
        %v663 = vpop.f32.mrb[0].mxu0
        %v664 = vadd.f32 0.0, %v663
        %v665 = vpop.f32.mrb[0].mxu0
        %666 = vmatprep.mubr.f32.mxu0 0.0
        %667 = vmatmul.mubr.f32.gmra.mrb[0].mxu0 %v501
        %v668 = vpop.f32.mrb[0].mxu0
        %v669 = vadd.f32 0.0, %v668
        %v670 = vpop.f32.mrb[0].mxu0
        %671 = vmatprep.mubr.f32.mxu0 0.0
        %672 = vmatmul.mubr.f32.gmra.mrb[0].mxu0 %v502
        %v673 = vpop.f32.mrb[0].mxu0
        %v674 = vadd.f32 0.0, %v673
        %v675 = vpop.f32.mrb[0].mxu0
        %676 = vmatprep.mubr.f32.mxu0 0.0
        %677 = vmatmul.mubr.f32.gmra.mrb[0].mxu0 %v503
        %v678 = vpop.f32.mrb[0].mxu0
        %v679 = vadd.f32 0.0, %v678
        %v680 = vpop.f32.mrb[0].mxu0
        %681 = vmatprep.mubr.f32.mxu0 0.0
        %682 = vmatmul.mubr.f32.gmra.mrb[0].mxu0 %v504
        %v683 = vpop.f32.mrb[0].mxu0
        %v684 = vadd.f32 0.0, %v683
        %v685 = vpop.f32.mrb[0].mxu0
        %686 = vmatprep.mubr.f32.mxu0 0.0
        %687 = vmatmul.mubr.f32.gmra.mrb[0].mxu0 %v505
        %v688 = vpop.f32.mrb[0].mxu0
        %v689 = vadd.f32 0.0, %v688
        %v690 = vpop.f32.mrb[0].mxu0
        %691 = vmatprep.mubr.f32.mxu0 0.0
        %692 = vmatmul.mubr.f32.gmra.mrb[0].mxu0 %v506
        %v693 = vpop.f32.mrb[0].mxu0
        %v694 = vadd.f32 0.0, %v693
        %v695 = vpop.f32.mrb[0].mxu0
        %696 = vmatprep.mubr.f32.mxu0 0.0
        %697 = vmatmul.mubr.f32.gmra.mrb[0].mxu0 %v507
        %v698 = vpop.f32.mrb[0].mxu0
        %v699 = vadd.f32 0.0, %v698
        %v700 = vpop.f32.mrb[0].mxu0
        %701 = vmatprep.mubr.f32.mxu0 0.0
        %702 = vmatmul.mubr.f32.gmra.mrb[0].mxu0 %v508
        %v703 = vpop.f32.mrb[0].mxu0
        %v704 = vadd.f32 0.0, %v703
        %v705 = vpop.f32.mrb[0].mxu0
        %706 = vmatprep.mubr.f32.mxu0 0.0
        %707 = vmatmul.mubr.f32.gmra.mrb[0].mxu0 %v509
        %v708 = vpop.f32.mrb[0].mxu0
        %v709 = vadd.f32 0.0, %v708
        %v710 = vpop.f32.mrb[0].mxu0
        %711 = vmatprep.mubr.f32.mxu0 0.0
        %712 = vmatmul.mubr.f32.gmra.mrb[0].mxu0 %v510
        %v713 = vpop.f32.mrb[0].mxu0
        %v714 = vadd.f32 0.0, %v713
        %v715 = vpop.f32.mrb[0].mxu0
        %716 = vmatprep.mubr.f32.mxu0 0.0
        %717 = vmatmul.mubr.f32.gmra.mrb[0].mxu0 %v511
        %v718 = vpop.f32.mrb[0].mxu0
        %v719 = vadd.f32 0.0, %v718
        %v720 = vpop.f32.mrb[0].mxu0
        %721 = vmatprep.mubr.f32.mxu0 0.0
        %722 = vmatmul.mubr.f32.gmra.mrb[0].mxu0 %v512
        %v723 = vpop.f32.mrb[0].mxu0
        %v724 = vadd.f32 0.0, %v723
        %v725 = vpop.f32.mrb[0].mxu0
        %726 = vmatprep.mubr.f32.mxu0 0.0
        %727 = vmatmul.mubr.f32.gmra.mrb[0].mxu0 %v513
        %v728 = vpop.f32.mrb[0].mxu0
        %v729 = vadd.f32 0.0, %v728
        %v730 = vpop.f32.mrb[0].mxu0
        %731 = vmatprep.mubr.f32.mxu0 0.0
        %732 = vmatmul.mubr.f32.gmra.mrb[0].mxu0 %v514
        %v733 = vpop.f32.mrb[0].mxu0
        %v734 = vadd.f32 0.0, %v733
        %v735 = vpop.f32.mrb[0].mxu0
        %736 = vmatprep.mubr.f32.mxu0 0.0
        %737 = vmatmul.mubr.f32.gmra.mrb[0].mxu0 %v515
        %v738 = vpop.f32.mrb[0].mxu0
        %v739 = vadd.f32 0.0, %v738
        %v740 = vpop.f32.mrb[0].mxu0
        %741 = vmatprep.mubr.f32.mxu0 0.0
        %742 = vmatmul.mubr.f32.gmra.mrb[0].mxu0 %v516
        %v743 = vpop.f32.mrb[0].mxu0
        %v744 = vadd.f32 0.0, %v743
        %v745 = vpop.f32.mrb[0].mxu0
        %746 = vmatprep.mubr.f32.mxu0 0.0
        %747 = vmatmul.mubr.f32.gmra.mrb[0].mxu0 %v517
        %v748 = vpop.f32.mrb[0].mxu0
        %v749 = vadd.f32 0.0, %v748
        %v750 = vpop.f32.mrb[0].mxu0
        %751 = vmatprep.mubr.f32.mxu0 0.0
        %752 = vmatmul.mubr.f32.gmra.mrb[0].mxu0 %v518
        %v753 = vpop.f32.mrb[0].mxu0
        %v754 = vadd.f32 0.0, %v753
        %v755 = vpop.f32.mrb[0].mxu0
        %756 = vmatprep.mubr.f32.mxu0 0.0
        %757 = vmatmul.mubr.f32.gmra.mrb[0].mxu0 %v519
        %v758 = vpop.f32.mrb[0].mxu0
        %v759 = vadd.f32 0.0, %v758
        %v760 = vpop.f32.mrb[0].mxu0
        %761 = vdwg.mxu0
        %762 = vmatprep.subr.mxu0 0.0
        %763 = vmatpush1.msra.mxu0 %v472
        %764 = vmatprep.subr.mxu0 0.0
        %765 = vmatpush1.msra.mxu0 %v473
        %766 = vmatprep.subr.mxu0 0.0
        %767 = vmatpush1.msra.mxu0 %v474
        %768 = vmatprep.subr.mxu0 0.0
        %769 = vmatpush1.msra.mxu0 %v475
        %770 = vmatprep.subr.mxu0 0.0
        %771 = vmatpush1.msra.mxu0 %v476
        %772 = vmatprep.subr.mxu0 0.0
        %773 = vmatpush1.msra.mxu0 %v477
        %774 = vmatprep.subr.mxu0 0.0
        %775 = vmatpush1.msra.mxu0 %v478
        %776 = vmatprep.subr.mxu0 0.0
        %777 = vmatpush1.msra.mxu0 %v479
        %778 = vmatprep.subr.mxu0 0.0
        %779 = vmatpush1.msra.mxu0 %v480
        %780 = vmatprep.subr.mxu0 0.0
        %781 = vmatpush1.msra.mxu0 %v481
        %782 = vmatprep.subr.mxu0 0.0
        %783 = vmatpush1.msra.mxu0 %v482
        %784 = vmatprep.subr.mxu0 0.0
        %785 = vmatpush1.msra.mxu0 %v483
        %786 = vmatprep.subr.mxu0 0.0
        %787 = vmatpush1.msra.mxu0 %v484
        %788 = vmatprep.subr.mxu0 0.0
        %789 = vmatpush1.msra.mxu0 %v485
        %790 = vmatprep.subr.mxu0 0.0
        %791 = vmatpush1.msra.mxu0 %v486
        %792 = vmatprep.subr.mxu0 0.0
        %793 = vmatpush1.msra.mxu0 %v487
        %794 = vmatprep.subr.mxu0 0.0
        %795 = vmatpush1.msra.mxu0 0.0
        %796 = vmatprep.subr.mxu0 0.0
        %797 = vmatpush1.msra.mxu0 0.0
        %798 = vmatprep.subr.mxu0 0.0
        %799 = vmatpush1.msra.mxu0 0.0
        %800 = vmatprep.subr.mxu0 0.0
        %801 = vmatpush1.msra.mxu0 0.0
        %802 = vmatprep.subr.mxu0 0.0
        %803 = vmatpush1.msra.mxu0 0.0
        %804 = vmatprep.subr.mxu0 0.0
        %805 = vmatpush1.msra.mxu0 0.0
        %806 = vmatprep.subr.mxu0 0.0
        %807 = vmatpush1.msra.mxu0 0.0
        %808 = vmatprep.subr.mxu0 0.0
        %809 = vmatpush1.msra.mxu0 0.0
        %810 = vmatprep.subr.mxu0 0.0
        %811 = vmatpush1.msra.mxu0 0.0
        %812 = vmatprep.subr.mxu0 0.0
        %813 = vmatpush1.msra.mxu0 0.0
        %814 = vmatprep.subr.mxu0 0.0
        %815 = vmatpush1.msra.mxu0 0.0
        %816 = vmatprep.subr.mxu0 0.0
        %817 = vmatpush1.msra.mxu0 0.0
        %818 = vmatprep.subr.mxu0 0.0
        %819 = vmatpush1.msra.mxu0 0.0
        %820 = vmatprep.subr.mxu0 0.0
        %821 = vmatpush1.msra.mxu0 0.0
        %822 = vmatprep.subr.mxu0 0.0
        %823 = vmatpush1.msra.mxu0 0.0
        %824 = vmatprep.subr.mxu0 0.0
        %825 = vmatpush1.msra.mxu0 0.0
        %826 = vmatprep.mubr.f32.mxu0 0.0
        %827 = vmatmul.mubr.f32.gmra.mrb[0].mxu0 %v440
        %v828 = vpop.f32.mrb[0].mxu0
        %v829 = vadd.f32 %v604, %v828
        %v830 = vpop.f32.mrb[0].mxu0
        %831 = vmatprep.mubr.f32.mxu0 0.0
        %832 = vmatmul.mubr.f32.gmra.mrb[0].mxu0 %v441
        %v833 = vpop.f32.mrb[0].mxu0
        %v834 = vadd.f32 %v609, %v833
        %v835 = vpop.f32.mrb[0].mxu0
        %836 = vmatprep.mubr.f32.mxu0 0.0
        %837 = vmatmul.mubr.f32.gmra.mrb[0].mxu0 %v442
        %v838 = vpop.f32.mrb[0].mxu0
        %v839 = vadd.f32 %v614, %v838
        %v840 = vpop.f32.mrb[0].mxu0
        %841 = vmatprep.mubr.f32.mxu0 0.0
        %842 = vmatmul.mubr.f32.gmra.mrb[0].mxu0 %v443
        %v843 = vpop.f32.mrb[0].mxu0
        %v844 = vadd.f32 %v619, %v843
        %v845 = vpop.f32.mrb[0].mxu0
        %846 = vmatprep.mubr.f32.mxu0 0.0
        %847 = vmatmul.mubr.f32.gmra.mrb[0].mxu0 %v444
        %v848 = vpop.f32.mrb[0].mxu0
        %v849 = vadd.f32 %v624, %v848
        %v850 = vpop.f32.mrb[0].mxu0
        %851 = vmatprep.mubr.f32.mxu0 0.0
        %852 = vmatmul.mubr.f32.gmra.mrb[0].mxu0 %v445
        %v853 = vpop.f32.mrb[0].mxu0
        %v854 = vadd.f32 %v629, %v853
        %v855 = vpop.f32.mrb[0].mxu0
        %856 = vmatprep.mubr.f32.mxu0 0.0
        %857 = vmatmul.mubr.f32.gmra.mrb[0].mxu0 %v446
        %v858 = vpop.f32.mrb[0].mxu0
        %v859 = vadd.f32 %v634, %v858
        %v860 = vpop.f32.mrb[0].mxu0
        %861 = vmatprep.mubr.f32.mxu0 0.0
        %862 = vmatmul.mubr.f32.gmra.mrb[0].mxu0 %v447
        %v863 = vpop.f32.mrb[0].mxu0
        %v864 = vadd.f32 %v639, %v863
        %v865 = vpop.f32.mrb[0].mxu0
        %866 = vmatprep.mubr.f32.mxu0 0.0
        %867 = vmatmul.mubr.f32.gmra.mrb[0].mxu0 %v448
        %v868 = vpop.f32.mrb[0].mxu0
        %v869 = vadd.f32 %v644, %v868
        %v870 = vpop.f32.mrb[0].mxu0
        %871 = vmatprep.mubr.f32.mxu0 0.0
        %872 = vmatmul.mubr.f32.gmra.mrb[0].mxu0 %v449
        %v873 = vpop.f32.mrb[0].mxu0
        %v874 = vadd.f32 %v649, %v873
        %v875 = vpop.f32.mrb[0].mxu0
        %876 = vmatprep.mubr.f32.mxu0 0.0
        %877 = vmatmul.mubr.f32.gmra.mrb[0].mxu0 %v450
        %v878 = vpop.f32.mrb[0].mxu0
        %v879 = vadd.f32 %v654, %v878
        %v880 = vpop.f32.mrb[0].mxu0
        %881 = vmatprep.mubr.f32.mxu0 0.0
        %882 = vmatmul.mubr.f32.gmra.mrb[0].mxu0 %v451
        %v883 = vpop.f32.mrb[0].mxu0
        %v884 = vadd.f32 %v659, %v883
        %v885 = vpop.f32.mrb[0].mxu0
        %886 = vmatprep.mubr.f32.mxu0 0.0
        %887 = vmatmul.mubr.f32.gmra.mrb[0].mxu0 %v452
        %v888 = vpop.f32.mrb[0].mxu0
        %v889 = vadd.f32 %v664, %v888
        %v890 = vpop.f32.mrb[0].mxu0
        %891 = vmatprep.mubr.f32.mxu0 0.0
        %892 = vmatmul.mubr.f32.gmra.mrb[0].mxu0 %v453
        %v893 = vpop.f32.mrb[0].mxu0
        %v894 = vadd.f32 %v669, %v893
        %v895 = vpop.f32.mrb[0].mxu0
        %896 = vmatprep.mubr.f32.mxu0 0.0
        %897 = vmatmul.mubr.f32.gmra.mrb[0].mxu0 %v454
        %v898 = vpop.f32.mrb[0].mxu0
        %v899 = vadd.f32 %v674, %v898
        %v900 = vpop.f32.mrb[0].mxu0
        %901 = vmatprep.mubr.f32.mxu0 0.0
        %902 = vmatmul.mubr.f32.gmra.mrb[0].mxu0 %v455
        %v903 = vpop.f32.mrb[0].mxu0
        %v904 = vadd.f32 %v679, %v903
        %v905 = vpop.f32.mrb[0].mxu0
        %906 = vmatprep.mubr.f32.mxu0 0.0
        %907 = vmatmul.mubr.f32.gmra.mrb[0].mxu0 %v456
        %v908 = vpop.f32.mrb[0].mxu0
        %v909 = vadd.f32 %v684, %v908
        %v910 = vpop.f32.mrb[0].mxu0
        %911 = vmatprep.mubr.f32.mxu0 0.0
        %912 = vmatmul.mubr.f32.gmra.mrb[0].mxu0 %v457
        %v913 = vpop.f32.mrb[0].mxu0
        %v914 = vadd.f32 %v689, %v913
        %v915 = vpop.f32.mrb[0].mxu0
        %916 = vmatprep.mubr.f32.mxu0 0.0
        %917 = vmatmul.mubr.f32.gmra.mrb[0].mxu0 %v458
        %v918 = vpop.f32.mrb[0].mxu0
        %v919 = vadd.f32 %v694, %v918
        %v920 = vpop.f32.mrb[0].mxu0
        %921 = vmatprep.mubr.f32.mxu0 0.0
        %922 = vmatmul.mubr.f32.gmra.mrb[0].mxu0 %v459
        %v923 = vpop.f32.mrb[0].mxu0
        %v924 = vadd.f32 %v699, %v923
        %v925 = vpop.f32.mrb[0].mxu0
        %926 = vmatprep.mubr.f32.mxu0 0.0
        %927 = vmatmul.mubr.f32.gmra.mrb[0].mxu0 %v460
        %v928 = vpop.f32.mrb[0].mxu0
        %v929 = vadd.f32 %v704, %v928
        %v930 = vpop.f32.mrb[0].mxu0
        %931 = vmatprep.mubr.f32.mxu0 0.0
        %932 = vmatmul.mubr.f32.gmra.mrb[0].mxu0 %v461
        %v933 = vpop.f32.mrb[0].mxu0
        %v934 = vadd.f32 %v709, %v933
        %v935 = vpop.f32.mrb[0].mxu0
        %936 = vmatprep.mubr.f32.mxu0 0.0
        %937 = vmatmul.mubr.f32.gmra.mrb[0].mxu0 %v462
        %v938 = vpop.f32.mrb[0].mxu0
        %v939 = vadd.f32 %v714, %v938
        %v940 = vpop.f32.mrb[0].mxu0
        %941 = vmatprep.mubr.f32.mxu0 0.0
        %942 = vmatmul.mubr.f32.gmra.mrb[0].mxu0 %v463
        %v943 = vpop.f32.mrb[0].mxu0
        %v944 = vadd.f32 %v719, %v943
        %v945 = vpop.f32.mrb[0].mxu0
        %946 = vmatprep.mubr.f32.mxu0 0.0
        %947 = vmatmul.mubr.f32.gmra.mrb[0].mxu0 %v464
        %v948 = vpop.f32.mrb[0].mxu0
        %v949 = vadd.f32 %v724, %v948
        %v950 = vpop.f32.mrb[0].mxu0
        %951 = vmatprep.mubr.f32.mxu0 0.0
        %952 = vmatmul.mubr.f32.gmra.mrb[0].mxu0 %v465
        %v953 = vpop.f32.mrb[0].mxu0
        %v954 = vadd.f32 %v729, %v953
        %v955 = vpop.f32.mrb[0].mxu0
        %956 = vmatprep.mubr.f32.mxu0 0.0
        %957 = vmatmul.mubr.f32.gmra.mrb[0].mxu0 %v466
        %v958 = vpop.f32.mrb[0].mxu0
        %v959 = vadd.f32 %v734, %v958
        %v960 = vpop.f32.mrb[0].mxu0
        %961 = vmatprep.mubr.f32.mxu0 0.0
        %962 = vmatmul.mubr.f32.gmra.mrb[0].mxu0 %v467
        %v963 = vpop.f32.mrb[0].mxu0
        %v964 = vadd.f32 %v739, %v963
        %v965 = vpop.f32.mrb[0].mxu0
        %966 = vmatprep.mubr.f32.mxu0 0.0
        %967 = vmatmul.mubr.f32.gmra.mrb[0].mxu0 %v468
        %v968 = vpop.f32.mrb[0].mxu0
        %v969 = vadd.f32 %v744, %v968
        %v970 = vpop.f32.mrb[0].mxu0
        %971 = vmatprep.mubr.f32.mxu0 0.0
        %972 = vmatmul.mubr.f32.gmra.mrb[0].mxu0 %v469
        %v973 = vpop.f32.mrb[0].mxu0
        %v974 = vadd.f32 %v749, %v973
        %v975 = vpop.f32.mrb[0].mxu0
        %976 = vmatprep.mubr.f32.mxu0 0.0
        %977 = vmatmul.mubr.f32.gmra.mrb[0].mxu0 %v470
        %v978 = vpop.f32.mrb[0].mxu0
        %v979 = vadd.f32 %v754, %v978
        %v980 = vpop.f32.mrb[0].mxu0
        %981 = vmatprep.mubr.f32.mxu0 0.0
        %982 = vmatmul.mubr.f32.gmra.mrb[0].mxu0 %v471
        %v983 = vpop.f32.mrb[0].mxu0
        %v984 = vadd.f32 %v759, %v983
        %v985 = vpop.f32.mrb[0].mxu0
        %986 = vdwg.mxu0
        %v987 = vld [vmem:[#allocation2 + $0x9] sm:$0xff]
        %v988 = vld [vmem:[#allocation2 + $0x11] sm:$0xff]
        %v989 = vld [vmem:[#allocation2 + $0x29] sm:$0xff]
        %v990 = vld [vmem:[#allocation2 + $0x31] sm:$0xff]
        %v991 = vld [vmem:[#allocation2 + $0x49] sm:$0xff]
        %v992 = vld [vmem:[#allocation2 + $0x51] sm:$0xff]
        %v993 = vld [vmem:[#allocation2 + $0x69] sm:$0xff]
        %v994 = vld [vmem:[#allocation2 + $0x71] sm:$0xff]
        %v995 = vld [vmem:[#allocation2 + $0x89] sm:$0xff]
        %v996 = vld [vmem:[#allocation2 + $0x91] sm:$0xff]
        %v997 = vld [vmem:[#allocation2 + $0xa9] sm:$0xff]
        %v998 = vld [vmem:[#allocation2 + $0xb1] sm:$0xff]
        %v999 = vld [vmem:[#allocation2 + $0xc9] sm:$0xff]
        %v1000 = vld [vmem:[#allocation2 + $0xd1] sm:$0xff]
        %v1001 = vld [vmem:[#allocation2 + $0xe9] sm:$0xff]
        %v1002 = vld [vmem:[#allocation2 + $0xf1] sm:$0xff]
        %v1003 = vld [vmem:[#allocation2 + $0x109] sm:$0xff]
        %v1004 = vld [vmem:[#allocation2 + $0x111] sm:$0xff]
        %v1005 = vld [vmem:[#allocation2 + $0x129] sm:$0xff]
        %v1006 = vld [vmem:[#allocation2 + $0x131] sm:$0xff]
        %v1007 = vld [vmem:[#allocation2 + $0x149] sm:$0xff]
        %v1008 = vld [vmem:[#allocation2 + $0x151] sm:$0xff]
        %v1009 = vld [vmem:[#allocation2 + $0x169] sm:$0xff]
        %v1010 = vld [vmem:[#allocation2 + $0x171] sm:$0xff]
        %v1011 = vld [vmem:[#allocation2 + $0x189] sm:$0xff]
        %v1012 = vld [vmem:[#allocation2 + $0x191] sm:$0xff]
        %v1013 = vld [vmem:[#allocation2 + $0x1a9] sm:$0xff]
        %v1014 = vld [vmem:[#allocation2 + $0x1b1] sm:$0xff]
        %v1015 = vld [vmem:[#allocation2 + $0x1c9] sm:$0xff]
        %v1016 = vld [vmem:[#allocation2 + $0x1d1] sm:$0xff]
        %v1017 = vld [vmem:[#allocation2 + $0x1e9] sm:$0xff]
        %v1018 = vld [vmem:[#allocation2 + $0x1f1] sm:$0xff]
        %s1019 = scalar_lea.vmem %s3, 256
        %v1020 = vld [vmem:[%s1019] sm:$0xff]
        %v1021 = vld [vmem:[%s1019 + $0x8] sm:$0xff]
        %v1022 = vld [vmem:[%s1019 + $0x10] sm:$0xff]
        %v1023 = vld [vmem:[%s1019 + $0x18] sm:$0xff]
        %v1024 = vld [vmem:[%s1019 + $0x20] sm:$0xff]
        %v1025 = vld [vmem:[%s1019 + $0x28] sm:$0xff]
        %v1026 = vld [vmem:[%s1019 + $0x30] sm:$0xff]
        %v1027 = vld [vmem:[%s1019 + $0x38] sm:$0xff]
        %v1028 = vld [vmem:[%s1019 + $0x40] sm:$0xff]
        %v1029 = vld [vmem:[%s1019 + $0x48] sm:$0xff]
        %v1030 = vld [vmem:[%s1019 + $0x50] sm:$0xff]
        %v1031 = vld [vmem:[%s1019 + $0x58] sm:$0xff]
        %v1032 = vld [vmem:[%s1019 + $0x60] sm:$0xff]
        %v1033 = vld [vmem:[%s1019 + $0x68] sm:$0xff]
        %v1034 = vld [vmem:[%s1019 + $0x70] sm:$0xff]
        %v1035 = vld [vmem:[%s1019 + $0x78] sm:$0xff]
        %1036 = vmatprep.subr.mxu0 0.0
        %1037 = vmatpush1.msra.mxu0 %v1020
        %1038 = vmatprep.subr.mxu0 0.0
        %1039 = vmatpush1.msra.mxu0 %v1021
        %1040 = vmatprep.subr.mxu0 0.0
        %1041 = vmatpush1.msra.mxu0 %v1022
        %1042 = vmatprep.subr.mxu0 0.0
        %1043 = vmatpush1.msra.mxu0 %v1023
        %1044 = vmatprep.subr.mxu0 0.0
        %1045 = vmatpush1.msra.mxu0 %v1024
        %1046 = vmatprep.subr.mxu0 0.0
        %1047 = vmatpush1.msra.mxu0 %v1025
        %1048 = vmatprep.subr.mxu0 0.0
        %1049 = vmatpush1.msra.mxu0 %v1026
        %1050 = vmatprep.subr.mxu0 0.0
        %1051 = vmatpush1.msra.mxu0 %v1027
        %1052 = vmatprep.subr.mxu0 0.0
        %1053 = vmatpush1.msra.mxu0 %v1028
        %1054 = vmatprep.subr.mxu0 0.0
        %1055 = vmatpush1.msra.mxu0 %v1029
        %1056 = vmatprep.subr.mxu0 0.0
        %1057 = vmatpush1.msra.mxu0 %v1030
        %1058 = vmatprep.subr.mxu0 0.0
        %1059 = vmatpush1.msra.mxu0 %v1031
        %1060 = vmatprep.subr.mxu0 0.0
        %1061 = vmatpush1.msra.mxu0 %v1032
        %1062 = vmatprep.subr.mxu0 0.0
        %1063 = vmatpush1.msra.mxu0 %v1033
        %1064 = vmatprep.subr.mxu0 0.0
        %1065 = vmatpush1.msra.mxu0 %v1034
        %1066 = vmatprep.subr.mxu0 0.0
        %1067 = vmatpush1.msra.mxu0 %v1035
        %1068 = vmatprep.subr.mxu0 0.0
        %1069 = vmatpush1.msra.mxu0 0.0
        %1070 = vmatprep.subr.mxu0 0.0
        %1071 = vmatpush1.msra.mxu0 0.0
        %1072 = vmatprep.subr.mxu0 0.0
        %1073 = vmatpush1.msra.mxu0 0.0
        %1074 = vmatprep.subr.mxu0 0.0
        %1075 = vmatpush1.msra.mxu0 0.0
        %1076 = vmatprep.subr.mxu0 0.0
        %1077 = vmatpush1.msra.mxu0 0.0
        %1078 = vmatprep.subr.mxu0 0.0
        %1079 = vmatpush1.msra.mxu0 0.0
        %1080 = vmatprep.subr.mxu0 0.0
        %1081 = vmatpush1.msra.mxu0 0.0
        %1082 = vmatprep.subr.mxu0 0.0
        %1083 = vmatpush1.msra.mxu0 0.0
        %1084 = vmatprep.subr.mxu0 0.0
        %1085 = vmatpush1.msra.mxu0 0.0
        %1086 = vmatprep.subr.mxu0 0.0
        %1087 = vmatpush1.msra.mxu0 0.0
        %1088 = vmatprep.subr.mxu0 0.0
        %1089 = vmatpush1.msra.mxu0 0.0
        %1090 = vmatprep.subr.mxu0 0.0
        %1091 = vmatpush1.msra.mxu0 0.0
        %1092 = vmatprep.subr.mxu0 0.0
        %1093 = vmatpush1.msra.mxu0 0.0
        %1094 = vmatprep.subr.mxu0 0.0
        %1095 = vmatpush1.msra.mxu0 0.0
        %1096 = vmatprep.subr.mxu0 0.0
        %1097 = vmatpush1.msra.mxu0 0.0
        %1098 = vmatprep.subr.mxu0 0.0
        %1099 = vmatpush1.msra.mxu0 0.0
        %1100 = vmatprep.mubr.f32.mxu0 0.0
        %1101 = vmatmul.mubr.f32.gmra.mrb[0].mxu0 %v987
        %v1102 = vpop.f32.mrb[0].mxu0
        %v1103 = vadd.f32 0.0, %v1102
        %v1104 = vpop.f32.mrb[0].mxu0
        %1105 = vmatprep.mubr.f32.mxu0 0.0
        %1106 = vmatmul.mubr.f32.gmra.mrb[0].mxu0 %v988
        %v1107 = vpop.f32.mrb[0].mxu0
        %v1108 = vadd.f32 0.0, %v1107
        %v1109 = vpop.f32.mrb[0].mxu0
        %1110 = vmatprep.mubr.f32.mxu0 0.0
        %1111 = vmatmul.mubr.f32.gmra.mrb[0].mxu0 %v989
        %v1112 = vpop.f32.mrb[0].mxu0
        %v1113 = vadd.f32 0.0, %v1112
        %v1114 = vpop.f32.mrb[0].mxu0
        %1115 = vmatprep.mubr.f32.mxu0 0.0
        %1116 = vmatmul.mubr.f32.gmra.mrb[0].mxu0 %v990
        %v1117 = vpop.f32.mrb[0].mxu0
        %v1118 = vadd.f32 0.0, %v1117
        %v1119 = vpop.f32.mrb[0].mxu0
        %1120 = vmatprep.mubr.f32.mxu0 0.0
        %1121 = vmatmul.mubr.f32.gmra.mrb[0].mxu0 %v991
        %v1122 = vpop.f32.mrb[0].mxu0
        %v1123 = vadd.f32 0.0, %v1122
        %v1124 = vpop.f32.mrb[0].mxu0
        %1125 = vmatprep.mubr.f32.mxu0 0.0
        %1126 = vmatmul.mubr.f32.gmra.mrb[0].mxu0 %v992
        %v1127 = vpop.f32.mrb[0].mxu0
        %v1128 = vadd.f32 0.0, %v1127
        %v1129 = vpop.f32.mrb[0].mxu0
        %1130 = vmatprep.mubr.f32.mxu0 0.0
        %1131 = vmatmul.mubr.f32.gmra.mrb[0].mxu0 %v993
        %v1132 = vpop.f32.mrb[0].mxu0
        %v1133 = vadd.f32 0.0, %v1132
        %v1134 = vpop.f32.mrb[0].mxu0
        %1135 = vmatprep.mubr.f32.mxu0 0.0
        %1136 = vmatmul.mubr.f32.gmra.mrb[0].mxu0 %v994
        %v1137 = vpop.f32.mrb[0].mxu0
        %v1138 = vadd.f32 0.0, %v1137
        %v1139 = vpop.f32.mrb[0].mxu0
        %1140 = vmatprep.mubr.f32.mxu0 0.0
        %1141 = vmatmul.mubr.f32.gmra.mrb[0].mxu0 %v995
        %v1142 = vpop.f32.mrb[0].mxu0
        %v1143 = vadd.f32 0.0, %v1142
        %v1144 = vpop.f32.mrb[0].mxu0
        %1145 = vmatprep.mubr.f32.mxu0 0.0
        %1146 = vmatmul.mubr.f32.gmra.mrb[0].mxu0 %v996
        %v1147 = vpop.f32.mrb[0].mxu0
        %v1148 = vadd.f32 0.0, %v1147
        %v1149 = vpop.f32.mrb[0].mxu0
        %1150 = vmatprep.mubr.f32.mxu0 0.0
        %1151 = vmatmul.mubr.f32.gmra.mrb[0].mxu0 %v997
        %v1152 = vpop.f32.mrb[0].mxu0
        %v1153 = vadd.f32 0.0, %v1152
        %v1154 = vpop.f32.mrb[0].mxu0
        %1155 = vmatprep.mubr.f32.mxu0 0.0
        %1156 = vmatmul.mubr.f32.gmra.mrb[0].mxu0 %v998
        %v1157 = vpop.f32.mrb[0].mxu0
        %v1158 = vadd.f32 0.0, %v1157
        %v1159 = vpop.f32.mrb[0].mxu0
        %1160 = vmatprep.mubr.f32.mxu0 0.0
        %1161 = vmatmul.mubr.f32.gmra.mrb[0].mxu0 %v999
        %v1162 = vpop.f32.mrb[0].mxu0
        %v1163 = vadd.f32 0.0, %v1162
        %v1164 = vpop.f32.mrb[0].mxu0
        %1165 = vmatprep.mubr.f32.mxu0 0.0
        %1166 = vmatmul.mubr.f32.gmra.mrb[0].mxu0 %v1000
        %v1167 = vpop.f32.mrb[0].mxu0
        %v1168 = vadd.f32 0.0, %v1167
        %v1169 = vpop.f32.mrb[0].mxu0
        %1170 = vmatprep.mubr.f32.mxu0 0.0
        %1171 = vmatmul.mubr.f32.gmra.mrb[0].mxu0 %v1001
        %v1172 = vpop.f32.mrb[0].mxu0
        %v1173 = vadd.f32 0.0, %v1172
        %v1174 = vpop.f32.mrb[0].mxu0
        %1175 = vmatprep.mubr.f32.mxu0 0.0
        %1176 = vmatmul.mubr.f32.gmra.mrb[0].mxu0 %v1002
        %v1177 = vpop.f32.mrb[0].mxu0
        %v1178 = vadd.f32 0.0, %v1177
        %v1179 = vpop.f32.mrb[0].mxu0
        %1180 = vmatprep.mubr.f32.mxu0 0.0
        %1181 = vmatmul.mubr.f32.gmra.mrb[0].mxu0 %v1003
        %v1182 = vpop.f32.mrb[0].mxu0
        %v1183 = vadd.f32 0.0, %v1182
        %v1184 = vpop.f32.mrb[0].mxu0
        %1185 = vmatprep.mubr.f32.mxu0 0.0
        %1186 = vmatmul.mubr.f32.gmra.mrb[0].mxu0 %v1004
        %v1187 = vpop.f32.mrb[0].mxu0
        %v1188 = vadd.f32 0.0, %v1187
        %v1189 = vpop.f32.mrb[0].mxu0
        %1190 = vmatprep.mubr.f32.mxu0 0.0
        %1191 = vmatmul.mubr.f32.gmra.mrb[0].mxu0 %v1005
        %v1192 = vpop.f32.mrb[0].mxu0
        %v1193 = vadd.f32 0.0, %v1192
        %v1194 = vpop.f32.mrb[0].mxu0
        %1195 = vmatprep.mubr.f32.mxu0 0.0
        %1196 = vmatmul.mubr.f32.gmra.mrb[0].mxu0 %v1006
        %v1197 = vpop.f32.mrb[0].mxu0
        %v1198 = vadd.f32 0.0, %v1197
        %v1199 = vpop.f32.mrb[0].mxu0
        %1200 = vmatprep.mubr.f32.mxu0 0.0
        %1201 = vmatmul.mubr.f32.gmra.mrb[0].mxu0 %v1007
        %v1202 = vpop.f32.mrb[0].mxu0
        %v1203 = vadd.f32 0.0, %v1202
        %v1204 = vpop.f32.mrb[0].mxu0
        %1205 = vmatprep.mubr.f32.mxu0 0.0
        %1206 = vmatmul.mubr.f32.gmra.mrb[0].mxu0 %v1008
        %v1207 = vpop.f32.mrb[0].mxu0
        %v1208 = vadd.f32 0.0, %v1207
        %v1209 = vpop.f32.mrb[0].mxu0
        %1210 = vmatprep.mubr.f32.mxu0 0.0
        %1211 = vmatmul.mubr.f32.gmra.mrb[0].mxu0 %v1009
        %v1212 = vpop.f32.mrb[0].mxu0
        %v1213 = vadd.f32 0.0, %v1212
        %v1214 = vpop.f32.mrb[0].mxu0
        %1215 = vmatprep.mubr.f32.mxu0 0.0
        %1216 = vmatmul.mubr.f32.gmra.mrb[0].mxu0 %v1010
        %v1217 = vpop.f32.mrb[0].mxu0
        %v1218 = vadd.f32 0.0, %v1217
        %v1219 = vpop.f32.mrb[0].mxu0
        %1220 = vmatprep.mubr.f32.mxu0 0.0
        %1221 = vmatmul.mubr.f32.gmra.mrb[0].mxu0 %v1011
        %v1222 = vpop.f32.mrb[0].mxu0
        %v1223 = vadd.f32 0.0, %v1222
        %v1224 = vpop.f32.mrb[0].mxu0
        %1225 = vmatprep.mubr.f32.mxu0 0.0
        %1226 = vmatmul.mubr.f32.gmra.mrb[0].mxu0 %v1012
        %v1227 = vpop.f32.mrb[0].mxu0
        %v1228 = vadd.f32 0.0, %v1227
        %v1229 = vpop.f32.mrb[0].mxu0
        %1230 = vmatprep.mubr.f32.mxu0 0.0
        %1231 = vmatmul.mubr.f32.gmra.mrb[0].mxu0 %v1013
        %v1232 = vpop.f32.mrb[0].mxu0
        %v1233 = vadd.f32 0.0, %v1232
        %v1234 = vpop.f32.mrb[0].mxu0
        %1235 = vmatprep.mubr.f32.mxu0 0.0
        %1236 = vmatmul.mubr.f32.gmra.mrb[0].mxu0 %v1014
        %v1237 = vpop.f32.mrb[0].mxu0
        %v1238 = vadd.f32 0.0, %v1237
        %v1239 = vpop.f32.mrb[0].mxu0
        %1240 = vmatprep.mubr.f32.mxu0 0.0
        %1241 = vmatmul.mubr.f32.gmra.mrb[0].mxu0 %v1015
        %v1242 = vpop.f32.mrb[0].mxu0
        %v1243 = vadd.f32 0.0, %v1242
        %v1244 = vpop.f32.mrb[0].mxu0
        %1245 = vmatprep.mubr.f32.mxu0 0.0
        %1246 = vmatmul.mubr.f32.gmra.mrb[0].mxu0 %v1016
        %v1247 = vpop.f32.mrb[0].mxu0
        %v1248 = vadd.f32 0.0, %v1247
        %v1249 = vpop.f32.mrb[0].mxu0
        %1250 = vmatprep.mubr.f32.mxu0 0.0
        %1251 = vmatmul.mubr.f32.gmra.mrb[0].mxu0 %v1017
        %v1252 = vpop.f32.mrb[0].mxu0
        %v1253 = vadd.f32 0.0, %v1252
        %v1254 = vpop.f32.mrb[0].mxu0
        %1255 = vmatprep.mubr.f32.mxu0 0.0
        %1256 = vmatmul.mubr.f32.gmra.mrb[0].mxu0 %v1018
        %v1257 = vpop.f32.mrb[0].mxu0
        %v1258 = vadd.f32 0.0, %v1257
        %v1259 = vpop.f32.mrb[0].mxu0
        %1260 = vdwg.mxu0
        %v1261 = vadd.f32 %v829, %v1103
        %v1262 = vadd.f32 %v834, %v1108
        %v1263 = vadd.f32 %v839, %v1113
        %v1264 = vadd.f32 %v844, %v1118
        %v1265 = vadd.f32 %v849, %v1123
        %v1266 = vadd.f32 %v854, %v1128
        %v1267 = vadd.f32 %v859, %v1133
        %v1268 = vadd.f32 %v864, %v1138
        %v1269 = vadd.f32 %v869, %v1143
        %v1270 = vadd.f32 %v874, %v1148
        %v1271 = vadd.f32 %v879, %v1153
        %v1272 = vadd.f32 %v884, %v1158
        %v1273 = vadd.f32 %v889, %v1163
        %v1274 = vadd.f32 %v894, %v1168
        %v1275 = vadd.f32 %v899, %v1173
        %v1276 = vadd.f32 %v904, %v1178
        %v1277 = vadd.f32 %v909, %v1183
        %v1278 = vadd.f32 %v914, %v1188
        %v1279 = vadd.f32 %v919, %v1193
        %v1280 = vadd.f32 %v924, %v1198
        %v1281 = vadd.f32 %v929, %v1203
        %v1282 = vadd.f32 %v934, %v1208
        %v1283 = vadd.f32 %v939, %v1213
        %v1284 = vadd.f32 %v944, %v1218
        %v1285 = vadd.f32 %v949, %v1223
        %v1286 = vadd.f32 %v954, %v1228
        %v1287 = vadd.f32 %v959, %v1233
        %v1288 = vadd.f32 %v964, %v1238
        %v1289 = vadd.f32 %v969, %v1243
        %v1290 = vadd.f32 %v974, %v1248
        %v1291 = vadd.f32 %v979, %v1253
        %v1292 = vadd.f32 %v984, %v1258
        %v1293 = vld [vmem:[%s407 + $0x7] sm:$0xff]
        %v1294 = vld [vmem:[%s407 + $0xf] sm:$0xff]
        %v1295 = vld [vmem:[%s407 + $0x27] sm:$0xff]
        %v1296 = vld [vmem:[%s407 + $0x2f] sm:$0xff]
        %v1297 = vld [vmem:[%s407 + $0x47] sm:$0xff]
        %v1298 = vld [vmem:[%s407 + $0x4f] sm:$0xff]
        %v1299 = vld [vmem:[%s407 + $0x67] sm:$0xff]
        %v1300 = vld [vmem:[%s407 + $0x6f] sm:$0xff]
        %v1301 = vld [vmem:[%s407 + $0x87] sm:$0xff]
        %v1302 = vld [vmem:[%s407 + $0x8f] sm:$0xff]
        %v1303 = vld [vmem:[%s407 + $0xa7] sm:$0xff]
        %v1304 = vld [vmem:[%s407 + $0xaf] sm:$0xff]
        %v1305 = vld [vmem:[%s407 + $0xc7] sm:$0xff]
        %v1306 = vld [vmem:[%s407 + $0xcf] sm:$0xff]
        %v1307 = vld [vmem:[%s407 + $0xe7] sm:$0xff]
        %v1308 = vld [vmem:[%s407 + $0xef] sm:$0xff]
        %v1309 = vld [vmem:[%s407 + $0x107] sm:$0xff]
        %v1310 = vld [vmem:[%s407 + $0x10f] sm:$0xff]
        %v1311 = vld [vmem:[%s407 + $0x127] sm:$0xff]
        %v1312 = vld [vmem:[%s407 + $0x12f] sm:$0xff]
        %v1313 = vld [vmem:[%s407 + $0x147] sm:$0xff]
        %v1314 = vld [vmem:[%s407 + $0x14f] sm:$0xff]
        %v1315 = vld [vmem:[%s407 + $0x167] sm:$0xff]
        %v1316 = vld [vmem:[%s407 + $0x16f] sm:$0xff]
        %v1317 = vld [vmem:[%s407 + $0x187] sm:$0xff]
        %v1318 = vld [vmem:[%s407 + $0x18f] sm:$0xff]
        %v1319 = vld [vmem:[%s407 + $0x1a7] sm:$0xff]
        %v1320 = vld [vmem:[%s407 + $0x1af] sm:$0xff]
        %v1321 = vld [vmem:[%s407 + $0x1c7] sm:$0xff]
        %v1322 = vld [vmem:[%s407 + $0x1cf] sm:$0xff]
        %v1323 = vld [vmem:[%s407 + $0x1e7] sm:$0xff]
        %v1324 = vld [vmem:[%s407 + $0x1ef] sm:$0xff]
        %s1325 = scalar_lea.vmem %s3, 384
        %v1326 = vld [vmem:[%s1325] sm:$0xff]
        %v1327 = vld [vmem:[%s1325 + $0x8] sm:$0xff]
        %v1328 = vld [vmem:[%s1325 + $0x10] sm:$0xff]
        %v1329 = vld [vmem:[%s1325 + $0x18] sm:$0xff]
        %v1330 = vld [vmem:[%s1325 + $0x20] sm:$0xff]
        %v1331 = vld [vmem:[%s1325 + $0x28] sm:$0xff]
        %v1332 = vld [vmem:[%s1325 + $0x30] sm:$0xff]
        %v1333 = vld [vmem:[%s1325 + $0x38] sm:$0xff]
        %v1334 = vld [vmem:[%s1325 + $0x40] sm:$0xff]
        %v1335 = vld [vmem:[%s1325 + $0x48] sm:$0xff]
        %v1336 = vld [vmem:[%s1325 + $0x50] sm:$0xff]
        %v1337 = vld [vmem:[%s1325 + $0x58] sm:$0xff]
        %v1338 = vld [vmem:[%s1325 + $0x60] sm:$0xff]
        %v1339 = vld [vmem:[%s1325 + $0x68] sm:$0xff]
        %v1340 = vld [vmem:[%s1325 + $0x70] sm:$0xff]
        %v1341 = vld [vmem:[%s1325 + $0x78] sm:$0xff]
        %1342 = vmatprep.subr.mxu0 0.0
        %1343 = vmatpush1.msra.mxu0 %v1326
        %1344 = vmatprep.subr.mxu0 0.0
        %1345 = vmatpush1.msra.mxu0 %v1327
        %1346 = vmatprep.subr.mxu0 0.0
        %1347 = vmatpush1.msra.mxu0 %v1328
        %1348 = vmatprep.subr.mxu0 0.0
        %1349 = vmatpush1.msra.mxu0 %v1329
        %1350 = vmatprep.subr.mxu0 0.0
        %1351 = vmatpush1.msra.mxu0 %v1330
        %1352 = vmatprep.subr.mxu0 0.0
        %1353 = vmatpush1.msra.mxu0 %v1331
        %1354 = vmatprep.subr.mxu0 0.0
        %1355 = vmatpush1.msra.mxu0 %v1332
        %1356 = vmatprep.subr.mxu0 0.0
        %1357 = vmatpush1.msra.mxu0 %v1333
        %1358 = vmatprep.subr.mxu0 0.0
        %1359 = vmatpush1.msra.mxu0 %v1334
        %1360 = vmatprep.subr.mxu0 0.0
        %1361 = vmatpush1.msra.mxu0 %v1335
        %1362 = vmatprep.subr.mxu0 0.0
        %1363 = vmatpush1.msra.mxu0 %v1336
        %1364 = vmatprep.subr.mxu0 0.0
        %1365 = vmatpush1.msra.mxu0 %v1337
        %1366 = vmatprep.subr.mxu0 0.0
        %1367 = vmatpush1.msra.mxu0 %v1338
        %1368 = vmatprep.subr.mxu0 0.0
        %1369 = vmatpush1.msra.mxu0 %v1339
        %1370 = vmatprep.subr.mxu0 0.0
        %1371 = vmatpush1.msra.mxu0 %v1340
        %1372 = vmatprep.subr.mxu0 0.0
        %1373 = vmatpush1.msra.mxu0 %v1341
        %1374 = vmatprep.subr.mxu0 0.0
        %1375 = vmatpush1.msra.mxu0 0.0
        %1376 = vmatprep.subr.mxu0 0.0
        %1377 = vmatpush1.msra.mxu0 0.0
        %1378 = vmatprep.subr.mxu0 0.0
        %1379 = vmatpush1.msra.mxu0 0.0
        %1380 = vmatprep.subr.mxu0 0.0
        %1381 = vmatpush1.msra.mxu0 0.0
        %1382 = vmatprep.subr.mxu0 0.0
        %1383 = vmatpush1.msra.mxu0 0.0
        %1384 = vmatprep.subr.mxu0 0.0
        %1385 = vmatpush1.msra.mxu0 0.0
        %1386 = vmatprep.subr.mxu0 0.0
        %1387 = vmatpush1.msra.mxu0 0.0
        %1388 = vmatprep.subr.mxu0 0.0
        %1389 = vmatpush1.msra.mxu0 0.0
        %1390 = vmatprep.subr.mxu0 0.0
        %1391 = vmatpush1.msra.mxu0 0.0
        %1392 = vmatprep.subr.mxu0 0.0
        %1393 = vmatpush1.msra.mxu0 0.0
        %1394 = vmatprep.subr.mxu0 0.0
        %1395 = vmatpush1.msra.mxu0 0.0
        %1396 = vmatprep.subr.mxu0 0.0
        %1397 = vmatpush1.msra.mxu0 0.0
        %1398 = vmatprep.subr.mxu0 0.0
        %1399 = vmatpush1.msra.mxu0 0.0
        %1400 = vmatprep.subr.mxu0 0.0
        %1401 = vmatpush1.msra.mxu0 0.0
        %1402 = vmatprep.subr.mxu0 0.0
        %1403 = vmatpush1.msra.mxu0 0.0
        %1404 = vmatprep.subr.mxu0 0.0
        %1405 = vmatpush1.msra.mxu0 0.0
        %1406 = vmatprep.mubr.f32.mxu0 0.0
        %1407 = vmatmul.mubr.f32.gmra.mrb[0].mxu0 %v1293
        %v1408 = vpop.f32.mrb[0].mxu0
        %v1409 = vadd.f32 0.0, %v1408
        %v1410 = vpop.f32.mrb[0].mxu0
        %1411 = vmatprep.mubr.f32.mxu0 0.0
        %1412 = vmatmul.mubr.f32.gmra.mrb[0].mxu0 %v1294
        %v1413 = vpop.f32.mrb[0].mxu0
        %v1414 = vadd.f32 0.0, %v1413
        %v1415 = vpop.f32.mrb[0].mxu0
        %1416 = vmatprep.mubr.f32.mxu0 0.0
        %1417 = vmatmul.mubr.f32.gmra.mrb[0].mxu0 %v1295
        %v1418 = vpop.f32.mrb[0].mxu0
        %v1419 = vadd.f32 0.0, %v1418
        %v1420 = vpop.f32.mrb[0].mxu0
        %1421 = vmatprep.mubr.f32.mxu0 0.0
        %1422 = vmatmul.mubr.f32.gmra.mrb[0].mxu0 %v1296
        %v1423 = vpop.f32.mrb[0].mxu0
        %v1424 = vadd.f32 0.0, %v1423
        %v1425 = vpop.f32.mrb[0].mxu0
        %1426 = vmatprep.mubr.f32.mxu0 0.0
        %1427 = vmatmul.mubr.f32.gmra.mrb[0].mxu0 %v1297
        %v1428 = vpop.f32.mrb[0].mxu0
        %v1429 = vadd.f32 0.0, %v1428
        %v1430 = vpop.f32.mrb[0].mxu0
        %1431 = vmatprep.mubr.f32.mxu0 0.0
        %1432 = vmatmul.mubr.f32.gmra.mrb[0].mxu0 %v1298
        %v1433 = vpop.f32.mrb[0].mxu0
        %v1434 = vadd.f32 0.0, %v1433
        %v1435 = vpop.f32.mrb[0].mxu0
        %1436 = vmatprep.mubr.f32.mxu0 0.0
        %1437 = vmatmul.mubr.f32.gmra.mrb[0].mxu0 %v1299
        %v1438 = vpop.f32.mrb[0].mxu0
        %v1439 = vadd.f32 0.0, %v1438
        %v1440 = vpop.f32.mrb[0].mxu0
        %1441 = vmatprep.mubr.f32.mxu0 0.0
        %1442 = vmatmul.mubr.f32.gmra.mrb[0].mxu0 %v1300
        %v1443 = vpop.f32.mrb[0].mxu0
        %v1444 = vadd.f32 0.0, %v1443
        %v1445 = vpop.f32.mrb[0].mxu0
        %1446 = vmatprep.mubr.f32.mxu0 0.0
        %1447 = vmatmul.mubr.f32.gmra.mrb[0].mxu0 %v1301
        %v1448 = vpop.f32.mrb[0].mxu0
        %v1449 = vadd.f32 0.0, %v1448
        %v1450 = vpop.f32.mrb[0].mxu0
        %1451 = vmatprep.mubr.f32.mxu0 0.0
        %1452 = vmatmul.mubr.f32.gmra.mrb[0].mxu0 %v1302
        %v1453 = vpop.f32.mrb[0].mxu0
        %v1454 = vadd.f32 0.0, %v1453
        %v1455 = vpop.f32.mrb[0].mxu0
        %1456 = vmatprep.mubr.f32.mxu0 0.0
        %1457 = vmatmul.mubr.f32.gmra.mrb[0].mxu0 %v1303
        %v1458 = vpop.f32.mrb[0].mxu0
        %v1459 = vadd.f32 0.0, %v1458
        %v1460 = vpop.f32.mrb[0].mxu0
        %1461 = vmatprep.mubr.f32.mxu0 0.0
        %1462 = vmatmul.mubr.f32.gmra.mrb[0].mxu0 %v1304
        %v1463 = vpop.f32.mrb[0].mxu0
        %v1464 = vadd.f32 0.0, %v1463
        %v1465 = vpop.f32.mrb[0].mxu0
        %1466 = vmatprep.mubr.f32.mxu0 0.0
        %1467 = vmatmul.mubr.f32.gmra.mrb[0].mxu0 %v1305
        %v1468 = vpop.f32.mrb[0].mxu0
        %v1469 = vadd.f32 0.0, %v1468
        %v1470 = vpop.f32.mrb[0].mxu0
        %1471 = vmatprep.mubr.f32.mxu0 0.0
        %1472 = vmatmul.mubr.f32.gmra.mrb[0].mxu0 %v1306
        %v1473 = vpop.f32.mrb[0].mxu0
        %v1474 = vadd.f32 0.0, %v1473
        %v1475 = vpop.f32.mrb[0].mxu0
        %1476 = vmatprep.mubr.f32.mxu0 0.0
        %1477 = vmatmul.mubr.f32.gmra.mrb[0].mxu0 %v1307
        %v1478 = vpop.f32.mrb[0].mxu0
        %v1479 = vadd.f32 0.0, %v1478
        %v1480 = vpop.f32.mrb[0].mxu0
        %1481 = vmatprep.mubr.f32.mxu0 0.0
        %1482 = vmatmul.mubr.f32.gmra.mrb[0].mxu0 %v1308
        %v1483 = vpop.f32.mrb[0].mxu0
        %v1484 = vadd.f32 0.0, %v1483
        %v1485 = vpop.f32.mrb[0].mxu0
        %1486 = vmatprep.mubr.f32.mxu0 0.0
        %1487 = vmatmul.mubr.f32.gmra.mrb[0].mxu0 %v1309
        %v1488 = vpop.f32.mrb[0].mxu0
        %v1489 = vadd.f32 0.0, %v1488
        %v1490 = vpop.f32.mrb[0].mxu0
        %1491 = vmatprep.mubr.f32.mxu0 0.0
        %1492 = vmatmul.mubr.f32.gmra.mrb[0].mxu0 %v1310
        %v1493 = vpop.f32.mrb[0].mxu0
        %v1494 = vadd.f32 0.0, %v1493
        %v1495 = vpop.f32.mrb[0].mxu0
        %1496 = vmatprep.mubr.f32.mxu0 0.0
        %1497 = vmatmul.mubr.f32.gmra.mrb[0].mxu0 %v1311
        %v1498 = vpop.f32.mrb[0].mxu0
        %v1499 = vadd.f32 0.0, %v1498
        %v1500 = vpop.f32.mrb[0].mxu0
        %1501 = vmatprep.mubr.f32.mxu0 0.0
        %1502 = vmatmul.mubr.f32.gmra.mrb[0].mxu0 %v1312
        %v1503 = vpop.f32.mrb[0].mxu0
        %v1504 = vadd.f32 0.0, %v1503
        %v1505 = vpop.f32.mrb[0].mxu0
        %1506 = vmatprep.mubr.f32.mxu0 0.0
        %1507 = vmatmul.mubr.f32.gmra.mrb[0].mxu0 %v1313
        %v1508 = vpop.f32.mrb[0].mxu0
        %v1509 = vadd.f32 0.0, %v1508
        %v1510 = vpop.f32.mrb[0].mxu0
        %1511 = vmatprep.mubr.f32.mxu0 0.0
        %1512 = vmatmul.mubr.f32.gmra.mrb[0].mxu0 %v1314
        %v1513 = vpop.f32.mrb[0].mxu0
        %v1514 = vadd.f32 0.0, %v1513
        %v1515 = vpop.f32.mrb[0].mxu0
        %1516 = vmatprep.mubr.f32.mxu0 0.0
        %1517 = vmatmul.mubr.f32.gmra.mrb[0].mxu0 %v1315
        %v1518 = vpop.f32.mrb[0].mxu0
        %v1519 = vadd.f32 0.0, %v1518
        %v1520 = vpop.f32.mrb[0].mxu0
        %1521 = vmatprep.mubr.f32.mxu0 0.0
        %1522 = vmatmul.mubr.f32.gmra.mrb[0].mxu0 %v1316
        %v1523 = vpop.f32.mrb[0].mxu0
        %v1524 = vadd.f32 0.0, %v1523
        %v1525 = vpop.f32.mrb[0].mxu0
        %1526 = vmatprep.mubr.f32.mxu0 0.0
        %1527 = vmatmul.mubr.f32.gmra.mrb[0].mxu0 %v1317
        %v1528 = vpop.f32.mrb[0].mxu0
        %v1529 = vadd.f32 0.0, %v1528
        %v1530 = vpop.f32.mrb[0].mxu0
        %1531 = vmatprep.mubr.f32.mxu0 0.0
        %1532 = vmatmul.mubr.f32.gmra.mrb[0].mxu0 %v1318
        %v1533 = vpop.f32.mrb[0].mxu0
        %v1534 = vadd.f32 0.0, %v1533
        %v1535 = vpop.f32.mrb[0].mxu0
        %1536 = vmatprep.mubr.f32.mxu0 0.0
        %1537 = vmatmul.mubr.f32.gmra.mrb[0].mxu0 %v1319
        %v1538 = vpop.f32.mrb[0].mxu0
        %v1539 = vadd.f32 0.0, %v1538
        %v1540 = vpop.f32.mrb[0].mxu0
        %1541 = vmatprep.mubr.f32.mxu0 0.0
        %1542 = vmatmul.mubr.f32.gmra.mrb[0].mxu0 %v1320
        %v1543 = vpop.f32.mrb[0].mxu0
        %v1544 = vadd.f32 0.0, %v1543
        %v1545 = vpop.f32.mrb[0].mxu0
        %1546 = vmatprep.mubr.f32.mxu0 0.0
        %1547 = vmatmul.mubr.f32.gmra.mrb[0].mxu0 %v1321
        %v1548 = vpop.f32.mrb[0].mxu0
        %v1549 = vadd.f32 0.0, %v1548
        %v1550 = vpop.f32.mrb[0].mxu0
        %1551 = vmatprep.mubr.f32.mxu0 0.0
        %1552 = vmatmul.mubr.f32.gmra.mrb[0].mxu0 %v1322
        %v1553 = vpop.f32.mrb[0].mxu0
        %v1554 = vadd.f32 0.0, %v1553
        %v1555 = vpop.f32.mrb[0].mxu0
        %1556 = vmatprep.mubr.f32.mxu0 0.0
        %1557 = vmatmul.mubr.f32.gmra.mrb[0].mxu0 %v1323
        %v1558 = vpop.f32.mrb[0].mxu0
        %v1559 = vadd.f32 0.0, %v1558
        %v1560 = vpop.f32.mrb[0].mxu0
        %1561 = vmatprep.mubr.f32.mxu0 0.0
        %1562 = vmatmul.mubr.f32.gmra.mrb[0].mxu0 %v1324
        %v1563 = vpop.f32.mrb[0].mxu0
        %v1564 = vadd.f32 0.0, %v1563
        %v1565 = vpop.f32.mrb[0].mxu0
        %1566 = vdwg.mxu0
        %v1567 = vadd.f32 %v1261, %v1409
        %v1568 = vadd.f32 %v1262, %v1414
        %v1569 = vadd.f32 %v1263, %v1419
        %v1570 = vadd.f32 %v1264, %v1424
        %v1571 = vadd.f32 %v1265, %v1429
        %v1572 = vadd.f32 %v1266, %v1434
        %v1573 = vadd.f32 %v1267, %v1439
        %v1574 = vadd.f32 %v1268, %v1444
        %v1575 = vadd.f32 %v1269, %v1449
        %v1576 = vadd.f32 %v1270, %v1454
        %v1577 = vadd.f32 %v1271, %v1459
        %v1578 = vadd.f32 %v1272, %v1464
        %v1579 = vadd.f32 %v1273, %v1469
        %v1580 = vadd.f32 %v1274, %v1474
        %v1581 = vadd.f32 %v1275, %v1479
        %v1582 = vadd.f32 %v1276, %v1484
        %v1583 = vadd.f32 %v1277, %v1489
        %v1584 = vadd.f32 %v1278, %v1494
        %v1585 = vadd.f32 %v1279, %v1499
        %v1586 = vadd.f32 %v1280, %v1504
        %v1587 = vadd.f32 %v1281, %v1509
        %v1588 = vadd.f32 %v1282, %v1514
        %v1589 = vadd.f32 %v1283, %v1519
        %v1590 = vadd.f32 %v1284, %v1524
        %v1591 = vadd.f32 %v1285, %v1529
        %v1592 = vadd.f32 %v1286, %v1534
        %v1593 = vadd.f32 %v1287, %v1539
        %v1594 = vadd.f32 %v1288, %v1544
        %v1595 = vadd.f32 %v1289, %v1549
        %v1596 = vadd.f32 %v1290, %v1554
        %v1597 = vadd.f32 %v1291, %v1559
        %v1598 = vadd.f32 %v1292, %v1564
        %v1599 = vld [vmem:[%s407 + $0x8] sm:$0xff]
        %v1600 = vld [vmem:[%s407 + $0x10] sm:$0xff]
        %v1601 = vld [vmem:[%s407 + $0x28] sm:$0xff]
        %v1602 = vld [vmem:[%s407 + $0x30] sm:$0xff]
        %v1603 = vld [vmem:[%s407 + $0x48] sm:$0xff]
        %v1604 = vld [vmem:[%s407 + $0x50] sm:$0xff]
        %v1605 = vld [vmem:[%s407 + $0x68] sm:$0xff]
        %v1606 = vld [vmem:[%s407 + $0x70] sm:$0xff]
        %v1607 = vld [vmem:[%s407 + $0x88] sm:$0xff]
        %v1608 = vld [vmem:[%s407 + $0x90] sm:$0xff]
        %v1609 = vld [vmem:[%s407 + $0xa8] sm:$0xff]
        %v1610 = vld [vmem:[%s407 + $0xb0] sm:$0xff]
        %v1611 = vld [vmem:[%s407 + $0xc8] sm:$0xff]
        %v1612 = vld [vmem:[%s407 + $0xd0] sm:$0xff]
        %v1613 = vld [vmem:[%s407 + $0xe8] sm:$0xff]
        %v1614 = vld [vmem:[%s407 + $0xf0] sm:$0xff]
        %v1615 = vld [vmem:[%s407 + $0x108] sm:$0xff]
        %v1616 = vld [vmem:[%s407 + $0x110] sm:$0xff]
        %v1617 = vld [vmem:[%s407 + $0x128] sm:$0xff]
        %v1618 = vld [vmem:[%s407 + $0x130] sm:$0xff]
        %v1619 = vld [vmem:[%s407 + $0x148] sm:$0xff]
        %v1620 = vld [vmem:[%s407 + $0x150] sm:$0xff]
        %v1621 = vld [vmem:[%s407 + $0x168] sm:$0xff]
        %v1622 = vld [vmem:[%s407 + $0x170] sm:$0xff]
        %v1623 = vld [vmem:[%s407 + $0x188] sm:$0xff]
        %v1624 = vld [vmem:[%s407 + $0x190] sm:$0xff]
        %v1625 = vld [vmem:[%s407 + $0x1a8] sm:$0xff]
        %v1626 = vld [vmem:[%s407 + $0x1b0] sm:$0xff]
        %v1627 = vld [vmem:[%s407 + $0x1c8] sm:$0xff]
        %v1628 = vld [vmem:[%s407 + $0x1d0] sm:$0xff]
        %v1629 = vld [vmem:[%s407 + $0x1e8] sm:$0xff]
        %v1630 = vld [vmem:[%s407 + $0x1f0] sm:$0xff]
        %s1631 = scalar_lea.vmem %s3, 512
        %v1632 = vld [vmem:[%s1631] sm:$0xff]
        %v1633 = vld [vmem:[%s1631 + $0x8] sm:$0xff]
        %v1634 = vld [vmem:[%s1631 + $0x10] sm:$0xff]
        %v1635 = vld [vmem:[%s1631 + $0x18] sm:$0xff]
        %v1636 = vld [vmem:[%s1631 + $0x20] sm:$0xff]
        %v1637 = vld [vmem:[%s1631 + $0x28] sm:$0xff]
        %v1638 = vld [vmem:[%s1631 + $0x30] sm:$0xff]
        %v1639 = vld [vmem:[%s1631 + $0x38] sm:$0xff]
        %v1640 = vld [vmem:[%s1631 + $0x40] sm:$0xff]
        %v1641 = vld [vmem:[%s1631 + $0x48] sm:$0xff]
        %v1642 = vld [vmem:[%s1631 + $0x50] sm:$0xff]
        %v1643 = vld [vmem:[%s1631 + $0x58] sm:$0xff]
        %v1644 = vld [vmem:[%s1631 + $0x60] sm:$0xff]
        %v1645 = vld [vmem:[%s1631 + $0x68] sm:$0xff]
        %v1646 = vld [vmem:[%s1631 + $0x70] sm:$0xff]
        %v1647 = vld [vmem:[%s1631 + $0x78] sm:$0xff]
        %1648 = vmatprep.subr.mxu0 0.0
        %1649 = vmatpush1.msra.mxu0 %v1632
        %1650 = vmatprep.subr.mxu0 0.0
        %1651 = vmatpush1.msra.mxu0 %v1633
        %1652 = vmatprep.subr.mxu0 0.0
        %1653 = vmatpush1.msra.mxu0 %v1634
        %1654 = vmatprep.subr.mxu0 0.0
        %1655 = vmatpush1.msra.mxu0 %v1635
        %1656 = vmatprep.subr.mxu0 0.0
        %1657 = vmatpush1.msra.mxu0 %v1636
        %1658 = vmatprep.subr.mxu0 0.0
        %1659 = vmatpush1.msra.mxu0 %v1637
        %1660 = vmatprep.subr.mxu0 0.0
        %1661 = vmatpush1.msra.mxu0 %v1638
        %1662 = vmatprep.subr.mxu0 0.0
        %1663 = vmatpush1.msra.mxu0 %v1639
        %1664 = vmatprep.subr.mxu0 0.0
        %1665 = vmatpush1.msra.mxu0 %v1640
        %1666 = vmatprep.subr.mxu0 0.0
        %1667 = vmatpush1.msra.mxu0 %v1641
        %1668 = vmatprep.subr.mxu0 0.0
        %1669 = vmatpush1.msra.mxu0 %v1642
        %1670 = vmatprep.subr.mxu0 0.0
        %1671 = vmatpush1.msra.mxu0 %v1643
        %1672 = vmatprep.subr.mxu0 0.0
        %1673 = vmatpush1.msra.mxu0 %v1644
        %1674 = vmatprep.subr.mxu0 0.0
        %1675 = vmatpush1.msra.mxu0 %v1645
        %1676 = vmatprep.subr.mxu0 0.0
        %1677 = vmatpush1.msra.mxu0 %v1646
        %1678 = vmatprep.subr.mxu0 0.0
        %1679 = vmatpush1.msra.mxu0 %v1647
        %1680 = vmatprep.subr.mxu0 0.0
        %1681 = vmatpush1.msra.mxu0 0.0
        %1682 = vmatprep.subr.mxu0 0.0
        %1683 = vmatpush1.msra.mxu0 0.0
        %1684 = vmatprep.subr.mxu0 0.0
        %1685 = vmatpush1.msra.mxu0 0.0
        %1686 = vmatprep.subr.mxu0 0.0
        %1687 = vmatpush1.msra.mxu0 0.0
        %1688 = vmatprep.subr.mxu0 0.0
        %1689 = vmatpush1.msra.mxu0 0.0
        %1690 = vmatprep.subr.mxu0 0.0
        %1691 = vmatpush1.msra.mxu0 0.0
        %1692 = vmatprep.subr.mxu0 0.0
        %1693 = vmatpush1.msra.mxu0 0.0
        %1694 = vmatprep.subr.mxu0 0.0
        %1695 = vmatpush1.msra.mxu0 0.0
        %1696 = vmatprep.subr.mxu0 0.0
        %1697 = vmatpush1.msra.mxu0 0.0
        %1698 = vmatprep.subr.mxu0 0.0
        %1699 = vmatpush1.msra.mxu0 0.0
        %1700 = vmatprep.subr.mxu0 0.0
        %1701 = vmatpush1.msra.mxu0 0.0
        %1702 = vmatprep.subr.mxu0 0.0
        %1703 = vmatpush1.msra.mxu0 0.0
        %1704 = vmatprep.subr.mxu0 0.0
        %1705 = vmatpush1.msra.mxu0 0.0
        %1706 = vmatprep.subr.mxu0 0.0
        %1707 = vmatpush1.msra.mxu0 0.0
        %1708 = vmatprep.subr.mxu0 0.0
        %1709 = vmatpush1.msra.mxu0 0.0
        %1710 = vmatprep.subr.mxu0 0.0
        %1711 = vmatpush1.msra.mxu0 0.0
        %1712 = vmatprep.mubr.f32.mxu0 0.0
        %1713 = vmatmul.mubr.f32.gmra.mrb[0].mxu0 %v1599
        %v1714 = vpop.f32.mrb[0].mxu0
        %v1715 = vadd.f32 0.0, %v1714
        %v1716 = vpop.f32.mrb[0].mxu0
        %1717 = vmatprep.mubr.f32.mxu0 0.0
        %1718 = vmatmul.mubr.f32.gmra.mrb[0].mxu0 %v1600
        %v1719 = vpop.f32.mrb[0].mxu0
        %v1720 = vadd.f32 0.0, %v1719
        %v1721 = vpop.f32.mrb[0].mxu0
        %1722 = vmatprep.mubr.f32.mxu0 0.0
        %1723 = vmatmul.mubr.f32.gmra.mrb[0].mxu0 %v1601
        %v1724 = vpop.f32.mrb[0].mxu0
        %v1725 = vadd.f32 0.0, %v1724
        %v1726 = vpop.f32.mrb[0].mxu0
        %1727 = vmatprep.mubr.f32.mxu0 0.0
        %1728 = vmatmul.mubr.f32.gmra.mrb[0].mxu0 %v1602
        %v1729 = vpop.f32.mrb[0].mxu0
        %v1730 = vadd.f32 0.0, %v1729
        %v1731 = vpop.f32.mrb[0].mxu0
        %1732 = vmatprep.mubr.f32.mxu0 0.0
        %1733 = vmatmul.mubr.f32.gmra.mrb[0].mxu0 %v1603
        %v1734 = vpop.f32.mrb[0].mxu0
        %v1735 = vadd.f32 0.0, %v1734
        %v1736 = vpop.f32.mrb[0].mxu0
        %1737 = vmatprep.mubr.f32.mxu0 0.0
        %1738 = vmatmul.mubr.f32.gmra.mrb[0].mxu0 %v1604
        %v1739 = vpop.f32.mrb[0].mxu0
        %v1740 = vadd.f32 0.0, %v1739
        %v1741 = vpop.f32.mrb[0].mxu0
        %1742 = vmatprep.mubr.f32.mxu0 0.0
        %1743 = vmatmul.mubr.f32.gmra.mrb[0].mxu0 %v1605
        %v1744 = vpop.f32.mrb[0].mxu0
        %v1745 = vadd.f32 0.0, %v1744
        %v1746 = vpop.f32.mrb[0].mxu0
        %1747 = vmatprep.mubr.f32.mxu0 0.0
        %1748 = vmatmul.mubr.f32.gmra.mrb[0].mxu0 %v1606
        %v1749 = vpop.f32.mrb[0].mxu0
        %v1750 = vadd.f32 0.0, %v1749
        %v1751 = vpop.f32.mrb[0].mxu0
        %1752 = vmatprep.mubr.f32.mxu0 0.0
        %1753 = vmatmul.mubr.f32.gmra.mrb[0].mxu0 %v1607
        %v1754 = vpop.f32.mrb[0].mxu0
        %v1755 = vadd.f32 0.0, %v1754
        %v1756 = vpop.f32.mrb[0].mxu0
        %1757 = vmatprep.mubr.f32.mxu0 0.0
        %1758 = vmatmul.mubr.f32.gmra.mrb[0].mxu0 %v1608
        %v1759 = vpop.f32.mrb[0].mxu0
        %v1760 = vadd.f32 0.0, %v1759
        %v1761 = vpop.f32.mrb[0].mxu0
        %1762 = vmatprep.mubr.f32.mxu0 0.0
        %1763 = vmatmul.mubr.f32.gmra.mrb[0].mxu0 %v1609
        %v1764 = vpop.f32.mrb[0].mxu0
        %v1765 = vadd.f32 0.0, %v1764
        %v1766 = vpop.f32.mrb[0].mxu0
        %1767 = vmatprep.mubr.f32.mxu0 0.0
        %1768 = vmatmul.mubr.f32.gmra.mrb[0].mxu0 %v1610
        %v1769 = vpop.f32.mrb[0].mxu0
        %v1770 = vadd.f32 0.0, %v1769
        %v1771 = vpop.f32.mrb[0].mxu0
        %1772 = vmatprep.mubr.f32.mxu0 0.0
        %1773 = vmatmul.mubr.f32.gmra.mrb[0].mxu0 %v1611
        %v1774 = vpop.f32.mrb[0].mxu0
        %v1775 = vadd.f32 0.0, %v1774
        %v1776 = vpop.f32.mrb[0].mxu0
        %1777 = vmatprep.mubr.f32.mxu0 0.0
        %1778 = vmatmul.mubr.f32.gmra.mrb[0].mxu0 %v1612
        %v1779 = vpop.f32.mrb[0].mxu0
        %v1780 = vadd.f32 0.0, %v1779
        %v1781 = vpop.f32.mrb[0].mxu0
        %1782 = vmatprep.mubr.f32.mxu0 0.0
        %1783 = vmatmul.mubr.f32.gmra.mrb[0].mxu0 %v1613
        %v1784 = vpop.f32.mrb[0].mxu0
        %v1785 = vadd.f32 0.0, %v1784
        %v1786 = vpop.f32.mrb[0].mxu0
        %1787 = vmatprep.mubr.f32.mxu0 0.0
        %1788 = vmatmul.mubr.f32.gmra.mrb[0].mxu0 %v1614
        %v1789 = vpop.f32.mrb[0].mxu0
        %v1790 = vadd.f32 0.0, %v1789
        %v1791 = vpop.f32.mrb[0].mxu0
        %1792 = vmatprep.mubr.f32.mxu0 0.0
        %1793 = vmatmul.mubr.f32.gmra.mrb[0].mxu0 %v1615
        %v1794 = vpop.f32.mrb[0].mxu0
        %v1795 = vadd.f32 0.0, %v1794
        %v1796 = vpop.f32.mrb[0].mxu0
        %1797 = vmatprep.mubr.f32.mxu0 0.0
        %1798 = vmatmul.mubr.f32.gmra.mrb[0].mxu0 %v1616
        %v1799 = vpop.f32.mrb[0].mxu0
        %v1800 = vadd.f32 0.0, %v1799
        %v1801 = vpop.f32.mrb[0].mxu0
        %1802 = vmatprep.mubr.f32.mxu0 0.0
        %1803 = vmatmul.mubr.f32.gmra.mrb[0].mxu0 %v1617
        %v1804 = vpop.f32.mrb[0].mxu0
        %v1805 = vadd.f32 0.0, %v1804
        %v1806 = vpop.f32.mrb[0].mxu0
        %1807 = vmatprep.mubr.f32.mxu0 0.0
        %1808 = vmatmul.mubr.f32.gmra.mrb[0].mxu0 %v1618
        %v1809 = vpop.f32.mrb[0].mxu0
        %v1810 = vadd.f32 0.0, %v1809
        %v1811 = vpop.f32.mrb[0].mxu0
        %1812 = vmatprep.mubr.f32.mxu0 0.0
        %1813 = vmatmul.mubr.f32.gmra.mrb[0].mxu0 %v1619
        %v1814 = vpop.f32.mrb[0].mxu0
        %v1815 = vadd.f32 0.0, %v1814
        %v1816 = vpop.f32.mrb[0].mxu0
        %1817 = vmatprep.mubr.f32.mxu0 0.0
        %1818 = vmatmul.mubr.f32.gmra.mrb[0].mxu0 %v1620
        %v1819 = vpop.f32.mrb[0].mxu0
        %v1820 = vadd.f32 0.0, %v1819
        %v1821 = vpop.f32.mrb[0].mxu0
        %1822 = vmatprep.mubr.f32.mxu0 0.0
        %1823 = vmatmul.mubr.f32.gmra.mrb[0].mxu0 %v1621
        %v1824 = vpop.f32.mrb[0].mxu0
        %v1825 = vadd.f32 0.0, %v1824
        %v1826 = vpop.f32.mrb[0].mxu0
        %1827 = vmatprep.mubr.f32.mxu0 0.0
        %1828 = vmatmul.mubr.f32.gmra.mrb[0].mxu0 %v1622
        %v1829 = vpop.f32.mrb[0].mxu0
        %v1830 = vadd.f32 0.0, %v1829
        %v1831 = vpop.f32.mrb[0].mxu0
        %1832 = vmatprep.mubr.f32.mxu0 0.0
        %1833 = vmatmul.mubr.f32.gmra.mrb[0].mxu0 %v1623
        %v1834 = vpop.f32.mrb[0].mxu0
        %v1835 = vadd.f32 0.0, %v1834
        %v1836 = vpop.f32.mrb[0].mxu0
        %1837 = vmatprep.mubr.f32.mxu0 0.0
        %1838 = vmatmul.mubr.f32.gmra.mrb[0].mxu0 %v1624
        %v1839 = vpop.f32.mrb[0].mxu0
        %v1840 = vadd.f32 0.0, %v1839
        %v1841 = vpop.f32.mrb[0].mxu0
        %1842 = vmatprep.mubr.f32.mxu0 0.0
        %1843 = vmatmul.mubr.f32.gmra.mrb[0].mxu0 %v1625
        %v1844 = vpop.f32.mrb[0].mxu0
        %v1845 = vadd.f32 0.0, %v1844
        %v1846 = vpop.f32.mrb[0].mxu0
        %1847 = vmatprep.mubr.f32.mxu0 0.0
        %1848 = vmatmul.mubr.f32.gmra.mrb[0].mxu0 %v1626
        %v1849 = vpop.f32.mrb[0].mxu0
        %v1850 = vadd.f32 0.0, %v1849
        %v1851 = vpop.f32.mrb[0].mxu0
        %1852 = vmatprep.mubr.f32.mxu0 0.0
        %1853 = vmatmul.mubr.f32.gmra.mrb[0].mxu0 %v1627
        %v1854 = vpop.f32.mrb[0].mxu0
        %v1855 = vadd.f32 0.0, %v1854
        %v1856 = vpop.f32.mrb[0].mxu0
        %1857 = vmatprep.mubr.f32.mxu0 0.0
        %1858 = vmatmul.mubr.f32.gmra.mrb[0].mxu0 %v1628
        %v1859 = vpop.f32.mrb[0].mxu0
        %v1860 = vadd.f32 0.0, %v1859
        %v1861 = vpop.f32.mrb[0].mxu0
        %1862 = vmatprep.mubr.f32.mxu0 0.0
        %1863 = vmatmul.mubr.f32.gmra.mrb[0].mxu0 %v1629
        %v1864 = vpop.f32.mrb[0].mxu0
        %v1865 = vadd.f32 0.0, %v1864
        %v1866 = vpop.f32.mrb[0].mxu0
        %1867 = vmatprep.mubr.f32.mxu0 0.0
        %1868 = vmatmul.mubr.f32.gmra.mrb[0].mxu0 %v1630
        %v1869 = vpop.f32.mrb[0].mxu0
        %v1870 = vadd.f32 0.0, %v1869
        %v1871 = vpop.f32.mrb[0].mxu0
        %1872 = vdwg.mxu0
        %v1873 = vadd.f32 %v1567, %v1715
        %v1874 = vadd.f32 %v1568, %v1720
        %v1875 = vadd.f32 %v1569, %v1725
        %v1876 = vadd.f32 %v1570, %v1730
        %v1877 = vadd.f32 %v1571, %v1735
        %v1878 = vadd.f32 %v1572, %v1740
        %v1879 = vadd.f32 %v1573, %v1745
        %v1880 = vadd.f32 %v1574, %v1750
        %v1881 = vadd.f32 %v1575, %v1755
        %v1882 = vadd.f32 %v1576, %v1760
        %v1883 = vadd.f32 %v1577, %v1765
        %v1884 = vadd.f32 %v1578, %v1770
        %v1885 = vadd.f32 %v1579, %v1775
        %v1886 = vadd.f32 %v1580, %v1780
        %v1887 = vadd.f32 %v1581, %v1785
        %v1888 = vadd.f32 %v1582, %v1790
        %v1889 = vadd.f32 %v1583, %v1795
        %v1890 = vadd.f32 %v1584, %v1800
        %v1891 = vadd.f32 %v1585, %v1805
        %v1892 = vadd.f32 %v1586, %v1810
        %v1893 = vadd.f32 %v1587, %v1815
        %v1894 = vadd.f32 %v1588, %v1820
        %v1895 = vadd.f32 %v1589, %v1825
        %v1896 = vadd.f32 %v1590, %v1830
        %v1897 = vadd.f32 %v1591, %v1835
        %v1898 = vadd.f32 %v1592, %v1840
        %v1899 = vadd.f32 %v1593, %v1845
        %v1900 = vadd.f32 %v1594, %v1850
        %v1901 = vadd.f32 %v1595, %v1855
        %v1902 = vadd.f32 %v1596, %v1860
        %v1903 = vadd.f32 %v1597, %v1865
        %v1904 = vadd.f32 %v1598, %v1870
        %v1905 = vld [vmem:[%s407 + $0x9] sm:$0xff]
        %v1906 = vld [vmem:[%s407 + $0x11] sm:$0xff]
        %v1907 = vld [vmem:[%s407 + $0x29] sm:$0xff]
        %v1908 = vld [vmem:[%s407 + $0x31] sm:$0xff]
        %v1909 = vld [vmem:[%s407 + $0x49] sm:$0xff]
        %v1910 = vld [vmem:[%s407 + $0x51] sm:$0xff]
        %v1911 = vld [vmem:[%s407 + $0x69] sm:$0xff]
        %v1912 = vld [vmem:[%s407 + $0x71] sm:$0xff]
        %v1913 = vld [vmem:[%s407 + $0x89] sm:$0xff]
        %v1914 = vld [vmem:[%s407 + $0x91] sm:$0xff]
        %v1915 = vld [vmem:[%s407 + $0xa9] sm:$0xff]
        %v1916 = vld [vmem:[%s407 + $0xb1] sm:$0xff]
        %v1917 = vld [vmem:[%s407 + $0xc9] sm:$0xff]
        %v1918 = vld [vmem:[%s407 + $0xd1] sm:$0xff]
        %v1919 = vld [vmem:[%s407 + $0xe9] sm:$0xff]
        %v1920 = vld [vmem:[%s407 + $0xf1] sm:$0xff]
        %v1921 = vld [vmem:[%s407 + $0x109] sm:$0xff]
        %v1922 = vld [vmem:[%s407 + $0x111] sm:$0xff]
        %v1923 = vld [vmem:[%s407 + $0x129] sm:$0xff]
        %v1924 = vld [vmem:[%s407 + $0x131] sm:$0xff]
        %v1925 = vld [vmem:[%s407 + $0x149] sm:$0xff]
        %v1926 = vld [vmem:[%s407 + $0x151] sm:$0xff]
        %v1927 = vld [vmem:[%s407 + $0x169] sm:$0xff]
        %v1928 = vld [vmem:[%s407 + $0x171] sm:$0xff]
        %v1929 = vld [vmem:[%s407 + $0x189] sm:$0xff]
        %v1930 = vld [vmem:[%s407 + $0x191] sm:$0xff]
        %v1931 = vld [vmem:[%s407 + $0x1a9] sm:$0xff]
        %v1932 = vld [vmem:[%s407 + $0x1b1] sm:$0xff]
        %v1933 = vld [vmem:[%s407 + $0x1c9] sm:$0xff]
        %v1934 = vld [vmem:[%s407 + $0x1d1] sm:$0xff]
        %v1935 = vld [vmem:[%s407 + $0x1e9] sm:$0xff]
        %v1936 = vld [vmem:[%s407 + $0x1f1] sm:$0xff]
        %s1937 = scalar_lea.vmem %s3, 640
        %v1938 = vld [vmem:[%s1937] sm:$0xff]
        %v1939 = vld [vmem:[%s1937 + $0x8] sm:$0xff]
        %v1940 = vld [vmem:[%s1937 + $0x10] sm:$0xff]
        %v1941 = vld [vmem:[%s1937 + $0x18] sm:$0xff]
        %v1942 = vld [vmem:[%s1937 + $0x20] sm:$0xff]
        %v1943 = vld [vmem:[%s1937 + $0x28] sm:$0xff]
        %v1944 = vld [vmem:[%s1937 + $0x30] sm:$0xff]
        %v1945 = vld [vmem:[%s1937 + $0x38] sm:$0xff]
        %v1946 = vld [vmem:[%s1937 + $0x40] sm:$0xff]
        %v1947 = vld [vmem:[%s1937 + $0x48] sm:$0xff]
        %v1948 = vld [vmem:[%s1937 + $0x50] sm:$0xff]
        %v1949 = vld [vmem:[%s1937 + $0x58] sm:$0xff]
        %v1950 = vld [vmem:[%s1937 + $0x60] sm:$0xff]
        %v1951 = vld [vmem:[%s1937 + $0x68] sm:$0xff]
        %v1952 = vld [vmem:[%s1937 + $0x70] sm:$0xff]
        %v1953 = vld [vmem:[%s1937 + $0x78] sm:$0xff]
        %1954 = vmatprep.subr.mxu0 0.0
        %1955 = vmatpush1.msra.mxu0 %v1938
        %1956 = vmatprep.subr.mxu0 0.0
        %1957 = vmatpush1.msra.mxu0 %v1939
        %1958 = vmatprep.subr.mxu0 0.0
        %1959 = vmatpush1.msra.mxu0 %v1940
        %1960 = vmatprep.subr.mxu0 0.0
        %1961 = vmatpush1.msra.mxu0 %v1941
        %1962 = vmatprep.subr.mxu0 0.0
        %1963 = vmatpush1.msra.mxu0 %v1942
        %1964 = vmatprep.subr.mxu0 0.0
        %1965 = vmatpush1.msra.mxu0 %v1943
        %1966 = vmatprep.subr.mxu0 0.0
        %1967 = vmatpush1.msra.mxu0 %v1944
        %1968 = vmatprep.subr.mxu0 0.0
        %1969 = vmatpush1.msra.mxu0 %v1945
        %1970 = vmatprep.subr.mxu0 0.0
        %1971 = vmatpush1.msra.mxu0 %v1946
        %1972 = vmatprep.subr.mxu0 0.0
        %1973 = vmatpush1.msra.mxu0 %v1947
        %1974 = vmatprep.subr.mxu0 0.0
        %1975 = vmatpush1.msra.mxu0 %v1948
        %1976 = vmatprep.subr.mxu0 0.0
        %1977 = vmatpush1.msra.mxu0 %v1949
        %1978 = vmatprep.subr.mxu0 0.0
        %1979 = vmatpush1.msra.mxu0 %v1950
        %1980 = vmatprep.subr.mxu0 0.0
        %1981 = vmatpush1.msra.mxu0 %v1951
        %1982 = vmatprep.subr.mxu0 0.0
        %1983 = vmatpush1.msra.mxu0 %v1952
        %1984 = vmatprep.subr.mxu0 0.0
        %1985 = vmatpush1.msra.mxu0 %v1953
        %1986 = vmatprep.subr.mxu0 0.0
        %1987 = vmatpush1.msra.mxu0 0.0
        %1988 = vmatprep.subr.mxu0 0.0
        %1989 = vmatpush1.msra.mxu0 0.0
        %1990 = vmatprep.subr.mxu0 0.0
        %1991 = vmatpush1.msra.mxu0 0.0
        %1992 = vmatprep.subr.mxu0 0.0
        %1993 = vmatpush1.msra.mxu0 0.0
        %1994 = vmatprep.subr.mxu0 0.0
        %1995 = vmatpush1.msra.mxu0 0.0
        %1996 = vmatprep.subr.mxu0 0.0
        %1997 = vmatpush1.msra.mxu0 0.0
        %1998 = vmatprep.subr.mxu0 0.0
        %1999 = vmatpush1.msra.mxu0 0.0
        %2000 = vmatprep.subr.mxu0 0.0
        %2001 = vmatpush1.msra.mxu0 0.0
        %2002 = vmatprep.subr.mxu0 0.0
        %2003 = vmatpush1.msra.mxu0 0.0
        %2004 = vmatprep.subr.mxu0 0.0
        %2005 = vmatpush1.msra.mxu0 0.0
        %2006 = vmatprep.subr.mxu0 0.0
        %2007 = vmatpush1.msra.mxu0 0.0
        %2008 = vmatprep.subr.mxu0 0.0
        %2009 = vmatpush1.msra.mxu0 0.0
        %2010 = vmatprep.subr.mxu0 0.0
        %2011 = vmatpush1.msra.mxu0 0.0
        %2012 = vmatprep.subr.mxu0 0.0
        %2013 = vmatpush1.msra.mxu0 0.0
        %2014 = vmatprep.subr.mxu0 0.0
        %2015 = vmatpush1.msra.mxu0 0.0
        %2016 = vmatprep.subr.mxu0 0.0
        %2017 = vmatpush1.msra.mxu0 0.0
        %2018 = vmatprep.mubr.f32.mxu0 0.0
        %2019 = vmatmul.mubr.f32.gmra.mrb[0].mxu0 %v1905
        %v2020 = vpop.f32.mrb[0].mxu0
        %v2021 = vadd.f32 0.0, %v2020
        %v2022 = vpop.f32.mrb[0].mxu0
        %2023 = vmatprep.mubr.f32.mxu0 0.0
        %2024 = vmatmul.mubr.f32.gmra.mrb[0].mxu0 %v1906
        %v2025 = vpop.f32.mrb[0].mxu0
        %v2026 = vadd.f32 0.0, %v2025
        %v2027 = vpop.f32.mrb[0].mxu0
        %2028 = vmatprep.mubr.f32.mxu0 0.0
        %2029 = vmatmul.mubr.f32.gmra.mrb[0].mxu0 %v1907
        %v2030 = vpop.f32.mrb[0].mxu0
        %v2031 = vadd.f32 0.0, %v2030
        %v2032 = vpop.f32.mrb[0].mxu0
        %2033 = vmatprep.mubr.f32.mxu0 0.0
        %2034 = vmatmul.mubr.f32.gmra.mrb[0].mxu0 %v1908
        %v2035 = vpop.f32.mrb[0].mxu0
        %v2036 = vadd.f32 0.0, %v2035
        %v2037 = vpop.f32.mrb[0].mxu0
        %2038 = vmatprep.mubr.f32.mxu0 0.0
        %2039 = vmatmul.mubr.f32.gmra.mrb[0].mxu0 %v1909
        %v2040 = vpop.f32.mrb[0].mxu0
        %v2041 = vadd.f32 0.0, %v2040
        %v2042 = vpop.f32.mrb[0].mxu0
        %2043 = vmatprep.mubr.f32.mxu0 0.0
        %2044 = vmatmul.mubr.f32.gmra.mrb[0].mxu0 %v1910
        %v2045 = vpop.f32.mrb[0].mxu0
        %v2046 = vadd.f32 0.0, %v2045
        %v2047 = vpop.f32.mrb[0].mxu0
        %2048 = vmatprep.mubr.f32.mxu0 0.0
        %2049 = vmatmul.mubr.f32.gmra.mrb[0].mxu0 %v1911
        %v2050 = vpop.f32.mrb[0].mxu0
        %v2051 = vadd.f32 0.0, %v2050
        %v2052 = vpop.f32.mrb[0].mxu0
        %2053 = vmatprep.mubr.f32.mxu0 0.0
        %2054 = vmatmul.mubr.f32.gmra.mrb[0].mxu0 %v1912
        %v2055 = vpop.f32.mrb[0].mxu0
        %v2056 = vadd.f32 0.0, %v2055
        %v2057 = vpop.f32.mrb[0].mxu0
        %2058 = vmatprep.mubr.f32.mxu0 0.0
        %2059 = vmatmul.mubr.f32.gmra.mrb[0].mxu0 %v1913
        %v2060 = vpop.f32.mrb[0].mxu0
        %v2061 = vadd.f32 0.0, %v2060
        %v2062 = vpop.f32.mrb[0].mxu0
        %2063 = vmatprep.mubr.f32.mxu0 0.0
        %2064 = vmatmul.mubr.f32.gmra.mrb[0].mxu0 %v1914
        %v2065 = vpop.f32.mrb[0].mxu0
        %v2066 = vadd.f32 0.0, %v2065
        %v2067 = vpop.f32.mrb[0].mxu0
        %2068 = vmatprep.mubr.f32.mxu0 0.0
        %2069 = vmatmul.mubr.f32.gmra.mrb[0].mxu0 %v1915
        %v2070 = vpop.f32.mrb[0].mxu0
        %v2071 = vadd.f32 0.0, %v2070
        %v2072 = vpop.f32.mrb[0].mxu0
        %2073 = vmatprep.mubr.f32.mxu0 0.0
        %2074 = vmatmul.mubr.f32.gmra.mrb[0].mxu0 %v1916
        %v2075 = vpop.f32.mrb[0].mxu0
        %v2076 = vadd.f32 0.0, %v2075
        %v2077 = vpop.f32.mrb[0].mxu0
        %2078 = vmatprep.mubr.f32.mxu0 0.0
        %2079 = vmatmul.mubr.f32.gmra.mrb[0].mxu0 %v1917
        %v2080 = vpop.f32.mrb[0].mxu0
        %v2081 = vadd.f32 0.0, %v2080
        %v2082 = vpop.f32.mrb[0].mxu0
        %2083 = vmatprep.mubr.f32.mxu0 0.0
        %2084 = vmatmul.mubr.f32.gmra.mrb[0].mxu0 %v1918
        %v2085 = vpop.f32.mrb[0].mxu0
        %v2086 = vadd.f32 0.0, %v2085
        %v2087 = vpop.f32.mrb[0].mxu0
        %2088 = vmatprep.mubr.f32.mxu0 0.0
        %2089 = vmatmul.mubr.f32.gmra.mrb[0].mxu0 %v1919
        %v2090 = vpop.f32.mrb[0].mxu0
        %v2091 = vadd.f32 0.0, %v2090
        %v2092 = vpop.f32.mrb[0].mxu0
        %2093 = vmatprep.mubr.f32.mxu0 0.0
        %2094 = vmatmul.mubr.f32.gmra.mrb[0].mxu0 %v1920
        %v2095 = vpop.f32.mrb[0].mxu0
        %v2096 = vadd.f32 0.0, %v2095
        %v2097 = vpop.f32.mrb[0].mxu0
        %2098 = vmatprep.mubr.f32.mxu0 0.0
        %2099 = vmatmul.mubr.f32.gmra.mrb[0].mxu0 %v1921
        %v2100 = vpop.f32.mrb[0].mxu0
        %v2101 = vadd.f32 0.0, %v2100
        %v2102 = vpop.f32.mrb[0].mxu0
        %2103 = vmatprep.mubr.f32.mxu0 0.0
        %2104 = vmatmul.mubr.f32.gmra.mrb[0].mxu0 %v1922
        %v2105 = vpop.f32.mrb[0].mxu0
        %v2106 = vadd.f32 0.0, %v2105
        %v2107 = vpop.f32.mrb[0].mxu0
        %2108 = vmatprep.mubr.f32.mxu0 0.0
        %2109 = vmatmul.mubr.f32.gmra.mrb[0].mxu0 %v1923
        %v2110 = vpop.f32.mrb[0].mxu0
        %v2111 = vadd.f32 0.0, %v2110
        %v2112 = vpop.f32.mrb[0].mxu0
        %2113 = vmatprep.mubr.f32.mxu0 0.0
        %2114 = vmatmul.mubr.f32.gmra.mrb[0].mxu0 %v1924
        %v2115 = vpop.f32.mrb[0].mxu0
        %v2116 = vadd.f32 0.0, %v2115
        %v2117 = vpop.f32.mrb[0].mxu0
        %2118 = vmatprep.mubr.f32.mxu0 0.0
        %2119 = vmatmul.mubr.f32.gmra.mrb[0].mxu0 %v1925
        %v2120 = vpop.f32.mrb[0].mxu0
        %v2121 = vadd.f32 0.0, %v2120
        %v2122 = vpop.f32.mrb[0].mxu0
        %2123 = vmatprep.mubr.f32.mxu0 0.0
        %2124 = vmatmul.mubr.f32.gmra.mrb[0].mxu0 %v1926
        %v2125 = vpop.f32.mrb[0].mxu0
        %v2126 = vadd.f32 0.0, %v2125
        %v2127 = vpop.f32.mrb[0].mxu0
        %2128 = vmatprep.mubr.f32.mxu0 0.0
        %2129 = vmatmul.mubr.f32.gmra.mrb[0].mxu0 %v1927
        %v2130 = vpop.f32.mrb[0].mxu0
        %v2131 = vadd.f32 0.0, %v2130
        %v2132 = vpop.f32.mrb[0].mxu0
        %2133 = vmatprep.mubr.f32.mxu0 0.0
        %2134 = vmatmul.mubr.f32.gmra.mrb[0].mxu0 %v1928
        %v2135 = vpop.f32.mrb[0].mxu0
        %v2136 = vadd.f32 0.0, %v2135
        %v2137 = vpop.f32.mrb[0].mxu0
        %2138 = vmatprep.mubr.f32.mxu0 0.0
        %2139 = vmatmul.mubr.f32.gmra.mrb[0].mxu0 %v1929
        %v2140 = vpop.f32.mrb[0].mxu0
        %v2141 = vadd.f32 0.0, %v2140
        %v2142 = vpop.f32.mrb[0].mxu0
        %2143 = vmatprep.mubr.f32.mxu0 0.0
        %2144 = vmatmul.mubr.f32.gmra.mrb[0].mxu0 %v1930
        %v2145 = vpop.f32.mrb[0].mxu0
        %v2146 = vadd.f32 0.0, %v2145
        %v2147 = vpop.f32.mrb[0].mxu0
        %2148 = vmatprep.mubr.f32.mxu0 0.0
        %2149 = vmatmul.mubr.f32.gmra.mrb[0].mxu0 %v1931
        %v2150 = vpop.f32.mrb[0].mxu0
        %v2151 = vadd.f32 0.0, %v2150
        %v2152 = vpop.f32.mrb[0].mxu0
        %2153 = vmatprep.mubr.f32.mxu0 0.0
        %2154 = vmatmul.mubr.f32.gmra.mrb[0].mxu0 %v1932
        %v2155 = vpop.f32.mrb[0].mxu0
        %v2156 = vadd.f32 0.0, %v2155
        %v2157 = vpop.f32.mrb[0].mxu0
        %2158 = vmatprep.mubr.f32.mxu0 0.0
        %2159 = vmatmul.mubr.f32.gmra.mrb[0].mxu0 %v1933
        %v2160 = vpop.f32.mrb[0].mxu0
        %v2161 = vadd.f32 0.0, %v2160
        %v2162 = vpop.f32.mrb[0].mxu0
        %2163 = vmatprep.mubr.f32.mxu0 0.0
        %2164 = vmatmul.mubr.f32.gmra.mrb[0].mxu0 %v1934
        %v2165 = vpop.f32.mrb[0].mxu0
        %v2166 = vadd.f32 0.0, %v2165
        %v2167 = vpop.f32.mrb[0].mxu0
        %2168 = vmatprep.mubr.f32.mxu0 0.0
        %2169 = vmatmul.mubr.f32.gmra.mrb[0].mxu0 %v1935
        %v2170 = vpop.f32.mrb[0].mxu0
        %v2171 = vadd.f32 0.0, %v2170
        %v2172 = vpop.f32.mrb[0].mxu0
        %2173 = vmatprep.mubr.f32.mxu0 0.0
        %2174 = vmatmul.mubr.f32.gmra.mrb[0].mxu0 %v1936
        %v2175 = vpop.f32.mrb[0].mxu0
        %v2176 = vadd.f32 0.0, %v2175
        %v2177 = vpop.f32.mrb[0].mxu0
        %2178 = vdwg.mxu0
        %v2179 = vadd.f32 %v1873, %v2021
        %v2180 = vadd.f32 %v1874, %v2026
        %v2181 = vadd.f32 %v1875, %v2031
        %v2182 = vadd.f32 %v1876, %v2036
        %v2183 = vadd.f32 %v1877, %v2041
        %v2184 = vadd.f32 %v1878, %v2046
        %v2185 = vadd.f32 %v1879, %v2051
        %v2186 = vadd.f32 %v1880, %v2056
        %v2187 = vadd.f32 %v1881, %v2061
        %v2188 = vadd.f32 %v1882, %v2066
        %v2189 = vadd.f32 %v1883, %v2071
        %v2190 = vadd.f32 %v1884, %v2076
        %v2191 = vadd.f32 %v1885, %v2081
        %v2192 = vadd.f32 %v1886, %v2086
        %v2193 = vadd.f32 %v1887, %v2091
        %v2194 = vadd.f32 %v1888, %v2096
        %v2195 = vadd.f32 %v1889, %v2101
        %v2196 = vadd.f32 %v1890, %v2106
        %v2197 = vadd.f32 %v1891, %v2111
        %v2198 = vadd.f32 %v1892, %v2116
        %v2199 = vadd.f32 %v1893, %v2121
        %v2200 = vadd.f32 %v1894, %v2126
        %v2201 = vadd.f32 %v1895, %v2131
        %v2202 = vadd.f32 %v1896, %v2136
        %v2203 = vadd.f32 %v1897, %v2141
        %v2204 = vadd.f32 %v1898, %v2146
        %v2205 = vadd.f32 %v1899, %v2151
        %v2206 = vadd.f32 %v1900, %v2156
        %v2207 = vadd.f32 %v1901, %v2161
        %v2208 = vadd.f32 %v1902, %v2166
        %v2209 = vadd.f32 %v1903, %v2171
        %v2210 = vadd.f32 %v1904, %v2176
        %s2211 = scalar_lea.vmem [#allocation2], 64
        %v2212 = vld [vmem:[%s2211 + $0x7] sm:$0xff]
        %v2213 = vld [vmem:[%s2211 + $0xf] sm:$0xff]
        %v2214 = vld [vmem:[%s2211 + $0x27] sm:$0xff]
        %v2215 = vld [vmem:[%s2211 + $0x2f] sm:$0xff]
        %v2216 = vld [vmem:[%s2211 + $0x47] sm:$0xff]
        %v2217 = vld [vmem:[%s2211 + $0x4f] sm:$0xff]
        %v2218 = vld [vmem:[%s2211 + $0x67] sm:$0xff]
        %v2219 = vld [vmem:[%s2211 + $0x6f] sm:$0xff]
        %v2220 = vld [vmem:[%s2211 + $0x87] sm:$0xff]
        %v2221 = vld [vmem:[%s2211 + $0x8f] sm:$0xff]
        %v2222 = vld [vmem:[%s2211 + $0xa7] sm:$0xff]
        %v2223 = vld [vmem:[%s2211 + $0xaf] sm:$0xff]
        %v2224 = vld [vmem:[%s2211 + $0xc7] sm:$0xff]
        %v2225 = vld [vmem:[%s2211 + $0xcf] sm:$0xff]
        %v2226 = vld [vmem:[%s2211 + $0xe7] sm:$0xff]
        %v2227 = vld [vmem:[%s2211 + $0xef] sm:$0xff]
        %v2228 = vld [vmem:[%s2211 + $0x107] sm:$0xff]
        %v2229 = vld [vmem:[%s2211 + $0x10f] sm:$0xff]
        %v2230 = vld [vmem:[%s2211 + $0x127] sm:$0xff]
        %v2231 = vld [vmem:[%s2211 + $0x12f] sm:$0xff]
        %v2232 = vld [vmem:[%s2211 + $0x147] sm:$0xff]
        %v2233 = vld [vmem:[%s2211 + $0x14f] sm:$0xff]
        %v2234 = vld [vmem:[%s2211 + $0x167] sm:$0xff]
        %v2235 = vld [vmem:[%s2211 + $0x16f] sm:$0xff]
        %v2236 = vld [vmem:[%s2211 + $0x187] sm:$0xff]
        %v2237 = vld [vmem:[%s2211 + $0x18f] sm:$0xff]
        %v2238 = vld [vmem:[%s2211 + $0x1a7] sm:$0xff]
        %v2239 = vld [vmem:[%s2211 + $0x1af] sm:$0xff]
        %v2240 = vld [vmem:[%s2211 + $0x1c7] sm:$0xff]
        %v2241 = vld [vmem:[%s2211 + $0x1cf] sm:$0xff]
        %v2242 = vld [vmem:[%s2211 + $0x1e7] sm:$0xff]
        %v2243 = vld [vmem:[%s2211 + $0x1ef] sm:$0xff]
        %s2244 = scalar_lea.vmem %s3, 768
        %v2245 = vld [vmem:[%s2244] sm:$0xff]
        %v2246 = vld [vmem:[%s2244 + $0x8] sm:$0xff]
        %v2247 = vld [vmem:[%s2244 + $0x10] sm:$0xff]
        %v2248 = vld [vmem:[%s2244 + $0x18] sm:$0xff]
        %v2249 = vld [vmem:[%s2244 + $0x20] sm:$0xff]
        %v2250 = vld [vmem:[%s2244 + $0x28] sm:$0xff]
        %v2251 = vld [vmem:[%s2244 + $0x30] sm:$0xff]
        %v2252 = vld [vmem:[%s2244 + $0x38] sm:$0xff]
        %v2253 = vld [vmem:[%s2244 + $0x40] sm:$0xff]
        %v2254 = vld [vmem:[%s2244 + $0x48] sm:$0xff]
        %v2255 = vld [vmem:[%s2244 + $0x50] sm:$0xff]
        %v2256 = vld [vmem:[%s2244 + $0x58] sm:$0xff]
        %v2257 = vld [vmem:[%s2244 + $0x60] sm:$0xff]
        %v2258 = vld [vmem:[%s2244 + $0x68] sm:$0xff]
        %v2259 = vld [vmem:[%s2244 + $0x70] sm:$0xff]
        %v2260 = vld [vmem:[%s2244 + $0x78] sm:$0xff]
        %2261 = vmatprep.subr.mxu0 0.0
        %2262 = vmatpush1.msra.mxu0 %v2245
        %2263 = vmatprep.subr.mxu0 0.0
        %2264 = vmatpush1.msra.mxu0 %v2246
        %2265 = vmatprep.subr.mxu0 0.0
        %2266 = vmatpush1.msra.mxu0 %v2247
        %2267 = vmatprep.subr.mxu0 0.0
        %2268 = vmatpush1.msra.mxu0 %v2248
        %2269 = vmatprep.subr.mxu0 0.0
        %2270 = vmatpush1.msra.mxu0 %v2249
        %2271 = vmatprep.subr.mxu0 0.0
        %2272 = vmatpush1.msra.mxu0 %v2250
        %2273 = vmatprep.subr.mxu0 0.0
        %2274 = vmatpush1.msra.mxu0 %v2251
        %2275 = vmatprep.subr.mxu0 0.0
        %2276 = vmatpush1.msra.mxu0 %v2252
        %2277 = vmatprep.subr.mxu0 0.0
        %2278 = vmatpush1.msra.mxu0 %v2253
        %2279 = vmatprep.subr.mxu0 0.0
        %2280 = vmatpush1.msra.mxu0 %v2254
        %2281 = vmatprep.subr.mxu0 0.0
        %2282 = vmatpush1.msra.mxu0 %v2255
        %2283 = vmatprep.subr.mxu0 0.0
        %2284 = vmatpush1.msra.mxu0 %v2256
        %2285 = vmatprep.subr.mxu0 0.0
        %2286 = vmatpush1.msra.mxu0 %v2257
        %2287 = vmatprep.subr.mxu0 0.0
        %2288 = vmatpush1.msra.mxu0 %v2258
        %2289 = vmatprep.subr.mxu0 0.0
        %2290 = vmatpush1.msra.mxu0 %v2259
        %2291 = vmatprep.subr.mxu0 0.0
        %2292 = vmatpush1.msra.mxu0 %v2260
        %2293 = vmatprep.subr.mxu0 0.0
        %2294 = vmatpush1.msra.mxu0 0.0
        %2295 = vmatprep.subr.mxu0 0.0
        %2296 = vmatpush1.msra.mxu0 0.0
        %2297 = vmatprep.subr.mxu0 0.0
        %2298 = vmatpush1.msra.mxu0 0.0
        %2299 = vmatprep.subr.mxu0 0.0
        %2300 = vmatpush1.msra.mxu0 0.0
        %2301 = vmatprep.subr.mxu0 0.0
        %2302 = vmatpush1.msra.mxu0 0.0
        %2303 = vmatprep.subr.mxu0 0.0
        %2304 = vmatpush1.msra.mxu0 0.0
        %2305 = vmatprep.subr.mxu0 0.0
        %2306 = vmatpush1.msra.mxu0 0.0
        %2307 = vmatprep.subr.mxu0 0.0
        %2308 = vmatpush1.msra.mxu0 0.0
        %2309 = vmatprep.subr.mxu0 0.0
        %2310 = vmatpush1.msra.mxu0 0.0
        %2311 = vmatprep.subr.mxu0 0.0
        %2312 = vmatpush1.msra.mxu0 0.0
        %2313 = vmatprep.subr.mxu0 0.0
        %2314 = vmatpush1.msra.mxu0 0.0
        %2315 = vmatprep.subr.mxu0 0.0
        %2316 = vmatpush1.msra.mxu0 0.0
        %2317 = vmatprep.subr.mxu0 0.0
        %2318 = vmatpush1.msra.mxu0 0.0
        %2319 = vmatprep.subr.mxu0 0.0
        %2320 = vmatpush1.msra.mxu0 0.0
        %2321 = vmatprep.subr.mxu0 0.0
        %2322 = vmatpush1.msra.mxu0 0.0
        %2323 = vmatprep.subr.mxu0 0.0
        %2324 = vmatpush1.msra.mxu0 0.0
        %2325 = vmatprep.mubr.f32.mxu0 0.0
        %2326 = vmatmul.mubr.f32.gmra.mrb[0].mxu0 %v2212
        %v2327 = vpop.f32.mrb[0].mxu0
        %v2328 = vadd.f32 0.0, %v2327
        %v2329 = vpop.f32.mrb[0].mxu0
        %2330 = vmatprep.mubr.f32.mxu0 0.0
        %2331 = vmatmul.mubr.f32.gmra.mrb[0].mxu0 %v2213
        %v2332 = vpop.f32.mrb[0].mxu0
        %v2333 = vadd.f32 0.0, %v2332
        %v2334 = vpop.f32.mrb[0].mxu0
        %2335 = vmatprep.mubr.f32.mxu0 0.0
        %2336 = vmatmul.mubr.f32.gmra.mrb[0].mxu0 %v2214
        %v2337 = vpop.f32.mrb[0].mxu0
        %v2338 = vadd.f32 0.0, %v2337
        %v2339 = vpop.f32.mrb[0].mxu0
        %2340 = vmatprep.mubr.f32.mxu0 0.0
        %2341 = vmatmul.mubr.f32.gmra.mrb[0].mxu0 %v2215
        %v2342 = vpop.f32.mrb[0].mxu0
        %v2343 = vadd.f32 0.0, %v2342
        %v2344 = vpop.f32.mrb[0].mxu0
        %2345 = vmatprep.mubr.f32.mxu0 0.0
        %2346 = vmatmul.mubr.f32.gmra.mrb[0].mxu0 %v2216
        %v2347 = vpop.f32.mrb[0].mxu0
        %v2348 = vadd.f32 0.0, %v2347
        %v2349 = vpop.f32.mrb[0].mxu0
        %2350 = vmatprep.mubr.f32.mxu0 0.0
        %2351 = vmatmul.mubr.f32.gmra.mrb[0].mxu0 %v2217
        %v2352 = vpop.f32.mrb[0].mxu0
        %v2353 = vadd.f32 0.0, %v2352
        %v2354 = vpop.f32.mrb[0].mxu0
        %2355 = vmatprep.mubr.f32.mxu0 0.0
        %2356 = vmatmul.mubr.f32.gmra.mrb[0].mxu0 %v2218
        %v2357 = vpop.f32.mrb[0].mxu0
        %v2358 = vadd.f32 0.0, %v2357
        %v2359 = vpop.f32.mrb[0].mxu0
        %2360 = vmatprep.mubr.f32.mxu0 0.0
        %2361 = vmatmul.mubr.f32.gmra.mrb[0].mxu0 %v2219
        %v2362 = vpop.f32.mrb[0].mxu0
        %v2363 = vadd.f32 0.0, %v2362
        %v2364 = vpop.f32.mrb[0].mxu0
        %2365 = vmatprep.mubr.f32.mxu0 0.0
        %2366 = vmatmul.mubr.f32.gmra.mrb[0].mxu0 %v2220
        %v2367 = vpop.f32.mrb[0].mxu0
        %v2368 = vadd.f32 0.0, %v2367
        %v2369 = vpop.f32.mrb[0].mxu0
        %2370 = vmatprep.mubr.f32.mxu0 0.0
        %2371 = vmatmul.mubr.f32.gmra.mrb[0].mxu0 %v2221
        %v2372 = vpop.f32.mrb[0].mxu0
        %v2373 = vadd.f32 0.0, %v2372
        %v2374 = vpop.f32.mrb[0].mxu0
        %2375 = vmatprep.mubr.f32.mxu0 0.0
        %2376 = vmatmul.mubr.f32.gmra.mrb[0].mxu0 %v2222
        %v2377 = vpop.f32.mrb[0].mxu0
        %v2378 = vadd.f32 0.0, %v2377
        %v2379 = vpop.f32.mrb[0].mxu0
        %2380 = vmatprep.mubr.f32.mxu0 0.0
        %2381 = vmatmul.mubr.f32.gmra.mrb[0].mxu0 %v2223
        %v2382 = vpop.f32.mrb[0].mxu0
        %v2383 = vadd.f32 0.0, %v2382
        %v2384 = vpop.f32.mrb[0].mxu0
        %2385 = vmatprep.mubr.f32.mxu0 0.0
        %2386 = vmatmul.mubr.f32.gmra.mrb[0].mxu0 %v2224
        %v2387 = vpop.f32.mrb[0].mxu0
        %v2388 = vadd.f32 0.0, %v2387
        %v2389 = vpop.f32.mrb[0].mxu0
        %2390 = vmatprep.mubr.f32.mxu0 0.0
        %2391 = vmatmul.mubr.f32.gmra.mrb[0].mxu0 %v2225
        %v2392 = vpop.f32.mrb[0].mxu0
        %v2393 = vadd.f32 0.0, %v2392
        %v2394 = vpop.f32.mrb[0].mxu0
        %2395 = vmatprep.mubr.f32.mxu0 0.0
        %2396 = vmatmul.mubr.f32.gmra.mrb[0].mxu0 %v2226
        %v2397 = vpop.f32.mrb[0].mxu0
        %v2398 = vadd.f32 0.0, %v2397
        %v2399 = vpop.f32.mrb[0].mxu0
        %2400 = vmatprep.mubr.f32.mxu0 0.0
        %2401 = vmatmul.mubr.f32.gmra.mrb[0].mxu0 %v2227
        %v2402 = vpop.f32.mrb[0].mxu0
        %v2403 = vadd.f32 0.0, %v2402
        %v2404 = vpop.f32.mrb[0].mxu0
        %2405 = vmatprep.mubr.f32.mxu0 0.0
        %2406 = vmatmul.mubr.f32.gmra.mrb[0].mxu0 %v2228
        %v2407 = vpop.f32.mrb[0].mxu0
        %v2408 = vadd.f32 0.0, %v2407
        %v2409 = vpop.f32.mrb[0].mxu0
        %2410 = vmatprep.mubr.f32.mxu0 0.0
        %2411 = vmatmul.mubr.f32.gmra.mrb[0].mxu0 %v2229
        %v2412 = vpop.f32.mrb[0].mxu0
        %v2413 = vadd.f32 0.0, %v2412
        %v2414 = vpop.f32.mrb[0].mxu0
        %2415 = vmatprep.mubr.f32.mxu0 0.0
        %2416 = vmatmul.mubr.f32.gmra.mrb[0].mxu0 %v2230
        %v2417 = vpop.f32.mrb[0].mxu0
        %v2418 = vadd.f32 0.0, %v2417
        %v2419 = vpop.f32.mrb[0].mxu0
        %2420 = vmatprep.mubr.f32.mxu0 0.0
        %2421 = vmatmul.mubr.f32.gmra.mrb[0].mxu0 %v2231
        %v2422 = vpop.f32.mrb[0].mxu0
        %v2423 = vadd.f32 0.0, %v2422
        %v2424 = vpop.f32.mrb[0].mxu0
        %2425 = vmatprep.mubr.f32.mxu0 0.0
        %2426 = vmatmul.mubr.f32.gmra.mrb[0].mxu0 %v2232
        %v2427 = vpop.f32.mrb[0].mxu0
        %v2428 = vadd.f32 0.0, %v2427
        %v2429 = vpop.f32.mrb[0].mxu0
        %2430 = vmatprep.mubr.f32.mxu0 0.0
        %2431 = vmatmul.mubr.f32.gmra.mrb[0].mxu0 %v2233
        %v2432 = vpop.f32.mrb[0].mxu0
        %v2433 = vadd.f32 0.0, %v2432
        %v2434 = vpop.f32.mrb[0].mxu0
        %2435 = vmatprep.mubr.f32.mxu0 0.0
        %2436 = vmatmul.mubr.f32.gmra.mrb[0].mxu0 %v2234
        %v2437 = vpop.f32.mrb[0].mxu0
        %v2438 = vadd.f32 0.0, %v2437
        %v2439 = vpop.f32.mrb[0].mxu0
        %2440 = vmatprep.mubr.f32.mxu0 0.0
        %2441 = vmatmul.mubr.f32.gmra.mrb[0].mxu0 %v2235
        %v2442 = vpop.f32.mrb[0].mxu0
        %v2443 = vadd.f32 0.0, %v2442
        %v2444 = vpop.f32.mrb[0].mxu0
        %2445 = vmatprep.mubr.f32.mxu0 0.0
        %2446 = vmatmul.mubr.f32.gmra.mrb[0].mxu0 %v2236
        %v2447 = vpop.f32.mrb[0].mxu0
        %v2448 = vadd.f32 0.0, %v2447
        %v2449 = vpop.f32.mrb[0].mxu0
        %2450 = vmatprep.mubr.f32.mxu0 0.0
        %2451 = vmatmul.mubr.f32.gmra.mrb[0].mxu0 %v2237
        %v2452 = vpop.f32.mrb[0].mxu0
        %v2453 = vadd.f32 0.0, %v2452
        %v2454 = vpop.f32.mrb[0].mxu0
        %2455 = vmatprep.mubr.f32.mxu0 0.0
        %2456 = vmatmul.mubr.f32.gmra.mrb[0].mxu0 %v2238
        %v2457 = vpop.f32.mrb[0].mxu0
        %v2458 = vadd.f32 0.0, %v2457
        %v2459 = vpop.f32.mrb[0].mxu0
        %2460 = vmatprep.mubr.f32.mxu0 0.0
        %2461 = vmatmul.mubr.f32.gmra.mrb[0].mxu0 %v2239
        %v2462 = vpop.f32.mrb[0].mxu0
        %v2463 = vadd.f32 0.0, %v2462
        %v2464 = vpop.f32.mrb[0].mxu0
        %2465 = vmatprep.mubr.f32.mxu0 0.0
        %2466 = vmatmul.mubr.f32.gmra.mrb[0].mxu0 %v2240
        %v2467 = vpop.f32.mrb[0].mxu0
        %v2468 = vadd.f32 0.0, %v2467
        %v2469 = vpop.f32.mrb[0].mxu0
        %2470 = vmatprep.mubr.f32.mxu0 0.0
        %2471 = vmatmul.mubr.f32.gmra.mrb[0].mxu0 %v2241
        %v2472 = vpop.f32.mrb[0].mxu0
        %v2473 = vadd.f32 0.0, %v2472
        %v2474 = vpop.f32.mrb[0].mxu0
        %2475 = vmatprep.mubr.f32.mxu0 0.0
        %2476 = vmatmul.mubr.f32.gmra.mrb[0].mxu0 %v2242
        %v2477 = vpop.f32.mrb[0].mxu0
        %v2478 = vadd.f32 0.0, %v2477
        %v2479 = vpop.f32.mrb[0].mxu0
        %2480 = vmatprep.mubr.f32.mxu0 0.0
        %2481 = vmatmul.mubr.f32.gmra.mrb[0].mxu0 %v2243
        %v2482 = vpop.f32.mrb[0].mxu0
        %v2483 = vadd.f32 0.0, %v2482
        %v2484 = vpop.f32.mrb[0].mxu0
        %2485 = vdwg.mxu0
        %v2486 = vadd.f32 %v2179, %v2328
        %v2487 = vadd.f32 %v2180, %v2333
        %v2488 = vadd.f32 %v2181, %v2338
        %v2489 = vadd.f32 %v2182, %v2343
        %v2490 = vadd.f32 %v2183, %v2348
        %v2491 = vadd.f32 %v2184, %v2353
        %v2492 = vadd.f32 %v2185, %v2358
        %v2493 = vadd.f32 %v2186, %v2363
        %v2494 = vadd.f32 %v2187, %v2368
        %v2495 = vadd.f32 %v2188, %v2373
        %v2496 = vadd.f32 %v2189, %v2378
        %v2497 = vadd.f32 %v2190, %v2383
        %v2498 = vadd.f32 %v2191, %v2388
        %v2499 = vadd.f32 %v2192, %v2393
        %v2500 = vadd.f32 %v2193, %v2398
        %v2501 = vadd.f32 %v2194, %v2403
        %v2502 = vadd.f32 %v2195, %v2408
        %v2503 = vadd.f32 %v2196, %v2413
        %v2504 = vadd.f32 %v2197, %v2418
        %v2505 = vadd.f32 %v2198, %v2423
        %v2506 = vadd.f32 %v2199, %v2428
        %v2507 = vadd.f32 %v2200, %v2433
        %v2508 = vadd.f32 %v2201, %v2438
        %v2509 = vadd.f32 %v2202, %v2443
        %v2510 = vadd.f32 %v2203, %v2448
        %v2511 = vadd.f32 %v2204, %v2453
        %v2512 = vadd.f32 %v2205, %v2458
        %v2513 = vadd.f32 %v2206, %v2463
        %v2514 = vadd.f32 %v2207, %v2468
        %v2515 = vadd.f32 %v2208, %v2473
        %v2516 = vadd.f32 %v2209, %v2478
        %v2517 = vadd.f32 %v2210, %v2483
        %v2518 = vld [vmem:[%s2211 + $0x8] sm:$0xff]
        %v2519 = vld [vmem:[%s2211 + $0x10] sm:$0xff]
        %v2520 = vld [vmem:[%s2211 + $0x28] sm:$0xff]
        %v2521 = vld [vmem:[%s2211 + $0x30] sm:$0xff]
        %v2522 = vld [vmem:[%s2211 + $0x48] sm:$0xff]
        %v2523 = vld [vmem:[%s2211 + $0x50] sm:$0xff]
        %v2524 = vld [vmem:[%s2211 + $0x68] sm:$0xff]
        %v2525 = vld [vmem:[%s2211 + $0x70] sm:$0xff]
        %v2526 = vld [vmem:[%s2211 + $0x88] sm:$0xff]
        %v2527 = vld [vmem:[%s2211 + $0x90] sm:$0xff]
        %v2528 = vld [vmem:[%s2211 + $0xa8] sm:$0xff]
        %v2529 = vld [vmem:[%s2211 + $0xb0] sm:$0xff]
        %v2530 = vld [vmem:[%s2211 + $0xc8] sm:$0xff]
        %v2531 = vld [vmem:[%s2211 + $0xd0] sm:$0xff]
        %v2532 = vld [vmem:[%s2211 + $0xe8] sm:$0xff]
        %v2533 = vld [vmem:[%s2211 + $0xf0] sm:$0xff]
        %v2534 = vld [vmem:[%s2211 + $0x108] sm:$0xff]
        %v2535 = vld [vmem:[%s2211 + $0x110] sm:$0xff]
        %v2536 = vld [vmem:[%s2211 + $0x128] sm:$0xff]
        %v2537 = vld [vmem:[%s2211 + $0x130] sm:$0xff]
        %v2538 = vld [vmem:[%s2211 + $0x148] sm:$0xff]
        %v2539 = vld [vmem:[%s2211 + $0x150] sm:$0xff]
        %v2540 = vld [vmem:[%s2211 + $0x168] sm:$0xff]
        %v2541 = vld [vmem:[%s2211 + $0x170] sm:$0xff]
        %v2542 = vld [vmem:[%s2211 + $0x188] sm:$0xff]
        %v2543 = vld [vmem:[%s2211 + $0x190] sm:$0xff]
        %v2544 = vld [vmem:[%s2211 + $0x1a8] sm:$0xff]
        %v2545 = vld [vmem:[%s2211 + $0x1b0] sm:$0xff]
        %v2546 = vld [vmem:[%s2211 + $0x1c8] sm:$0xff]
        %v2547 = vld [vmem:[%s2211 + $0x1d0] sm:$0xff]
        %v2548 = vld [vmem:[%s2211 + $0x1e8] sm:$0xff]
        %v2549 = vld [vmem:[%s2211 + $0x1f0] sm:$0xff]
        %s2550 = scalar_lea.vmem %s3, 896
        %v2551 = vld [vmem:[%s2550] sm:$0xff]
        %v2552 = vld [vmem:[%s2550 + $0x8] sm:$0xff]
        %v2553 = vld [vmem:[%s2550 + $0x10] sm:$0xff]
        %v2554 = vld [vmem:[%s2550 + $0x18] sm:$0xff]
        %v2555 = vld [vmem:[%s2550 + $0x20] sm:$0xff]
        %v2556 = vld [vmem:[%s2550 + $0x28] sm:$0xff]
        %v2557 = vld [vmem:[%s2550 + $0x30] sm:$0xff]
        %v2558 = vld [vmem:[%s2550 + $0x38] sm:$0xff]
        %v2559 = vld [vmem:[%s2550 + $0x40] sm:$0xff]
        %v2560 = vld [vmem:[%s2550 + $0x48] sm:$0xff]
        %v2561 = vld [vmem:[%s2550 + $0x50] sm:$0xff]
        %v2562 = vld [vmem:[%s2550 + $0x58] sm:$0xff]
        %v2563 = vld [vmem:[%s2550 + $0x60] sm:$0xff]
        %v2564 = vld [vmem:[%s2550 + $0x68] sm:$0xff]
        %v2565 = vld [vmem:[%s2550 + $0x70] sm:$0xff]
        %v2566 = vld [vmem:[%s2550 + $0x78] sm:$0xff]
        %2567 = vmatprep.subr.mxu0 0.0
        %2568 = vmatpush1.msra.mxu0 %v2551
        %2569 = vmatprep.subr.mxu0 0.0
        %2570 = vmatpush1.msra.mxu0 %v2552
        %2571 = vmatprep.subr.mxu0 0.0
        %2572 = vmatpush1.msra.mxu0 %v2553
        %2573 = vmatprep.subr.mxu0 0.0
        %2574 = vmatpush1.msra.mxu0 %v2554
        %2575 = vmatprep.subr.mxu0 0.0
        %2576 = vmatpush1.msra.mxu0 %v2555
        %2577 = vmatprep.subr.mxu0 0.0
        %2578 = vmatpush1.msra.mxu0 %v2556
        %2579 = vmatprep.subr.mxu0 0.0
        %2580 = vmatpush1.msra.mxu0 %v2557
        %2581 = vmatprep.subr.mxu0 0.0
        %2582 = vmatpush1.msra.mxu0 %v2558
        %2583 = vmatprep.subr.mxu0 0.0
        %2584 = vmatpush1.msra.mxu0 %v2559
        %2585 = vmatprep.subr.mxu0 0.0
        %2586 = vmatpush1.msra.mxu0 %v2560
        %2587 = vmatprep.subr.mxu0 0.0
        %2588 = vmatpush1.msra.mxu0 %v2561
        %2589 = vmatprep.subr.mxu0 0.0
        %2590 = vmatpush1.msra.mxu0 %v2562
        %2591 = vmatprep.subr.mxu0 0.0
        %2592 = vmatpush1.msra.mxu0 %v2563
        %2593 = vmatprep.subr.mxu0 0.0
        %2594 = vmatpush1.msra.mxu0 %v2564
        %2595 = vmatprep.subr.mxu0 0.0
        %2596 = vmatpush1.msra.mxu0 %v2565
        %2597 = vmatprep.subr.mxu0 0.0
        %2598 = vmatpush1.msra.mxu0 %v2566
        %2599 = vmatprep.subr.mxu0 0.0
        %2600 = vmatpush1.msra.mxu0 0.0
        %2601 = vmatprep.subr.mxu0 0.0
        %2602 = vmatpush1.msra.mxu0 0.0
        %2603 = vmatprep.subr.mxu0 0.0
        %2604 = vmatpush1.msra.mxu0 0.0
        %2605 = vmatprep.subr.mxu0 0.0
        %2606 = vmatpush1.msra.mxu0 0.0
        %2607 = vmatprep.subr.mxu0 0.0
        %2608 = vmatpush1.msra.mxu0 0.0
        %2609 = vmatprep.subr.mxu0 0.0
        %2610 = vmatpush1.msra.mxu0 0.0
        %2611 = vmatprep.subr.mxu0 0.0
        %2612 = vmatpush1.msra.mxu0 0.0
        %2613 = vmatprep.subr.mxu0 0.0
        %2614 = vmatpush1.msra.mxu0 0.0
        %2615 = vmatprep.subr.mxu0 0.0
        %2616 = vmatpush1.msra.mxu0 0.0
        %2617 = vmatprep.subr.mxu0 0.0
        %2618 = vmatpush1.msra.mxu0 0.0
        %2619 = vmatprep.subr.mxu0 0.0
        %2620 = vmatpush1.msra.mxu0 0.0
        %2621 = vmatprep.subr.mxu0 0.0
        %2622 = vmatpush1.msra.mxu0 0.0
        %2623 = vmatprep.subr.mxu0 0.0
        %2624 = vmatpush1.msra.mxu0 0.0
        %2625 = vmatprep.subr.mxu0 0.0
        %2626 = vmatpush1.msra.mxu0 0.0
        %2627 = vmatprep.subr.mxu0 0.0
        %2628 = vmatpush1.msra.mxu0 0.0
        %2629 = vmatprep.subr.mxu0 0.0
        %2630 = vmatpush1.msra.mxu0 0.0
        %2631 = vmatprep.mubr.f32.mxu0 0.0
        %2632 = vmatmul.mubr.f32.gmra.mrb[0].mxu0 %v2518
        %v2633 = vpop.f32.mrb[0].mxu0
        %v2634 = vadd.f32 0.0, %v2633
        %v2635 = vpop.f32.mrb[0].mxu0
        %2636 = vmatprep.mubr.f32.mxu0 0.0
        %2637 = vmatmul.mubr.f32.gmra.mrb[0].mxu0 %v2519
        %v2638 = vpop.f32.mrb[0].mxu0
        %v2639 = vadd.f32 0.0, %v2638
        %v2640 = vpop.f32.mrb[0].mxu0
        %2641 = vmatprep.mubr.f32.mxu0 0.0
        %2642 = vmatmul.mubr.f32.gmra.mrb[0].mxu0 %v2520
        %v2643 = vpop.f32.mrb[0].mxu0
        %v2644 = vadd.f32 0.0, %v2643
        %v2645 = vpop.f32.mrb[0].mxu0
        %2646 = vmatprep.mubr.f32.mxu0 0.0
        %2647 = vmatmul.mubr.f32.gmra.mrb[0].mxu0 %v2521
        %v2648 = vpop.f32.mrb[0].mxu0
        %v2649 = vadd.f32 0.0, %v2648
        %v2650 = vpop.f32.mrb[0].mxu0
        %2651 = vmatprep.mubr.f32.mxu0 0.0
        %2652 = vmatmul.mubr.f32.gmra.mrb[0].mxu0 %v2522
        %v2653 = vpop.f32.mrb[0].mxu0
        %v2654 = vadd.f32 0.0, %v2653
        %v2655 = vpop.f32.mrb[0].mxu0
        %2656 = vmatprep.mubr.f32.mxu0 0.0
        %2657 = vmatmul.mubr.f32.gmra.mrb[0].mxu0 %v2523
        %v2658 = vpop.f32.mrb[0].mxu0
        %v2659 = vadd.f32 0.0, %v2658
        %v2660 = vpop.f32.mrb[0].mxu0
        %2661 = vmatprep.mubr.f32.mxu0 0.0
        %2662 = vmatmul.mubr.f32.gmra.mrb[0].mxu0 %v2524
        %v2663 = vpop.f32.mrb[0].mxu0
        %v2664 = vadd.f32 0.0, %v2663
        %v2665 = vpop.f32.mrb[0].mxu0
        %2666 = vmatprep.mubr.f32.mxu0 0.0
        %2667 = vmatmul.mubr.f32.gmra.mrb[0].mxu0 %v2525
        %v2668 = vpop.f32.mrb[0].mxu0
        %v2669 = vadd.f32 0.0, %v2668
        %v2670 = vpop.f32.mrb[0].mxu0
        %2671 = vmatprep.mubr.f32.mxu0 0.0
        %2672 = vmatmul.mubr.f32.gmra.mrb[0].mxu0 %v2526
        %v2673 = vpop.f32.mrb[0].mxu0
        %v2674 = vadd.f32 0.0, %v2673
        %v2675 = vpop.f32.mrb[0].mxu0
        %2676 = vmatprep.mubr.f32.mxu0 0.0
        %2677 = vmatmul.mubr.f32.gmra.mrb[0].mxu0 %v2527
        %v2678 = vpop.f32.mrb[0].mxu0
        %v2679 = vadd.f32 0.0, %v2678
        %v2680 = vpop.f32.mrb[0].mxu0
        %2681 = vmatprep.mubr.f32.mxu0 0.0
        %2682 = vmatmul.mubr.f32.gmra.mrb[0].mxu0 %v2528
        %v2683 = vpop.f32.mrb[0].mxu0
        %v2684 = vadd.f32 0.0, %v2683
        %v2685 = vpop.f32.mrb[0].mxu0
        %2686 = vmatprep.mubr.f32.mxu0 0.0
        %2687 = vmatmul.mubr.f32.gmra.mrb[0].mxu0 %v2529
        %v2688 = vpop.f32.mrb[0].mxu0
        %v2689 = vadd.f32 0.0, %v2688
        %v2690 = vpop.f32.mrb[0].mxu0
        %2691 = vmatprep.mubr.f32.mxu0 0.0
        %2692 = vmatmul.mubr.f32.gmra.mrb[0].mxu0 %v2530
        %v2693 = vpop.f32.mrb[0].mxu0
        %v2694 = vadd.f32 0.0, %v2693
        %v2695 = vpop.f32.mrb[0].mxu0
        %2696 = vmatprep.mubr.f32.mxu0 0.0
        %2697 = vmatmul.mubr.f32.gmra.mrb[0].mxu0 %v2531
        %v2698 = vpop.f32.mrb[0].mxu0
        %v2699 = vadd.f32 0.0, %v2698
        %v2700 = vpop.f32.mrb[0].mxu0
        %2701 = vmatprep.mubr.f32.mxu0 0.0
        %2702 = vmatmul.mubr.f32.gmra.mrb[0].mxu0 %v2532
        %v2703 = vpop.f32.mrb[0].mxu0
        %v2704 = vadd.f32 0.0, %v2703
        %v2705 = vpop.f32.mrb[0].mxu0
        %2706 = vmatprep.mubr.f32.mxu0 0.0
        %2707 = vmatmul.mubr.f32.gmra.mrb[0].mxu0 %v2533
        %v2708 = vpop.f32.mrb[0].mxu0
        %v2709 = vadd.f32 0.0, %v2708
        %v2710 = vpop.f32.mrb[0].mxu0
        %2711 = vmatprep.mubr.f32.mxu0 0.0
        %2712 = vmatmul.mubr.f32.gmra.mrb[0].mxu0 %v2534
        %v2713 = vpop.f32.mrb[0].mxu0
        %v2714 = vadd.f32 0.0, %v2713
        %v2715 = vpop.f32.mrb[0].mxu0
        %2716 = vmatprep.mubr.f32.mxu0 0.0
        %2717 = vmatmul.mubr.f32.gmra.mrb[0].mxu0 %v2535
        %v2718 = vpop.f32.mrb[0].mxu0
        %v2719 = vadd.f32 0.0, %v2718
        %v2720 = vpop.f32.mrb[0].mxu0
        %2721 = vmatprep.mubr.f32.mxu0 0.0
        %2722 = vmatmul.mubr.f32.gmra.mrb[0].mxu0 %v2536
        %v2723 = vpop.f32.mrb[0].mxu0
        %v2724 = vadd.f32 0.0, %v2723
        %v2725 = vpop.f32.mrb[0].mxu0
        %2726 = vmatprep.mubr.f32.mxu0 0.0
        %2727 = vmatmul.mubr.f32.gmra.mrb[0].mxu0 %v2537
        %v2728 = vpop.f32.mrb[0].mxu0
        %v2729 = vadd.f32 0.0, %v2728
        %v2730 = vpop.f32.mrb[0].mxu0
        %2731 = vmatprep.mubr.f32.mxu0 0.0
        %2732 = vmatmul.mubr.f32.gmra.mrb[0].mxu0 %v2538
        %v2733 = vpop.f32.mrb[0].mxu0
        %v2734 = vadd.f32 0.0, %v2733
        %v2735 = vpop.f32.mrb[0].mxu0
        %2736 = vmatprep.mubr.f32.mxu0 0.0
        %2737 = vmatmul.mubr.f32.gmra.mrb[0].mxu0 %v2539
        %v2738 = vpop.f32.mrb[0].mxu0
        %v2739 = vadd.f32 0.0, %v2738
        %v2740 = vpop.f32.mrb[0].mxu0
        %2741 = vmatprep.mubr.f32.mxu0 0.0
        %2742 = vmatmul.mubr.f32.gmra.mrb[0].mxu0 %v2540
        %v2743 = vpop.f32.mrb[0].mxu0
        %v2744 = vadd.f32 0.0, %v2743
        %v2745 = vpop.f32.mrb[0].mxu0
        %2746 = vmatprep.mubr.f32.mxu0 0.0
        %2747 = vmatmul.mubr.f32.gmra.mrb[0].mxu0 %v2541
        %v2748 = vpop.f32.mrb[0].mxu0
        %v2749 = vadd.f32 0.0, %v2748
        %v2750 = vpop.f32.mrb[0].mxu0
        %2751 = vmatprep.mubr.f32.mxu0 0.0
        %2752 = vmatmul.mubr.f32.gmra.mrb[0].mxu0 %v2542
        %v2753 = vpop.f32.mrb[0].mxu0
        %v2754 = vadd.f32 0.0, %v2753
        %v2755 = vpop.f32.mrb[0].mxu0
        %2756 = vmatprep.mubr.f32.mxu0 0.0
        %2757 = vmatmul.mubr.f32.gmra.mrb[0].mxu0 %v2543
        %v2758 = vpop.f32.mrb[0].mxu0
        %v2759 = vadd.f32 0.0, %v2758
        %v2760 = vpop.f32.mrb[0].mxu0
        %2761 = vmatprep.mubr.f32.mxu0 0.0
        %2762 = vmatmul.mubr.f32.gmra.mrb[0].mxu0 %v2544
        %v2763 = vpop.f32.mrb[0].mxu0
        %v2764 = vadd.f32 0.0, %v2763
        %v2765 = vpop.f32.mrb[0].mxu0
        %2766 = vmatprep.mubr.f32.mxu0 0.0
        %2767 = vmatmul.mubr.f32.gmra.mrb[0].mxu0 %v2545
        %v2768 = vpop.f32.mrb[0].mxu0
        %v2769 = vadd.f32 0.0, %v2768
        %v2770 = vpop.f32.mrb[0].mxu0
        %2771 = vmatprep.mubr.f32.mxu0 0.0
        %2772 = vmatmul.mubr.f32.gmra.mrb[0].mxu0 %v2546
        %v2773 = vpop.f32.mrb[0].mxu0
        %v2774 = vadd.f32 0.0, %v2773
        %v2775 = vpop.f32.mrb[0].mxu0
        %2776 = vmatprep.mubr.f32.mxu0 0.0
        %2777 = vmatmul.mubr.f32.gmra.mrb[0].mxu0 %v2547
        %v2778 = vpop.f32.mrb[0].mxu0
        %v2779 = vadd.f32 0.0, %v2778
        %v2780 = vpop.f32.mrb[0].mxu0
        %2781 = vmatprep.mubr.f32.mxu0 0.0
        %2782 = vmatmul.mubr.f32.gmra.mrb[0].mxu0 %v2548
        %v2783 = vpop.f32.mrb[0].mxu0
        %v2784 = vadd.f32 0.0, %v2783
        %v2785 = vpop.f32.mrb[0].mxu0
        %2786 = vmatprep.mubr.f32.mxu0 0.0
        %2787 = vmatmul.mubr.f32.gmra.mrb[0].mxu0 %v2549
        %v2788 = vpop.f32.mrb[0].mxu0
        %v2789 = vadd.f32 0.0, %v2788
        %v2790 = vpop.f32.mrb[0].mxu0
        %2791 = vdwg.mxu0
        %v2792 = vadd.f32 %v2486, %v2634
        %v2793 = vadd.f32 %v2487, %v2639
        %v2794 = vadd.f32 %v2488, %v2644
        %v2795 = vadd.f32 %v2489, %v2649
        %v2796 = vadd.f32 %v2490, %v2654
        %v2797 = vadd.f32 %v2491, %v2659
        %v2798 = vadd.f32 %v2492, %v2664
        %v2799 = vadd.f32 %v2493, %v2669
        %v2800 = vadd.f32 %v2494, %v2674
        %v2801 = vadd.f32 %v2495, %v2679
        %v2802 = vadd.f32 %v2496, %v2684
        %v2803 = vadd.f32 %v2497, %v2689
        %v2804 = vadd.f32 %v2498, %v2694
        %v2805 = vadd.f32 %v2499, %v2699
        %v2806 = vadd.f32 %v2500, %v2704
        %v2807 = vadd.f32 %v2501, %v2709
        %v2808 = vadd.f32 %v2502, %v2714
        %v2809 = vadd.f32 %v2503, %v2719
        %v2810 = vadd.f32 %v2504, %v2724
        %v2811 = vadd.f32 %v2505, %v2729
        %v2812 = vadd.f32 %v2506, %v2734
        %v2813 = vadd.f32 %v2507, %v2739
        %v2814 = vadd.f32 %v2508, %v2744
        %v2815 = vadd.f32 %v2509, %v2749
        %v2816 = vadd.f32 %v2510, %v2754
        %v2817 = vadd.f32 %v2511, %v2759
        %v2818 = vadd.f32 %v2512, %v2764
        %v2819 = vadd.f32 %v2513, %v2769
        %v2820 = vadd.f32 %v2514, %v2774
        %v2821 = vadd.f32 %v2515, %v2779
        %v2822 = vadd.f32 %v2516, %v2784
        %v2823 = vadd.f32 %v2517, %v2789
        %v2824 = vld [vmem:[%s2211 + $0x9] sm:$0xff]
        %v2825 = vld [vmem:[%s2211 + $0x11] sm:$0xff]
        %v2826 = vld [vmem:[%s2211 + $0x29] sm:$0xff]
        %v2827 = vld [vmem:[%s2211 + $0x31] sm:$0xff]
        %v2828 = vld [vmem:[%s2211 + $0x49] sm:$0xff]
        %v2829 = vld [vmem:[%s2211 + $0x51] sm:$0xff]
        %v2830 = vld [vmem:[%s2211 + $0x69] sm:$0xff]
        %v2831 = vld [vmem:[%s2211 + $0x71] sm:$0xff]
        %v2832 = vld [vmem:[%s2211 + $0x89] sm:$0xff]
        %v2833 = vld [vmem:[%s2211 + $0x91] sm:$0xff]
        %v2834 = vld [vmem:[%s2211 + $0xa9] sm:$0xff]
        %v2835 = vld [vmem:[%s2211 + $0xb1] sm:$0xff]
        %v2836 = vld [vmem:[%s2211 + $0xc9] sm:$0xff]
        %v2837 = vld [vmem:[%s2211 + $0xd1] sm:$0xff]
        %v2838 = vld [vmem:[%s2211 + $0xe9] sm:$0xff]
        %v2839 = vld [vmem:[%s2211 + $0xf1] sm:$0xff]
        %v2840 = vld [vmem:[%s2211 + $0x109] sm:$0xff]
        %v2841 = vld [vmem:[%s2211 + $0x111] sm:$0xff]
        %v2842 = vld [vmem:[%s2211 + $0x129] sm:$0xff]
        %v2843 = vld [vmem:[%s2211 + $0x131] sm:$0xff]
        %v2844 = vld [vmem:[%s2211 + $0x149] sm:$0xff]
        %v2845 = vld [vmem:[%s2211 + $0x151] sm:$0xff]
        %v2846 = vld [vmem:[%s2211 + $0x169] sm:$0xff]
        %v2847 = vld [vmem:[%s2211 + $0x171] sm:$0xff]
        %v2848 = vld [vmem:[%s2211 + $0x189] sm:$0xff]
        %v2849 = vld [vmem:[%s2211 + $0x191] sm:$0xff]
        %v2850 = vld [vmem:[%s2211 + $0x1a9] sm:$0xff]
        %v2851 = vld [vmem:[%s2211 + $0x1b1] sm:$0xff]
        %v2852 = vld [vmem:[%s2211 + $0x1c9] sm:$0xff]
        %v2853 = vld [vmem:[%s2211 + $0x1d1] sm:$0xff]
        %v2854 = vld [vmem:[%s2211 + $0x1e9] sm:$0xff]
        %v2855 = vld [vmem:[%s2211 + $0x1f1] sm:$0xff]
        %s2856 = scalar_lea.vmem %s3, 1024
        %v2857 = vld [vmem:[%s2856] sm:$0xff]
        %v2858 = vld [vmem:[%s2856 + $0x8] sm:$0xff]
        %v2859 = vld [vmem:[%s2856 + $0x10] sm:$0xff]
        %v2860 = vld [vmem:[%s2856 + $0x18] sm:$0xff]
        %v2861 = vld [vmem:[%s2856 + $0x20] sm:$0xff]
        %v2862 = vld [vmem:[%s2856 + $0x28] sm:$0xff]
        %v2863 = vld [vmem:[%s2856 + $0x30] sm:$0xff]
        %v2864 = vld [vmem:[%s2856 + $0x38] sm:$0xff]
        %v2865 = vld [vmem:[%s2856 + $0x40] sm:$0xff]
        %v2866 = vld [vmem:[%s2856 + $0x48] sm:$0xff]
        %v2867 = vld [vmem:[%s2856 + $0x50] sm:$0xff]
        %v2868 = vld [vmem:[%s2856 + $0x58] sm:$0xff]
        %v2869 = vld [vmem:[%s2856 + $0x60] sm:$0xff]
        %v2870 = vld [vmem:[%s2856 + $0x68] sm:$0xff]
        %v2871 = vld [vmem:[%s2856 + $0x70] sm:$0xff]
        %v2872 = vld [vmem:[%s2856 + $0x78] sm:$0xff]
        %2873 = vmatprep.subr.mxu0 0.0
        %2874 = vmatpush1.msra.mxu0 %v2857
        %2875 = vmatprep.subr.mxu0 0.0
        %2876 = vmatpush1.msra.mxu0 %v2858
        %2877 = vmatprep.subr.mxu0 0.0
        %2878 = vmatpush1.msra.mxu0 %v2859
        %2879 = vmatprep.subr.mxu0 0.0
        %2880 = vmatpush1.msra.mxu0 %v2860
        %2881 = vmatprep.subr.mxu0 0.0
        %2882 = vmatpush1.msra.mxu0 %v2861
        %2883 = vmatprep.subr.mxu0 0.0
        %2884 = vmatpush1.msra.mxu0 %v2862
        %2885 = vmatprep.subr.mxu0 0.0
        %2886 = vmatpush1.msra.mxu0 %v2863
        %2887 = vmatprep.subr.mxu0 0.0
        %2888 = vmatpush1.msra.mxu0 %v2864
        %2889 = vmatprep.subr.mxu0 0.0
        %2890 = vmatpush1.msra.mxu0 %v2865
        %2891 = vmatprep.subr.mxu0 0.0
        %2892 = vmatpush1.msra.mxu0 %v2866
        %2893 = vmatprep.subr.mxu0 0.0
        %2894 = vmatpush1.msra.mxu0 %v2867
        %2895 = vmatprep.subr.mxu0 0.0
        %2896 = vmatpush1.msra.mxu0 %v2868
        %2897 = vmatprep.subr.mxu0 0.0
        %2898 = vmatpush1.msra.mxu0 %v2869
        %2899 = vmatprep.subr.mxu0 0.0
        %2900 = vmatpush1.msra.mxu0 %v2870
        %2901 = vmatprep.subr.mxu0 0.0
        %2902 = vmatpush1.msra.mxu0 %v2871
        %2903 = vmatprep.subr.mxu0 0.0
        %2904 = vmatpush1.msra.mxu0 %v2872
        %2905 = vmatprep.subr.mxu0 0.0
        %2906 = vmatpush1.msra.mxu0 0.0
        %2907 = vmatprep.subr.mxu0 0.0
        %2908 = vmatpush1.msra.mxu0 0.0
        %2909 = vmatprep.subr.mxu0 0.0
        %2910 = vmatpush1.msra.mxu0 0.0
        %2911 = vmatprep.subr.mxu0 0.0
        %2912 = vmatpush1.msra.mxu0 0.0
        %2913 = vmatprep.subr.mxu0 0.0
        %2914 = vmatpush1.msra.mxu0 0.0
        %2915 = vmatprep.subr.mxu0 0.0
        %2916 = vmatpush1.msra.mxu0 0.0
        %2917 = vmatprep.subr.mxu0 0.0
        %2918 = vmatpush1.msra.mxu0 0.0
        %2919 = vmatprep.subr.mxu0 0.0
        %2920 = vmatpush1.msra.mxu0 0.0
        %2921 = vmatprep.subr.mxu0 0.0
        %2922 = vmatpush1.msra.mxu0 0.0
        %2923 = vmatprep.subr.mxu0 0.0
        %2924 = vmatpush1.msra.mxu0 0.0
        %2925 = vmatprep.subr.mxu0 0.0
        %2926 = vmatpush1.msra.mxu0 0.0
        %2927 = vmatprep.subr.mxu0 0.0
        %2928 = vmatpush1.msra.mxu0 0.0
        %2929 = vmatprep.subr.mxu0 0.0
        %2930 = vmatpush1.msra.mxu0 0.0
        %2931 = vmatprep.subr.mxu0 0.0
        %2932 = vmatpush1.msra.mxu0 0.0
        %2933 = vmatprep.subr.mxu0 0.0
        %2934 = vmatpush1.msra.mxu0 0.0
        %2935 = vmatprep.subr.mxu0 0.0
        %2936 = vmatpush1.msra.mxu0 0.0
        %2937 = vmatprep.mubr.f32.mxu0 0.0
        %2938 = vmatmul.mubr.f32.gmra.mrb[0].mxu0 %v2824
        %v2939 = vpop.f32.mrb[0].mxu0
        %v2940 = vadd.f32 0.0, %v2939
        %v2941 = vpop.f32.mrb[0].mxu0
        %2942 = vmatprep.mubr.f32.mxu0 0.0
        %2943 = vmatmul.mubr.f32.gmra.mrb[0].mxu0 %v2825
        %v2944 = vpop.f32.mrb[0].mxu0
        %v2945 = vadd.f32 0.0, %v2944
        %v2946 = vpop.f32.mrb[0].mxu0
        %2947 = vmatprep.mubr.f32.mxu0 0.0
        %2948 = vmatmul.mubr.f32.gmra.mrb[0].mxu0 %v2826
        %v2949 = vpop.f32.mrb[0].mxu0
        %v2950 = vadd.f32 0.0, %v2949
        %v2951 = vpop.f32.mrb[0].mxu0
        %2952 = vmatprep.mubr.f32.mxu0 0.0
        %2953 = vmatmul.mubr.f32.gmra.mrb[0].mxu0 %v2827
        %v2954 = vpop.f32.mrb[0].mxu0
        %v2955 = vadd.f32 0.0, %v2954
        %v2956 = vpop.f32.mrb[0].mxu0
        %2957 = vmatprep.mubr.f32.mxu0 0.0
        %2958 = vmatmul.mubr.f32.gmra.mrb[0].mxu0 %v2828
        %v2959 = vpop.f32.mrb[0].mxu0
        %v2960 = vadd.f32 0.0, %v2959
        %v2961 = vpop.f32.mrb[0].mxu0
        %2962 = vmatprep.mubr.f32.mxu0 0.0
        %2963 = vmatmul.mubr.f32.gmra.mrb[0].mxu0 %v2829
        %v2964 = vpop.f32.mrb[0].mxu0
        %v2965 = vadd.f32 0.0, %v2964
        %v2966 = vpop.f32.mrb[0].mxu0
        %2967 = vmatprep.mubr.f32.mxu0 0.0
        %2968 = vmatmul.mubr.f32.gmra.mrb[0].mxu0 %v2830
        %v2969 = vpop.f32.mrb[0].mxu0
        %v2970 = vadd.f32 0.0, %v2969
        %v2971 = vpop.f32.mrb[0].mxu0
        %2972 = vmatprep.mubr.f32.mxu0 0.0
        %2973 = vmatmul.mubr.f32.gmra.mrb[0].mxu0 %v2831
        %v2974 = vpop.f32.mrb[0].mxu0
        %v2975 = vadd.f32 0.0, %v2974
        %v2976 = vpop.f32.mrb[0].mxu0
        %2977 = vmatprep.mubr.f32.mxu0 0.0
        %2978 = vmatmul.mubr.f32.gmra.mrb[0].mxu0 %v2832
        %v2979 = vpop.f32.mrb[0].mxu0
        %v2980 = vadd.f32 0.0, %v2979
        %v2981 = vpop.f32.mrb[0].mxu0
        %2982 = vmatprep.mubr.f32.mxu0 0.0
        %2983 = vmatmul.mubr.f32.gmra.mrb[0].mxu0 %v2833
        %v2984 = vpop.f32.mrb[0].mxu0
        %v2985 = vadd.f32 0.0, %v2984
        %v2986 = vpop.f32.mrb[0].mxu0
        %2987 = vmatprep.mubr.f32.mxu0 0.0
        %2988 = vmatmul.mubr.f32.gmra.mrb[0].mxu0 %v2834
        %v2989 = vpop.f32.mrb[0].mxu0
        %v2990 = vadd.f32 0.0, %v2989
        %v2991 = vpop.f32.mrb[0].mxu0
        %2992 = vmatprep.mubr.f32.mxu0 0.0
        %2993 = vmatmul.mubr.f32.gmra.mrb[0].mxu0 %v2835
        %v2994 = vpop.f32.mrb[0].mxu0
        %v2995 = vadd.f32 0.0, %v2994
        %v2996 = vpop.f32.mrb[0].mxu0
        %2997 = vmatprep.mubr.f32.mxu0 0.0
        %2998 = vmatmul.mubr.f32.gmra.mrb[0].mxu0 %v2836
        %v2999 = vpop.f32.mrb[0].mxu0
        %v3000 = vadd.f32 0.0, %v2999
        %v3001 = vpop.f32.mrb[0].mxu0
        %3002 = vmatprep.mubr.f32.mxu0 0.0
        %3003 = vmatmul.mubr.f32.gmra.mrb[0].mxu0 %v2837
        %v3004 = vpop.f32.mrb[0].mxu0
        %v3005 = vadd.f32 0.0, %v3004
        %v3006 = vpop.f32.mrb[0].mxu0
        %3007 = vmatprep.mubr.f32.mxu0 0.0
        %3008 = vmatmul.mubr.f32.gmra.mrb[0].mxu0 %v2838
        %v3009 = vpop.f32.mrb[0].mxu0
        %v3010 = vadd.f32 0.0, %v3009
        %v3011 = vpop.f32.mrb[0].mxu0
        %3012 = vmatprep.mubr.f32.mxu0 0.0
        %3013 = vmatmul.mubr.f32.gmra.mrb[0].mxu0 %v2839
        %v3014 = vpop.f32.mrb[0].mxu0
        %v3015 = vadd.f32 0.0, %v3014
        %v3016 = vpop.f32.mrb[0].mxu0
        %3017 = vmatprep.mubr.f32.mxu0 0.0
        %3018 = vmatmul.mubr.f32.gmra.mrb[0].mxu0 %v2840
        %v3019 = vpop.f32.mrb[0].mxu0
        %v3020 = vadd.f32 0.0, %v3019
        %v3021 = vpop.f32.mrb[0].mxu0
        %3022 = vmatprep.mubr.f32.mxu0 0.0
        %3023 = vmatmul.mubr.f32.gmra.mrb[0].mxu0 %v2841
        %v3024 = vpop.f32.mrb[0].mxu0
        %v3025 = vadd.f32 0.0, %v3024
        %v3026 = vpop.f32.mrb[0].mxu0
        %3027 = vmatprep.mubr.f32.mxu0 0.0
        %3028 = vmatmul.mubr.f32.gmra.mrb[0].mxu0 %v2842
        %v3029 = vpop.f32.mrb[0].mxu0
        %v3030 = vadd.f32 0.0, %v3029
        %v3031 = vpop.f32.mrb[0].mxu0
        %3032 = vmatprep.mubr.f32.mxu0 0.0
        %3033 = vmatmul.mubr.f32.gmra.mrb[0].mxu0 %v2843
        %v3034 = vpop.f32.mrb[0].mxu0
        %v3035 = vadd.f32 0.0, %v3034
        %v3036 = vpop.f32.mrb[0].mxu0
        %3037 = vmatprep.mubr.f32.mxu0 0.0
        %3038 = vmatmul.mubr.f32.gmra.mrb[0].mxu0 %v2844
        %v3039 = vpop.f32.mrb[0].mxu0
        %v3040 = vadd.f32 0.0, %v3039
        %v3041 = vpop.f32.mrb[0].mxu0
        %3042 = vmatprep.mubr.f32.mxu0 0.0
        %3043 = vmatmul.mubr.f32.gmra.mrb[0].mxu0 %v2845
        %v3044 = vpop.f32.mrb[0].mxu0
        %v3045 = vadd.f32 0.0, %v3044
        %v3046 = vpop.f32.mrb[0].mxu0
        %3047 = vmatprep.mubr.f32.mxu0 0.0
        %3048 = vmatmul.mubr.f32.gmra.mrb[0].mxu0 %v2846
        %v3049 = vpop.f32.mrb[0].mxu0
        %v3050 = vadd.f32 0.0, %v3049
        %v3051 = vpop.f32.mrb[0].mxu0
        %3052 = vmatprep.mubr.f32.mxu0 0.0
        %3053 = vmatmul.mubr.f32.gmra.mrb[0].mxu0 %v2847
        %v3054 = vpop.f32.mrb[0].mxu0
        %v3055 = vadd.f32 0.0, %v3054
        %v3056 = vpop.f32.mrb[0].mxu0
        %3057 = vmatprep.mubr.f32.mxu0 0.0
        %3058 = vmatmul.mubr.f32.gmra.mrb[0].mxu0 %v2848
        %v3059 = vpop.f32.mrb[0].mxu0
        %v3060 = vadd.f32 0.0, %v3059
        %v3061 = vpop.f32.mrb[0].mxu0
        %3062 = vmatprep.mubr.f32.mxu0 0.0
        %3063 = vmatmul.mubr.f32.gmra.mrb[0].mxu0 %v2849
        %v3064 = vpop.f32.mrb[0].mxu0
        %v3065 = vadd.f32 0.0, %v3064
        %v3066 = vpop.f32.mrb[0].mxu0
        %3067 = vmatprep.mubr.f32.mxu0 0.0
        %3068 = vmatmul.mubr.f32.gmra.mrb[0].mxu0 %v2850
        %v3069 = vpop.f32.mrb[0].mxu0
        %v3070 = vadd.f32 0.0, %v3069
        %v3071 = vpop.f32.mrb[0].mxu0
        %3072 = vmatprep.mubr.f32.mxu0 0.0
        %3073 = vmatmul.mubr.f32.gmra.mrb[0].mxu0 %v2851
        %v3074 = vpop.f32.mrb[0].mxu0
        %v3075 = vadd.f32 0.0, %v3074
        %v3076 = vpop.f32.mrb[0].mxu0
        %3077 = vmatprep.mubr.f32.mxu0 0.0
        %3078 = vmatmul.mubr.f32.gmra.mrb[0].mxu0 %v2852
        %v3079 = vpop.f32.mrb[0].mxu0
        %v3080 = vadd.f32 0.0, %v3079
        %v3081 = vpop.f32.mrb[0].mxu0
        %3082 = vmatprep.mubr.f32.mxu0 0.0
        %3083 = vmatmul.mubr.f32.gmra.mrb[0].mxu0 %v2853
        %v3084 = vpop.f32.mrb[0].mxu0
        %v3085 = vadd.f32 0.0, %v3084
        %v3086 = vpop.f32.mrb[0].mxu0
        %3087 = vmatprep.mubr.f32.mxu0 0.0
        %3088 = vmatmul.mubr.f32.gmra.mrb[0].mxu0 %v2854
        %v3089 = vpop.f32.mrb[0].mxu0
        %v3090 = vadd.f32 0.0, %v3089
        %v3091 = vpop.f32.mrb[0].mxu0
        %3092 = vmatprep.mubr.f32.mxu0 0.0
        %3093 = vmatmul.mubr.f32.gmra.mrb[0].mxu0 %v2855
        %v3094 = vpop.f32.mrb[0].mxu0
        %v3095 = vadd.f32 0.0, %v3094
        %v3096 = vpop.f32.mrb[0].mxu0
        %3097 = vdwg.mxu0
        %v3098 = vadd.f32 %v2792, %v2940
        %v3099 = vadd.f32 %v2793, %v2945
        %v3100 = vadd.f32 %v2794, %v2950
        %v3101 = vadd.f32 %v2795, %v2955
        %v3102 = vadd.f32 %v2796, %v2960
        %v3103 = vadd.f32 %v2797, %v2965
        %v3104 = vadd.f32 %v2798, %v2970
        %v3105 = vadd.f32 %v2799, %v2975
        %v3106 = vadd.f32 %v2800, %v2980
        %v3107 = vadd.f32 %v2801, %v2985
        %v3108 = vadd.f32 %v2802, %v2990
        %v3109 = vadd.f32 %v2803, %v2995
        %v3110 = vadd.f32 %v2804, %v3000
        %v3111 = vadd.f32 %v2805, %v3005
        %v3112 = vadd.f32 %v2806, %v3010
        %v3113 = vadd.f32 %v2807, %v3015
        %v3114 = vadd.f32 %v2808, %v3020
        %v3115 = vadd.f32 %v2809, %v3025
        %v3116 = vadd.f32 %v2810, %v3030
        %v3117 = vadd.f32 %v2811, %v3035
        %v3118 = vadd.f32 %v2812, %v3040
        %v3119 = vadd.f32 %v2813, %v3045
        %v3120 = vadd.f32 %v2814, %v3050
        %v3121 = vadd.f32 %v2815, %v3055
        %v3122 = vadd.f32 %v2816, %v3060
        %v3123 = vadd.f32 %v2817, %v3065
        %v3124 = vadd.f32 %v2818, %v3070
        %v3125 = vadd.f32 %v2819, %v3075
        %v3126 = vadd.f32 %v2820, %v3080
        %v3127 = vadd.f32 %v2821, %v3085
        %v3128 = vadd.f32 %v2822, %v3090
        %v3129 = vadd.f32 %v2823, %v3095
        %3130 = vst [vmem:[%s187] sm:$0xff] %v3098
        %3131 = vst [vmem:[%s187 + $0x8] sm:$0xff] %v3099
        %3132 = vst [vmem:[%s187 + $0x10] sm:$0xff] %v3100
        %3133 = vst [vmem:[%s187 + $0x18] sm:$0xff] %v3101
        %3134 = vst [vmem:[%s187 + $0x20] sm:$0xff] %v3102
        %3135 = vst [vmem:[%s187 + $0x28] sm:$0xff] %v3103
        %3136 = vst [vmem:[%s187 + $0x30] sm:$0xff] %v3104
        %3137 = vst [vmem:[%s187 + $0x38] sm:$0xff] %v3105
        %3138 = vst [vmem:[%s187 + $0x40] sm:$0xff] %v3106
        %3139 = vst [vmem:[%s187 + $0x48] sm:$0xff] %v3107
        %3140 = vst [vmem:[%s187 + $0x50] sm:$0xff] %v3108
        %3141 = vst [vmem:[%s187 + $0x58] sm:$0xff] %v3109
        %3142 = vst [vmem:[%s187 + $0x60] sm:$0xff] %v3110
        %3143 = vst [vmem:[%s187 + $0x68] sm:$0xff] %v3111
        %3144 = vst [vmem:[%s187 + $0x70] sm:$0xff] %v3112
        %3145 = vst [vmem:[%s187 + $0x78] sm:$0xff] %v3113
        %3146 = vst [vmem:[%s187 + $0x80] sm:$0xff] %v3114
        %3147 = vst [vmem:[%s187 + $0x88] sm:$0xff] %v3115
        %3148 = vst [vmem:[%s187 + $0x90] sm:$0xff] %v3116
        %3149 = vst [vmem:[%s187 + $0x98] sm:$0xff] %v3117
        %3150 = vst [vmem:[%s187 + $0xa0] sm:$0xff] %v3118
        %3151 = vst [vmem:[%s187 + $0xa8] sm:$0xff] %v3119
        %3152 = vst [vmem:[%s187 + $0xb0] sm:$0xff] %v3120
        %3153 = vst [vmem:[%s187 + $0xb8] sm:$0xff] %v3121
        %3154 = vst [vmem:[%s187 + $0xc0] sm:$0xff] %v3122
        %3155 = vst [vmem:[%s187 + $0xc8] sm:$0xff] %v3123
        %3156 = vst [vmem:[%s187 + $0xd0] sm:$0xff] %v3124
        %3157 = vst [vmem:[%s187 + $0xd8] sm:$0xff] %v3125
        %3158 = vst [vmem:[%s187 + $0xe0] sm:$0xff] %v3126
        %3159 = vst [vmem:[%s187 + $0xe8] sm:$0xff] %v3127
        %3160 = vst [vmem:[%s187 + $0xf0] sm:$0xff] %v3128
        %3161 = vst [vmem:[%s187 + $0xf8] sm:$0xff] %v3129
        %s3162 = sand.u32 %s113, 1
        %s3163 = sand.u32 %s113, 1
        %s3164 = smul.addr %s3163, 256
        %s3165 = scalar_lea.vmem [#allocation3], %s3164
        // Predicated region
        $region37: #{dense_block_forward.5} parent=35 // pred_check
          %p3166 = pneg %p123
        $region38: #{dense_block_forward.5} parent=35 // pred_check_branch
          %3168 = sbr.rel (%p3166) target = $region40
        $region39: #{dense_block_forward.5} parent=35 // pred_region
          %s3169 = smul.addr %s16, 96
          %s3170 = sadd.s32 1, %s3169
          %s3171 = smul.addr %s3170, 8
          %s3172 = scalar_lea.vmem %s5, %s3171
          // Predicated region
          $region41: #{dense_block_forward.5} parent=39 // pred_check
            _
          $region42: #{dense_block_forward.5} parent=39 // pred_check_branch
            %3174 = sbr.rel (0) target = $region44
          $region43: #{dense_block_forward.5} parent=39 // pred_region
            // Predicated region
            $region45: #{dense_block_forward.5} parent=43 // pred_check
              _
            $region46: #{dense_block_forward.5} parent=43 // pred_check_branch
              %3176 = sbr.rel (0) target = $region48
            $region47: #{dense_block_forward.5} parent=43 // pred_region
              // Predicated region
              $region60: #{dense_block_forward.5} parent=47 // pred_check
                _
              $region61: #{dense_block_forward.5} parent=47 // pred_check_branch
                %3253 = sbr.rel (0) target = $region63
              $region62: #{dense_block_forward.5} parent=47 // pred_region
                loop: start=0, step=1, limit=1
                $region64: #{dense_block_forward.5} parent=62 // loop_pre_header
                  _
                $region65: #{dense_block_forward.5} parent=62 // loop_header
                  %s3255 = sphi 0, %s3259
                  %p3256 = scmp.ge.s32.totalorder %s3255, 1
                  %s3260 = sphi %s3165, %s3165
                  %s3261 = sphi %s3172, %s3172
                $region66: #{dense_block_forward.5} parent=62 // loop_header_branch
                  %3258 = sbr.rel (%p3256) target = $region70
                $region67: #{dense_block_forward.5} parent=62 // loop_body
                  %v3262 = vld [vmem:[%s3260] sm:$0xff]
                  %3263 = vst [vmem:[%s3261] sm:$0xff] %v3262
                  %v3264 = vld [vmem:[%s3260 + $0x8] sm:$0xff]
                  %3265 = vst [vmem:[%s3261 + $0x18] sm:$0xff] %v3264
                  %v3266 = vld [vmem:[%s3260 + $0x10] sm:$0xff]
                  %3267 = vst [vmem:[%s3261 + $0x30] sm:$0xff] %v3266
                  %v3268 = vld [vmem:[%s3260 + $0x18] sm:$0xff]
                  %3269 = vst [vmem:[%s3261 + $0x48] sm:$0xff] %v3268
                  %v3270 = vld [vmem:[%s3260 + $0x20] sm:$0xff]
                  %3271 = vst [vmem:[%s3261 + $0x60] sm:$0xff] %v3270
                  %v3272 = vld [vmem:[%s3260 + $0x28] sm:$0xff]
                  %3273 = vst [vmem:[%s3261 + $0x78] sm:$0xff] %v3272
                  %v3274 = vld [vmem:[%s3260 + $0x30] sm:$0xff]
                  %3275 = vst [vmem:[%s3261 + $0x90] sm:$0xff] %v3274
                  %v3276 = vld [vmem:[%s3260 + $0x38] sm:$0xff]
                  %3277 = vst [vmem:[%s3261 + $0xa8] sm:$0xff] %v3276
                  %v3278 = vld [vmem:[%s3260 + $0x40] sm:$0xff]
                  %3279 = vst [vmem:[%s3261 + $0xc0] sm:$0xff] %v3278
                  %v3280 = vld [vmem:[%s3260 + $0x48] sm:$0xff]
                  %3281 = vst [vmem:[%s3261 + $0xd8] sm:$0xff] %v3280
                  %v3282 = vld [vmem:[%s3260 + $0x50] sm:$0xff]
                  %3283 = vst [vmem:[%s3261 + $0xf0] sm:$0xff] %v3282
                  %v3284 = vld [vmem:[%s3260 + $0x58] sm:$0xff]
                  %3285 = vst [vmem:[%s3261 + $0x108] sm:$0xff] %v3284
                  %v3286 = vld [vmem:[%s3260 + $0x60] sm:$0xff]
                  %3287 = vst [vmem:[%s3261 + $0x120] sm:$0xff] %v3286
                  %v3288 = vld [vmem:[%s3260 + $0x68] sm:$0xff]
                  %3289 = vst [vmem:[%s3261 + $0x138] sm:$0xff] %v3288
                  %v3290 = vld [vmem:[%s3260 + $0x70] sm:$0xff]
                  %3291 = vst [vmem:[%s3261 + $0x150] sm:$0xff] %v3290
                  %v3292 = vld [vmem:[%s3260 + $0x78] sm:$0xff]
                  %3293 = vst [vmem:[%s3261 + $0x168] sm:$0xff] %v3292
                  %v3294 = vld [vmem:[%s3260 + $0x80] sm:$0xff]
                  %3295 = vst [vmem:[%s3261 + $0x180] sm:$0xff] %v3294
                  %v3296 = vld [vmem:[%s3260 + $0x88] sm:$0xff]
                  %3297 = vst [vmem:[%s3261 + $0x198] sm:$0xff] %v3296
                  %v3298 = vld [vmem:[%s3260 + $0x90] sm:$0xff]
                  %3299 = vst [vmem:[%s3261 + $0x1b0] sm:$0xff] %v3298
                  %v3300 = vld [vmem:[%s3260 + $0x98] sm:$0xff]
                  %3301 = vst [vmem:[%s3261 + $0x1c8] sm:$0xff] %v3300
                  %v3302 = vld [vmem:[%s3260 + $0xa0] sm:$0xff]
                  %3303 = vst [vmem:[%s3261 + $0x1e0] sm:$0xff] %v3302
                  %v3304 = vld [vmem:[%s3260 + $0xa8] sm:$0xff]
                  %3305 = vst [vmem:[%s3261 + $0x1f8] sm:$0xff] %v3304
                  %v3306 = vld [vmem:[%s3260 + $0xb0] sm:$0xff]
                  %3307 = vst [vmem:[%s3261 + $0x210] sm:$0xff] %v3306
                  %v3308 = vld [vmem:[%s3260 + $0xb8] sm:$0xff]
                  %3309 = vst [vmem:[%s3261 + $0x228] sm:$0xff] %v3308
                  %v3310 = vld [vmem:[%s3260 + $0xc0] sm:$0xff]
                  %3311 = vst [vmem:[%s3261 + $0x240] sm:$0xff] %v3310
                  %v3312 = vld [vmem:[%s3260 + $0xc8] sm:$0xff]
                  %3313 = vst [vmem:[%s3261 + $0x258] sm:$0xff] %v3312
                  %v3314 = vld [vmem:[%s3260 + $0xd0] sm:$0xff]
                  %3315 = vst [vmem:[%s3261 + $0x270] sm:$0xff] %v3314
                  %v3316 = vld [vmem:[%s3260 + $0xd8] sm:$0xff]
                  %3317 = vst [vmem:[%s3261 + $0x288] sm:$0xff] %v3316
                  %v3318 = vld [vmem:[%s3260 + $0xe0] sm:$0xff]
                  %3319 = vst [vmem:[%s3261 + $0x2a0] sm:$0xff] %v3318
                  %v3320 = vld [vmem:[%s3260 + $0xe8] sm:$0xff]
                  %3321 = vst [vmem:[%s3261 + $0x2b8] sm:$0xff] %v3320
                  %v3322 = vld [vmem:[%s3260 + $0xf0] sm:$0xff]
                  %3323 = vst [vmem:[%s3261 + $0x2d0] sm:$0xff] %v3322
                  %v3324 = vld [vmem:[%s3260 + $0xf8] sm:$0xff]
                  %3325 = vst [vmem:[%s3261 + $0x2e8] sm:$0xff] %v3324
                $region68: #{dense_block_forward.5} parent=62 // loop_footer
                  %s3259 = sadd.s32 1, %s3255
                $region69: #{dense_block_forward.5} parent=62 // loop_footer_branch
                  %3254 = sbr.rel target = $region65
                $region70: #{dense_block_forward.5} parent=62 // loop_exit
                  _
              $region63: #{dense_block_forward.5} parent=47 // pred_fallthru
                _
              // Predicated region
              $region71: #{dense_block_forward.5} parent=47 // pred_check
                _
              $region72: #{dense_block_forward.5} parent=47 // pred_check_branch
                %3327 = sbr.rel target = $region74
              $region73: #{dense_block_forward.5} parent=47 // pred_region
                _
              $region74: #{dense_block_forward.5} parent=47 // pred_fallthru
                _
            $region48: #{dense_block_forward.5} parent=43 // pred_fallthru
              _
            // Predicated region
            $region49: #{dense_block_forward.5} parent=43 // pred_check
              _
            $region50: #{dense_block_forward.5} parent=43 // pred_check_branch
              %3178 = sbr.rel target = $region52
            $region51: #{dense_block_forward.5} parent=43 // pred_region
              loop: start=0, step=1, limit=1
              $region53: #{dense_block_forward.5} parent=51 // loop_pre_header
                _
              $region54: #{dense_block_forward.5} parent=51 // loop_header
                %s3181 = sphi 0, %s3185
                %p3182 = scmp.ge.s32.totalorder %s3181, 1
                %s3186 = sphi %s3165, %s3165
                %s3187 = sphi %s3172, %s3172
              $region55: #{dense_block_forward.5} parent=51 // loop_header_branch
                %3184 = sbr.rel (%p3182) target = $region59
              $region56: #{dense_block_forward.5} parent=51 // loop_body
                %v3188 = vld [vmem:[%s3186] sm:$0xff]
                %3189 = vst [vmem:[%s3187] sm:$0xff] %v3188
                %v3190 = vld [vmem:[%s3186 + $0x8] sm:$0xff]
                %3191 = vst [vmem:[%s3187 + $0x18] sm:$0xff] %v3190
                %v3192 = vld [vmem:[%s3186 + $0x10] sm:$0xff]
                %3193 = vst [vmem:[%s3187 + $0x30] sm:$0xff] %v3192
                %v3194 = vld [vmem:[%s3186 + $0x18] sm:$0xff]
                %3195 = vst [vmem:[%s3187 + $0x48] sm:$0xff] %v3194
                %v3196 = vld [vmem:[%s3186 + $0x20] sm:$0xff]
                %3197 = vst [vmem:[%s3187 + $0x60] sm:$0xff] %v3196
                %v3198 = vld [vmem:[%s3186 + $0x28] sm:$0xff]
                %3199 = vst [vmem:[%s3187 + $0x78] sm:$0xff] %v3198
                %v3200 = vld [vmem:[%s3186 + $0x30] sm:$0xff]
                %3201 = vst [vmem:[%s3187 + $0x90] sm:$0xff] %v3200
                %v3202 = vld [vmem:[%s3186 + $0x38] sm:$0xff]
                %3203 = vst [vmem:[%s3187 + $0xa8] sm:$0xff] %v3202
                %v3204 = vld [vmem:[%s3186 + $0x40] sm:$0xff]
                %3205 = vst [vmem:[%s3187 + $0xc0] sm:$0xff] %v3204
                %v3206 = vld [vmem:[%s3186 + $0x48] sm:$0xff]
                %3207 = vst [vmem:[%s3187 + $0xd8] sm:$0xff] %v3206
                %v3208 = vld [vmem:[%s3186 + $0x50] sm:$0xff]
                %3209 = vst [vmem:[%s3187 + $0xf0] sm:$0xff] %v3208
                %v3210 = vld [vmem:[%s3186 + $0x58] sm:$0xff]
                %3211 = vst [vmem:[%s3187 + $0x108] sm:$0xff] %v3210
                %v3212 = vld [vmem:[%s3186 + $0x60] sm:$0xff]
                %3213 = vst [vmem:[%s3187 + $0x120] sm:$0xff] %v3212
                %v3214 = vld [vmem:[%s3186 + $0x68] sm:$0xff]
                %3215 = vst [vmem:[%s3187 + $0x138] sm:$0xff] %v3214
                %v3216 = vld [vmem:[%s3186 + $0x70] sm:$0xff]
                %3217 = vst [vmem:[%s3187 + $0x150] sm:$0xff] %v3216
                %v3218 = vld [vmem:[%s3186 + $0x78] sm:$0xff]
                %3219 = vst [vmem:[%s3187 + $0x168] sm:$0xff] %v3218
                %v3220 = vld [vmem:[%s3186 + $0x80] sm:$0xff]
                %3221 = vst [vmem:[%s3187 + $0x180] sm:$0xff] %v3220
                %v3222 = vld [vmem:[%s3186 + $0x88] sm:$0xff]
                %3223 = vst [vmem:[%s3187 + $0x198] sm:$0xff] %v3222
                %v3224 = vld [vmem:[%s3186 + $0x90] sm:$0xff]
                %3225 = vst [vmem:[%s3187 + $0x1b0] sm:$0xff] %v3224
                %v3226 = vld [vmem:[%s3186 + $0x98] sm:$0xff]
                %3227 = vst [vmem:[%s3187 + $0x1c8] sm:$0xff] %v3226
                %v3228 = vld [vmem:[%s3186 + $0xa0] sm:$0xff]
                %3229 = vst [vmem:[%s3187 + $0x1e0] sm:$0xff] %v3228
                %v3230 = vld [vmem:[%s3186 + $0xa8] sm:$0xff]
                %3231 = vst [vmem:[%s3187 + $0x1f8] sm:$0xff] %v3230
                %v3232 = vld [vmem:[%s3186 + $0xb0] sm:$0xff]
                %3233 = vst [vmem:[%s3187 + $0x210] sm:$0xff] %v3232
                %v3234 = vld [vmem:[%s3186 + $0xb8] sm:$0xff]
                %3235 = vst [vmem:[%s3187 + $0x228] sm:$0xff] %v3234
                %v3236 = vld [vmem:[%s3186 + $0xc0] sm:$0xff]
                %3237 = vst [vmem:[%s3187 + $0x240] sm:$0xff] %v3236
                %v3238 = vld [vmem:[%s3186 + $0xc8] sm:$0xff]
                %3239 = vst [vmem:[%s3187 + $0x258] sm:$0xff] %v3238
                %v3240 = vld [vmem:[%s3186 + $0xd0] sm:$0xff]
                %3241 = vst [vmem:[%s3187 + $0x270] sm:$0xff] %v3240
                %v3242 = vld [vmem:[%s3186 + $0xd8] sm:$0xff]
                %3243 = vst [vmem:[%s3187 + $0x288] sm:$0xff] %v3242
                %v3244 = vld [vmem:[%s3186 + $0xe0] sm:$0xff]
                %3245 = vst [vmem:[%s3187 + $0x2a0] sm:$0xff] %v3244
                %v3246 = vld [vmem:[%s3186 + $0xe8] sm:$0xff]
                %3247 = vst [vmem:[%s3187 + $0x2b8] sm:$0xff] %v3246
                %v3248 = vld [vmem:[%s3186 + $0xf0] sm:$0xff]
                %3249 = vst [vmem:[%s3187 + $0x2d0] sm:$0xff] %v3248
                %v3250 = vld [vmem:[%s3186 + $0xf8] sm:$0xff]
                %3251 = vst [vmem:[%s3187 + $0x2e8] sm:$0xff] %v3250
              $region57: #{dense_block_forward.5} parent=51 // loop_footer
                %s3185 = sadd.s32 1, %s3181
              $region58: #{dense_block_forward.5} parent=51 // loop_footer_branch
                %3180 = sbr.rel target = $region54
              $region59: #{dense_block_forward.5} parent=51 // loop_exit
                _
            $region52: #{dense_block_forward.5} parent=43 // pred_fallthru
              _
          $region44: #{dense_block_forward.5} parent=39 // pred_fallthru
            _
          %3328 = vnop
        $region40: #{dense_block_forward.5} parent=35 // pred_fallthru
          _
      $region36: #{dense_block_forward.5} parent=5 // pred_fallthru
        _
      %p3329 = scmp.le.s32.totalorder 2, %s11
      // Predicated region
      $region75: #{dense_block_forward.5} parent=5 // pred_check
        %p3330 = pneg %p3329
      $region76: #{dense_block_forward.5} parent=5 // pred_check_branch
        %3332 = sbr.rel (%p3330) target = $region78
      $region77: #{dense_block_forward.5} parent=5 // pred_region
        %s3333 = ssub.s32 %s11, 2
        // Predicated region
        $region79: #{dense_block_forward.5} parent=77 // pred_check
          %p3334 = pneg %p129
        $region80: #{dense_block_forward.5} parent=77 // pred_check_branch
          %3336 = sbr.rel (%p3334) target = $region82
        $region81: #{dense_block_forward.5} parent=77 // pred_region
          %s3337 = sand.u32 %s114, 1
          %s3338 = sand.u32 %s114, 1
          %s3339 = smul.addr %s3338, 256
          %s3340 = scalar_lea.vmem [#allocation3], %s3339
        $region82: #{dense_block_forward.5} parent=77 // pred_fallthru
          _
      $region78: #{dense_block_forward.5} parent=5 // pred_fallthru
        _
    $region6: #{dense_block_forward.5} parent=1 // loop_footer
      %s15 = sadd.s32 1, %s11
    $region7: #{dense_block_forward.5} parent=1 // loop_footer_branch
      %10 = sbr.rel target = $region3
    $region8: #{dense_block_forward.5} parent=1 // loop_exit
      _

// kernel: dense_block_forward.7
$region0: #{dense_block_forward.7}
  #allocation0 [shape = 'u32[]', space=smem, size = 0x4, offset = 0x4, fixed_abs, tag = 'smem constant byte address 0x4 - core index']
  #allocation1 [shape = 'u32[144,128]{1,0:T(1,128)}', space=vmem, size = 0x12000, scoped, tag = 'internal scratch']
  #allocation2 [shape = 'f32[18,32,128]{2,1,0:T(8,128)}', space=vmem, size = 0x48000, scoped, tag = 'scratch operand']
  %s0 = inlined_call_operand.vmem [shape: f32[2,16,16,128], index: 0, kind: input, shape index: {}]
  %s1 = inlined_call_operand.vmem [shape: f32[1,128], index: 1, kind: input, shape index: {}]
  %s2 = inlined_call_operand.vmem [shape: f32[1,128], index: 2, kind: input, shape index: {}]
  %s3 = inlined_call_operand.vmem [shape: f32[9,128,128], index: 3, kind: input, shape index: {}]
  %s4 = inlined_call_operand.vmem [shape: f32[2,16,16,384], index: 4, kind: input, shape index: {}, may-alias: {4,5}]
  %s5 = inlined_call_operand.vmem [shape: f32[2,16,16,384], index: 5, kind: output, shape index: {}, may-alias: {4,5}]
  %s6 = sld [smem:[#allocation0]]
  $region83: #{dense_block_forward.7} parent=0
    _
  %s8 = ssub.s32 1, %s6
  %s9 = scalar_select 0, %s8, %s6
  $region1: #{dense_block_forward.7} parent=0
    #allocation3 [shape = 'u8[262144]{0}', space=vmem, size = 0x40000, scoped, tag = 'output window, operand 0']
    loop: start=0, step=1, limit=4
    $region2: #{dense_block_forward.7} parent=1 // loop_pre_header
      _
    $region3: #{dense_block_forward.7} parent=1 // loop_header
      %s11 = sphi 0, %s15
      %p12 = scmp.ge.s32.totalorder %s11, 4
      %s21 = sphi 0, %s23
      %s24 = sphi 0, %s21
      %s25 = sphi 0, %s24
      %s41 = sphi 0, %s25
      %s45 = sphi 0, %s45
      %s47 = sphi 0, %s45
      %s48 = sphi 0, %s47
      %s62 = sphi 0, %s48
      %s66 = sphi 0, %s66
      %s68 = sphi 0, %s66
      %s69 = sphi 0, %s68
      %s83 = sphi 0, %s69
      %s87 = sphi 0, %s87
      %s89 = sphi 0, %s87
      %s90 = sphi 0, %s89
      %s104 = sphi 0, %s90
      %s110 = sphi 0, %s112
      %s113 = sphi 0, %s110
      %s114 = sphi 0, %s113
      %s130 = sphi 0, %s114
    $region4: #{dense_block_forward.7} parent=1 // loop_header_branch
      %14 = sbr.rel (%p12) target = $region8
    $region5: #{dense_block_forward.7} parent=1 // loop_body
      %s16 = ssub.s32 %s11, 1
      %s17 = ssub.s32 %s11, 2
      %s18 = sadd.s32 %s11, 1
      %s19 = ssub.s32 %s11, %s18
      %p20 = scmp.eq.s32.totalorder %s19, 0
      %s22 = sadd.s32 %s21, 1
      %s23 = scalar_select %p20, %s21, %s22
      %p26 = pneg %p20
      %p27 = scmp.eq.s32.totalorder %s11, 1
      %p28 = por %p26, %p27
      %p29 = scmp.ne.s32.totalorder %s21, %s24
      %p30 = scmp.eq.s32.totalorder %s11, 0
      %p31 = por %p29, %p30
      %p32 = scmp.ne.s32.totalorder %s21, %s24
      %p33 = scmp.eq.s32.totalorder %s16, 1
      %p34 = por %p32, %p33
      %p35 = scmp.ne.s32.totalorder %s24, %s25
      %p36 = scmp.eq.s32.totalorder %s16, 0
      %p37 = por %p35, %p36
      %p38 = scmp.ne.s32.totalorder %s24, %s25
      %p39 = scmp.eq.s32.totalorder %s17, 1
      %p40 = por %p38, %p39
      %p42 = scmp.ne.s32.totalorder %s25, %s41
      %p43 = scmp.eq.s32.totalorder %s17, 0
      %p44 = por %p42, %p43
      %s46 = sadd.s32 %s45, 1
      %p49 = scmp.eq.s32.totalorder %s11, 1
      %p50 = scmp.ne.s32.totalorder %s45, %s47
      %p51 = scmp.eq.s32.totalorder %s11, 0
      %p52 = por %p50, %p51
      %p53 = scmp.ne.s32.totalorder %s45, %s47
      %p54 = scmp.eq.s32.totalorder %s16, 1
      %p55 = por %p53, %p54
      %p56 = scmp.ne.s32.totalorder %s47, %s48
      %p57 = scmp.eq.s32.totalorder %s16, 0
      %p58 = por %p56, %p57
      %p59 = scmp.ne.s32.totalorder %s47, %s48
      %p60 = scmp.eq.s32.totalorder %s17, 1
      %p61 = por %p59, %p60
      %p63 = scmp.ne.s32.totalorder %s48, %s62
      %p64 = scmp.eq.s32.totalorder %s17, 0
      %p65 = por %p63, %p64
      %s67 = sadd.s32 %s66, 1
      %p70 = scmp.eq.s32.totalorder %s11, 1
      %p71 = scmp.ne.s32.totalorder %s66, %s68
      %p72 = scmp.eq.s32.totalorder %s11, 0
      %p73 = por %p71, %p72
      %p74 = scmp.ne.s32.totalorder %s66, %s68
      %p75 = scmp.eq.s32.totalorder %s16, 1
      %p76 = por %p74, %p75
      %p77 = scmp.ne.s32.totalorder %s68, %s69
      %p78 = scmp.eq.s32.totalorder %s16, 0
      %p79 = por %p77, %p78
      %p80 = scmp.ne.s32.totalorder %s68, %s69
      %p81 = scmp.eq.s32.totalorder %s17, 1
      %p82 = por %p80, %p81
      %p84 = scmp.ne.s32.totalorder %s69, %s83
      %p85 = scmp.eq.s32.totalorder %s17, 0
      %p86 = por %p84, %p85
      %s88 = sadd.s32 %s87, 1
      %p91 = scmp.eq.s32.totalorder %s11, 1
      %p92 = scmp.ne.s32.totalorder %s87, %s89
      %p93 = scmp.eq.s32.totalorder %s11, 0
      %p94 = por %p92, %p93
      %p95 = scmp.ne.s32.totalorder %s87, %s89
      %p96 = scmp.eq.s32.totalorder %s16, 1
      %p97 = por %p95, %p96
      %p98 = scmp.ne.s32.totalorder %s89, %s90
      %p99 = scmp.eq.s32.totalorder %s16, 0
      %p100 = por %p98, %p99
      %p101 = scmp.ne.s32.totalorder %s89, %s90
      %p102 = scmp.eq.s32.totalorder %s17, 1
      %p103 = por %p101, %p102
      %p105 = scmp.ne.s32.totalorder %s90, %s104
      %p106 = scmp.eq.s32.totalorder %s17, 0
      %p107 = por %p105, %p106
      %s108 = ssub.s32 %s11, %s18
      %p109 = scmp.eq.s32.totalorder %s108, 0
      %s111 = sadd.s32 %s110, 1
      %s112 = scalar_select %p109, %s110, %s111
      %p115 = pneg %p109
      %p116 = scmp.eq.s32.totalorder %s11, 1
      %p117 = por %p115, %p116
      %p118 = scmp.ne.s32.totalorder %s110, %s113
      %p119 = scmp.eq.s32.totalorder %s11, 0
      %p120 = por %p118, %p119
      %p121 = scmp.ne.s32.totalorder %s110, %s113
      %p122 = scmp.eq.s32.totalorder %s16, 1
      %p123 = por %p121, %p122
      %p124 = scmp.ne.s32.totalorder %s113, %s114
      %p125 = scmp.eq.s32.totalorder %s16, 0
      %p126 = por %p124, %p125
      %p127 = scmp.ne.s32.totalorder %s113, %s114
      %p128 = scmp.eq.s32.totalorder %s17, 1
      %p129 = por %p127, %p128
      %p131 = scmp.ne.s32.totalorder %s114, %s130
      %p132 = scmp.eq.s32.totalorder %s17, 0
      %p133 = por %p131, %p132
      %p134 = scmp.le.s32.totalorder 1, %s11
      %p135 = scmp.lt.s32.totalorder %s11, 3
      %p136 = pnand %p134, %p135
      %p137 = pneg %p136
      // Predicated region
      $region9: #{dense_block_forward.7} parent=5 // pred_check
        _
      $region10: #{dense_block_forward.7} parent=5 // pred_check_branch
        %139 = sbr.rel (%p136) target = $region12
      $region11: #{dense_block_forward.7} parent=5 // pred_region
        %s140 = ssub.s32 %s11, 1
        // Predicated region
        $region13: #{dense_block_forward.7} parent=11 // pred_check
          %p141 = pneg %p58
        $region14: #{dense_block_forward.7} parent=11 // pred_check_branch
          %143 = sbr.rel (%p141) target = $region16
        $region15: #{dense_block_forward.7} parent=11 // pred_region
          _
        $region16: #{dense_block_forward.7} parent=11 // pred_fallthru
          _
        // Predicated region
        $region17: #{dense_block_forward.7} parent=11 // pred_check
          %p144 = pneg %p79
        $region18: #{dense_block_forward.7} parent=11 // pred_check_branch
          %146 = sbr.rel (%p144) target = $region20
        $region19: #{dense_block_forward.7} parent=11 // pred_region
          _
        $region20: #{dense_block_forward.7} parent=11 // pred_fallthru
          _
        // Predicated region
        $region21: #{dense_block_forward.7} parent=11 // pred_check
          %p147 = pneg %p100
        $region22: #{dense_block_forward.7} parent=11 // pred_check_branch
          %149 = sbr.rel (%p147) target = $region24
        $region23: #{dense_block_forward.7} parent=11 // pred_region
          _
        $region24: #{dense_block_forward.7} parent=11 // pred_fallthru
          _
      $region12: #{dense_block_forward.7} parent=5 // pred_fallthru
        _
      %p150 = scmp.lt.s32.totalorder %s11, 2
      // Predicated region
      $region25: #{dense_block_forward.7} parent=5 // pred_check
        %p151 = pneg %p150
      $region26: #{dense_block_forward.7} parent=5 // pred_check_branch
        %153 = sbr.rel (%p151) target = $region28
      $region27: #{dense_block_forward.7} parent=5 // pred_region
        // Predicated region
        $region29: #{dense_block_forward.7} parent=27 // pred_check
          %p154 = pneg %p31
        $region30: #{dense_block_forward.7} parent=27 // pred_check_branch
          %156 = sbr.rel (%p154) target = $region32
        $region31: #{dense_block_forward.7} parent=27 // pred_region
          %p157 = scmp.lt.s32.totalorder %s11, 1
          %s158 = scalar_select %p157, %s11, 1
          %s159 = smul.addr %s158, 32
          %s160 = smul.addr %s159, 8
          %s161 = scalar_lea.vmem %s0, %s160
        $region32: #{dense_block_forward.7} parent=27 // pred_fallthru
          _
      $region28: #{dense_block_forward.7} parent=5 // pred_fallthru
        _
      %p162 = scmp.le.s32.totalorder 1, %s11
      %p163 = scmp.lt.s32.totalorder %s11, 3
      %p164 = pnand %p162, %p163
      %p165 = pneg %p164
      // Predicated region
      $region33: #{dense_block_forward.7} parent=5 // pred_check
        _
      $region34: #{dense_block_forward.7} parent=5 // pred_check_branch
        %167 = sbr.rel (%p164) target = $region36
      $region35: #{dense_block_forward.7} parent=5 // pred_region
        %s168 = ssub.s32 %s11, 1
        %p169 = scmp.lt.s32.totalorder %s16, 1
        %s170 = scalar_select %p169, %s16, 1
        %s171 = smul.addr %s170, 32
        %s172 = smul.addr %s171, 8
        %s173 = scalar_lea.vmem %s0, %s172
        %p174 = pneg %p37
        %p175 = pneg %p34
        %p176 = pneg %p58
        %p177 = pneg %p55
        %p178 = pneg %p79
        %p179 = pneg %p76
        %p180 = pneg %p100
        %p181 = pneg %p97
        %p182 = pneg %p126
        %p183 = pneg %p123
        %s184 = sand.u32 %s113, 1
        %s185 = sand.u32 %s113, 1
        %s186 = smul.addr %s185, 256
        %s187 = scalar_lea.vmem [#allocation3], %s186
        %p188 = scmp.lt.s32.totalorder %s16, 1
        %s189 = scalar_select %p188, %s16, 1
        %s190 = smul.addr %s189, 32
        %s191 = smul.addr %s190, 8
        %s192 = scalar_lea.vmem %s0, %s191
        %193 = vst [vmem:[#allocation2] sm:$0xff] 0.0
        %194 = vst [vmem:[#allocation2 + $0x8] sm:$0xff] 0.0
        %195 = vst [vmem:[#allocation2 + $0x10] sm:$0xff] 0.0
        %196 = vst [vmem:[#allocation2 + $0x18] sm:$0xff] 0.0
        %197 = vst [vmem:[#allocation2 + $0x20] sm:$0xff] 0.0
        %198 = vst [vmem:[#allocation2 + $0x28] sm:$0xff] 0.0
        %199 = vst [vmem:[#allocation2 + $0x30] sm:$0xff] 0.0
        %200 = vst [vmem:[#allocation2 + $0x38] sm:$0xff] 0.0
        %201 = vst [vmem:[#allocation2 + $0x40] sm:$0xff] 0.0
        %202 = vst [vmem:[#allocation2 + $0x48] sm:$0xff] 0.0
        %203 = vst [vmem:[#allocation2 + $0x50] sm:$0xff] 0.0
        %204 = vst [vmem:[#allocation2 + $0x58] sm:$0xff] 0.0
        %205 = vst [vmem:[#allocation2 + $0x60] sm:$0xff] 0.0
        %206 = vst [vmem:[#allocation2 + $0x68] sm:$0xff] 0.0
        %207 = vst [vmem:[#allocation2 + $0x70] sm:$0xff] 0.0
        %208 = vst [vmem:[#allocation2 + $0x78] sm:$0xff] 0.0
        %209 = vst [vmem:[#allocation2 + $0x80] sm:$0xff] 0.0
        %210 = vst [vmem:[#allocation2 + $0x88] sm:$0xff] 0.0
        %211 = vst [vmem:[#allocation2 + $0x90] sm:$0xff] 0.0
        %212 = vst [vmem:[#allocation2 + $0x98] sm:$0xff] 0.0
        %213 = vst [vmem:[#allocation2 + $0xa0] sm:$0xff] 0.0
        %214 = vst [vmem:[#allocation2 + $0xa8] sm:$0xff] 0.0
        %215 = vst [vmem:[#allocation2 + $0xb0] sm:$0xff] 0.0
        %216 = vst [vmem:[#allocation2 + $0xb8] sm:$0xff] 0.0
        %217 = vst [vmem:[#allocation2 + $0xc0] sm:$0xff] 0.0
        %218 = vst [vmem:[#allocation2 + $0xc8] sm:$0xff] 0.0
        %219 = vst [vmem:[#allocation2 + $0xd0] sm:$0xff] 0.0
        %220 = vst [vmem:[#allocation2 + $0xd8] sm:$0xff] 0.0
        %221 = vst [vmem:[#allocation2 + $0xe0] sm:$0xff] 0.0
        %222 = vst [vmem:[#allocation2 + $0xe8] sm:$0xff] 0.0
        %223 = vst [vmem:[#allocation2 + $0xf0] sm:$0xff] 0.0
        %224 = vst [vmem:[#allocation2 + $0xf8] sm:$0xff] 0.0
        %225 = vst [vmem:[#allocation2 + $0x100] sm:$0xff] 0.0
        %226 = vst [vmem:[#allocation2 + $0x108] sm:$0xff] 0.0
        %227 = vst [vmem:[#allocation2 + $0x110] sm:$0xff] 0.0
        %228 = vst [vmem:[#allocation2 + $0x118] sm:$0xff] 0.0
        %229 = vst [vmem:[#allocation2 + $0x120] sm:$0xff] 0.0
        %230 = vst [vmem:[#allocation2 + $0x128] sm:$0xff] 0.0
        %231 = vst [vmem:[#allocation2 + $0x130] sm:$0xff] 0.0
        %232 = vst [vmem:[#allocation2 + $0x138] sm:$0xff] 0.0
        %233 = vst [vmem:[#allocation2 + $0x140] sm:$0xff] 0.0
        %234 = vst [vmem:[#allocation2 + $0x148] sm:$0xff] 0.0
        %235 = vst [vmem:[#allocation2 + $0x150] sm:$0xff] 0.0
        %236 = vst [vmem:[#allocation2 + $0x158] sm:$0xff] 0.0
        %237 = vst [vmem:[#allocation2 + $0x160] sm:$0xff] 0.0
        %238 = vst [vmem:[#allocation2 + $0x168] sm:$0xff] 0.0
        %239 = vst [vmem:[#allocation2 + $0x170] sm:$0xff] 0.0
        %240 = vst [vmem:[#allocation2 + $0x178] sm:$0xff] 0.0
        %241 = vst [vmem:[#allocation2 + $0x180] sm:$0xff] 0.0
        %242 = vst [vmem:[#allocation2 + $0x188] sm:$0xff] 0.0
        %243 = vst [vmem:[#allocation2 + $0x190] sm:$0xff] 0.0
        %244 = vst [vmem:[#allocation2 + $0x198] sm:$0xff] 0.0
        %245 = vst [vmem:[#allocation2 + $0x1a0] sm:$0xff] 0.0
        %246 = vst [vmem:[#allocation2 + $0x1a8] sm:$0xff] 0.0
        %247 = vst [vmem:[#allocation2 + $0x1b0] sm:$0xff] 0.0
        %248 = vst [vmem:[#allocation2 + $0x1b8] sm:$0xff] 0.0
        %249 = vst [vmem:[#allocation2 + $0x1c0] sm:$0xff] 0.0
        %250 = vst [vmem:[#allocation2 + $0x1c8] sm:$0xff] 0.0
        %251 = vst [vmem:[#allocation2 + $0x1d0] sm:$0xff] 0.0
        %252 = vst [vmem:[#allocation2 + $0x1d8] sm:$0xff] 0.0
        %253 = vst [vmem:[#allocation2 + $0x1e0] sm:$0xff] 0.0
        %254 = vst [vmem:[#allocation2 + $0x1e8] sm:$0xff] 0.0
        %255 = vst [vmem:[#allocation2 + $0x1f0] sm:$0xff] 0.0
        %256 = vst [vmem:[#allocation2 + $0x1f8] sm:$0xff] 0.0
        %257 = vst [vmem:[#allocation2 + $0x200] sm:$0xff] 0.0
        %258 = vst [vmem:[#allocation2 + $0x208] sm:$0xff] 0.0
        %259 = vst [vmem:[#allocation2 + $0x210] sm:$0xff] 0.0
        %260 = vst [vmem:[#allocation2 + $0x218] sm:$0xff] 0.0
        %261 = vst [vmem:[#allocation2 + $0x220] sm:$0xff] 0.0
        %262 = vst [vmem:[#allocation2 + $0x228] sm:$0xff] 0.0
        %263 = vst [vmem:[#allocation2 + $0x230] sm:$0xff] 0.0
        %264 = vst [vmem:[#allocation2 + $0x238] sm:$0xff] 0.0
        %v265 = vld [vmem:[%s192] sm:$0xff]
        %v266 = vld [vmem:[%s192 + $0x8] sm:$0xff]
        %v267 = vld [vmem:[%s192 + $0x10] sm:$0xff]
        %v268 = vld [vmem:[%s192 + $0x18] sm:$0xff]
        %v269 = vld [vmem:[%s192 + $0x20] sm:$0xff]
        %v270 = vld [vmem:[%s192 + $0x28] sm:$0xff]
        %v271 = vld [vmem:[%s192 + $0x30] sm:$0xff]
        %v272 = vld [vmem:[%s192 + $0x38] sm:$0xff]
        %v273 = vld [vmem:[%s192 + $0x40] sm:$0xff]
        %v274 = vld [vmem:[%s192 + $0x48] sm:$0xff]
        %v275 = vld [vmem:[%s192 + $0x50] sm:$0xff]
        %v276 = vld [vmem:[%s192 + $0x58] sm:$0xff]
        %v277 = vld [vmem:[%s192 + $0x60] sm:$0xff]
        %v278 = vld [vmem:[%s192 + $0x68] sm:$0xff]
        %v279 = vld [vmem:[%s192 + $0x70] sm:$0xff]
        %v280 = vld [vmem:[%s192 + $0x78] sm:$0xff]
        %v281 = vld [vmem:[%s192 + $0x80] sm:$0xff]
        %v282 = vld [vmem:[%s192 + $0x88] sm:$0xff]
        %v283 = vld [vmem:[%s192 + $0x90] sm:$0xff]
        %v284 = vld [vmem:[%s192 + $0x98] sm:$0xff]
        %v285 = vld [vmem:[%s192 + $0xa0] sm:$0xff]
        %v286 = vld [vmem:[%s192 + $0xa8] sm:$0xff]
        %v287 = vld [vmem:[%s192 + $0xb0] sm:$0xff]
        %v288 = vld [vmem:[%s192 + $0xb8] sm:$0xff]
        %v289 = vld [vmem:[%s192 + $0xc0] sm:$0xff]
        %v290 = vld [vmem:[%s192 + $0xc8] sm:$0xff]
        %v291 = vld [vmem:[%s192 + $0xd0] sm:$0xff]
        %v292 = vld [vmem:[%s192 + $0xd8] sm:$0xff]
        %v293 = vld [vmem:[%s192 + $0xe0] sm:$0xff]
        %v294 = vld [vmem:[%s192 + $0xe8] sm:$0xff]
        %v295 = vld [vmem:[%s192 + $0xf0] sm:$0xff]
        %v296 = vld [vmem:[%s192 + $0xf8] sm:$0xff]
        %v297 = vld [vmem:[%s1] sm:$0x1]
        %v299 = vlaneseq
        %v300 = vshrl.u32 %v299, 7
        %v301 = vsub.s32 0, %v300
        %v302 = vrot.slane %v297, %v301
        %v304 = vmul.f32 %v265, %v302
        %v305 = vmul.f32 %v266, %v302
        %v306 = vmul.f32 %v267, %v302
        %v307 = vmul.f32 %v268, %v302
        %v308 = vmul.f32 %v269, %v302
        %v309 = vmul.f32 %v270, %v302
        %v310 = vmul.f32 %v271, %v302
        %v311 = vmul.f32 %v272, %v302
        %v312 = vmul.f32 %v273, %v302
        %v313 = vmul.f32 %v274, %v302
        %v314 = vmul.f32 %v275, %v302
        %v315 = vmul.f32 %v276, %v302
        %v316 = vmul.f32 %v277, %v302
        %v317 = vmul.f32 %v278, %v302
        %v318 = vmul.f32 %v279, %v302
        %v319 = vmul.f32 %v280, %v302
        %v320 = vmul.f32 %v281, %v302
        %v321 = vmul.f32 %v282, %v302
        %v322 = vmul.f32 %v283, %v302
        %v323 = vmul.f32 %v284, %v302
        %v324 = vmul.f32 %v285, %v302
        %v325 = vmul.f32 %v286, %v302
        %v326 = vmul.f32 %v287, %v302
        %v327 = vmul.f32 %v288, %v302
        %v328 = vmul.f32 %v289, %v302
        %v329 = vmul.f32 %v290, %v302
        %v330 = vmul.f32 %v291, %v302
        %v331 = vmul.f32 %v292, %v302
        %v332 = vmul.f32 %v293, %v302
        %v333 = vmul.f32 %v294, %v302
        %v334 = vmul.f32 %v295, %v302
        %v335 = vmul.f32 %v296, %v302
        %v336 = vld [vmem:[%s2] sm:$0x1]
        %v338 = vlaneseq
        %v339 = vshrl.u32 %v338, 7
        %v340 = vsub.s32 0, %v339
        %v341 = vrot.slane %v336, %v340
        %v343 = vadd.f32 %v304, %v341
        %v344 = vadd.f32 %v305, %v341
        %v345 = vadd.f32 %v306, %v341
        %v346 = vadd.f32 %v307, %v341
        %v347 = vadd.f32 %v308, %v341
        %v348 = vadd.f32 %v309, %v341
        %v349 = vadd.f32 %v310, %v341
        %v350 = vadd.f32 %v311, %v341
        %v351 = vadd.f32 %v312, %v341
        %v352 = vadd.f32 %v313, %v341
        %v353 = vadd.f32 %v314, %v341
        %v354 = vadd.f32 %v315, %v341
        %v355 = vadd.f32 %v316, %v341
        %v356 = vadd.f32 %v317, %v341
        %v357 = vadd.f32 %v318, %v341
        %v358 = vadd.f32 %v319, %v341
        %v359 = vadd.f32 %v320, %v341
        %v360 = vadd.f32 %v321, %v341
        %v361 = vadd.f32 %v322, %v341
        %v362 = vadd.f32 %v323, %v341
        %v363 = vadd.f32 %v324, %v341
        %v364 = vadd.f32 %v325, %v341
        %v365 = vadd.f32 %v326, %v341
        %v366 = vadd.f32 %v327, %v341
        %v367 = vadd.f32 %v328, %v341
        %v368 = vadd.f32 %v329, %v341
        %v369 = vadd.f32 %v330, %v341
        %v370 = vadd.f32 %v331, %v341
        %v371 = vadd.f32 %v332, %v341
        %v372 = vadd.f32 %v333, %v341
        %v373 = vadd.f32 %v334, %v341
        %v374 = vadd.f32 %v335, %v341
        %v375 = vmax.f32 %v343, 0.0
        %v376 = vmax.f32 %v344, 0.0
        %v377 = vmax.f32 %v345, 0.0
        %v378 = vmax.f32 %v346, 0.0
        %v379 = vmax.f32 %v347, 0.0
        %v380 = vmax.f32 %v348, 0.0
        %v381 = vmax.f32 %v349, 0.0
        %v382 = vmax.f32 %v350, 0.0
        %v383 = vmax.f32 %v351, 0.0
        %v384 = vmax.f32 %v352, 0.0
        %v385 = vmax.f32 %v353, 0.0
        %v386 = vmax.f32 %v354, 0.0
        %v387 = vmax.f32 %v355, 0.0
        %v388 = vmax.f32 %v356, 0.0
        %v389 = vmax.f32 %v357, 0.0
        %v390 = vmax.f32 %v358, 0.0
        %v391 = vmax.f32 %v359, 0.0
        %v392 = vmax.f32 %v360, 0.0
        %v393 = vmax.f32 %v361, 0.0
        %v394 = vmax.f32 %v362, 0.0
        %v395 = vmax.f32 %v363, 0.0
        %v396 = vmax.f32 %v364, 0.0
        %v397 = vmax.f32 %v365, 0.0
        %v398 = vmax.f32 %v366, 0.0
        %v399 = vmax.f32 %v367, 0.0
        %v400 = vmax.f32 %v368, 0.0
        %v401 = vmax.f32 %v369, 0.0
        %v402 = vmax.f32 %v370, 0.0
        %v403 = vmax.f32 %v371, 0.0
        %v404 = vmax.f32 %v372, 0.0
        %v405 = vmax.f32 %v373, 0.0
        %v406 = vmax.f32 %v374, 0.0
        %s407 = scalar_lea.vmem [#allocation2], 32
        %408 = vst [vmem:[%s407 + $0x8] sm:$0xff] %v375
        %409 = vst [vmem:[%s407 + $0x10] sm:$0xff] %v376
        %410 = vst [vmem:[%s407 + $0x28] sm:$0xff] %v377
        %411 = vst [vmem:[%s407 + $0x30] sm:$0xff] %v378
        %412 = vst [vmem:[%s407 + $0x48] sm:$0xff] %v379
        %413 = vst [vmem:[%s407 + $0x50] sm:$0xff] %v380
        %414 = vst [vmem:[%s407 + $0x68] sm:$0xff] %v381
        %415 = vst [vmem:[%s407 + $0x70] sm:$0xff] %v382
        %416 = vst [vmem:[%s407 + $0x88] sm:$0xff] %v383
        %417 = vst [vmem:[%s407 + $0x90] sm:$0xff] %v384
        %418 = vst [vmem:[%s407 + $0xa8] sm:$0xff] %v385
        %419 = vst [vmem:[%s407 + $0xb0] sm:$0xff] %v386
        %420 = vst [vmem:[%s407 + $0xc8] sm:$0xff] %v387
        %421 = vst [vmem:[%s407 + $0xd0] sm:$0xff] %v388
        %422 = vst [vmem:[%s407 + $0xe8] sm:$0xff] %v389
        %423 = vst [vmem:[%s407 + $0xf0] sm:$0xff] %v390
        %424 = vst [vmem:[%s407 + $0x108] sm:$0xff] %v391
        %425 = vst [vmem:[%s407 + $0x110] sm:$0xff] %v392
        %426 = vst [vmem:[%s407 + $0x128] sm:$0xff] %v393
        %427 = vst [vmem:[%s407 + $0x130] sm:$0xff] %v394
        %428 = vst [vmem:[%s407 + $0x148] sm:$0xff] %v395
        %429 = vst [vmem:[%s407 + $0x150] sm:$0xff] %v396
        %430 = vst [vmem:[%s407 + $0x168] sm:$0xff] %v397
        %431 = vst [vmem:[%s407 + $0x170] sm:$0xff] %v398
        %432 = vst [vmem:[%s407 + $0x188] sm:$0xff] %v399
        %433 = vst [vmem:[%s407 + $0x190] sm:$0xff] %v400
        %434 = vst [vmem:[%s407 + $0x1a8] sm:$0xff] %v401
        %435 = vst [vmem:[%s407 + $0x1b0] sm:$0xff] %v402
        %436 = vst [vmem:[%s407 + $0x1c8] sm:$0xff] %v403
        %437 = vst [vmem:[%s407 + $0x1d0] sm:$0xff] %v404
        %438 = vst [vmem:[%s407 + $0x1e8] sm:$0xff] %v405
        %439 = vst [vmem:[%s407 + $0x1f0] sm:$0xff] %v406
        %v440 = vld [vmem:[#allocation2 + $0x7] sm:$0xff]
        %v441 = vld [vmem:[#allocation2 + $0xf] sm:$0xff]
        %v442 = vld [vmem:[#allocation2 + $0x27] sm:$0xff]
        %v443 = vld [vmem:[#allocation2 + $0x2f] sm:$0xff]
        %v444 = vld [vmem:[#allocation2 + $0x47] sm:$0xff]
        %v445 = vld [vmem:[#allocation2 + $0x4f] sm:$0xff]
        %v446 = vld [vmem:[#allocation2 + $0x67] sm:$0xff]
        %v447 = vld [vmem:[#allocation2 + $0x6f] sm:$0xff]
        %v448 = vld [vmem:[#allocation2 + $0x87] sm:$0xff]
        %v449 = vld [vmem:[#allocation2 + $0x8f] sm:$0xff]
        %v450 = vld [vmem:[#allocation2 + $0xa7] sm:$0xff]
        %v451 = vld [vmem:[#allocation2 + $0xaf] sm:$0xff]
        %v452 = vld [vmem:[#allocation2 + $0xc7] sm:$0xff]
        %v453 = vld [vmem:[#allocation2 + $0xcf] sm:$0xff]
        %v454 = vld [vmem:[#allocation2 + $0xe7] sm:$0xff]
        %v455 = vld [vmem:[#allocation2 + $0xef] sm:$0xff]
        %v456 = vld [vmem:[#allocation2 + $0x107] sm:$0xff]
        %v457 = vld [vmem:[#allocation2 + $0x10f] sm:$0xff]
        %v458 = vld [vmem:[#allocation2 + $0x127] sm:$0xff]
        %v459 = vld [vmem:[#allocation2 + $0x12f] sm:$0xff]
        %v460 = vld [vmem:[#allocation2 + $0x147] sm:$0xff]
        %v461 = vld [vmem:[#allocation2 + $0x14f] sm:$0xff]
        %v462 = vld [vmem:[#allocation2 + $0x167] sm:$0xff]
        %v463 = vld [vmem:[#allocation2 + $0x16f] sm:$0xff]
        %v464 = vld [vmem:[#allocation2 + $0x187] sm:$0xff]
        %v465 = vld [vmem:[#allocation2 + $0x18f] sm:$0xff]
        %v466 = vld [vmem:[#allocation2 + $0x1a7] sm:$0xff]
        %v467 = vld [vmem:[#allocation2 + $0x1af] sm:$0xff]
        %v468 = vld [vmem:[#allocation2 + $0x1c7] sm:$0xff]
        %v469 = vld [vmem:[#allocation2 + $0x1cf] sm:$0xff]
        %v470 = vld [vmem:[#allocation2 + $0x1e7] sm:$0xff]
        %v471 = vld [vmem:[#allocation2 + $0x1ef] sm:$0xff]
        %v472 = vld [vmem:[%s3] sm:$0xff]
        %v473 = vld [vmem:[%s3 + $0x8] sm:$0xff]
        %v474 = vld [vmem:[%s3 + $0x10] sm:$0xff]
        %v475 = vld [vmem:[%s3 + $0x18] sm:$0xff]
        %v476 = vld [vmem:[%s3 + $0x20] sm:$0xff]
        %v477 = vld [vmem:[%s3 + $0x28] sm:$0xff]
        %v478 = vld [vmem:[%s3 + $0x30] sm:$0xff]
        %v479 = vld [vmem:[%s3 + $0x38] sm:$0xff]
        %v480 = vld [vmem:[%s3 + $0x40] sm:$0xff]
        %v481 = vld [vmem:[%s3 + $0x48] sm:$0xff]
        %v482 = vld [vmem:[%s3 + $0x50] sm:$0xff]
        %v483 = vld [vmem:[%s3 + $0x58] sm:$0xff]
        %v484 = vld [vmem:[%s3 + $0x60] sm:$0xff]
        %v485 = vld [vmem:[%s3 + $0x68] sm:$0xff]
        %v486 = vld [vmem:[%s3 + $0x70] sm:$0xff]
        %v487 = vld [vmem:[%s3 + $0x78] sm:$0xff]
        %v488 = vld [vmem:[#allocation2 + $0x8] sm:$0xff]
        %v489 = vld [vmem:[#allocation2 + $0x10] sm:$0xff]
        %v490 = vld [vmem:[#allocation2 + $0x28] sm:$0xff]
        %v491 = vld [vmem:[#allocation2 + $0x30] sm:$0xff]
        %v492 = vld [vmem:[#allocation2 + $0x48] sm:$0xff]
        %v493 = vld [vmem:[#allocation2 + $0x50] sm:$0xff]
        %v494 = vld [vmem:[#allocation2 + $0x68] sm:$0xff]
        %v495 = vld [vmem:[#allocation2 + $0x70] sm:$0xff]
        %v496 = vld [vmem:[#allocation2 + $0x88] sm:$0xff]
        %v497 = vld [vmem:[#allocation2 + $0x90] sm:$0xff]
        %v498 = vld [vmem:[#allocation2 + $0xa8] sm:$0xff]
        %v499 = vld [vmem:[#allocation2 + $0xb0] sm:$0xff]
        %v500 = vld [vmem:[#allocation2 + $0xc8] sm:$0xff]
        %v501 = vld [vmem:[#allocation2 + $0xd0] sm:$0xff]
        %v502 = vld [vmem:[#allocation2 + $0xe8] sm:$0xff]
        %v503 = vld [vmem:[#allocation2 + $0xf0] sm:$0xff]
        %v504 = vld [vmem:[#allocation2 + $0x108] sm:$0xff]
        %v505 = vld [vmem:[#allocation2 + $0x110] sm:$0xff]
        %v506 = vld [vmem:[#allocation2 + $0x128] sm:$0xff]
        %v507 = vld [vmem:[#allocation2 + $0x130] sm:$0xff]
        %v508 = vld [vmem:[#allocation2 + $0x148] sm:$0xff]
        %v509 = vld [vmem:[#allocation2 + $0x150] sm:$0xff]
        %v510 = vld [vmem:[#allocation2 + $0x168] sm:$0xff]
        %v511 = vld [vmem:[#allocation2 + $0x170] sm:$0xff]
        %v512 = vld [vmem:[#allocation2 + $0x188] sm:$0xff]
        %v513 = vld [vmem:[#allocation2 + $0x190] sm:$0xff]
        %v514 = vld [vmem:[#allocation2 + $0x1a8] sm:$0xff]
        %v515 = vld [vmem:[#allocation2 + $0x1b0] sm:$0xff]
        %v516 = vld [vmem:[#allocation2 + $0x1c8] sm:$0xff]
        %v517 = vld [vmem:[#allocation2 + $0x1d0] sm:$0xff]
        %v518 = vld [vmem:[#allocation2 + $0x1e8] sm:$0xff]
        %v519 = vld [vmem:[#allocation2 + $0x1f0] sm:$0xff]
        %s520 = scalar_lea.vmem %s3, 128
        %v521 = vld [vmem:[%s520] sm:$0xff]
        %v522 = vld [vmem:[%s520 + $0x8] sm:$0xff]
        %v523 = vld [vmem:[%s520 + $0x10] sm:$0xff]
        %v524 = vld [vmem:[%s520 + $0x18] sm:$0xff]
        %v525 = vld [vmem:[%s520 + $0x20] sm:$0xff]
        %v526 = vld [vmem:[%s520 + $0x28] sm:$0xff]
        %v527 = vld [vmem:[%s520 + $0x30] sm:$0xff]
        %v528 = vld [vmem:[%s520 + $0x38] sm:$0xff]
        %v529 = vld [vmem:[%s520 + $0x40] sm:$0xff]
        %v530 = vld [vmem:[%s520 + $0x48] sm:$0xff]
        %v531 = vld [vmem:[%s520 + $0x50] sm:$0xff]
        %v532 = vld [vmem:[%s520 + $0x58] sm:$0xff]
        %v533 = vld [vmem:[%s520 + $0x60] sm:$0xff]
        %v534 = vld [vmem:[%s520 + $0x68] sm:$0xff]
        %v535 = vld [vmem:[%s520 + $0x70] sm:$0xff]
        %v536 = vld [vmem:[%s520 + $0x78] sm:$0xff]
        %537 = vmatprep.subr.mxu0 0.0
        %538 = vmatpush1.msra.mxu0 %v521
        %539 = vmatprep.subr.mxu0 0.0
        %540 = vmatpush1.msra.mxu0 %v522
        %541 = vmatprep.subr.mxu0 0.0
        %542 = vmatpush1.msra.mxu0 %v523
        %543 = vmatprep.subr.mxu0 0.0
        %544 = vmatpush1.msra.mxu0 %v524
        %545 = vmatprep.subr.mxu0 0.0
        %546 = vmatpush1.msra.mxu0 %v525
        %547 = vmatprep.subr.mxu0 0.0
        %548 = vmatpush1.msra.mxu0 %v526
        %549 = vmatprep.subr.mxu0 0.0
        %550 = vmatpush1.msra.mxu0 %v527
        %551 = vmatprep.subr.mxu0 0.0
        %552 = vmatpush1.msra.mxu0 %v528
        %553 = vmatprep.subr.mxu0 0.0
        %554 = vmatpush1.msra.mxu0 %v529
        %555 = vmatprep.subr.mxu0 0.0
        %556 = vmatpush1.msra.mxu0 %v530
        %557 = vmatprep.subr.mxu0 0.0
        %558 = vmatpush1.msra.mxu0 %v531
        %559 = vmatprep.subr.mxu0 0.0
        %560 = vmatpush1.msra.mxu0 %v532
        %561 = vmatprep.subr.mxu0 0.0
        %562 = vmatpush1.msra.mxu0 %v533
        %563 = vmatprep.subr.mxu0 0.0
        %564 = vmatpush1.msra.mxu0 %v534
        %565 = vmatprep.subr.mxu0 0.0
        %566 = vmatpush1.msra.mxu0 %v535
        %567 = vmatprep.subr.mxu0 0.0
        %568 = vmatpush1.msra.mxu0 %v536
        %569 = vmatprep.subr.mxu0 0.0
        %570 = vmatpush1.msra.mxu0 0.0
        %571 = vmatprep.subr.mxu0 0.0
        %572 = vmatpush1.msra.mxu0 0.0
        %573 = vmatprep.subr.mxu0 0.0
        %574 = vmatpush1.msra.mxu0 0.0
        %575 = vmatprep.subr.mxu0 0.0
        %576 = vmatpush1.msra.mxu0 0.0
        %577 = vmatprep.subr.mxu0 0.0
        %578 = vmatpush1.msra.mxu0 0.0
        %579 = vmatprep.subr.mxu0 0.0
        %580 = vmatpush1.msra.mxu0 0.0
        %581 = vmatprep.subr.mxu0 0.0
        %582 = vmatpush1.msra.mxu0 0.0
        %583 = vmatprep.subr.mxu0 0.0
        %584 = vmatpush1.msra.mxu0 0.0
        %585 = vmatprep.subr.mxu0 0.0
        %586 = vmatpush1.msra.mxu0 0.0
        %587 = vmatprep.subr.mxu0 0.0
        %588 = vmatpush1.msra.mxu0 0.0
        %589 = vmatprep.subr.mxu0 0.0
        %590 = vmatpush1.msra.mxu0 0.0
        %591 = vmatprep.subr.mxu0 0.0
        %592 = vmatpush1.msra.mxu0 0.0
        %593 = vmatprep.subr.mxu0 0.0
        %594 = vmatpush1.msra.mxu0 0.0
        %595 = vmatprep.subr.mxu0 0.0
        %596 = vmatpush1.msra.mxu0 0.0
        %597 = vmatprep.subr.mxu0 0.0
        %598 = vmatpush1.msra.mxu0 0.0
        %599 = vmatprep.subr.mxu0 0.0
        %600 = vmatpush1.msra.mxu0 0.0
        %601 = vmatprep.mubr.f32.mxu0 0.0
        %602 = vmatmul.mubr.f32.gmra.mrb[0].mxu0 %v488
        %v603 = vpop.f32.mrb[0].mxu0
        %v604 = vadd.f32 0.0, %v603
        %v605 = vpop.f32.mrb[0].mxu0
        %606 = vmatprep.mubr.f32.mxu0 0.0
        %607 = vmatmul.mubr.f32.gmra.mrb[0].mxu0 %v489
        %v608 = vpop.f32.mrb[0].mxu0
        %v609 = vadd.f32 0.0, %v608
        %v610 = vpop.f32.mrb[0].mxu0
        %611 = vmatprep.mubr.f32.mxu0 0.0
        %612 = vmatmul.mubr.f32.gmra.mrb[0].mxu0 %v490
        %v613 = vpop.f32.mrb[0].mxu0
        %v614 = vadd.f32 0.0, %v613
        %v615 = vpop.f32.mrb[0].mxu0
        %616 = vmatprep.mubr.f32.mxu0 0.0
        %617 = vmatmul.mubr.f32.gmra.mrb[0].mxu0 %v491
        %v618 = vpop.f32.mrb[0].mxu0
        %v619 = vadd.f32 0.0, %v618
        %v620 = vpop.f32.mrb[0].mxu0
        %621 = vmatprep.mubr.f32.mxu0 0.0
        %622 = vmatmul.mubr.f32.gmra.mrb[0].mxu0 %v492
        %v623 = vpop.f32.mrb[0].mxu0
        %v624 = vadd.f32 0.0, %v623
        %v625 = vpop.f32.mrb[0].mxu0
        %626 = vmatprep.mubr.f32.mxu0 0.0
        %627 = vmatmul.mubr.f32.gmra.mrb[0].mxu0 %v493
        %v628 = vpop.f32.mrb[0].mxu0
        %v629 = vadd.f32 0.0, %v628
        %v630 = vpop.f32.mrb[0].mxu0
        %631 = vmatprep.mubr.f32.mxu0 0.0
        %632 = vmatmul.mubr.f32.gmra.mrb[0].mxu0 %v494
        %v633 = vpop.f32.mrb[0].mxu0
        %v634 = vadd.f32 0.0, %v633
        %v635 = vpop.f32.mrb[0].mxu0
        %636 = vmatprep.mubr.f32.mxu0 0.0
        %637 = vmatmul.mubr.f32.gmra.mrb[0].mxu0 %v495
        %v638 = vpop.f32.mrb[0].mxu0
        %v639 = vadd.f32 0.0, %v638
        %v640 = vpop.f32.mrb[0].mxu0
        %641 = vmatprep.mubr.f32.mxu0 0.0
        %642 = vmatmul.mubr.f32.gmra.mrb[0].mxu0 %v496
        %v643 = vpop.f32.mrb[0].mxu0
        %v644 = vadd.f32 0.0, %v643
        %v645 = vpop.f32.mrb[0].mxu0
        %646 = vmatprep.mubr.f32.mxu0 0.0
        %647 = vmatmul.mubr.f32.gmra.mrb[0].mxu0 %v497
        %v648 = vpop.f32.mrb[0].mxu0
        %v649 = vadd.f32 0.0, %v648
        %v650 = vpop.f32.mrb[0].mxu0
        %651 = vmatprep.mubr.f32.mxu0 0.0
        %652 = vmatmul.mubr.f32.gmra.mrb[0].mxu0 %v498
        %v653 = vpop.f32.mrb[0].mxu0
        %v654 = vadd.f32 0.0, %v653
        %v655 = vpop.f32.mrb[0].mxu0
        %656 = vmatprep.mubr.f32.mxu0 0.0
        %657 = vmatmul.mubr.f32.gmra.mrb[0].mxu0 %v499
        %v658 = vpop.f32.mrb[0].mxu0
        %v659 = vadd.f32 0.0, %v658
        %v660 = vpop.f32.mrb[0].mxu0
        %661 = vmatprep.mubr.f32.mxu0 0.0
        %662 = vmatmul.mubr.f32.gmra.mrb[0].mxu0 %v500
        %v663 = vpop.f32.mrb[0].mxu0
        %v664 = vadd.f32 0.0, %v663
        %v665 = vpop.f32.mrb[0].mxu0
        %666 = vmatprep.mubr.f32.mxu0 0.0
        %667 = vmatmul.mubr.f32.gmra.mrb[0].mxu0 %v501
        %v668 = vpop.f32.mrb[0].mxu0
        %v669 = vadd.f32 0.0, %v668
        %v670 = vpop.f32.mrb[0].mxu0
        %671 = vmatprep.mubr.f32.mxu0 0.0
        %672 = vmatmul.mubr.f32.gmra.mrb[0].mxu0 %v502
        %v673 = vpop.f32.mrb[0].mxu0
        %v674 = vadd.f32 0.0, %v673
        %v675 = vpop.f32.mrb[0].mxu0
        %676 = vmatprep.mubr.f32.mxu0 0.0
        %677 = vmatmul.mubr.f32.gmra.mrb[0].mxu0 %v503
        %v678 = vpop.f32.mrb[0].mxu0
        %v679 = vadd.f32 0.0, %v678
        %v680 = vpop.f32.mrb[0].mxu0
        %681 = vmatprep.mubr.f32.mxu0 0.0
        %682 = vmatmul.mubr.f32.gmra.mrb[0].mxu0 %v504
        %v683 = vpop.f32.mrb[0].mxu0
        %v684 = vadd.f32 0.0, %v683
        %v685 = vpop.f32.mrb[0].mxu0
        %686 = vmatprep.mubr.f32.mxu0 0.0
        %687 = vmatmul.mubr.f32.gmra.mrb[0].mxu0 %v505
        %v688 = vpop.f32.mrb[0].mxu0
        %v689 = vadd.f32 0.0, %v688
        %v690 = vpop.f32.mrb[0].mxu0
        %691 = vmatprep.mubr.f32.mxu0 0.0
        %692 = vmatmul.mubr.f32.gmra.mrb[0].mxu0 %v506
        %v693 = vpop.f32.mrb[0].mxu0
        %v694 = vadd.f32 0.0, %v693
        %v695 = vpop.f32.mrb[0].mxu0
        %696 = vmatprep.mubr.f32.mxu0 0.0
        %697 = vmatmul.mubr.f32.gmra.mrb[0].mxu0 %v507
        %v698 = vpop.f32.mrb[0].mxu0
        %v699 = vadd.f32 0.0, %v698
        %v700 = vpop.f32.mrb[0].mxu0
        %701 = vmatprep.mubr.f32.mxu0 0.0
        %702 = vmatmul.mubr.f32.gmra.mrb[0].mxu0 %v508
        %v703 = vpop.f32.mrb[0].mxu0
        %v704 = vadd.f32 0.0, %v703
        %v705 = vpop.f32.mrb[0].mxu0
        %706 = vmatprep.mubr.f32.mxu0 0.0
        %707 = vmatmul.mubr.f32.gmra.mrb[0].mxu0 %v509
        %v708 = vpop.f32.mrb[0].mxu0
        %v709 = vadd.f32 0.0, %v708
        %v710 = vpop.f32.mrb[0].mxu0
        %711 = vmatprep.mubr.f32.mxu0 0.0
        %712 = vmatmul.mubr.f32.gmra.mrb[0].mxu0 %v510
        %v713 = vpop.f32.mrb[0].mxu0
        %v714 = vadd.f32 0.0, %v713
        %v715 = vpop.f32.mrb[0].mxu0
        %716 = vmatprep.mubr.f32.mxu0 0.0
        %717 = vmatmul.mubr.f32.gmra.mrb[0].mxu0 %v511
        %v718 = vpop.f32.mrb[0].mxu0
        %v719 = vadd.f32 0.0, %v718
        %v720 = vpop.f32.mrb[0].mxu0
        %721 = vmatprep.mubr.f32.mxu0 0.0
        %722 = vmatmul.mubr.f32.gmra.mrb[0].mxu0 %v512
        %v723 = vpop.f32.mrb[0].mxu0
        %v724 = vadd.f32 0.0, %v723
        %v725 = vpop.f32.mrb[0].mxu0
        %726 = vmatprep.mubr.f32.mxu0 0.0
        %727 = vmatmul.mubr.f32.gmra.mrb[0].mxu0 %v513
        %v728 = vpop.f32.mrb[0].mxu0
        %v729 = vadd.f32 0.0, %v728
        %v730 = vpop.f32.mrb[0].mxu0
        %731 = vmatprep.mubr.f32.mxu0 0.0
        %732 = vmatmul.mubr.f32.gmra.mrb[0].mxu0 %v514
        %v733 = vpop.f32.mrb[0].mxu0
        %v734 = vadd.f32 0.0, %v733
        %v735 = vpop.f32.mrb[0].mxu0
        %736 = vmatprep.mubr.f32.mxu0 0.0
        %737 = vmatmul.mubr.f32.gmra.mrb[0].mxu0 %v515
        %v738 = vpop.f32.mrb[0].mxu0
        %v739 = vadd.f32 0.0, %v738
        %v740 = vpop.f32.mrb[0].mxu0
        %741 = vmatprep.mubr.f32.mxu0 0.0
        %742 = vmatmul.mubr.f32.gmra.mrb[0].mxu0 %v516
        %v743 = vpop.f32.mrb[0].mxu0
        %v744 = vadd.f32 0.0, %v743
        %v745 = vpop.f32.mrb[0].mxu0
        %746 = vmatprep.mubr.f32.mxu0 0.0
        %747 = vmatmul.mubr.f32.gmra.mrb[0].mxu0 %v517
        %v748 = vpop.f32.mrb[0].mxu0
        %v749 = vadd.f32 0.0, %v748
        %v750 = vpop.f32.mrb[0].mxu0
        %751 = vmatprep.mubr.f32.mxu0 0.0
        %752 = vmatmul.mubr.f32.gmra.mrb[0].mxu0 %v518
        %v753 = vpop.f32.mrb[0].mxu0
        %v754 = vadd.f32 0.0, %v753
        %v755 = vpop.f32.mrb[0].mxu0
        %756 = vmatprep.mubr.f32.mxu0 0.0
        %757 = vmatmul.mubr.f32.gmra.mrb[0].mxu0 %v519
        %v758 = vpop.f32.mrb[0].mxu0
        %v759 = vadd.f32 0.0, %v758
        %v760 = vpop.f32.mrb[0].mxu0
        %761 = vdwg.mxu0
        %762 = vmatprep.subr.mxu0 0.0
        %763 = vmatpush1.msra.mxu0 %v472
        %764 = vmatprep.subr.mxu0 0.0
        %765 = vmatpush1.msra.mxu0 %v473
        %766 = vmatprep.subr.mxu0 0.0
        %767 = vmatpush1.msra.mxu0 %v474
        %768 = vmatprep.subr.mxu0 0.0
        %769 = vmatpush1.msra.mxu0 %v475
        %770 = vmatprep.subr.mxu0 0.0
        %771 = vmatpush1.msra.mxu0 %v476
        %772 = vmatprep.subr.mxu0 0.0
        %773 = vmatpush1.msra.mxu0 %v477
        %774 = vmatprep.subr.mxu0 0.0
        %775 = vmatpush1.msra.mxu0 %v478
        %776 = vmatprep.subr.mxu0 0.0
        %777 = vmatpush1.msra.mxu0 %v479
        %778 = vmatprep.subr.mxu0 0.0
        %779 = vmatpush1.msra.mxu0 %v480
        %780 = vmatprep.subr.mxu0 0.0
        %781 = vmatpush1.msra.mxu0 %v481
        %782 = vmatprep.subr.mxu0 0.0
        %783 = vmatpush1.msra.mxu0 %v482
        %784 = vmatprep.subr.mxu0 0.0
        %785 = vmatpush1.msra.mxu0 %v483
        %786 = vmatprep.subr.mxu0 0.0
        %787 = vmatpush1.msra.mxu0 %v484
        %788 = vmatprep.subr.mxu0 0.0
        %789 = vmatpush1.msra.mxu0 %v485
        %790 = vmatprep.subr.mxu0 0.0
        %791 = vmatpush1.msra.mxu0 %v486
        %792 = vmatprep.subr.mxu0 0.0
        %793 = vmatpush1.msra.mxu0 %v487
        %794 = vmatprep.subr.mxu0 0.0
        %795 = vmatpush1.msra.mxu0 0.0
        %796 = vmatprep.subr.mxu0 0.0
        %797 = vmatpush1.msra.mxu0 0.0
        %798 = vmatprep.subr.mxu0 0.0
        %799 = vmatpush1.msra.mxu0 0.0
        %800 = vmatprep.subr.mxu0 0.0
        %801 = vmatpush1.msra.mxu0 0.0
        %802 = vmatprep.subr.mxu0 0.0
        %803 = vmatpush1.msra.mxu0 0.0
        %804 = vmatprep.subr.mxu0 0.0
        %805 = vmatpush1.msra.mxu0 0.0
        %806 = vmatprep.subr.mxu0 0.0
        %807 = vmatpush1.msra.mxu0 0.0
        %808 = vmatprep.subr.mxu0 0.0
        %809 = vmatpush1.msra.mxu0 0.0
        %810 = vmatprep.subr.mxu0 0.0
        %811 = vmatpush1.msra.mxu0 0.0
        %812 = vmatprep.subr.mxu0 0.0
        %813 = vmatpush1.msra.mxu0 0.0
        %814 = vmatprep.subr.mxu0 0.0
        %815 = vmatpush1.msra.mxu0 0.0
        %816 = vmatprep.subr.mxu0 0.0
        %817 = vmatpush1.msra.mxu0 0.0
        %818 = vmatprep.subr.mxu0 0.0
        %819 = vmatpush1.msra.mxu0 0.0
        %820 = vmatprep.subr.mxu0 0.0
        %821 = vmatpush1.msra.mxu0 0.0
        %822 = vmatprep.subr.mxu0 0.0
        %823 = vmatpush1.msra.mxu0 0.0
        %824 = vmatprep.subr.mxu0 0.0
        %825 = vmatpush1.msra.mxu0 0.0
        %826 = vmatprep.mubr.f32.mxu0 0.0
        %827 = vmatmul.mubr.f32.gmra.mrb[0].mxu0 %v440
        %v828 = vpop.f32.mrb[0].mxu0
        %v829 = vadd.f32 %v604, %v828
        %v830 = vpop.f32.mrb[0].mxu0
        %831 = vmatprep.mubr.f32.mxu0 0.0
        %832 = vmatmul.mubr.f32.gmra.mrb[0].mxu0 %v441
        %v833 = vpop.f32.mrb[0].mxu0
        %v834 = vadd.f32 %v609, %v833
        %v835 = vpop.f32.mrb[0].mxu0
        %836 = vmatprep.mubr.f32.mxu0 0.0
        %837 = vmatmul.mubr.f32.gmra.mrb[0].mxu0 %v442
        %v838 = vpop.f32.mrb[0].mxu0
        %v839 = vadd.f32 %v614, %v838
        %v840 = vpop.f32.mrb[0].mxu0
        %841 = vmatprep.mubr.f32.mxu0 0.0
        %842 = vmatmul.mubr.f32.gmra.mrb[0].mxu0 %v443
        %v843 = vpop.f32.mrb[0].mxu0
        %v844 = vadd.f32 %v619, %v843
        %v845 = vpop.f32.mrb[0].mxu0
        %846 = vmatprep.mubr.f32.mxu0 0.0
        %847 = vmatmul.mubr.f32.gmra.mrb[0].mxu0 %v444
        %v848 = vpop.f32.mrb[0].mxu0
        %v849 = vadd.f32 %v624, %v848
        %v850 = vpop.f32.mrb[0].mxu0
        %851 = vmatprep.mubr.f32.mxu0 0.0
        %852 = vmatmul.mubr.f32.gmra.mrb[0].mxu0 %v445
        %v853 = vpop.f32.mrb[0].mxu0
        %v854 = vadd.f32 %v629, %v853
        %v855 = vpop.f32.mrb[0].mxu0
        %856 = vmatprep.mubr.f32.mxu0 0.0
        %857 = vmatmul.mubr.f32.gmra.mrb[0].mxu0 %v446
        %v858 = vpop.f32.mrb[0].mxu0
        %v859 = vadd.f32 %v634, %v858
        %v860 = vpop.f32.mrb[0].mxu0
        %861 = vmatprep.mubr.f32.mxu0 0.0
        %862 = vmatmul.mubr.f32.gmra.mrb[0].mxu0 %v447
        %v863 = vpop.f32.mrb[0].mxu0
        %v864 = vadd.f32 %v639, %v863
        %v865 = vpop.f32.mrb[0].mxu0
        %866 = vmatprep.mubr.f32.mxu0 0.0
        %867 = vmatmul.mubr.f32.gmra.mrb[0].mxu0 %v448
        %v868 = vpop.f32.mrb[0].mxu0
        %v869 = vadd.f32 %v644, %v868
        %v870 = vpop.f32.mrb[0].mxu0
        %871 = vmatprep.mubr.f32.mxu0 0.0
        %872 = vmatmul.mubr.f32.gmra.mrb[0].mxu0 %v449
        %v873 = vpop.f32.mrb[0].mxu0
        %v874 = vadd.f32 %v649, %v873
        %v875 = vpop.f32.mrb[0].mxu0
        %876 = vmatprep.mubr.f32.mxu0 0.0
        %877 = vmatmul.mubr.f32.gmra.mrb[0].mxu0 %v450
        %v878 = vpop.f32.mrb[0].mxu0
        %v879 = vadd.f32 %v654, %v878
        %v880 = vpop.f32.mrb[0].mxu0
        %881 = vmatprep.mubr.f32.mxu0 0.0
        %882 = vmatmul.mubr.f32.gmra.mrb[0].mxu0 %v451
        %v883 = vpop.f32.mrb[0].mxu0
        %v884 = vadd.f32 %v659, %v883
        %v885 = vpop.f32.mrb[0].mxu0
        %886 = vmatprep.mubr.f32.mxu0 0.0
        %887 = vmatmul.mubr.f32.gmra.mrb[0].mxu0 %v452
        %v888 = vpop.f32.mrb[0].mxu0
        %v889 = vadd.f32 %v664, %v888
        %v890 = vpop.f32.mrb[0].mxu0
        %891 = vmatprep.mubr.f32.mxu0 0.0
        %892 = vmatmul.mubr.f32.gmra.mrb[0].mxu0 %v453
        %v893 = vpop.f32.mrb[0].mxu0
        %v894 = vadd.f32 %v669, %v893
        %v895 = vpop.f32.mrb[0].mxu0
        %896 = vmatprep.mubr.f32.mxu0 0.0
        %897 = vmatmul.mubr.f32.gmra.mrb[0].mxu0 %v454
        %v898 = vpop.f32.mrb[0].mxu0
        %v899 = vadd.f32 %v674, %v898
        %v900 = vpop.f32.mrb[0].mxu0
        %901 = vmatprep.mubr.f32.mxu0 0.0
        %902 = vmatmul.mubr.f32.gmra.mrb[0].mxu0 %v455
        %v903 = vpop.f32.mrb[0].mxu0
        %v904 = vadd.f32 %v679, %v903
        %v905 = vpop.f32.mrb[0].mxu0
        %906 = vmatprep.mubr.f32.mxu0 0.0
        %907 = vmatmul.mubr.f32.gmra.mrb[0].mxu0 %v456
        %v908 = vpop.f32.mrb[0].mxu0
        %v909 = vadd.f32 %v684, %v908
        %v910 = vpop.f32.mrb[0].mxu0
        %911 = vmatprep.mubr.f32.mxu0 0.0
        %912 = vmatmul.mubr.f32.gmra.mrb[0].mxu0 %v457
        %v913 = vpop.f32.mrb[0].mxu0
        %v914 = vadd.f32 %v689, %v913
        %v915 = vpop.f32.mrb[0].mxu0
        %916 = vmatprep.mubr.f32.mxu0 0.0
        %917 = vmatmul.mubr.f32.gmra.mrb[0].mxu0 %v458
        %v918 = vpop.f32.mrb[0].mxu0
        %v919 = vadd.f32 %v694, %v918
        %v920 = vpop.f32.mrb[0].mxu0
        %921 = vmatprep.mubr.f32.mxu0 0.0
        %922 = vmatmul.mubr.f32.gmra.mrb[0].mxu0 %v459
        %v923 = vpop.f32.mrb[0].mxu0
        %v924 = vadd.f32 %v699, %v923
        %v925 = vpop.f32.mrb[0].mxu0
        %926 = vmatprep.mubr.f32.mxu0 0.0
        %927 = vmatmul.mubr.f32.gmra.mrb[0].mxu0 %v460
        %v928 = vpop.f32.mrb[0].mxu0
        %v929 = vadd.f32 %v704, %v928
        %v930 = vpop.f32.mrb[0].mxu0
        %931 = vmatprep.mubr.f32.mxu0 0.0
        %932 = vmatmul.mubr.f32.gmra.mrb[0].mxu0 %v461
        %v933 = vpop.f32.mrb[0].mxu0
        %v934 = vadd.f32 %v709, %v933
        %v935 = vpop.f32.mrb[0].mxu0
        %936 = vmatprep.mubr.f32.mxu0 0.0
        %937 = vmatmul.mubr.f32.gmra.mrb[0].mxu0 %v462
        %v938 = vpop.f32.mrb[0].mxu0
        %v939 = vadd.f32 %v714, %v938
        %v940 = vpop.f32.mrb[0].mxu0
        %941 = vmatprep.mubr.f32.mxu0 0.0
        %942 = vmatmul.mubr.f32.gmra.mrb[0].mxu0 %v463
        %v943 = vpop.f32.mrb[0].mxu0
        %v944 = vadd.f32 %v719, %v943
        %v945 = vpop.f32.mrb[0].mxu0
        %946 = vmatprep.mubr.f32.mxu0 0.0
        %947 = vmatmul.mubr.f32.gmra.mrb[0].mxu0 %v464
        %v948 = vpop.f32.mrb[0].mxu0
        %v949 = vadd.f32 %v724, %v948
        %v950 = vpop.f32.mrb[0].mxu0
        %951 = vmatprep.mubr.f32.mxu0 0.0
        %952 = vmatmul.mubr.f32.gmra.mrb[0].mxu0 %v465
        %v953 = vpop.f32.mrb[0].mxu0
        %v954 = vadd.f32 %v729, %v953
        %v955 = vpop.f32.mrb[0].mxu0
        %956 = vmatprep.mubr.f32.mxu0 0.0
        %957 = vmatmul.mubr.f32.gmra.mrb[0].mxu0 %v466
        %v958 = vpop.f32.mrb[0].mxu0
        %v959 = vadd.f32 %v734, %v958
        %v960 = vpop.f32.mrb[0].mxu0
        %961 = vmatprep.mubr.f32.mxu0 0.0
        %962 = vmatmul.mubr.f32.gmra.mrb[0].mxu0 %v467
        %v963 = vpop.f32.mrb[0].mxu0
        %v964 = vadd.f32 %v739, %v963
        %v965 = vpop.f32.mrb[0].mxu0
        %966 = vmatprep.mubr.f32.mxu0 0.0
        %967 = vmatmul.mubr.f32.gmra.mrb[0].mxu0 %v468
        %v968 = vpop.f32.mrb[0].mxu0
        %v969 = vadd.f32 %v744, %v968
        %v970 = vpop.f32.mrb[0].mxu0
        %971 = vmatprep.mubr.f32.mxu0 0.0
        %972 = vmatmul.mubr.f32.gmra.mrb[0].mxu0 %v469
        %v973 = vpop.f32.mrb[0].mxu0
        %v974 = vadd.f32 %v749, %v973
        %v975 = vpop.f32.mrb[0].mxu0
        %976 = vmatprep.mubr.f32.mxu0 0.0
        %977 = vmatmul.mubr.f32.gmra.mrb[0].mxu0 %v470
        %v978 = vpop.f32.mrb[0].mxu0
        %v979 = vadd.f32 %v754, %v978
        %v980 = vpop.f32.mrb[0].mxu0
        %981 = vmatprep.mubr.f32.mxu0 0.0
        %982 = vmatmul.mubr.f32.gmra.mrb[0].mxu0 %v471
        %v983 = vpop.f32.mrb[0].mxu0
        %v984 = vadd.f32 %v759, %v983
        %v985 = vpop.f32.mrb[0].mxu0
        %986 = vdwg.mxu0
        %v987 = vld [vmem:[#allocation2 + $0x9] sm:$0xff]
        %v988 = vld [vmem:[#allocation2 + $0x11] sm:$0xff]
        %v989 = vld [vmem:[#allocation2 + $0x29] sm:$0xff]
        %v990 = vld [vmem:[#allocation2 + $0x31] sm:$0xff]
        %v991 = vld [vmem:[#allocation2 + $0x49] sm:$0xff]
        %v992 = vld [vmem:[#allocation2 + $0x51] sm:$0xff]
        %v993 = vld [vmem:[#allocation2 + $0x69] sm:$0xff]
        %v994 = vld [vmem:[#allocation2 + $0x71] sm:$0xff]
        %v995 = vld [vmem:[#allocation2 + $0x89] sm:$0xff]
        %v996 = vld [vmem:[#allocation2 + $0x91] sm:$0xff]
        %v997 = vld [vmem:[#allocation2 + $0xa9] sm:$0xff]
        %v998 = vld [vmem:[#allocation2 + $0xb1] sm:$0xff]
        %v999 = vld [vmem:[#allocation2 + $0xc9] sm:$0xff]
        %v1000 = vld [vmem:[#allocation2 + $0xd1] sm:$0xff]
        %v1001 = vld [vmem:[#allocation2 + $0xe9] sm:$0xff]
        %v1002 = vld [vmem:[#allocation2 + $0xf1] sm:$0xff]
        %v1003 = vld [vmem:[#allocation2 + $0x109] sm:$0xff]
        %v1004 = vld [vmem:[#allocation2 + $0x111] sm:$0xff]
        %v1005 = vld [vmem:[#allocation2 + $0x129] sm:$0xff]
        %v1006 = vld [vmem:[#allocation2 + $0x131] sm:$0xff]
        %v1007 = vld [vmem:[#allocation2 + $0x149] sm:$0xff]
        %v1008 = vld [vmem:[#allocation2 + $0x151] sm:$0xff]
        %v1009 = vld [vmem:[#allocation2 + $0x169] sm:$0xff]
        %v1010 = vld [vmem:[#allocation2 + $0x171] sm:$0xff]
        %v1011 = vld [vmem:[#allocation2 + $0x189] sm:$0xff]
        %v1012 = vld [vmem:[#allocation2 + $0x191] sm:$0xff]
        %v1013 = vld [vmem:[#allocation2 + $0x1a9] sm:$0xff]
        %v1014 = vld [vmem:[#allocation2 + $0x1b1] sm:$0xff]
        %v1015 = vld [vmem:[#allocation2 + $0x1c9] sm:$0xff]
        %v1016 = vld [vmem:[#allocation2 + $0x1d1] sm:$0xff]
        %v1017 = vld [vmem:[#allocation2 + $0x1e9] sm:$0xff]
        %v1018 = vld [vmem:[#allocation2 + $0x1f1] sm:$0xff]
        %s1019 = scalar_lea.vmem %s3, 256
        %v1020 = vld [vmem:[%s1019] sm:$0xff]
        %v1021 = vld [vmem:[%s1019 + $0x8] sm:$0xff]
        %v1022 = vld [vmem:[%s1019 + $0x10] sm:$0xff]
        %v1023 = vld [vmem:[%s1019 + $0x18] sm:$0xff]
        %v1024 = vld [vmem:[%s1019 + $0x20] sm:$0xff]
        %v1025 = vld [vmem:[%s1019 + $0x28] sm:$0xff]
        %v1026 = vld [vmem:[%s1019 + $0x30] sm:$0xff]
        %v1027 = vld [vmem:[%s1019 + $0x38] sm:$0xff]
        %v1028 = vld [vmem:[%s1019 + $0x40] sm:$0xff]
        %v1029 = vld [vmem:[%s1019 + $0x48] sm:$0xff]
        %v1030 = vld [vmem:[%s1019 + $0x50] sm:$0xff]
        %v1031 = vld [vmem:[%s1019 + $0x58] sm:$0xff]
        %v1032 = vld [vmem:[%s1019 + $0x60] sm:$0xff]
        %v1033 = vld [vmem:[%s1019 + $0x68] sm:$0xff]
        %v1034 = vld [vmem:[%s1019 + $0x70] sm:$0xff]
        %v1035 = vld [vmem:[%s1019 + $0x78] sm:$0xff]
        %1036 = vmatprep.subr.mxu0 0.0
        %1037 = vmatpush1.msra.mxu0 %v1020
        %1038 = vmatprep.subr.mxu0 0.0
        %1039 = vmatpush1.msra.mxu0 %v1021
        %1040 = vmatprep.subr.mxu0 0.0
        %1041 = vmatpush1.msra.mxu0 %v1022
        %1042 = vmatprep.subr.mxu0 0.0
        %1043 = vmatpush1.msra.mxu0 %v1023
        %1044 = vmatprep.subr.mxu0 0.0
        %1045 = vmatpush1.msra.mxu0 %v1024
        %1046 = vmatprep.subr.mxu0 0.0
        %1047 = vmatpush1.msra.mxu0 %v1025
        %1048 = vmatprep.subr.mxu0 0.0
        %1049 = vmatpush1.msra.mxu0 %v1026
        %1050 = vmatprep.subr.mxu0 0.0
        %1051 = vmatpush1.msra.mxu0 %v1027
        %1052 = vmatprep.subr.mxu0 0.0
        %1053 = vmatpush1.msra.mxu0 %v1028
        %1054 = vmatprep.subr.mxu0 0.0
        %1055 = vmatpush1.msra.mxu0 %v1029
        %1056 = vmatprep.subr.mxu0 0.0
        %1057 = vmatpush1.msra.mxu0 %v1030
        %1058 = vmatprep.subr.mxu0 0.0
        %1059 = vmatpush1.msra.mxu0 %v1031
        %1060 = vmatprep.subr.mxu0 0.0
        %1061 = vmatpush1.msra.mxu0 %v1032
        %1062 = vmatprep.subr.mxu0 0.0
        %1063 = vmatpush1.msra.mxu0 %v1033
        %1064 = vmatprep.subr.mxu0 0.0
        %1065 = vmatpush1.msra.mxu0 %v1034
        %1066 = vmatprep.subr.mxu0 0.0
        %1067 = vmatpush1.msra.mxu0 %v1035
        %1068 = vmatprep.subr.mxu0 0.0
        %1069 = vmatpush1.msra.mxu0 0.0
        %1070 = vmatprep.subr.mxu0 0.0
        %1071 = vmatpush1.msra.mxu0 0.0
        %1072 = vmatprep.subr.mxu0 0.0
        %1073 = vmatpush1.msra.mxu0 0.0
        %1074 = vmatprep.subr.mxu0 0.0
        %1075 = vmatpush1.msra.mxu0 0.0
        %1076 = vmatprep.subr.mxu0 0.0
        %1077 = vmatpush1.msra.mxu0 0.0
        %1078 = vmatprep.subr.mxu0 0.0
        %1079 = vmatpush1.msra.mxu0 0.0
        %1080 = vmatprep.subr.mxu0 0.0
        %1081 = vmatpush1.msra.mxu0 0.0
        %1082 = vmatprep.subr.mxu0 0.0
        %1083 = vmatpush1.msra.mxu0 0.0
        %1084 = vmatprep.subr.mxu0 0.0
        %1085 = vmatpush1.msra.mxu0 0.0
        %1086 = vmatprep.subr.mxu0 0.0
        %1087 = vmatpush1.msra.mxu0 0.0
        %1088 = vmatprep.subr.mxu0 0.0
        %1089 = vmatpush1.msra.mxu0 0.0
        %1090 = vmatprep.subr.mxu0 0.0
        %1091 = vmatpush1.msra.mxu0 0.0
        %1092 = vmatprep.subr.mxu0 0.0
        %1093 = vmatpush1.msra.mxu0 0.0
        %1094 = vmatprep.subr.mxu0 0.0
        %1095 = vmatpush1.msra.mxu0 0.0
        %1096 = vmatprep.subr.mxu0 0.0
        %1097 = vmatpush1.msra.mxu0 0.0
        %1098 = vmatprep.subr.mxu0 0.0
        %1099 = vmatpush1.msra.mxu0 0.0
        %1100 = vmatprep.mubr.f32.mxu0 0.0
        %1101 = vmatmul.mubr.f32.gmra.mrb[0].mxu0 %v987
        %v1102 = vpop.f32.mrb[0].mxu0
        %v1103 = vadd.f32 0.0, %v1102
        %v1104 = vpop.f32.mrb[0].mxu0
        %1105 = vmatprep.mubr.f32.mxu0 0.0
        %1106 = vmatmul.mubr.f32.gmra.mrb[0].mxu0 %v988
        %v1107 = vpop.f32.mrb[0].mxu0
        %v1108 = vadd.f32 0.0, %v1107
        %v1109 = vpop.f32.mrb[0].mxu0
        %1110 = vmatprep.mubr.f32.mxu0 0.0
        %1111 = vmatmul.mubr.f32.gmra.mrb[0].mxu0 %v989
        %v1112 = vpop.f32.mrb[0].mxu0
        %v1113 = vadd.f32 0.0, %v1112
        %v1114 = vpop.f32.mrb[0].mxu0
        %1115 = vmatprep.mubr.f32.mxu0 0.0
        %1116 = vmatmul.mubr.f32.gmra.mrb[0].mxu0 %v990
        %v1117 = vpop.f32.mrb[0].mxu0
        %v1118 = vadd.f32 0.0, %v1117
        %v1119 = vpop.f32.mrb[0].mxu0
        %1120 = vmatprep.mubr.f32.mxu0 0.0
        %1121 = vmatmul.mubr.f32.gmra.mrb[0].mxu0 %v991
        %v1122 = vpop.f32.mrb[0].mxu0
        %v1123 = vadd.f32 0.0, %v1122
        %v1124 = vpop.f32.mrb[0].mxu0
        %1125 = vmatprep.mubr.f32.mxu0 0.0
        %1126 = vmatmul.mubr.f32.gmra.mrb[0].mxu0 %v992
        %v1127 = vpop.f32.mrb[0].mxu0
        %v1128 = vadd.f32 0.0, %v1127
        %v1129 = vpop.f32.mrb[0].mxu0
        %1130 = vmatprep.mubr.f32.mxu0 0.0
        %1131 = vmatmul.mubr.f32.gmra.mrb[0].mxu0 %v993
        %v1132 = vpop.f32.mrb[0].mxu0
        %v1133 = vadd.f32 0.0, %v1132
        %v1134 = vpop.f32.mrb[0].mxu0
        %1135 = vmatprep.mubr.f32.mxu0 0.0
        %1136 = vmatmul.mubr.f32.gmra.mrb[0].mxu0 %v994
        %v1137 = vpop.f32.mrb[0].mxu0
        %v1138 = vadd.f32 0.0, %v1137
        %v1139 = vpop.f32.mrb[0].mxu0
        %1140 = vmatprep.mubr.f32.mxu0 0.0
        %1141 = vmatmul.mubr.f32.gmra.mrb[0].mxu0 %v995
        %v1142 = vpop.f32.mrb[0].mxu0
        %v1143 = vadd.f32 0.0, %v1142
        %v1144 = vpop.f32.mrb[0].mxu0
        %1145 = vmatprep.mubr.f32.mxu0 0.0
        %1146 = vmatmul.mubr.f32.gmra.mrb[0].mxu0 %v996
        %v1147 = vpop.f32.mrb[0].mxu0
        %v1148 = vadd.f32 0.0, %v1147
        %v1149 = vpop.f32.mrb[0].mxu0
        %1150 = vmatprep.mubr.f32.mxu0 0.0
        %1151 = vmatmul.mubr.f32.gmra.mrb[0].mxu0 %v997
        %v1152 = vpop.f32.mrb[0].mxu0
        %v1153 = vadd.f32 0.0, %v1152
        %v1154 = vpop.f32.mrb[0].mxu0
        %1155 = vmatprep.mubr.f32.mxu0 0.0
        %1156 = vmatmul.mubr.f32.gmra.mrb[0].mxu0 %v998
        %v1157 = vpop.f32.mrb[0].mxu0
        %v1158 = vadd.f32 0.0, %v1157
        %v1159 = vpop.f32.mrb[0].mxu0
        %1160 = vmatprep.mubr.f32.mxu0 0.0
        %1161 = vmatmul.mubr.f32.gmra.mrb[0].mxu0 %v999
        %v1162 = vpop.f32.mrb[0].mxu0
        %v1163 = vadd.f32 0.0, %v1162
        %v1164 = vpop.f32.mrb[0].mxu0
        %1165 = vmatprep.mubr.f32.mxu0 0.0
        %1166 = vmatmul.mubr.f32.gmra.mrb[0].mxu0 %v1000
        %v1167 = vpop.f32.mrb[0].mxu0
        %v1168 = vadd.f32 0.0, %v1167
        %v1169 = vpop.f32.mrb[0].mxu0
        %1170 = vmatprep.mubr.f32.mxu0 0.0
        %1171 = vmatmul.mubr.f32.gmra.mrb[0].mxu0 %v1001
        %v1172 = vpop.f32.mrb[0].mxu0
        %v1173 = vadd.f32 0.0, %v1172
        %v1174 = vpop.f32.mrb[0].mxu0
        %1175 = vmatprep.mubr.f32.mxu0 0.0
        %1176 = vmatmul.mubr.f32.gmra.mrb[0].mxu0 %v1002
        %v1177 = vpop.f32.mrb[0].mxu0
        %v1178 = vadd.f32 0.0, %v1177
        %v1179 = vpop.f32.mrb[0].mxu0
        %1180 = vmatprep.mubr.f32.mxu0 0.0
        %1181 = vmatmul.mubr.f32.gmra.mrb[0].mxu0 %v1003
        %v1182 = vpop.f32.mrb[0].mxu0
        %v1183 = vadd.f32 0.0, %v1182
        %v1184 = vpop.f32.mrb[0].mxu0
        %1185 = vmatprep.mubr.f32.mxu0 0.0
        %1186 = vmatmul.mubr.f32.gmra.mrb[0].mxu0 %v1004
        %v1187 = vpop.f32.mrb[0].mxu0
        %v1188 = vadd.f32 0.0, %v1187
        %v1189 = vpop.f32.mrb[0].mxu0
        %1190 = vmatprep.mubr.f32.mxu0 0.0
        %1191 = vmatmul.mubr.f32.gmra.mrb[0].mxu0 %v1005
        %v1192 = vpop.f32.mrb[0].mxu0
        %v1193 = vadd.f32 0.0, %v1192
        %v1194 = vpop.f32.mrb[0].mxu0
        %1195 = vmatprep.mubr.f32.mxu0 0.0
        %1196 = vmatmul.mubr.f32.gmra.mrb[0].mxu0 %v1006
        %v1197 = vpop.f32.mrb[0].mxu0
        %v1198 = vadd.f32 0.0, %v1197
        %v1199 = vpop.f32.mrb[0].mxu0
        %1200 = vmatprep.mubr.f32.mxu0 0.0
        %1201 = vmatmul.mubr.f32.gmra.mrb[0].mxu0 %v1007
        %v1202 = vpop.f32.mrb[0].mxu0
        %v1203 = vadd.f32 0.0, %v1202
        %v1204 = vpop.f32.mrb[0].mxu0
        %1205 = vmatprep.mubr.f32.mxu0 0.0
        %1206 = vmatmul.mubr.f32.gmra.mrb[0].mxu0 %v1008
        %v1207 = vpop.f32.mrb[0].mxu0
        %v1208 = vadd.f32 0.0, %v1207
        %v1209 = vpop.f32.mrb[0].mxu0
        %1210 = vmatprep.mubr.f32.mxu0 0.0
        %1211 = vmatmul.mubr.f32.gmra.mrb[0].mxu0 %v1009
        %v1212 = vpop.f32.mrb[0].mxu0
        %v1213 = vadd.f32 0.0, %v1212
        %v1214 = vpop.f32.mrb[0].mxu0
        %1215 = vmatprep.mubr.f32.mxu0 0.0
        %1216 = vmatmul.mubr.f32.gmra.mrb[0].mxu0 %v1010
        %v1217 = vpop.f32.mrb[0].mxu0
        %v1218 = vadd.f32 0.0, %v1217
        %v1219 = vpop.f32.mrb[0].mxu0
        %1220 = vmatprep.mubr.f32.mxu0 0.0
        %1221 = vmatmul.mubr.f32.gmra.mrb[0].mxu0 %v1011
        %v1222 = vpop.f32.mrb[0].mxu0
        %v1223 = vadd.f32 0.0, %v1222
        %v1224 = vpop.f32.mrb[0].mxu0
        %1225 = vmatprep.mubr.f32.mxu0 0.0
        %1226 = vmatmul.mubr.f32.gmra.mrb[0].mxu0 %v1012
        %v1227 = vpop.f32.mrb[0].mxu0
        %v1228 = vadd.f32 0.0, %v1227
        %v1229 = vpop.f32.mrb[0].mxu0
        %1230 = vmatprep.mubr.f32.mxu0 0.0
        %1231 = vmatmul.mubr.f32.gmra.mrb[0].mxu0 %v1013
        %v1232 = vpop.f32.mrb[0].mxu0
        %v1233 = vadd.f32 0.0, %v1232
        %v1234 = vpop.f32.mrb[0].mxu0
        %1235 = vmatprep.mubr.f32.mxu0 0.0
        %1236 = vmatmul.mubr.f32.gmra.mrb[0].mxu0 %v1014
        %v1237 = vpop.f32.mrb[0].mxu0
        %v1238 = vadd.f32 0.0, %v1237
        %v1239 = vpop.f32.mrb[0].mxu0
        %1240 = vmatprep.mubr.f32.mxu0 0.0
        %1241 = vmatmul.mubr.f32.gmra.mrb[0].mxu0 %v1015
        %v1242 = vpop.f32.mrb[0].mxu0
        %v1243 = vadd.f32 0.0, %v1242
        %v1244 = vpop.f32.mrb[0].mxu0
        %1245 = vmatprep.mubr.f32.mxu0 0.0
        %1246 = vmatmul.mubr.f32.gmra.mrb[0].mxu0 %v1016
        %v1247 = vpop.f32.mrb[0].mxu0
        %v1248 = vadd.f32 0.0, %v1247
        %v1249 = vpop.f32.mrb[0].mxu0
        %1250 = vmatprep.mubr.f32.mxu0 0.0
        %1251 = vmatmul.mubr.f32.gmra.mrb[0].mxu0 %v1017
        %v1252 = vpop.f32.mrb[0].mxu0
        %v1253 = vadd.f32 0.0, %v1252
        %v1254 = vpop.f32.mrb[0].mxu0
        %1255 = vmatprep.mubr.f32.mxu0 0.0
        %1256 = vmatmul.mubr.f32.gmra.mrb[0].mxu0 %v1018
        %v1257 = vpop.f32.mrb[0].mxu0
        %v1258 = vadd.f32 0.0, %v1257
        %v1259 = vpop.f32.mrb[0].mxu0
        %1260 = vdwg.mxu0
        %v1261 = vadd.f32 %v829, %v1103
        %v1262 = vadd.f32 %v834, %v1108
        %v1263 = vadd.f32 %v839, %v1113
        %v1264 = vadd.f32 %v844, %v1118
        %v1265 = vadd.f32 %v849, %v1123
        %v1266 = vadd.f32 %v854, %v1128
        %v1267 = vadd.f32 %v859, %v1133
        %v1268 = vadd.f32 %v864, %v1138
        %v1269 = vadd.f32 %v869, %v1143
        %v1270 = vadd.f32 %v874, %v1148
        %v1271 = vadd.f32 %v879, %v1153
        %v1272 = vadd.f32 %v884, %v1158
        %v1273 = vadd.f32 %v889, %v1163
        %v1274 = vadd.f32 %v894, %v1168
        %v1275 = vadd.f32 %v899, %v1173
        %v1276 = vadd.f32 %v904, %v1178
        %v1277 = vadd.f32 %v909, %v1183
        %v1278 = vadd.f32 %v914, %v1188
        %v1279 = vadd.f32 %v919, %v1193
        %v1280 = vadd.f32 %v924, %v1198
        %v1281 = vadd.f32 %v929, %v1203
        %v1282 = vadd.f32 %v934, %v1208
        %v1283 = vadd.f32 %v939, %v1213
        %v1284 = vadd.f32 %v944, %v1218
        %v1285 = vadd.f32 %v949, %v1223
        %v1286 = vadd.f32 %v954, %v1228
        %v1287 = vadd.f32 %v959, %v1233
        %v1288 = vadd.f32 %v964, %v1238
        %v1289 = vadd.f32 %v969, %v1243
        %v1290 = vadd.f32 %v974, %v1248
        %v1291 = vadd.f32 %v979, %v1253
        %v1292 = vadd.f32 %v984, %v1258
        %v1293 = vld [vmem:[%s407 + $0x7] sm:$0xff]
        %v1294 = vld [vmem:[%s407 + $0xf] sm:$0xff]
        %v1295 = vld [vmem:[%s407 + $0x27] sm:$0xff]
        %v1296 = vld [vmem:[%s407 + $0x2f] sm:$0xff]
        %v1297 = vld [vmem:[%s407 + $0x47] sm:$0xff]
        %v1298 = vld [vmem:[%s407 + $0x4f] sm:$0xff]
        %v1299 = vld [vmem:[%s407 + $0x67] sm:$0xff]
        %v1300 = vld [vmem:[%s407 + $0x6f] sm:$0xff]
        %v1301 = vld [vmem:[%s407 + $0x87] sm:$0xff]
        %v1302 = vld [vmem:[%s407 + $0x8f] sm:$0xff]
        %v1303 = vld [vmem:[%s407 + $0xa7] sm:$0xff]
        %v1304 = vld [vmem:[%s407 + $0xaf] sm:$0xff]
        %v1305 = vld [vmem:[%s407 + $0xc7] sm:$0xff]
        %v1306 = vld [vmem:[%s407 + $0xcf] sm:$0xff]
        %v1307 = vld [vmem:[%s407 + $0xe7] sm:$0xff]
        %v1308 = vld [vmem:[%s407 + $0xef] sm:$0xff]
        %v1309 = vld [vmem:[%s407 + $0x107] sm:$0xff]
        %v1310 = vld [vmem:[%s407 + $0x10f] sm:$0xff]
        %v1311 = vld [vmem:[%s407 + $0x127] sm:$0xff]
        %v1312 = vld [vmem:[%s407 + $0x12f] sm:$0xff]
        %v1313 = vld [vmem:[%s407 + $0x147] sm:$0xff]
        %v1314 = vld [vmem:[%s407 + $0x14f] sm:$0xff]
        %v1315 = vld [vmem:[%s407 + $0x167] sm:$0xff]
        %v1316 = vld [vmem:[%s407 + $0x16f] sm:$0xff]
        %v1317 = vld [vmem:[%s407 + $0x187] sm:$0xff]
        %v1318 = vld [vmem:[%s407 + $0x18f] sm:$0xff]
        %v1319 = vld [vmem:[%s407 + $0x1a7] sm:$0xff]
        %v1320 = vld [vmem:[%s407 + $0x1af] sm:$0xff]
        %v1321 = vld [vmem:[%s407 + $0x1c7] sm:$0xff]
        %v1322 = vld [vmem:[%s407 + $0x1cf] sm:$0xff]
        %v1323 = vld [vmem:[%s407 + $0x1e7] sm:$0xff]
        %v1324 = vld [vmem:[%s407 + $0x1ef] sm:$0xff]
        %s1325 = scalar_lea.vmem %s3, 384
        %v1326 = vld [vmem:[%s1325] sm:$0xff]
        %v1327 = vld [vmem:[%s1325 + $0x8] sm:$0xff]
        %v1328 = vld [vmem:[%s1325 + $0x10] sm:$0xff]
        %v1329 = vld [vmem:[%s1325 + $0x18] sm:$0xff]
        %v1330 = vld [vmem:[%s1325 + $0x20] sm:$0xff]
        %v1331 = vld [vmem:[%s1325 + $0x28] sm:$0xff]
        %v1332 = vld [vmem:[%s1325 + $0x30] sm:$0xff]
        %v1333 = vld [vmem:[%s1325 + $0x38] sm:$0xff]
        %v1334 = vld [vmem:[%s1325 + $0x40] sm:$0xff]
        %v1335 = vld [vmem:[%s1325 + $0x48] sm:$0xff]
        %v1336 = vld [vmem:[%s1325 + $0x50] sm:$0xff]
        %v1337 = vld [vmem:[%s1325 + $0x58] sm:$0xff]
        %v1338 = vld [vmem:[%s1325 + $0x60] sm:$0xff]
        %v1339 = vld [vmem:[%s1325 + $0x68] sm:$0xff]
        %v1340 = vld [vmem:[%s1325 + $0x70] sm:$0xff]
        %v1341 = vld [vmem:[%s1325 + $0x78] sm:$0xff]
        %1342 = vmatprep.subr.mxu0 0.0
        %1343 = vmatpush1.msra.mxu0 %v1326
        %1344 = vmatprep.subr.mxu0 0.0
        %1345 = vmatpush1.msra.mxu0 %v1327
        %1346 = vmatprep.subr.mxu0 0.0
        %1347 = vmatpush1.msra.mxu0 %v1328
        %1348 = vmatprep.subr.mxu0 0.0
        %1349 = vmatpush1.msra.mxu0 %v1329
        %1350 = vmatprep.subr.mxu0 0.0
        %1351 = vmatpush1.msra.mxu0 %v1330
        %1352 = vmatprep.subr.mxu0 0.0
        %1353 = vmatpush1.msra.mxu0 %v1331
        %1354 = vmatprep.subr.mxu0 0.0
        %1355 = vmatpush1.msra.mxu0 %v1332
        %1356 = vmatprep.subr.mxu0 0.0
        %1357 = vmatpush1.msra.mxu0 %v1333
        %1358 = vmatprep.subr.mxu0 0.0
        %1359 = vmatpush1.msra.mxu0 %v1334
        %1360 = vmatprep.subr.mxu0 0.0
        %1361 = vmatpush1.msra.mxu0 %v1335
        %1362 = vmatprep.subr.mxu0 0.0
        %1363 = vmatpush1.msra.mxu0 %v1336
        %1364 = vmatprep.subr.mxu0 0.0
        %1365 = vmatpush1.msra.mxu0 %v1337
        %1366 = vmatprep.subr.mxu0 0.0
        %1367 = vmatpush1.msra.mxu0 %v1338
        %1368 = vmatprep.subr.mxu0 0.0
        %1369 = vmatpush1.msra.mxu0 %v1339
        %1370 = vmatprep.subr.mxu0 0.0
        %1371 = vmatpush1.msra.mxu0 %v1340
        %1372 = vmatprep.subr.mxu0 0.0
        %1373 = vmatpush1.msra.mxu0 %v1341
        %1374 = vmatprep.subr.mxu0 0.0
        %1375 = vmatpush1.msra.mxu0 0.0
        %1376 = vmatprep.subr.mxu0 0.0
        %1377 = vmatpush1.msra.mxu0 0.0
        %1378 = vmatprep.subr.mxu0 0.0
        %1379 = vmatpush1.msra.mxu0 0.0
        %1380 = vmatprep.subr.mxu0 0.0
        %1381 = vmatpush1.msra.mxu0 0.0
        %1382 = vmatprep.subr.mxu0 0.0
        %1383 = vmatpush1.msra.mxu0 0.0
        %1384 = vmatprep.subr.mxu0 0.0
        %1385 = vmatpush1.msra.mxu0 0.0
        %1386 = vmatprep.subr.mxu0 0.0
        %1387 = vmatpush1.msra.mxu0 0.0
        %1388 = vmatprep.subr.mxu0 0.0
        %1389 = vmatpush1.msra.mxu0 0.0
        %1390 = vmatprep.subr.mxu0 0.0
        %1391 = vmatpush1.msra.mxu0 0.0
        %1392 = vmatprep.subr.mxu0 0.0
        %1393 = vmatpush1.msra.mxu0 0.0
        %1394 = vmatprep.subr.mxu0 0.0
        %1395 = vmatpush1.msra.mxu0 0.0
        %1396 = vmatprep.subr.mxu0 0.0
        %1397 = vmatpush1.msra.mxu0 0.0
        %1398 = vmatprep.subr.mxu0 0.0
        %1399 = vmatpush1.msra.mxu0 0.0
        %1400 = vmatprep.subr.mxu0 0.0
        %1401 = vmatpush1.msra.mxu0 0.0
        %1402 = vmatprep.subr.mxu0 0.0
        %1403 = vmatpush1.msra.mxu0 0.0
        %1404 = vmatprep.subr.mxu0 0.0
        %1405 = vmatpush1.msra.mxu0 0.0
        %1406 = vmatprep.mubr.f32.mxu0 0.0
        %1407 = vmatmul.mubr.f32.gmra.mrb[0].mxu0 %v1293
        %v1408 = vpop.f32.mrb[0].mxu0
        %v1409 = vadd.f32 0.0, %v1408
        %v1410 = vpop.f32.mrb[0].mxu0
        %1411 = vmatprep.mubr.f32.mxu0 0.0
        %1412 = vmatmul.mubr.f32.gmra.mrb[0].mxu0 %v1294
        %v1413 = vpop.f32.mrb[0].mxu0
        %v1414 = vadd.f32 0.0, %v1413
        %v1415 = vpop.f32.mrb[0].mxu0
        %1416 = vmatprep.mubr.f32.mxu0 0.0
        %1417 = vmatmul.mubr.f32.gmra.mrb[0].mxu0 %v1295
        %v1418 = vpop.f32.mrb[0].mxu0
        %v1419 = vadd.f32 0.0, %v1418
        %v1420 = vpop.f32.mrb[0].mxu0
        %1421 = vmatprep.mubr.f32.mxu0 0.0
        %1422 = vmatmul.mubr.f32.gmra.mrb[0].mxu0 %v1296
        %v1423 = vpop.f32.mrb[0].mxu0
        %v1424 = vadd.f32 0.0, %v1423
        %v1425 = vpop.f32.mrb[0].mxu0
        %1426 = vmatprep.mubr.f32.mxu0 0.0
        %1427 = vmatmul.mubr.f32.gmra.mrb[0].mxu0 %v1297
        %v1428 = vpop.f32.mrb[0].mxu0
        %v1429 = vadd.f32 0.0, %v1428
        %v1430 = vpop.f32.mrb[0].mxu0
        %1431 = vmatprep.mubr.f32.mxu0 0.0
        %1432 = vmatmul.mubr.f32.gmra.mrb[0].mxu0 %v1298
        %v1433 = vpop.f32.mrb[0].mxu0
        %v1434 = vadd.f32 0.0, %v1433
        %v1435 = vpop.f32.mrb[0].mxu0
        %1436 = vmatprep.mubr.f32.mxu0 0.0
        %1437 = vmatmul.mubr.f32.gmra.mrb[0].mxu0 %v1299
        %v1438 = vpop.f32.mrb[0].mxu0
        %v1439 = vadd.f32 0.0, %v1438
        %v1440 = vpop.f32.mrb[0].mxu0
        %1441 = vmatprep.mubr.f32.mxu0 0.0
        %1442 = vmatmul.mubr.f32.gmra.mrb[0].mxu0 %v1300
        %v1443 = vpop.f32.mrb[0].mxu0
        %v1444 = vadd.f32 0.0, %v1443
        %v1445 = vpop.f32.mrb[0].mxu0
        %1446 = vmatprep.mubr.f32.mxu0 0.0
        %1447 = vmatmul.mubr.f32.gmra.mrb[0].mxu0 %v1301
        %v1448 = vpop.f32.mrb[0].mxu0
        %v1449 = vadd.f32 0.0, %v1448
        %v1450 = vpop.f32.mrb[0].mxu0
        %1451 = vmatprep.mubr.f32.mxu0 0.0
        %1452 = vmatmul.mubr.f32.gmra.mrb[0].mxu0 %v1302
        %v1453 = vpop.f32.mrb[0].mxu0
        %v1454 = vadd.f32 0.0, %v1453
        %v1455 = vpop.f32.mrb[0].mxu0
        %1456 = vmatprep.mubr.f32.mxu0 0.0
        %1457 = vmatmul.mubr.f32.gmra.mrb[0].mxu0 %v1303
        %v1458 = vpop.f32.mrb[0].mxu0
        %v1459 = vadd.f32 0.0, %v1458
        %v1460 = vpop.f32.mrb[0].mxu0
        %1461 = vmatprep.mubr.f32.mxu0 0.0
        %1462 = vmatmul.mubr.f32.gmra.mrb[0].mxu0 %v1304
        %v1463 = vpop.f32.mrb[0].mxu0
        %v1464 = vadd.f32 0.0, %v1463
        %v1465 = vpop.f32.mrb[0].mxu0
        %1466 = vmatprep.mubr.f32.mxu0 0.0
        %1467 = vmatmul.mubr.f32.gmra.mrb[0].mxu0 %v1305
        %v1468 = vpop.f32.mrb[0].mxu0
        %v1469 = vadd.f32 0.0, %v1468
        %v1470 = vpop.f32.mrb[0].mxu0
        %1471 = vmatprep.mubr.f32.mxu0 0.0
        %1472 = vmatmul.mubr.f32.gmra.mrb[0].mxu0 %v1306
        %v1473 = vpop.f32.mrb[0].mxu0
        %v1474 = vadd.f32 0.0, %v1473
        %v1475 = vpop.f32.mrb[0].mxu0
        %1476 = vmatprep.mubr.f32.mxu0 0.0
        %1477 = vmatmul.mubr.f32.gmra.mrb[0].mxu0 %v1307
        %v1478 = vpop.f32.mrb[0].mxu0
        %v1479 = vadd.f32 0.0, %v1478
        %v1480 = vpop.f32.mrb[0].mxu0
        %1481 = vmatprep.mubr.f32.mxu0 0.0
        %1482 = vmatmul.mubr.f32.gmra.mrb[0].mxu0 %v1308
        %v1483 = vpop.f32.mrb[0].mxu0
        %v1484 = vadd.f32 0.0, %v1483
        %v1485 = vpop.f32.mrb[0].mxu0
        %1486 = vmatprep.mubr.f32.mxu0 0.0
        %1487 = vmatmul.mubr.f32.gmra.mrb[0].mxu0 %v1309
        %v1488 = vpop.f32.mrb[0].mxu0
        %v1489 = vadd.f32 0.0, %v1488
        %v1490 = vpop.f32.mrb[0].mxu0
        %1491 = vmatprep.mubr.f32.mxu0 0.0
        %1492 = vmatmul.mubr.f32.gmra.mrb[0].mxu0 %v1310
        %v1493 = vpop.f32.mrb[0].mxu0
        %v1494 = vadd.f32 0.0, %v1493
        %v1495 = vpop.f32.mrb[0].mxu0
        %1496 = vmatprep.mubr.f32.mxu0 0.0
        %1497 = vmatmul.mubr.f32.gmra.mrb[0].mxu0 %v1311
        %v1498 = vpop.f32.mrb[0].mxu0
        %v1499 = vadd.f32 0.0, %v1498
        %v1500 = vpop.f32.mrb[0].mxu0
        %1501 = vmatprep.mubr.f32.mxu0 0.0
        %1502 = vmatmul.mubr.f32.gmra.mrb[0].mxu0 %v1312
        %v1503 = vpop.f32.mrb[0].mxu0
        %v1504 = vadd.f32 0.0, %v1503
        %v1505 = vpop.f32.mrb[0].mxu0
        %1506 = vmatprep.mubr.f32.mxu0 0.0
        %1507 = vmatmul.mubr.f32.gmra.mrb[0].mxu0 %v1313
        %v1508 = vpop.f32.mrb[0].mxu0
        %v1509 = vadd.f32 0.0, %v1508
        %v1510 = vpop.f32.mrb[0].mxu0
        %1511 = vmatprep.mubr.f32.mxu0 0.0
        %1512 = vmatmul.mubr.f32.gmra.mrb[0].mxu0 %v1314
        %v1513 = vpop.f32.mrb[0].mxu0
        %v1514 = vadd.f32 0.0, %v1513
        %v1515 = vpop.f32.mrb[0].mxu0
        %1516 = vmatprep.mubr.f32.mxu0 0.0
        %1517 = vmatmul.mubr.f32.gmra.mrb[0].mxu0 %v1315
        %v1518 = vpop.f32.mrb[0].mxu0
        %v1519 = vadd.f32 0.0, %v1518
        %v1520 = vpop.f32.mrb[0].mxu0
        %1521 = vmatprep.mubr.f32.mxu0 0.0
        %1522 = vmatmul.mubr.f32.gmra.mrb[0].mxu0 %v1316
        %v1523 = vpop.f32.mrb[0].mxu0
        %v1524 = vadd.f32 0.0, %v1523
        %v1525 = vpop.f32.mrb[0].mxu0
        %1526 = vmatprep.mubr.f32.mxu0 0.0
        %1527 = vmatmul.mubr.f32.gmra.mrb[0].mxu0 %v1317
        %v1528 = vpop.f32.mrb[0].mxu0
        %v1529 = vadd.f32 0.0, %v1528
        %v1530 = vpop.f32.mrb[0].mxu0
        %1531 = vmatprep.mubr.f32.mxu0 0.0
        %1532 = vmatmul.mubr.f32.gmra.mrb[0].mxu0 %v1318
        %v1533 = vpop.f32.mrb[0].mxu0
        %v1534 = vadd.f32 0.0, %v1533
        %v1535 = vpop.f32.mrb[0].mxu0
        %1536 = vmatprep.mubr.f32.mxu0 0.0
        %1537 = vmatmul.mubr.f32.gmra.mrb[0].mxu0 %v1319
        %v1538 = vpop.f32.mrb[0].mxu0
        %v1539 = vadd.f32 0.0, %v1538
        %v1540 = vpop.f32.mrb[0].mxu0
        %1541 = vmatprep.mubr.f32.mxu0 0.0
        %1542 = vmatmul.mubr.f32.gmra.mrb[0].mxu0 %v1320
        %v1543 = vpop.f32.mrb[0].mxu0
        %v1544 = vadd.f32 0.0, %v1543
        %v1545 = vpop.f32.mrb[0].mxu0
        %1546 = vmatprep.mubr.f32.mxu0 0.0
        %1547 = vmatmul.mubr.f32.gmra.mrb[0].mxu0 %v1321
        %v1548 = vpop.f32.mrb[0].mxu0
        %v1549 = vadd.f32 0.0, %v1548
        %v1550 = vpop.f32.mrb[0].mxu0
        %1551 = vmatprep.mubr.f32.mxu0 0.0
        %1552 = vmatmul.mubr.f32.gmra.mrb[0].mxu0 %v1322
        %v1553 = vpop.f32.mrb[0].mxu0
        %v1554 = vadd.f32 0.0, %v1553
        %v1555 = vpop.f32.mrb[0].mxu0
        %1556 = vmatprep.mubr.f32.mxu0 0.0
        %1557 = vmatmul.mubr.f32.gmra.mrb[0].mxu0 %v1323
        %v1558 = vpop.f32.mrb[0].mxu0
        %v1559 = vadd.f32 0.0, %v1558
        %v1560 = vpop.f32.mrb[0].mxu0
        %1561 = vmatprep.mubr.f32.mxu0 0.0
        %1562 = vmatmul.mubr.f32.gmra.mrb[0].mxu0 %v1324
        %v1563 = vpop.f32.mrb[0].mxu0
        %v1564 = vadd.f32 0.0, %v1563
        %v1565 = vpop.f32.mrb[0].mxu0
        %1566 = vdwg.mxu0
        %v1567 = vadd.f32 %v1261, %v1409
        %v1568 = vadd.f32 %v1262, %v1414
        %v1569 = vadd.f32 %v1263, %v1419
        %v1570 = vadd.f32 %v1264, %v1424
        %v1571 = vadd.f32 %v1265, %v1429
        %v1572 = vadd.f32 %v1266, %v1434
        %v1573 = vadd.f32 %v1267, %v1439
        %v1574 = vadd.f32 %v1268, %v1444
        %v1575 = vadd.f32 %v1269, %v1449
        %v1576 = vadd.f32 %v1270, %v1454
        %v1577 = vadd.f32 %v1271, %v1459
        %v1578 = vadd.f32 %v1272, %v1464
        %v1579 = vadd.f32 %v1273, %v1469
        %v1580 = vadd.f32 %v1274, %v1474
        %v1581 = vadd.f32 %v1275, %v1479
        %v1582 = vadd.f32 %v1276, %v1484
        %v1583 = vadd.f32 %v1277, %v1489
        %v1584 = vadd.f32 %v1278, %v1494
        %v1585 = vadd.f32 %v1279, %v1499
        %v1586 = vadd.f32 %v1280, %v1504
        %v1587 = vadd.f32 %v1281, %v1509
        %v1588 = vadd.f32 %v1282, %v1514
        %v1589 = vadd.f32 %v1283, %v1519
        %v1590 = vadd.f32 %v1284, %v1524
        %v1591 = vadd.f32 %v1285, %v1529
        %v1592 = vadd.f32 %v1286, %v1534
        %v1593 = vadd.f32 %v1287, %v1539
        %v1594 = vadd.f32 %v1288, %v1544
        %v1595 = vadd.f32 %v1289, %v1549
        %v1596 = vadd.f32 %v1290, %v1554
        %v1597 = vadd.f32 %v1291, %v1559
        %v1598 = vadd.f32 %v1292, %v1564
        %v1599 = vld [vmem:[%s407 + $0x8] sm:$0xff]
        %v1600 = vld [vmem:[%s407 + $0x10] sm:$0xff]
        %v1601 = vld [vmem:[%s407 + $0x28] sm:$0xff]
        %v1602 = vld [vmem:[%s407 + $0x30] sm:$0xff]
        %v1603 = vld [vmem:[%s407 + $0x48] sm:$0xff]
        %v1604 = vld [vmem:[%s407 + $0x50] sm:$0xff]
        %v1605 = vld [vmem:[%s407 + $0x68] sm:$0xff]
        %v1606 = vld [vmem:[%s407 + $0x70] sm:$0xff]
        %v1607 = vld [vmem:[%s407 + $0x88] sm:$0xff]
        %v1608 = vld [vmem:[%s407 + $0x90] sm:$0xff]
        %v1609 = vld [vmem:[%s407 + $0xa8] sm:$0xff]
        %v1610 = vld [vmem:[%s407 + $0xb0] sm:$0xff]
        %v1611 = vld [vmem:[%s407 + $0xc8] sm:$0xff]
        %v1612 = vld [vmem:[%s407 + $0xd0] sm:$0xff]
        %v1613 = vld [vmem:[%s407 + $0xe8] sm:$0xff]
        %v1614 = vld [vmem:[%s407 + $0xf0] sm:$0xff]
        %v1615 = vld [vmem:[%s407 + $0x108] sm:$0xff]
        %v1616 = vld [vmem:[%s407 + $0x110] sm:$0xff]
        %v1617 = vld [vmem:[%s407 + $0x128] sm:$0xff]
        %v1618 = vld [vmem:[%s407 + $0x130] sm:$0xff]
        %v1619 = vld [vmem:[%s407 + $0x148] sm:$0xff]
        %v1620 = vld [vmem:[%s407 + $0x150] sm:$0xff]
        %v1621 = vld [vmem:[%s407 + $0x168] sm:$0xff]
        %v1622 = vld [vmem:[%s407 + $0x170] sm:$0xff]
        %v1623 = vld [vmem:[%s407 + $0x188] sm:$0xff]
        %v1624 = vld [vmem:[%s407 + $0x190] sm:$0xff]
        %v1625 = vld [vmem:[%s407 + $0x1a8] sm:$0xff]
        %v1626 = vld [vmem:[%s407 + $0x1b0] sm:$0xff]
        %v1627 = vld [vmem:[%s407 + $0x1c8] sm:$0xff]
        %v1628 = vld [vmem:[%s407 + $0x1d0] sm:$0xff]
        %v1629 = vld [vmem:[%s407 + $0x1e8] sm:$0xff]
        %v1630 = vld [vmem:[%s407 + $0x1f0] sm:$0xff]
        %s1631 = scalar_lea.vmem %s3, 512
        %v1632 = vld [vmem:[%s1631] sm:$0xff]
        %v1633 = vld [vmem:[%s1631 + $0x8] sm:$0xff]
        %v1634 = vld [vmem:[%s1631 + $0x10] sm:$0xff]
        %v1635 = vld [vmem:[%s1631 + $0x18] sm:$0xff]
        %v1636 = vld [vmem:[%s1631 + $0x20] sm:$0xff]
        %v1637 = vld [vmem:[%s1631 + $0x28] sm:$0xff]
        %v1638 = vld [vmem:[%s1631 + $0x30] sm:$0xff]
        %v1639 = vld [vmem:[%s1631 + $0x38] sm:$0xff]
        %v1640 = vld [vmem:[%s1631 + $0x40] sm:$0xff]
        %v1641 = vld [vmem:[%s1631 + $0x48] sm:$0xff]
        %v1642 = vld [vmem:[%s1631 + $0x50] sm:$0xff]
        %v1643 = vld [vmem:[%s1631 + $0x58] sm:$0xff]
        %v1644 = vld [vmem:[%s1631 + $0x60] sm:$0xff]
        %v1645 = vld [vmem:[%s1631 + $0x68] sm:$0xff]
        %v1646 = vld [vmem:[%s1631 + $0x70] sm:$0xff]
        %v1647 = vld [vmem:[%s1631 + $0x78] sm:$0xff]
        %1648 = vmatprep.subr.mxu0 0.0
        %1649 = vmatpush1.msra.mxu0 %v1632
        %1650 = vmatprep.subr.mxu0 0.0
        %1651 = vmatpush1.msra.mxu0 %v1633
        %1652 = vmatprep.subr.mxu0 0.0
        %1653 = vmatpush1.msra.mxu0 %v1634
        %1654 = vmatprep.subr.mxu0 0.0
        %1655 = vmatpush1.msra.mxu0 %v1635
        %1656 = vmatprep.subr.mxu0 0.0
        %1657 = vmatpush1.msra.mxu0 %v1636
        %1658 = vmatprep.subr.mxu0 0.0
        %1659 = vmatpush1.msra.mxu0 %v1637
        %1660 = vmatprep.subr.mxu0 0.0
        %1661 = vmatpush1.msra.mxu0 %v1638
        %1662 = vmatprep.subr.mxu0 0.0
        %1663 = vmatpush1.msra.mxu0 %v1639
        %1664 = vmatprep.subr.mxu0 0.0
        %1665 = vmatpush1.msra.mxu0 %v1640
        %1666 = vmatprep.subr.mxu0 0.0
        %1667 = vmatpush1.msra.mxu0 %v1641
        %1668 = vmatprep.subr.mxu0 0.0
        %1669 = vmatpush1.msra.mxu0 %v1642
        %1670 = vmatprep.subr.mxu0 0.0
        %1671 = vmatpush1.msra.mxu0 %v1643
        %1672 = vmatprep.subr.mxu0 0.0
        %1673 = vmatpush1.msra.mxu0 %v1644
        %1674 = vmatprep.subr.mxu0 0.0
        %1675 = vmatpush1.msra.mxu0 %v1645
        %1676 = vmatprep.subr.mxu0 0.0
        %1677 = vmatpush1.msra.mxu0 %v1646
        %1678 = vmatprep.subr.mxu0 0.0
        %1679 = vmatpush1.msra.mxu0 %v1647
        %1680 = vmatprep.subr.mxu0 0.0
        %1681 = vmatpush1.msra.mxu0 0.0
        %1682 = vmatprep.subr.mxu0 0.0
        %1683 = vmatpush1.msra.mxu0 0.0
        %1684 = vmatprep.subr.mxu0 0.0
        %1685 = vmatpush1.msra.mxu0 0.0
        %1686 = vmatprep.subr.mxu0 0.0
        %1687 = vmatpush1.msra.mxu0 0.0
        %1688 = vmatprep.subr.mxu0 0.0
        %1689 = vmatpush1.msra.mxu0 0.0
        %1690 = vmatprep.subr.mxu0 0.0
        %1691 = vmatpush1.msra.mxu0 0.0
        %1692 = vmatprep.subr.mxu0 0.0
        %1693 = vmatpush1.msra.mxu0 0.0
        %1694 = vmatprep.subr.mxu0 0.0
        %1695 = vmatpush1.msra.mxu0 0.0
        %1696 = vmatprep.subr.mxu0 0.0
        %1697 = vmatpush1.msra.mxu0 0.0
        %1698 = vmatprep.subr.mxu0 0.0
        %1699 = vmatpush1.msra.mxu0 0.0
        %1700 = vmatprep.subr.mxu0 0.0
        %1701 = vmatpush1.msra.mxu0 0.0
        %1702 = vmatprep.subr.mxu0 0.0
        %1703 = vmatpush1.msra.mxu0 0.0
        %1704 = vmatprep.subr.mxu0 0.0
        %1705 = vmatpush1.msra.mxu0 0.0
        %1706 = vmatprep.subr.mxu0 0.0
        %1707 = vmatpush1.msra.mxu0 0.0
        %1708 = vmatprep.subr.mxu0 0.0
        %1709 = vmatpush1.msra.mxu0 0.0
        %1710 = vmatprep.subr.mxu0 0.0
        %1711 = vmatpush1.msra.mxu0 0.0
        %1712 = vmatprep.mubr.f32.mxu0 0.0
        %1713 = vmatmul.mubr.f32.gmra.mrb[0].mxu0 %v1599
        %v1714 = vpop.f32.mrb[0].mxu0
        %v1715 = vadd.f32 0.0, %v1714
        %v1716 = vpop.f32.mrb[0].mxu0
        %1717 = vmatprep.mubr.f32.mxu0 0.0
        %1718 = vmatmul.mubr.f32.gmra.mrb[0].mxu0 %v1600
        %v1719 = vpop.f32.mrb[0].mxu0
        %v1720 = vadd.f32 0.0, %v1719
        %v1721 = vpop.f32.mrb[0].mxu0
        %1722 = vmatprep.mubr.f32.mxu0 0.0
        %1723 = vmatmul.mubr.f32.gmra.mrb[0].mxu0 %v1601
        %v1724 = vpop.f32.mrb[0].mxu0
        %v1725 = vadd.f32 0.0, %v1724
        %v1726 = vpop.f32.mrb[0].mxu0
        %1727 = vmatprep.mubr.f32.mxu0 0.0
        %1728 = vmatmul.mubr.f32.gmra.mrb[0].mxu0 %v1602
        %v1729 = vpop.f32.mrb[0].mxu0
        %v1730 = vadd.f32 0.0, %v1729
        %v1731 = vpop.f32.mrb[0].mxu0
        %1732 = vmatprep.mubr.f32.mxu0 0.0
        %1733 = vmatmul.mubr.f32.gmra.mrb[0].mxu0 %v1603
        %v1734 = vpop.f32.mrb[0].mxu0
        %v1735 = vadd.f32 0.0, %v1734
        %v1736 = vpop.f32.mrb[0].mxu0
        %1737 = vmatprep.mubr.f32.mxu0 0.0
        %1738 = vmatmul.mubr.f32.gmra.mrb[0].mxu0 %v1604
        %v1739 = vpop.f32.mrb[0].mxu0
        %v1740 = vadd.f32 0.0, %v1739
        %v1741 = vpop.f32.mrb[0].mxu0
        %1742 = vmatprep.mubr.f32.mxu0 0.0
        %1743 = vmatmul.mubr.f32.gmra.mrb[0].mxu0 %v1605
        %v1744 = vpop.f32.mrb[0].mxu0
        %v1745 = vadd.f32 0.0, %v1744
        %v1746 = vpop.f32.mrb[0].mxu0
        %1747 = vmatprep.mubr.f32.mxu0 0.0
        %1748 = vmatmul.mubr.f32.gmra.mrb[0].mxu0 %v1606
        %v1749 = vpop.f32.mrb[0].mxu0
        %v1750 = vadd.f32 0.0, %v1749
        %v1751 = vpop.f32.mrb[0].mxu0
        %1752 = vmatprep.mubr.f32.mxu0 0.0
        %1753 = vmatmul.mubr.f32.gmra.mrb[0].mxu0 %v1607
        %v1754 = vpop.f32.mrb[0].mxu0
        %v1755 = vadd.f32 0.0, %v1754
        %v1756 = vpop.f32.mrb[0].mxu0
        %1757 = vmatprep.mubr.f32.mxu0 0.0
        %1758 = vmatmul.mubr.f32.gmra.mrb[0].mxu0 %v1608
        %v1759 = vpop.f32.mrb[0].mxu0
        %v1760 = vadd.f32 0.0, %v1759
        %v1761 = vpop.f32.mrb[0].mxu0
        %1762 = vmatprep.mubr.f32.mxu0 0.0
        %1763 = vmatmul.mubr.f32.gmra.mrb[0].mxu0 %v1609
        %v1764 = vpop.f32.mrb[0].mxu0
        %v1765 = vadd.f32 0.0, %v1764
        %v1766 = vpop.f32.mrb[0].mxu0
        %1767 = vmatprep.mubr.f32.mxu0 0.0
        %1768 = vmatmul.mubr.f32.gmra.mrb[0].mxu0 %v1610
        %v1769 = vpop.f32.mrb[0].mxu0
        %v1770 = vadd.f32 0.0, %v1769
        %v1771 = vpop.f32.mrb[0].mxu0
        %1772 = vmatprep.mubr.f32.mxu0 0.0
        %1773 = vmatmul.mubr.f32.gmra.mrb[0].mxu0 %v1611
        %v1774 = vpop.f32.mrb[0].mxu0
        %v1775 = vadd.f32 0.0, %v1774
        %v1776 = vpop.f32.mrb[0].mxu0
        %1777 = vmatprep.mubr.f32.mxu0 0.0
        %1778 = vmatmul.mubr.f32.gmra.mrb[0].mxu0 %v1612
        %v1779 = vpop.f32.mrb[0].mxu0
        %v1780 = vadd.f32 0.0, %v1779
        %v1781 = vpop.f32.mrb[0].mxu0
        %1782 = vmatprep.mubr.f32.mxu0 0.0
        %1783 = vmatmul.mubr.f32.gmra.mrb[0].mxu0 %v1613
        %v1784 = vpop.f32.mrb[0].mxu0
        %v1785 = vadd.f32 0.0, %v1784
        %v1786 = vpop.f32.mrb[0].mxu0
        %1787 = vmatprep.mubr.f32.mxu0 0.0
        %1788 = vmatmul.mubr.f32.gmra.mrb[0].mxu0 %v1614
        %v1789 = vpop.f32.mrb[0].mxu0
        %v1790 = vadd.f32 0.0, %v1789
        %v1791 = vpop.f32.mrb[0].mxu0
        %1792 = vmatprep.mubr.f32.mxu0 0.0
        %1793 = vmatmul.mubr.f32.gmra.mrb[0].mxu0 %v1615
        %v1794 = vpop.f32.mrb[0].mxu0
        %v1795 = vadd.f32 0.0, %v1794
        %v1796 = vpop.f32.mrb[0].mxu0
        %1797 = vmatprep.mubr.f32.mxu0 0.0
        %1798 = vmatmul.mubr.f32.gmra.mrb[0].mxu0 %v1616
        %v1799 = vpop.f32.mrb[0].mxu0
        %v1800 = vadd.f32 0.0, %v1799
        %v1801 = vpop.f32.mrb[0].mxu0
        %1802 = vmatprep.mubr.f32.mxu0 0.0
        %1803 = vmatmul.mubr.f32.gmra.mrb[0].mxu0 %v1617
        %v1804 = vpop.f32.mrb[0].mxu0
        %v1805 = vadd.f32 0.0, %v1804
        %v1806 = vpop.f32.mrb[0].mxu0
        %1807 = vmatprep.mubr.f32.mxu0 0.0
        %1808 = vmatmul.mubr.f32.gmra.mrb[0].mxu0 %v1618
        %v1809 = vpop.f32.mrb[0].mxu0
        %v1810 = vadd.f32 0.0, %v1809
        %v1811 = vpop.f32.mrb[0].mxu0
        %1812 = vmatprep.mubr.f32.mxu0 0.0
        %1813 = vmatmul.mubr.f32.gmra.mrb[0].mxu0 %v1619
        %v1814 = vpop.f32.mrb[0].mxu0
        %v1815 = vadd.f32 0.0, %v1814
        %v1816 = vpop.f32.mrb[0].mxu0
        %1817 = vmatprep.mubr.f32.mxu0 0.0
        %1818 = vmatmul.mubr.f32.gmra.mrb[0].mxu0 %v1620
        %v1819 = vpop.f32.mrb[0].mxu0
        %v1820 = vadd.f32 0.0, %v1819
        %v1821 = vpop.f32.mrb[0].mxu0
        %1822 = vmatprep.mubr.f32.mxu0 0.0
        %1823 = vmatmul.mubr.f32.gmra.mrb[0].mxu0 %v1621
        %v1824 = vpop.f32.mrb[0].mxu0
        %v1825 = vadd.f32 0.0, %v1824
        %v1826 = vpop.f32.mrb[0].mxu0
        %1827 = vmatprep.mubr.f32.mxu0 0.0
        %1828 = vmatmul.mubr.f32.gmra.mrb[0].mxu0 %v1622
        %v1829 = vpop.f32.mrb[0].mxu0
        %v1830 = vadd.f32 0.0, %v1829
        %v1831 = vpop.f32.mrb[0].mxu0
        %1832 = vmatprep.mubr.f32.mxu0 0.0
        %1833 = vmatmul.mubr.f32.gmra.mrb[0].mxu0 %v1623
        %v1834 = vpop.f32.mrb[0].mxu0
        %v1835 = vadd.f32 0.0, %v1834
        %v1836 = vpop.f32.mrb[0].mxu0
        %1837 = vmatprep.mubr.f32.mxu0 0.0
        %1838 = vmatmul.mubr.f32.gmra.mrb[0].mxu0 %v1624
        %v1839 = vpop.f32.mrb[0].mxu0
        %v1840 = vadd.f32 0.0, %v1839
        %v1841 = vpop.f32.mrb[0].mxu0
        %1842 = vmatprep.mubr.f32.mxu0 0.0
        %1843 = vmatmul.mubr.f32.gmra.mrb[0].mxu0 %v1625
        %v1844 = vpop.f32.mrb[0].mxu0
        %v1845 = vadd.f32 0.0, %v1844
        %v1846 = vpop.f32.mrb[0].mxu0
        %1847 = vmatprep.mubr.f32.mxu0 0.0
        %1848 = vmatmul.mubr.f32.gmra.mrb[0].mxu0 %v1626
        %v1849 = vpop.f32.mrb[0].mxu0
        %v1850 = vadd.f32 0.0, %v1849
        %v1851 = vpop.f32.mrb[0].mxu0
        %1852 = vmatprep.mubr.f32.mxu0 0.0
        %1853 = vmatmul.mubr.f32.gmra.mrb[0].mxu0 %v1627
        %v1854 = vpop.f32.mrb[0].mxu0
        %v1855 = vadd.f32 0.0, %v1854
        %v1856 = vpop.f32.mrb[0].mxu0
        %1857 = vmatprep.mubr.f32.mxu0 0.0
        %1858 = vmatmul.mubr.f32.gmra.mrb[0].mxu0 %v1628
        %v1859 = vpop.f32.mrb[0].mxu0
        %v1860 = vadd.f32 0.0, %v1859
        %v1861 = vpop.f32.mrb[0].mxu0
        %1862 = vmatprep.mubr.f32.mxu0 0.0
        %1863 = vmatmul.mubr.f32.gmra.mrb[0].mxu0 %v1629
        %v1864 = vpop.f32.mrb[0].mxu0
        %v1865 = vadd.f32 0.0, %v1864
        %v1866 = vpop.f32.mrb[0].mxu0
        %1867 = vmatprep.mubr.f32.mxu0 0.0
        %1868 = vmatmul.mubr.f32.gmra.mrb[0].mxu0 %v1630
        %v1869 = vpop.f32.mrb[0].mxu0
        %v1870 = vadd.f32 0.0, %v1869
        %v1871 = vpop.f32.mrb[0].mxu0
        %1872 = vdwg.mxu0
        %v1873 = vadd.f32 %v1567, %v1715
        %v1874 = vadd.f32 %v1568, %v1720
        %v1875 = vadd.f32 %v1569, %v1725
        %v1876 = vadd.f32 %v1570, %v1730
        %v1877 = vadd.f32 %v1571, %v1735
        %v1878 = vadd.f32 %v1572, %v1740
        %v1879 = vadd.f32 %v1573, %v1745
        %v1880 = vadd.f32 %v1574, %v1750
        %v1881 = vadd.f32 %v1575, %v1755
        %v1882 = vadd.f32 %v1576, %v1760
        %v1883 = vadd.f32 %v1577, %v1765
        %v1884 = vadd.f32 %v1578, %v1770
        %v1885 = vadd.f32 %v1579, %v1775
        %v1886 = vadd.f32 %v1580, %v1780
        %v1887 = vadd.f32 %v1581, %v1785
        %v1888 = vadd.f32 %v1582, %v1790
        %v1889 = vadd.f32 %v1583, %v1795
        %v1890 = vadd.f32 %v1584, %v1800
        %v1891 = vadd.f32 %v1585, %v1805
        %v1892 = vadd.f32 %v1586, %v1810
        %v1893 = vadd.f32 %v1587, %v1815
        %v1894 = vadd.f32 %v1588, %v1820
        %v1895 = vadd.f32 %v1589, %v1825
        %v1896 = vadd.f32 %v1590, %v1830
        %v1897 = vadd.f32 %v1591, %v1835
        %v1898 = vadd.f32 %v1592, %v1840
        %v1899 = vadd.f32 %v1593, %v1845
        %v1900 = vadd.f32 %v1594, %v1850
        %v1901 = vadd.f32 %v1595, %v1855
        %v1902 = vadd.f32 %v1596, %v1860
        %v1903 = vadd.f32 %v1597, %v1865
        %v1904 = vadd.f32 %v1598, %v1870
        %v1905 = vld [vmem:[%s407 + $0x9] sm:$0xff]
        %v1906 = vld [vmem:[%s407 + $0x11] sm:$0xff]
        %v1907 = vld [vmem:[%s407 + $0x29] sm:$0xff]
        %v1908 = vld [vmem:[%s407 + $0x31] sm:$0xff]
        %v1909 = vld [vmem:[%s407 + $0x49] sm:$0xff]
        %v1910 = vld [vmem:[%s407 + $0x51] sm:$0xff]
        %v1911 = vld [vmem:[%s407 + $0x69] sm:$0xff]
        %v1912 = vld [vmem:[%s407 + $0x71] sm:$0xff]
        %v1913 = vld [vmem:[%s407 + $0x89] sm:$0xff]
        %v1914 = vld [vmem:[%s407 + $0x91] sm:$0xff]
        %v1915 = vld [vmem:[%s407 + $0xa9] sm:$0xff]
        %v1916 = vld [vmem:[%s407 + $0xb1] sm:$0xff]
        %v1917 = vld [vmem:[%s407 + $0xc9] sm:$0xff]
        %v1918 = vld [vmem:[%s407 + $0xd1] sm:$0xff]
        %v1919 = vld [vmem:[%s407 + $0xe9] sm:$0xff]
        %v1920 = vld [vmem:[%s407 + $0xf1] sm:$0xff]
        %v1921 = vld [vmem:[%s407 + $0x109] sm:$0xff]
        %v1922 = vld [vmem:[%s407 + $0x111] sm:$0xff]
        %v1923 = vld [vmem:[%s407 + $0x129] sm:$0xff]
        %v1924 = vld [vmem:[%s407 + $0x131] sm:$0xff]
        %v1925 = vld [vmem:[%s407 + $0x149] sm:$0xff]
        %v1926 = vld [vmem:[%s407 + $0x151] sm:$0xff]
        %v1927 = vld [vmem:[%s407 + $0x169] sm:$0xff]
        %v1928 = vld [vmem:[%s407 + $0x171] sm:$0xff]
        %v1929 = vld [vmem:[%s407 + $0x189] sm:$0xff]
        %v1930 = vld [vmem:[%s407 + $0x191] sm:$0xff]
        %v1931 = vld [vmem:[%s407 + $0x1a9] sm:$0xff]
        %v1932 = vld [vmem:[%s407 + $0x1b1] sm:$0xff]
        %v1933 = vld [vmem:[%s407 + $0x1c9] sm:$0xff]
        %v1934 = vld [vmem:[%s407 + $0x1d1] sm:$0xff]
        %v1935 = vld [vmem:[%s407 + $0x1e9] sm:$0xff]
        %v1936 = vld [vmem:[%s407 + $0x1f1] sm:$0xff]
        %s1937 = scalar_lea.vmem %s3, 640
        %v1938 = vld [vmem:[%s1937] sm:$0xff]
        %v1939 = vld [vmem:[%s1937 + $0x8] sm:$0xff]
        %v1940 = vld [vmem:[%s1937 + $0x10] sm:$0xff]
        %v1941 = vld [vmem:[%s1937 + $0x18] sm:$0xff]
        %v1942 = vld [vmem:[%s1937 + $0x20] sm:$0xff]
        %v1943 = vld [vmem:[%s1937 + $0x28] sm:$0xff]
        %v1944 = vld [vmem:[%s1937 + $0x30] sm:$0xff]
        %v1945 = vld [vmem:[%s1937 + $0x38] sm:$0xff]
        %v1946 = vld [vmem:[%s1937 + $0x40] sm:$0xff]
        %v1947 = vld [vmem:[%s1937 + $0x48] sm:$0xff]
        %v1948 = vld [vmem:[%s1937 + $0x50] sm:$0xff]
        %v1949 = vld [vmem:[%s1937 + $0x58] sm:$0xff]
        %v1950 = vld [vmem:[%s1937 + $0x60] sm:$0xff]
        %v1951 = vld [vmem:[%s1937 + $0x68] sm:$0xff]
        %v1952 = vld [vmem:[%s1937 + $0x70] sm:$0xff]
        %v1953 = vld [vmem:[%s1937 + $0x78] sm:$0xff]
        %1954 = vmatprep.subr.mxu0 0.0
        %1955 = vmatpush1.msra.mxu0 %v1938
        %1956 = vmatprep.subr.mxu0 0.0
        %1957 = vmatpush1.msra.mxu0 %v1939
        %1958 = vmatprep.subr.mxu0 0.0
        %1959 = vmatpush1.msra.mxu0 %v1940
        %1960 = vmatprep.subr.mxu0 0.0
        %1961 = vmatpush1.msra.mxu0 %v1941
        %1962 = vmatprep.subr.mxu0 0.0
        %1963 = vmatpush1.msra.mxu0 %v1942
        %1964 = vmatprep.subr.mxu0 0.0
        %1965 = vmatpush1.msra.mxu0 %v1943
        %1966 = vmatprep.subr.mxu0 0.0
        %1967 = vmatpush1.msra.mxu0 %v1944
        %1968 = vmatprep.subr.mxu0 0.0
        %1969 = vmatpush1.msra.mxu0 %v1945
        %1970 = vmatprep.subr.mxu0 0.0
        %1971 = vmatpush1.msra.mxu0 %v1946
        %1972 = vmatprep.subr.mxu0 0.0
        %1973 = vmatpush1.msra.mxu0 %v1947
        %1974 = vmatprep.subr.mxu0 0.0
        %1975 = vmatpush1.msra.mxu0 %v1948
        %1976 = vmatprep.subr.mxu0 0.0
        %1977 = vmatpush1.msra.mxu0 %v1949
        %1978 = vmatprep.subr.mxu0 0.0
        %1979 = vmatpush1.msra.mxu0 %v1950
        %1980 = vmatprep.subr.mxu0 0.0
        %1981 = vmatpush1.msra.mxu0 %v1951
        %1982 = vmatprep.subr.mxu0 0.0
        %1983 = vmatpush1.msra.mxu0 %v1952
        %1984 = vmatprep.subr.mxu0 0.0
        %1985 = vmatpush1.msra.mxu0 %v1953
        %1986 = vmatprep.subr.mxu0 0.0
        %1987 = vmatpush1.msra.mxu0 0.0
        %1988 = vmatprep.subr.mxu0 0.0
        %1989 = vmatpush1.msra.mxu0 0.0
        %1990 = vmatprep.subr.mxu0 0.0
        %1991 = vmatpush1.msra.mxu0 0.0
        %1992 = vmatprep.subr.mxu0 0.0
        %1993 = vmatpush1.msra.mxu0 0.0
        %1994 = vmatprep.subr.mxu0 0.0
        %1995 = vmatpush1.msra.mxu0 0.0
        %1996 = vmatprep.subr.mxu0 0.0
        %1997 = vmatpush1.msra.mxu0 0.0
        %1998 = vmatprep.subr.mxu0 0.0
        %1999 = vmatpush1.msra.mxu0 0.0
        %2000 = vmatprep.subr.mxu0 0.0
        %2001 = vmatpush1.msra.mxu0 0.0
        %2002 = vmatprep.subr.mxu0 0.0
        %2003 = vmatpush1.msra.mxu0 0.0
        %2004 = vmatprep.subr.mxu0 0.0
        %2005 = vmatpush1.msra.mxu0 0.0
        %2006 = vmatprep.subr.mxu0 0.0
        %2007 = vmatpush1.msra.mxu0 0.0
        %2008 = vmatprep.subr.mxu0 0.0
        %2009 = vmatpush1.msra.mxu0 0.0
        %2010 = vmatprep.subr.mxu0 0.0
        %2011 = vmatpush1.msra.mxu0 0.0
        %2012 = vmatprep.subr.mxu0 0.0
        %2013 = vmatpush1.msra.mxu0 0.0
        %2014 = vmatprep.subr.mxu0 0.0
        %2015 = vmatpush1.msra.mxu0 0.0
        %2016 = vmatprep.subr.mxu0 0.0
        %2017 = vmatpush1.msra.mxu0 0.0
        %2018 = vmatprep.mubr.f32.mxu0 0.0
        %2019 = vmatmul.mubr.f32.gmra.mrb[0].mxu0 %v1905
        %v2020 = vpop.f32.mrb[0].mxu0
        %v2021 = vadd.f32 0.0, %v2020
        %v2022 = vpop.f32.mrb[0].mxu0
        %2023 = vmatprep.mubr.f32.mxu0 0.0
        %2024 = vmatmul.mubr.f32.gmra.mrb[0].mxu0 %v1906
        %v2025 = vpop.f32.mrb[0].mxu0
        %v2026 = vadd.f32 0.0, %v2025
        %v2027 = vpop.f32.mrb[0].mxu0
        %2028 = vmatprep.mubr.f32.mxu0 0.0
        %2029 = vmatmul.mubr.f32.gmra.mrb[0].mxu0 %v1907
        %v2030 = vpop.f32.mrb[0].mxu0
        %v2031 = vadd.f32 0.0, %v2030
        %v2032 = vpop.f32.mrb[0].mxu0
        %2033 = vmatprep.mubr.f32.mxu0 0.0
        %2034 = vmatmul.mubr.f32.gmra.mrb[0].mxu0 %v1908
        %v2035 = vpop.f32.mrb[0].mxu0
        %v2036 = vadd.f32 0.0, %v2035
        %v2037 = vpop.f32.mrb[0].mxu0
        %2038 = vmatprep.mubr.f32.mxu0 0.0
        %2039 = vmatmul.mubr.f32.gmra.mrb[0].mxu0 %v1909
        %v2040 = vpop.f32.mrb[0].mxu0
        %v2041 = vadd.f32 0.0, %v2040
        %v2042 = vpop.f32.mrb[0].mxu0
        %2043 = vmatprep.mubr.f32.mxu0 0.0
        %2044 = vmatmul.mubr.f32.gmra.mrb[0].mxu0 %v1910
        %v2045 = vpop.f32.mrb[0].mxu0
        %v2046 = vadd.f32 0.0, %v2045
        %v2047 = vpop.f32.mrb[0].mxu0
        %2048 = vmatprep.mubr.f32.mxu0 0.0
        %2049 = vmatmul.mubr.f32.gmra.mrb[0].mxu0 %v1911
        %v2050 = vpop.f32.mrb[0].mxu0
        %v2051 = vadd.f32 0.0, %v2050
        %v2052 = vpop.f32.mrb[0].mxu0
        %2053 = vmatprep.mubr.f32.mxu0 0.0
        %2054 = vmatmul.mubr.f32.gmra.mrb[0].mxu0 %v1912
        %v2055 = vpop.f32.mrb[0].mxu0
        %v2056 = vadd.f32 0.0, %v2055
        %v2057 = vpop.f32.mrb[0].mxu0
        %2058 = vmatprep.mubr.f32.mxu0 0.0
        %2059 = vmatmul.mubr.f32.gmra.mrb[0].mxu0 %v1913
        %v2060 = vpop.f32.mrb[0].mxu0
        %v2061 = vadd.f32 0.0, %v2060
        %v2062 = vpop.f32.mrb[0].mxu0
        %2063 = vmatprep.mubr.f32.mxu0 0.0
        %2064 = vmatmul.mubr.f32.gmra.mrb[0].mxu0 %v1914
        %v2065 = vpop.f32.mrb[0].mxu0
        %v2066 = vadd.f32 0.0, %v2065
        %v2067 = vpop.f32.mrb[0].mxu0
        %2068 = vmatprep.mubr.f32.mxu0 0.0
        %2069 = vmatmul.mubr.f32.gmra.mrb[0].mxu0 %v1915
        %v2070 = vpop.f32.mrb[0].mxu0
        %v2071 = vadd.f32 0.0, %v2070
        %v2072 = vpop.f32.mrb[0].mxu0
        %2073 = vmatprep.mubr.f32.mxu0 0.0
        %2074 = vmatmul.mubr.f32.gmra.mrb[0].mxu0 %v1916
        %v2075 = vpop.f32.mrb[0].mxu0
        %v2076 = vadd.f32 0.0, %v2075
        %v2077 = vpop.f32.mrb[0].mxu0
        %2078 = vmatprep.mubr.f32.mxu0 0.0
        %2079 = vmatmul.mubr.f32.gmra.mrb[0].mxu0 %v1917
        %v2080 = vpop.f32.mrb[0].mxu0
        %v2081 = vadd.f32 0.0, %v2080
        %v2082 = vpop.f32.mrb[0].mxu0
        %2083 = vmatprep.mubr.f32.mxu0 0.0
        %2084 = vmatmul.mubr.f32.gmra.mrb[0].mxu0 %v1918
        %v2085 = vpop.f32.mrb[0].mxu0
        %v2086 = vadd.f32 0.0, %v2085
        %v2087 = vpop.f32.mrb[0].mxu0
        %2088 = vmatprep.mubr.f32.mxu0 0.0
        %2089 = vmatmul.mubr.f32.gmra.mrb[0].mxu0 %v1919
        %v2090 = vpop.f32.mrb[0].mxu0
        %v2091 = vadd.f32 0.0, %v2090
        %v2092 = vpop.f32.mrb[0].mxu0
        %2093 = vmatprep.mubr.f32.mxu0 0.0
        %2094 = vmatmul.mubr.f32.gmra.mrb[0].mxu0 %v1920
        %v2095 = vpop.f32.mrb[0].mxu0
        %v2096 = vadd.f32 0.0, %v2095
        %v2097 = vpop.f32.mrb[0].mxu0
        %2098 = vmatprep.mubr.f32.mxu0 0.0
        %2099 = vmatmul.mubr.f32.gmra.mrb[0].mxu0 %v1921
        %v2100 = vpop.f32.mrb[0].mxu0
        %v2101 = vadd.f32 0.0, %v2100
        %v2102 = vpop.f32.mrb[0].mxu0
        %2103 = vmatprep.mubr.f32.mxu0 0.0
        %2104 = vmatmul.mubr.f32.gmra.mrb[0].mxu0 %v1922
        %v2105 = vpop.f32.mrb[0].mxu0
        %v2106 = vadd.f32 0.0, %v2105
        %v2107 = vpop.f32.mrb[0].mxu0
        %2108 = vmatprep.mubr.f32.mxu0 0.0
        %2109 = vmatmul.mubr.f32.gmra.mrb[0].mxu0 %v1923
        %v2110 = vpop.f32.mrb[0].mxu0
        %v2111 = vadd.f32 0.0, %v2110
        %v2112 = vpop.f32.mrb[0].mxu0
        %2113 = vmatprep.mubr.f32.mxu0 0.0
        %2114 = vmatmul.mubr.f32.gmra.mrb[0].mxu0 %v1924
        %v2115 = vpop.f32.mrb[0].mxu0
        %v2116 = vadd.f32 0.0, %v2115
        %v2117 = vpop.f32.mrb[0].mxu0
        %2118 = vmatprep.mubr.f32.mxu0 0.0
        %2119 = vmatmul.mubr.f32.gmra.mrb[0].mxu0 %v1925
        %v2120 = vpop.f32.mrb[0].mxu0
        %v2121 = vadd.f32 0.0, %v2120
        %v2122 = vpop.f32.mrb[0].mxu0
        %2123 = vmatprep.mubr.f32.mxu0 0.0
        %2124 = vmatmul.mubr.f32.gmra.mrb[0].mxu0 %v1926
        %v2125 = vpop.f32.mrb[0].mxu0
        %v2126 = vadd.f32 0.0, %v2125
        %v2127 = vpop.f32.mrb[0].mxu0
        %2128 = vmatprep.mubr.f32.mxu0 0.0
        %2129 = vmatmul.mubr.f32.gmra.mrb[0].mxu0 %v1927
        %v2130 = vpop.f32.mrb[0].mxu0
        %v2131 = vadd.f32 0.0, %v2130
        %v2132 = vpop.f32.mrb[0].mxu0
        %2133 = vmatprep.mubr.f32.mxu0 0.0
        %2134 = vmatmul.mubr.f32.gmra.mrb[0].mxu0 %v1928
        %v2135 = vpop.f32.mrb[0].mxu0
        %v2136 = vadd.f32 0.0, %v2135
        %v2137 = vpop.f32.mrb[0].mxu0
        %2138 = vmatprep.mubr.f32.mxu0 0.0
        %2139 = vmatmul.mubr.f32.gmra.mrb[0].mxu0 %v1929
        %v2140 = vpop.f32.mrb[0].mxu0
        %v2141 = vadd.f32 0.0, %v2140
        %v2142 = vpop.f32.mrb[0].mxu0
        %2143 = vmatprep.mubr.f32.mxu0 0.0
        %2144 = vmatmul.mubr.f32.gmra.mrb[0].mxu0 %v1930
        %v2145 = vpop.f32.mrb[0].mxu0
        %v2146 = vadd.f32 0.0, %v2145
        %v2147 = vpop.f32.mrb[0].mxu0
        %2148 = vmatprep.mubr.f32.mxu0 0.0
        %2149 = vmatmul.mubr.f32.gmra.mrb[0].mxu0 %v1931
        %v2150 = vpop.f32.mrb[0].mxu0
        %v2151 = vadd.f32 0.0, %v2150
        %v2152 = vpop.f32.mrb[0].mxu0
        %2153 = vmatprep.mubr.f32.mxu0 0.0
        %2154 = vmatmul.mubr.f32.gmra.mrb[0].mxu0 %v1932
        %v2155 = vpop.f32.mrb[0].mxu0
        %v2156 = vadd.f32 0.0, %v2155
        %v2157 = vpop.f32.mrb[0].mxu0
        %2158 = vmatprep.mubr.f32.mxu0 0.0
        %2159 = vmatmul.mubr.f32.gmra.mrb[0].mxu0 %v1933
        %v2160 = vpop.f32.mrb[0].mxu0
        %v2161 = vadd.f32 0.0, %v2160
        %v2162 = vpop.f32.mrb[0].mxu0
        %2163 = vmatprep.mubr.f32.mxu0 0.0
        %2164 = vmatmul.mubr.f32.gmra.mrb[0].mxu0 %v1934
        %v2165 = vpop.f32.mrb[0].mxu0
        %v2166 = vadd.f32 0.0, %v2165
        %v2167 = vpop.f32.mrb[0].mxu0
        %2168 = vmatprep.mubr.f32.mxu0 0.0
        %2169 = vmatmul.mubr.f32.gmra.mrb[0].mxu0 %v1935
        %v2170 = vpop.f32.mrb[0].mxu0
        %v2171 = vadd.f32 0.0, %v2170
        %v2172 = vpop.f32.mrb[0].mxu0
        %2173 = vmatprep.mubr.f32.mxu0 0.0
        %2174 = vmatmul.mubr.f32.gmra.mrb[0].mxu0 %v1936
        %v2175 = vpop.f32.mrb[0].mxu0
        %v2176 = vadd.f32 0.0, %v2175
        %v2177 = vpop.f32.mrb[0].mxu0
        %2178 = vdwg.mxu0
        %v2179 = vadd.f32 %v1873, %v2021
        %v2180 = vadd.f32 %v1874, %v2026
        %v2181 = vadd.f32 %v1875, %v2031
        %v2182 = vadd.f32 %v1876, %v2036
        %v2183 = vadd.f32 %v1877, %v2041
        %v2184 = vadd.f32 %v1878, %v2046
        %v2185 = vadd.f32 %v1879, %v2051
        %v2186 = vadd.f32 %v1880, %v2056
        %v2187 = vadd.f32 %v1881, %v2061
        %v2188 = vadd.f32 %v1882, %v2066
        %v2189 = vadd.f32 %v1883, %v2071
        %v2190 = vadd.f32 %v1884, %v2076
        %v2191 = vadd.f32 %v1885, %v2081
        %v2192 = vadd.f32 %v1886, %v2086
        %v2193 = vadd.f32 %v1887, %v2091
        %v2194 = vadd.f32 %v1888, %v2096
        %v2195 = vadd.f32 %v1889, %v2101
        %v2196 = vadd.f32 %v1890, %v2106
        %v2197 = vadd.f32 %v1891, %v2111
        %v2198 = vadd.f32 %v1892, %v2116
        %v2199 = vadd.f32 %v1893, %v2121
        %v2200 = vadd.f32 %v1894, %v2126
        %v2201 = vadd.f32 %v1895, %v2131
        %v2202 = vadd.f32 %v1896, %v2136
        %v2203 = vadd.f32 %v1897, %v2141
        %v2204 = vadd.f32 %v1898, %v2146
        %v2205 = vadd.f32 %v1899, %v2151
        %v2206 = vadd.f32 %v1900, %v2156
        %v2207 = vadd.f32 %v1901, %v2161
        %v2208 = vadd.f32 %v1902, %v2166
        %v2209 = vadd.f32 %v1903, %v2171
        %v2210 = vadd.f32 %v1904, %v2176
        %s2211 = scalar_lea.vmem [#allocation2], 64
        %v2212 = vld [vmem:[%s2211 + $0x7] sm:$0xff]
        %v2213 = vld [vmem:[%s2211 + $0xf] sm:$0xff]
        %v2214 = vld [vmem:[%s2211 + $0x27] sm:$0xff]
        %v2215 = vld [vmem:[%s2211 + $0x2f] sm:$0xff]
        %v2216 = vld [vmem:[%s2211 + $0x47] sm:$0xff]
        %v2217 = vld [vmem:[%s2211 + $0x4f] sm:$0xff]
        %v2218 = vld [vmem:[%s2211 + $0x67] sm:$0xff]
        %v2219 = vld [vmem:[%s2211 + $0x6f] sm:$0xff]
        %v2220 = vld [vmem:[%s2211 + $0x87] sm:$0xff]
        %v2221 = vld [vmem:[%s2211 + $0x8f] sm:$0xff]
        %v2222 = vld [vmem:[%s2211 + $0xa7] sm:$0xff]
        %v2223 = vld [vmem:[%s2211 + $0xaf] sm:$0xff]
        %v2224 = vld [vmem:[%s2211 + $0xc7] sm:$0xff]
        %v2225 = vld [vmem:[%s2211 + $0xcf] sm:$0xff]
        %v2226 = vld [vmem:[%s2211 + $0xe7] sm:$0xff]
        %v2227 = vld [vmem:[%s2211 + $0xef] sm:$0xff]
        %v2228 = vld [vmem:[%s2211 + $0x107] sm:$0xff]
        %v2229 = vld [vmem:[%s2211 + $0x10f] sm:$0xff]
        %v2230 = vld [vmem:[%s2211 + $0x127] sm:$0xff]
        %v2231 = vld [vmem:[%s2211 + $0x12f] sm:$0xff]
        %v2232 = vld [vmem:[%s2211 + $0x147] sm:$0xff]
        %v2233 = vld [vmem:[%s2211 + $0x14f] sm:$0xff]
        %v2234 = vld [vmem:[%s2211 + $0x167] sm:$0xff]
        %v2235 = vld [vmem:[%s2211 + $0x16f] sm:$0xff]
        %v2236 = vld [vmem:[%s2211 + $0x187] sm:$0xff]
        %v2237 = vld [vmem:[%s2211 + $0x18f] sm:$0xff]
        %v2238 = vld [vmem:[%s2211 + $0x1a7] sm:$0xff]
        %v2239 = vld [vmem:[%s2211 + $0x1af] sm:$0xff]
        %v2240 = vld [vmem:[%s2211 + $0x1c7] sm:$0xff]
        %v2241 = vld [vmem:[%s2211 + $0x1cf] sm:$0xff]
        %v2242 = vld [vmem:[%s2211 + $0x1e7] sm:$0xff]
        %v2243 = vld [vmem:[%s2211 + $0x1ef] sm:$0xff]
        %s2244 = scalar_lea.vmem %s3, 768
        %v2245 = vld [vmem:[%s2244] sm:$0xff]
        %v2246 = vld [vmem:[%s2244 + $0x8] sm:$0xff]
        %v2247 = vld [vmem:[%s2244 + $0x10] sm:$0xff]
        %v2248 = vld [vmem:[%s2244 + $0x18] sm:$0xff]
        %v2249 = vld [vmem:[%s2244 + $0x20] sm:$0xff]
        %v2250 = vld [vmem:[%s2244 + $0x28] sm:$0xff]
        %v2251 = vld [vmem:[%s2244 + $0x30] sm:$0xff]
        %v2252 = vld [vmem:[%s2244 + $0x38] sm:$0xff]
        %v2253 = vld [vmem:[%s2244 + $0x40] sm:$0xff]
        %v2254 = vld [vmem:[%s2244 + $0x48] sm:$0xff]
        %v2255 = vld [vmem:[%s2244 + $0x50] sm:$0xff]
        %v2256 = vld [vmem:[%s2244 + $0x58] sm:$0xff]
        %v2257 = vld [vmem:[%s2244 + $0x60] sm:$0xff]
        %v2258 = vld [vmem:[%s2244 + $0x68] sm:$0xff]
        %v2259 = vld [vmem:[%s2244 + $0x70] sm:$0xff]
        %v2260 = vld [vmem:[%s2244 + $0x78] sm:$0xff]
        %2261 = vmatprep.subr.mxu0 0.0
        %2262 = vmatpush1.msra.mxu0 %v2245
        %2263 = vmatprep.subr.mxu0 0.0
        %2264 = vmatpush1.msra.mxu0 %v2246
        %2265 = vmatprep.subr.mxu0 0.0
        %2266 = vmatpush1.msra.mxu0 %v2247
        %2267 = vmatprep.subr.mxu0 0.0
        %2268 = vmatpush1.msra.mxu0 %v2248
        %2269 = vmatprep.subr.mxu0 0.0
        %2270 = vmatpush1.msra.mxu0 %v2249
        %2271 = vmatprep.subr.mxu0 0.0
        %2272 = vmatpush1.msra.mxu0 %v2250
        %2273 = vmatprep.subr.mxu0 0.0
        %2274 = vmatpush1.msra.mxu0 %v2251
        %2275 = vmatprep.subr.mxu0 0.0
        %2276 = vmatpush1.msra.mxu0 %v2252
        %2277 = vmatprep.subr.mxu0 0.0
        %2278 = vmatpush1.msra.mxu0 %v2253
        %2279 = vmatprep.subr.mxu0 0.0
        %2280 = vmatpush1.msra.mxu0 %v2254
        %2281 = vmatprep.subr.mxu0 0.0
        %2282 = vmatpush1.msra.mxu0 %v2255
        %2283 = vmatprep.subr.mxu0 0.0
        %2284 = vmatpush1.msra.mxu0 %v2256
        %2285 = vmatprep.subr.mxu0 0.0
        %2286 = vmatpush1.msra.mxu0 %v2257
        %2287 = vmatprep.subr.mxu0 0.0
        %2288 = vmatpush1.msra.mxu0 %v2258
        %2289 = vmatprep.subr.mxu0 0.0
        %2290 = vmatpush1.msra.mxu0 %v2259
        %2291 = vmatprep.subr.mxu0 0.0
        %2292 = vmatpush1.msra.mxu0 %v2260
        %2293 = vmatprep.subr.mxu0 0.0
        %2294 = vmatpush1.msra.mxu0 0.0
        %2295 = vmatprep.subr.mxu0 0.0
        %2296 = vmatpush1.msra.mxu0 0.0
        %2297 = vmatprep.subr.mxu0 0.0
        %2298 = vmatpush1.msra.mxu0 0.0
        %2299 = vmatprep.subr.mxu0 0.0
        %2300 = vmatpush1.msra.mxu0 0.0
        %2301 = vmatprep.subr.mxu0 0.0
        %2302 = vmatpush1.msra.mxu0 0.0
        %2303 = vmatprep.subr.mxu0 0.0
        %2304 = vmatpush1.msra.mxu0 0.0
        %2305 = vmatprep.subr.mxu0 0.0
        %2306 = vmatpush1.msra.mxu0 0.0
        %2307 = vmatprep.subr.mxu0 0.0
        %2308 = vmatpush1.msra.mxu0 0.0
        %2309 = vmatprep.subr.mxu0 0.0
        %2310 = vmatpush1.msra.mxu0 0.0
        %2311 = vmatprep.subr.mxu0 0.0
        %2312 = vmatpush1.msra.mxu0 0.0
        %2313 = vmatprep.subr.mxu0 0.0
        %2314 = vmatpush1.msra.mxu0 0.0
        %2315 = vmatprep.subr.mxu0 0.0
        %2316 = vmatpush1.msra.mxu0 0.0
        %2317 = vmatprep.subr.mxu0 0.0
        %2318 = vmatpush1.msra.mxu0 0.0
        %2319 = vmatprep.subr.mxu0 0.0
        %2320 = vmatpush1.msra.mxu0 0.0
        %2321 = vmatprep.subr.mxu0 0.0
        %2322 = vmatpush1.msra.mxu0 0.0
        %2323 = vmatprep.subr.mxu0 0.0
        %2324 = vmatpush1.msra.mxu0 0.0
        %2325 = vmatprep.mubr.f32.mxu0 0.0
        %2326 = vmatmul.mubr.f32.gmra.mrb[0].mxu0 %v2212
        %v2327 = vpop.f32.mrb[0].mxu0
        %v2328 = vadd.f32 0.0, %v2327
        %v2329 = vpop.f32.mrb[0].mxu0
        %2330 = vmatprep.mubr.f32.mxu0 0.0
        %2331 = vmatmul.mubr.f32.gmra.mrb[0].mxu0 %v2213
        %v2332 = vpop.f32.mrb[0].mxu0
        %v2333 = vadd.f32 0.0, %v2332
        %v2334 = vpop.f32.mrb[0].mxu0
        %2335 = vmatprep.mubr.f32.mxu0 0.0
        %2336 = vmatmul.mubr.f32.gmra.mrb[0].mxu0 %v2214
        %v2337 = vpop.f32.mrb[0].mxu0
        %v2338 = vadd.f32 0.0, %v2337
        %v2339 = vpop.f32.mrb[0].mxu0
        %2340 = vmatprep.mubr.f32.mxu0 0.0
        %2341 = vmatmul.mubr.f32.gmra.mrb[0].mxu0 %v2215
        %v2342 = vpop.f32.mrb[0].mxu0
        %v2343 = vadd.f32 0.0, %v2342
        %v2344 = vpop.f32.mrb[0].mxu0
        %2345 = vmatprep.mubr.f32.mxu0 0.0
        %2346 = vmatmul.mubr.f32.gmra.mrb[0].mxu0 %v2216
        %v2347 = vpop.f32.mrb[0].mxu0
        %v2348 = vadd.f32 0.0, %v2347
        %v2349 = vpop.f32.mrb[0].mxu0
        %2350 = vmatprep.mubr.f32.mxu0 0.0
        %2351 = vmatmul.mubr.f32.gmra.mrb[0].mxu0 %v2217
        %v2352 = vpop.f32.mrb[0].mxu0
        %v2353 = vadd.f32 0.0, %v2352
        %v2354 = vpop.f32.mrb[0].mxu0
        %2355 = vmatprep.mubr.f32.mxu0 0.0
        %2356 = vmatmul.mubr.f32.gmra.mrb[0].mxu0 %v2218
        %v2357 = vpop.f32.mrb[0].mxu0
        %v2358 = vadd.f32 0.0, %v2357
        %v2359 = vpop.f32.mrb[0].mxu0
        %2360 = vmatprep.mubr.f32.mxu0 0.0
        %2361 = vmatmul.mubr.f32.gmra.mrb[0].mxu0 %v2219
        %v2362 = vpop.f32.mrb[0].mxu0
        %v2363 = vadd.f32 0.0, %v2362
        %v2364 = vpop.f32.mrb[0].mxu0
        %2365 = vmatprep.mubr.f32.mxu0 0.0
        %2366 = vmatmul.mubr.f32.gmra.mrb[0].mxu0 %v2220
        %v2367 = vpop.f32.mrb[0].mxu0
        %v2368 = vadd.f32 0.0, %v2367
        %v2369 = vpop.f32.mrb[0].mxu0
        %2370 = vmatprep.mubr.f32.mxu0 0.0
        %2371 = vmatmul.mubr.f32.gmra.mrb[0].mxu0 %v2221
        %v2372 = vpop.f32.mrb[0].mxu0
        %v2373 = vadd.f32 0.0, %v2372
        %v2374 = vpop.f32.mrb[0].mxu0
        %2375 = vmatprep.mubr.f32.mxu0 0.0
        %2376 = vmatmul.mubr.f32.gmra.mrb[0].mxu0 %v2222
        %v2377 = vpop.f32.mrb[0].mxu0
        %v2378 = vadd.f32 0.0, %v2377
        %v2379 = vpop.f32.mrb[0].mxu0
        %2380 = vmatprep.mubr.f32.mxu0 0.0
        %2381 = vmatmul.mubr.f32.gmra.mrb[0].mxu0 %v2223
        %v2382 = vpop.f32.mrb[0].mxu0
        %v2383 = vadd.f32 0.0, %v2382
        %v2384 = vpop.f32.mrb[0].mxu0
        %2385 = vmatprep.mubr.f32.mxu0 0.0
        %2386 = vmatmul.mubr.f32.gmra.mrb[0].mxu0 %v2224
        %v2387 = vpop.f32.mrb[0].mxu0
        %v2388 = vadd.f32 0.0, %v2387
        %v2389 = vpop.f32.mrb[0].mxu0
        %2390 = vmatprep.mubr.f32.mxu0 0.0
        %2391 = vmatmul.mubr.f32.gmra.mrb[0].mxu0 %v2225
        %v2392 = vpop.f32.mrb[0].mxu0
        %v2393 = vadd.f32 0.0, %v2392
        %v2394 = vpop.f32.mrb[0].mxu0
        %2395 = vmatprep.mubr.f32.mxu0 0.0
        %2396 = vmatmul.mubr.f32.gmra.mrb[0].mxu0 %v2226
        %v2397 = vpop.f32.mrb[0].mxu0
        %v2398 = vadd.f32 0.0, %v2397
        %v2399 = vpop.f32.mrb[0].mxu0
        %2400 = vmatprep.mubr.f32.mxu0 0.0
        %2401 = vmatmul.mubr.f32.gmra.mrb[0].mxu0 %v2227
        %v2402 = vpop.f32.mrb[0].mxu0
        %v2403 = vadd.f32 0.0, %v2402
        %v2404 = vpop.f32.mrb[0].mxu0
        %2405 = vmatprep.mubr.f32.mxu0 0.0
        %2406 = vmatmul.mubr.f32.gmra.mrb[0].mxu0 %v2228
        %v2407 = vpop.f32.mrb[0].mxu0
        %v2408 = vadd.f32 0.0, %v2407
        %v2409 = vpop.f32.mrb[0].mxu0
        %2410 = vmatprep.mubr.f32.mxu0 0.0
        %2411 = vmatmul.mubr.f32.gmra.mrb[0].mxu0 %v2229
        %v2412 = vpop.f32.mrb[0].mxu0
        %v2413 = vadd.f32 0.0, %v2412
        %v2414 = vpop.f32.mrb[0].mxu0
        %2415 = vmatprep.mubr.f32.mxu0 0.0
        %2416 = vmatmul.mubr.f32.gmra.mrb[0].mxu0 %v2230
        %v2417 = vpop.f32.mrb[0].mxu0
        %v2418 = vadd.f32 0.0, %v2417
        %v2419 = vpop.f32.mrb[0].mxu0
        %2420 = vmatprep.mubr.f32.mxu0 0.0
        %2421 = vmatmul.mubr.f32.gmra.mrb[0].mxu0 %v2231
        %v2422 = vpop.f32.mrb[0].mxu0
        %v2423 = vadd.f32 0.0, %v2422
        %v2424 = vpop.f32.mrb[0].mxu0
        %2425 = vmatprep.mubr.f32.mxu0 0.0
        %2426 = vmatmul.mubr.f32.gmra.mrb[0].mxu0 %v2232
        %v2427 = vpop.f32.mrb[0].mxu0
        %v2428 = vadd.f32 0.0, %v2427
        %v2429 = vpop.f32.mrb[0].mxu0
        %2430 = vmatprep.mubr.f32.mxu0 0.0
        %2431 = vmatmul.mubr.f32.gmra.mrb[0].mxu0 %v2233
        %v2432 = vpop.f32.mrb[0].mxu0
        %v2433 = vadd.f32 0.0, %v2432
        %v2434 = vpop.f32.mrb[0].mxu0
        %2435 = vmatprep.mubr.f32.mxu0 0.0
        %2436 = vmatmul.mubr.f32.gmra.mrb[0].mxu0 %v2234
        %v2437 = vpop.f32.mrb[0].mxu0
        %v2438 = vadd.f32 0.0, %v2437
        %v2439 = vpop.f32.mrb[0].mxu0
        %2440 = vmatprep.mubr.f32.mxu0 0.0
        %2441 = vmatmul.mubr.f32.gmra.mrb[0].mxu0 %v2235
        %v2442 = vpop.f32.mrb[0].mxu0
        %v2443 = vadd.f32 0.0, %v2442
        %v2444 = vpop.f32.mrb[0].mxu0
        %2445 = vmatprep.mubr.f32.mxu0 0.0
        %2446 = vmatmul.mubr.f32.gmra.mrb[0].mxu0 %v2236
        %v2447 = vpop.f32.mrb[0].mxu0
        %v2448 = vadd.f32 0.0, %v2447
        %v2449 = vpop.f32.mrb[0].mxu0
        %2450 = vmatprep.mubr.f32.mxu0 0.0
        %2451 = vmatmul.mubr.f32.gmra.mrb[0].mxu0 %v2237
        %v2452 = vpop.f32.mrb[0].mxu0
        %v2453 = vadd.f32 0.0, %v2452
        %v2454 = vpop.f32.mrb[0].mxu0
        %2455 = vmatprep.mubr.f32.mxu0 0.0
        %2456 = vmatmul.mubr.f32.gmra.mrb[0].mxu0 %v2238
        %v2457 = vpop.f32.mrb[0].mxu0
        %v2458 = vadd.f32 0.0, %v2457
        %v2459 = vpop.f32.mrb[0].mxu0
        %2460 = vmatprep.mubr.f32.mxu0 0.0
        %2461 = vmatmul.mubr.f32.gmra.mrb[0].mxu0 %v2239
        %v2462 = vpop.f32.mrb[0].mxu0
        %v2463 = vadd.f32 0.0, %v2462
        %v2464 = vpop.f32.mrb[0].mxu0
        %2465 = vmatprep.mubr.f32.mxu0 0.0
        %2466 = vmatmul.mubr.f32.gmra.mrb[0].mxu0 %v2240
        %v2467 = vpop.f32.mrb[0].mxu0
        %v2468 = vadd.f32 0.0, %v2467
        %v2469 = vpop.f32.mrb[0].mxu0
        %2470 = vmatprep.mubr.f32.mxu0 0.0
        %2471 = vmatmul.mubr.f32.gmra.mrb[0].mxu0 %v2241
        %v2472 = vpop.f32.mrb[0].mxu0
        %v2473 = vadd.f32 0.0, %v2472
        %v2474 = vpop.f32.mrb[0].mxu0
        %2475 = vmatprep.mubr.f32.mxu0 0.0
        %2476 = vmatmul.mubr.f32.gmra.mrb[0].mxu0 %v2242
        %v2477 = vpop.f32.mrb[0].mxu0
        %v2478 = vadd.f32 0.0, %v2477
        %v2479 = vpop.f32.mrb[0].mxu0
        %2480 = vmatprep.mubr.f32.mxu0 0.0
        %2481 = vmatmul.mubr.f32.gmra.mrb[0].mxu0 %v2243
        %v2482 = vpop.f32.mrb[0].mxu0
        %v2483 = vadd.f32 0.0, %v2482
        %v2484 = vpop.f32.mrb[0].mxu0
        %2485 = vdwg.mxu0
        %v2486 = vadd.f32 %v2179, %v2328
        %v2487 = vadd.f32 %v2180, %v2333
        %v2488 = vadd.f32 %v2181, %v2338
        %v2489 = vadd.f32 %v2182, %v2343
        %v2490 = vadd.f32 %v2183, %v2348
        %v2491 = vadd.f32 %v2184, %v2353
        %v2492 = vadd.f32 %v2185, %v2358
        %v2493 = vadd.f32 %v2186, %v2363
        %v2494 = vadd.f32 %v2187, %v2368
        %v2495 = vadd.f32 %v2188, %v2373
        %v2496 = vadd.f32 %v2189, %v2378
        %v2497 = vadd.f32 %v2190, %v2383
        %v2498 = vadd.f32 %v2191, %v2388
        %v2499 = vadd.f32 %v2192, %v2393
        %v2500 = vadd.f32 %v2193, %v2398
        %v2501 = vadd.f32 %v2194, %v2403
        %v2502 = vadd.f32 %v2195, %v2408
        %v2503 = vadd.f32 %v2196, %v2413
        %v2504 = vadd.f32 %v2197, %v2418
        %v2505 = vadd.f32 %v2198, %v2423
        %v2506 = vadd.f32 %v2199, %v2428
        %v2507 = vadd.f32 %v2200, %v2433
        %v2508 = vadd.f32 %v2201, %v2438
        %v2509 = vadd.f32 %v2202, %v2443
        %v2510 = vadd.f32 %v2203, %v2448
        %v2511 = vadd.f32 %v2204, %v2453
        %v2512 = vadd.f32 %v2205, %v2458
        %v2513 = vadd.f32 %v2206, %v2463
        %v2514 = vadd.f32 %v2207, %v2468
        %v2515 = vadd.f32 %v2208, %v2473
        %v2516 = vadd.f32 %v2209, %v2478
        %v2517 = vadd.f32 %v2210, %v2483
        %v2518 = vld [vmem:[%s2211 + $0x8] sm:$0xff]
        %v2519 = vld [vmem:[%s2211 + $0x10] sm:$0xff]
        %v2520 = vld [vmem:[%s2211 + $0x28] sm:$0xff]
        %v2521 = vld [vmem:[%s2211 + $0x30] sm:$0xff]
        %v2522 = vld [vmem:[%s2211 + $0x48] sm:$0xff]
        %v2523 = vld [vmem:[%s2211 + $0x50] sm:$0xff]
        %v2524 = vld [vmem:[%s2211 + $0x68] sm:$0xff]
        %v2525 = vld [vmem:[%s2211 + $0x70] sm:$0xff]
        %v2526 = vld [vmem:[%s2211 + $0x88] sm:$0xff]
        %v2527 = vld [vmem:[%s2211 + $0x90] sm:$0xff]
        %v2528 = vld [vmem:[%s2211 + $0xa8] sm:$0xff]
        %v2529 = vld [vmem:[%s2211 + $0xb0] sm:$0xff]
        %v2530 = vld [vmem:[%s2211 + $0xc8] sm:$0xff]
        %v2531 = vld [vmem:[%s2211 + $0xd0] sm:$0xff]
        %v2532 = vld [vmem:[%s2211 + $0xe8] sm:$0xff]
        %v2533 = vld [vmem:[%s2211 + $0xf0] sm:$0xff]
        %v2534 = vld [vmem:[%s2211 + $0x108] sm:$0xff]
        %v2535 = vld [vmem:[%s2211 + $0x110] sm:$0xff]
        %v2536 = vld [vmem:[%s2211 + $0x128] sm:$0xff]
        %v2537 = vld [vmem:[%s2211 + $0x130] sm:$0xff]
        %v2538 = vld [vmem:[%s2211 + $0x148] sm:$0xff]
        %v2539 = vld [vmem:[%s2211 + $0x150] sm:$0xff]
        %v2540 = vld [vmem:[%s2211 + $0x168] sm:$0xff]
        %v2541 = vld [vmem:[%s2211 + $0x170] sm:$0xff]
        %v2542 = vld [vmem:[%s2211 + $0x188] sm:$0xff]
        %v2543 = vld [vmem:[%s2211 + $0x190] sm:$0xff]
        %v2544 = vld [vmem:[%s2211 + $0x1a8] sm:$0xff]
        %v2545 = vld [vmem:[%s2211 + $0x1b0] sm:$0xff]
        %v2546 = vld [vmem:[%s2211 + $0x1c8] sm:$0xff]
        %v2547 = vld [vmem:[%s2211 + $0x1d0] sm:$0xff]
        %v2548 = vld [vmem:[%s2211 + $0x1e8] sm:$0xff]
        %v2549 = vld [vmem:[%s2211 + $0x1f0] sm:$0xff]
        %s2550 = scalar_lea.vmem %s3, 896
        %v2551 = vld [vmem:[%s2550] sm:$0xff]
        %v2552 = vld [vmem:[%s2550 + $0x8] sm:$0xff]
        %v2553 = vld [vmem:[%s2550 + $0x10] sm:$0xff]
        %v2554 = vld [vmem:[%s2550 + $0x18] sm:$0xff]
        %v2555 = vld [vmem:[%s2550 + $0x20] sm:$0xff]
        %v2556 = vld [vmem:[%s2550 + $0x28] sm:$0xff]
        %v2557 = vld [vmem:[%s2550 + $0x30] sm:$0xff]
        %v2558 = vld [vmem:[%s2550 + $0x38] sm:$0xff]
        %v2559 = vld [vmem:[%s2550 + $0x40] sm:$0xff]
        %v2560 = vld [vmem:[%s2550 + $0x48] sm:$0xff]
        %v2561 = vld [vmem:[%s2550 + $0x50] sm:$0xff]
        %v2562 = vld [vmem:[%s2550 + $0x58] sm:$0xff]
        %v2563 = vld [vmem:[%s2550 + $0x60] sm:$0xff]
        %v2564 = vld [vmem:[%s2550 + $0x68] sm:$0xff]
        %v2565 = vld [vmem:[%s2550 + $0x70] sm:$0xff]
        %v2566 = vld [vmem:[%s2550 + $0x78] sm:$0xff]
        %2567 = vmatprep.subr.mxu0 0.0
        %2568 = vmatpush1.msra.mxu0 %v2551
        %2569 = vmatprep.subr.mxu0 0.0
        %2570 = vmatpush1.msra.mxu0 %v2552
        %2571 = vmatprep.subr.mxu0 0.0
        %2572 = vmatpush1.msra.mxu0 %v2553
        %2573 = vmatprep.subr.mxu0 0.0
        %2574 = vmatpush1.msra.mxu0 %v2554
        %2575 = vmatprep.subr.mxu0 0.0
        %2576 = vmatpush1.msra.mxu0 %v2555
        %2577 = vmatprep.subr.mxu0 0.0
        %2578 = vmatpush1.msra.mxu0 %v2556
        %2579 = vmatprep.subr.mxu0 0.0
        %2580 = vmatpush1.msra.mxu0 %v2557
        %2581 = vmatprep.subr.mxu0 0.0
        %2582 = vmatpush1.msra.mxu0 %v2558
        %2583 = vmatprep.subr.mxu0 0.0
        %2584 = vmatpush1.msra.mxu0 %v2559
        %2585 = vmatprep.subr.mxu0 0.0
        %2586 = vmatpush1.msra.mxu0 %v2560
        %2587 = vmatprep.subr.mxu0 0.0
        %2588 = vmatpush1.msra.mxu0 %v2561
        %2589 = vmatprep.subr.mxu0 0.0
        %2590 = vmatpush1.msra.mxu0 %v2562
        %2591 = vmatprep.subr.mxu0 0.0
        %2592 = vmatpush1.msra.mxu0 %v2563
        %2593 = vmatprep.subr.mxu0 0.0
        %2594 = vmatpush1.msra.mxu0 %v2564
        %2595 = vmatprep.subr.mxu0 0.0
        %2596 = vmatpush1.msra.mxu0 %v2565
        %2597 = vmatprep.subr.mxu0 0.0
        %2598 = vmatpush1.msra.mxu0 %v2566
        %2599 = vmatprep.subr.mxu0 0.0
        %2600 = vmatpush1.msra.mxu0 0.0
        %2601 = vmatprep.subr.mxu0 0.0
        %2602 = vmatpush1.msra.mxu0 0.0
        %2603 = vmatprep.subr.mxu0 0.0
        %2604 = vmatpush1.msra.mxu0 0.0
        %2605 = vmatprep.subr.mxu0 0.0
        %2606 = vmatpush1.msra.mxu0 0.0
        %2607 = vmatprep.subr.mxu0 0.0
        %2608 = vmatpush1.msra.mxu0 0.0
        %2609 = vmatprep.subr.mxu0 0.0
        %2610 = vmatpush1.msra.mxu0 0.0
        %2611 = vmatprep.subr.mxu0 0.0
        %2612 = vmatpush1.msra.mxu0 0.0
        %2613 = vmatprep.subr.mxu0 0.0
        %2614 = vmatpush1.msra.mxu0 0.0
        %2615 = vmatprep.subr.mxu0 0.0
        %2616 = vmatpush1.msra.mxu0 0.0
        %2617 = vmatprep.subr.mxu0 0.0
        %2618 = vmatpush1.msra.mxu0 0.0
        %2619 = vmatprep.subr.mxu0 0.0
        %2620 = vmatpush1.msra.mxu0 0.0
        %2621 = vmatprep.subr.mxu0 0.0
        %2622 = vmatpush1.msra.mxu0 0.0
        %2623 = vmatprep.subr.mxu0 0.0
        %2624 = vmatpush1.msra.mxu0 0.0
        %2625 = vmatprep.subr.mxu0 0.0
        %2626 = vmatpush1.msra.mxu0 0.0
        %2627 = vmatprep.subr.mxu0 0.0
        %2628 = vmatpush1.msra.mxu0 0.0
        %2629 = vmatprep.subr.mxu0 0.0
        %2630 = vmatpush1.msra.mxu0 0.0
        %2631 = vmatprep.mubr.f32.mxu0 0.0
        %2632 = vmatmul.mubr.f32.gmra.mrb[0].mxu0 %v2518
        %v2633 = vpop.f32.mrb[0].mxu0
        %v2634 = vadd.f32 0.0, %v2633
        %v2635 = vpop.f32.mrb[0].mxu0
        %2636 = vmatprep.mubr.f32.mxu0 0.0
        %2637 = vmatmul.mubr.f32.gmra.mrb[0].mxu0 %v2519
        %v2638 = vpop.f32.mrb[0].mxu0
        %v2639 = vadd.f32 0.0, %v2638
        %v2640 = vpop.f32.mrb[0].mxu0
        %2641 = vmatprep.mubr.f32.mxu0 0.0
        %2642 = vmatmul.mubr.f32.gmra.mrb[0].mxu0 %v2520
        %v2643 = vpop.f32.mrb[0].mxu0
        %v2644 = vadd.f32 0.0, %v2643
        %v2645 = vpop.f32.mrb[0].mxu0
        %2646 = vmatprep.mubr.f32.mxu0 0.0
        %2647 = vmatmul.mubr.f32.gmra.mrb[0].mxu0 %v2521
        %v2648 = vpop.f32.mrb[0].mxu0
        %v2649 = vadd.f32 0.0, %v2648
        %v2650 = vpop.f32.mrb[0].mxu0
        %2651 = vmatprep.mubr.f32.mxu0 0.0
        %2652 = vmatmul.mubr.f32.gmra.mrb[0].mxu0 %v2522
        %v2653 = vpop.f32.mrb[0].mxu0
        %v2654 = vadd.f32 0.0, %v2653
        %v2655 = vpop.f32.mrb[0].mxu0
        %2656 = vmatprep.mubr.f32.mxu0 0.0
        %2657 = vmatmul.mubr.f32.gmra.mrb[0].mxu0 %v2523
        %v2658 = vpop.f32.mrb[0].mxu0
        %v2659 = vadd.f32 0.0, %v2658
        %v2660 = vpop.f32.mrb[0].mxu0
        %2661 = vmatprep.mubr.f32.mxu0 0.0
        %2662 = vmatmul.mubr.f32.gmra.mrb[0].mxu0 %v2524
        %v2663 = vpop.f32.mrb[0].mxu0
        %v2664 = vadd.f32 0.0, %v2663
        %v2665 = vpop.f32.mrb[0].mxu0
        %2666 = vmatprep.mubr.f32.mxu0 0.0
        %2667 = vmatmul.mubr.f32.gmra.mrb[0].mxu0 %v2525
        %v2668 = vpop.f32.mrb[0].mxu0
        %v2669 = vadd.f32 0.0, %v2668
        %v2670 = vpop.f32.mrb[0].mxu0
        %2671 = vmatprep.mubr.f32.mxu0 0.0
        %2672 = vmatmul.mubr.f32.gmra.mrb[0].mxu0 %v2526
        %v2673 = vpop.f32.mrb[0].mxu0
        %v2674 = vadd.f32 0.0, %v2673
        %v2675 = vpop.f32.mrb[0].mxu0
        %2676 = vmatprep.mubr.f32.mxu0 0.0
        %2677 = vmatmul.mubr.f32.gmra.mrb[0].mxu0 %v2527
        %v2678 = vpop.f32.mrb[0].mxu0
        %v2679 = vadd.f32 0.0, %v2678
        %v2680 = vpop.f32.mrb[0].mxu0
        %2681 = vmatprep.mubr.f32.mxu0 0.0
        %2682 = vmatmul.mubr.f32.gmra.mrb[0].mxu0 %v2528
        %v2683 = vpop.f32.mrb[0].mxu0
        %v2684 = vadd.f32 0.0, %v2683
        %v2685 = vpop.f32.mrb[0].mxu0
        %2686 = vmatprep.mubr.f32.mxu0 0.0
        %2687 = vmatmul.mubr.f32.gmra.mrb[0].mxu0 %v2529
        %v2688 = vpop.f32.mrb[0].mxu0
        %v2689 = vadd.f32 0.0, %v2688
        %v2690 = vpop.f32.mrb[0].mxu0
        %2691 = vmatprep.mubr.f32.mxu0 0.0
        %2692 = vmatmul.mubr.f32.gmra.mrb[0].mxu0 %v2530
        %v2693 = vpop.f32.mrb[0].mxu0
        %v2694 = vadd.f32 0.0, %v2693
        %v2695 = vpop.f32.mrb[0].mxu0
        %2696 = vmatprep.mubr.f32.mxu0 0.0
        %2697 = vmatmul.mubr.f32.gmra.mrb[0].mxu0 %v2531
        %v2698 = vpop.f32.mrb[0].mxu0
        %v2699 = vadd.f32 0.0, %v2698
        %v2700 = vpop.f32.mrb[0].mxu0
        %2701 = vmatprep.mubr.f32.mxu0 0.0
        %2702 = vmatmul.mubr.f32.gmra.mrb[0].mxu0 %v2532
        %v2703 = vpop.f32.mrb[0].mxu0
        %v2704 = vadd.f32 0.0, %v2703
        %v2705 = vpop.f32.mrb[0].mxu0
        %2706 = vmatprep.mubr.f32.mxu0 0.0
        %2707 = vmatmul.mubr.f32.gmra.mrb[0].mxu0 %v2533
        %v2708 = vpop.f32.mrb[0].mxu0
        %v2709 = vadd.f32 0.0, %v2708
        %v2710 = vpop.f32.mrb[0].mxu0
        %2711 = vmatprep.mubr.f32.mxu0 0.0
        %2712 = vmatmul.mubr.f32.gmra.mrb[0].mxu0 %v2534
        %v2713 = vpop.f32.mrb[0].mxu0
        %v2714 = vadd.f32 0.0, %v2713
        %v2715 = vpop.f32.mrb[0].mxu0
        %2716 = vmatprep.mubr.f32.mxu0 0.0
        %2717 = vmatmul.mubr.f32.gmra.mrb[0].mxu0 %v2535
        %v2718 = vpop.f32.mrb[0].mxu0
        %v2719 = vadd.f32 0.0, %v2718
        %v2720 = vpop.f32.mrb[0].mxu0
        %2721 = vmatprep.mubr.f32.mxu0 0.0
        %2722 = vmatmul.mubr.f32.gmra.mrb[0].mxu0 %v2536
        %v2723 = vpop.f32.mrb[0].mxu0
        %v2724 = vadd.f32 0.0, %v2723
        %v2725 = vpop.f32.mrb[0].mxu0
        %2726 = vmatprep.mubr.f32.mxu0 0.0
        %2727 = vmatmul.mubr.f32.gmra.mrb[0].mxu0 %v2537
        %v2728 = vpop.f32.mrb[0].mxu0
        %v2729 = vadd.f32 0.0, %v2728
        %v2730 = vpop.f32.mrb[0].mxu0
        %2731 = vmatprep.mubr.f32.mxu0 0.0
        %2732 = vmatmul.mubr.f32.gmra.mrb[0].mxu0 %v2538
        %v2733 = vpop.f32.mrb[0].mxu0
        %v2734 = vadd.f32 0.0, %v2733
        %v2735 = vpop.f32.mrb[0].mxu0
        %2736 = vmatprep.mubr.f32.mxu0 0.0
        %2737 = vmatmul.mubr.f32.gmra.mrb[0].mxu0 %v2539
        %v2738 = vpop.f32.mrb[0].mxu0
        %v2739 = vadd.f32 0.0, %v2738
        %v2740 = vpop.f32.mrb[0].mxu0
        %2741 = vmatprep.mubr.f32.mxu0 0.0
        %2742 = vmatmul.mubr.f32.gmra.mrb[0].mxu0 %v2540
        %v2743 = vpop.f32.mrb[0].mxu0
        %v2744 = vadd.f32 0.0, %v2743
        %v2745 = vpop.f32.mrb[0].mxu0
        %2746 = vmatprep.mubr.f32.mxu0 0.0
        %2747 = vmatmul.mubr.f32.gmra.mrb[0].mxu0 %v2541
        %v2748 = vpop.f32.mrb[0].mxu0
        %v2749 = vadd.f32 0.0, %v2748
        %v2750 = vpop.f32.mrb[0].mxu0
        %2751 = vmatprep.mubr.f32.mxu0 0.0
        %2752 = vmatmul.mubr.f32.gmra.mrb[0].mxu0 %v2542
        %v2753 = vpop.f32.mrb[0].mxu0
        %v2754 = vadd.f32 0.0, %v2753
        %v2755 = vpop.f32.mrb[0].mxu0
        %2756 = vmatprep.mubr.f32.mxu0 0.0
        %2757 = vmatmul.mubr.f32.gmra.mrb[0].mxu0 %v2543
        %v2758 = vpop.f32.mrb[0].mxu0
        %v2759 = vadd.f32 0.0, %v2758
        %v2760 = vpop.f32.mrb[0].mxu0
        %2761 = vmatprep.mubr.f32.mxu0 0.0
        %2762 = vmatmul.mubr.f32.gmra.mrb[0].mxu0 %v2544
        %v2763 = vpop.f32.mrb[0].mxu0
        %v2764 = vadd.f32 0.0, %v2763
        %v2765 = vpop.f32.mrb[0].mxu0
        %2766 = vmatprep.mubr.f32.mxu0 0.0
        %2767 = vmatmul.mubr.f32.gmra.mrb[0].mxu0 %v2545
        %v2768 = vpop.f32.mrb[0].mxu0
        %v2769 = vadd.f32 0.0, %v2768
        %v2770 = vpop.f32.mrb[0].mxu0
        %2771 = vmatprep.mubr.f32.mxu0 0.0
        %2772 = vmatmul.mubr.f32.gmra.mrb[0].mxu0 %v2546
        %v2773 = vpop.f32.mrb[0].mxu0
        %v2774 = vadd.f32 0.0, %v2773
        %v2775 = vpop.f32.mrb[0].mxu0
        %2776 = vmatprep.mubr.f32.mxu0 0.0
        %2777 = vmatmul.mubr.f32.gmra.mrb[0].mxu0 %v2547
        %v2778 = vpop.f32.mrb[0].mxu0
        %v2779 = vadd.f32 0.0, %v2778
        %v2780 = vpop.f32.mrb[0].mxu0
        %2781 = vmatprep.mubr.f32.mxu0 0.0
        %2782 = vmatmul.mubr.f32.gmra.mrb[0].mxu0 %v2548
        %v2783 = vpop.f32.mrb[0].mxu0
        %v2784 = vadd.f32 0.0, %v2783
        %v2785 = vpop.f32.mrb[0].mxu0
        %2786 = vmatprep.mubr.f32.mxu0 0.0
        %2787 = vmatmul.mubr.f32.gmra.mrb[0].mxu0 %v2549
        %v2788 = vpop.f32.mrb[0].mxu0
        %v2789 = vadd.f32 0.0, %v2788
        %v2790 = vpop.f32.mrb[0].mxu0
        %2791 = vdwg.mxu0
        %v2792 = vadd.f32 %v2486, %v2634
        %v2793 = vadd.f32 %v2487, %v2639
        %v2794 = vadd.f32 %v2488, %v2644
        %v2795 = vadd.f32 %v2489, %v2649
        %v2796 = vadd.f32 %v2490, %v2654
        %v2797 = vadd.f32 %v2491, %v2659
        %v2798 = vadd.f32 %v2492, %v2664
        %v2799 = vadd.f32 %v2493, %v2669
        %v2800 = vadd.f32 %v2494, %v2674
        %v2801 = vadd.f32 %v2495, %v2679
        %v2802 = vadd.f32 %v2496, %v2684
        %v2803 = vadd.f32 %v2497, %v2689
        %v2804 = vadd.f32 %v2498, %v2694
        %v2805 = vadd.f32 %v2499, %v2699
        %v2806 = vadd.f32 %v2500, %v2704
        %v2807 = vadd.f32 %v2501, %v2709
        %v2808 = vadd.f32 %v2502, %v2714
        %v2809 = vadd.f32 %v2503, %v2719
        %v2810 = vadd.f32 %v2504, %v2724
        %v2811 = vadd.f32 %v2505, %v2729
        %v2812 = vadd.f32 %v2506, %v2734
        %v2813 = vadd.f32 %v2507, %v2739
        %v2814 = vadd.f32 %v2508, %v2744
        %v2815 = vadd.f32 %v2509, %v2749
        %v2816 = vadd.f32 %v2510, %v2754
        %v2817 = vadd.f32 %v2511, %v2759
        %v2818 = vadd.f32 %v2512, %v2764
        %v2819 = vadd.f32 %v2513, %v2769
        %v2820 = vadd.f32 %v2514, %v2774
        %v2821 = vadd.f32 %v2515, %v2779
        %v2822 = vadd.f32 %v2516, %v2784
        %v2823 = vadd.f32 %v2517, %v2789
        %v2824 = vld [vmem:[%s2211 + $0x9] sm:$0xff]
        %v2825 = vld [vmem:[%s2211 + $0x11] sm:$0xff]
        %v2826 = vld [vmem:[%s2211 + $0x29] sm:$0xff]
        %v2827 = vld [vmem:[%s2211 + $0x31] sm:$0xff]
        %v2828 = vld [vmem:[%s2211 + $0x49] sm:$0xff]
        %v2829 = vld [vmem:[%s2211 + $0x51] sm:$0xff]
        %v2830 = vld [vmem:[%s2211 + $0x69] sm:$0xff]
        %v2831 = vld [vmem:[%s2211 + $0x71] sm:$0xff]
        %v2832 = vld [vmem:[%s2211 + $0x89] sm:$0xff]
        %v2833 = vld [vmem:[%s2211 + $0x91] sm:$0xff]
        %v2834 = vld [vmem:[%s2211 + $0xa9] sm:$0xff]
        %v2835 = vld [vmem:[%s2211 + $0xb1] sm:$0xff]
        %v2836 = vld [vmem:[%s2211 + $0xc9] sm:$0xff]
        %v2837 = vld [vmem:[%s2211 + $0xd1] sm:$0xff]
        %v2838 = vld [vmem:[%s2211 + $0xe9] sm:$0xff]
        %v2839 = vld [vmem:[%s2211 + $0xf1] sm:$0xff]
        %v2840 = vld [vmem:[%s2211 + $0x109] sm:$0xff]
        %v2841 = vld [vmem:[%s2211 + $0x111] sm:$0xff]
        %v2842 = vld [vmem:[%s2211 + $0x129] sm:$0xff]
        %v2843 = vld [vmem:[%s2211 + $0x131] sm:$0xff]
        %v2844 = vld [vmem:[%s2211 + $0x149] sm:$0xff]
        %v2845 = vld [vmem:[%s2211 + $0x151] sm:$0xff]
        %v2846 = vld [vmem:[%s2211 + $0x169] sm:$0xff]
        %v2847 = vld [vmem:[%s2211 + $0x171] sm:$0xff]
        %v2848 = vld [vmem:[%s2211 + $0x189] sm:$0xff]
        %v2849 = vld [vmem:[%s2211 + $0x191] sm:$0xff]
        %v2850 = vld [vmem:[%s2211 + $0x1a9] sm:$0xff]
        %v2851 = vld [vmem:[%s2211 + $0x1b1] sm:$0xff]
        %v2852 = vld [vmem:[%s2211 + $0x1c9] sm:$0xff]
        %v2853 = vld [vmem:[%s2211 + $0x1d1] sm:$0xff]
        %v2854 = vld [vmem:[%s2211 + $0x1e9] sm:$0xff]
        %v2855 = vld [vmem:[%s2211 + $0x1f1] sm:$0xff]
        %s2856 = scalar_lea.vmem %s3, 1024
        %v2857 = vld [vmem:[%s2856] sm:$0xff]
        %v2858 = vld [vmem:[%s2856 + $0x8] sm:$0xff]
        %v2859 = vld [vmem:[%s2856 + $0x10] sm:$0xff]
        %v2860 = vld [vmem:[%s2856 + $0x18] sm:$0xff]
        %v2861 = vld [vmem:[%s2856 + $0x20] sm:$0xff]
        %v2862 = vld [vmem:[%s2856 + $0x28] sm:$0xff]
        %v2863 = vld [vmem:[%s2856 + $0x30] sm:$0xff]
        %v2864 = vld [vmem:[%s2856 + $0x38] sm:$0xff]
        %v2865 = vld [vmem:[%s2856 + $0x40] sm:$0xff]
        %v2866 = vld [vmem:[%s2856 + $0x48] sm:$0xff]
        %v2867 = vld [vmem:[%s2856 + $0x50] sm:$0xff]
        %v2868 = vld [vmem:[%s2856 + $0x58] sm:$0xff]
        %v2869 = vld [vmem:[%s2856 + $0x60] sm:$0xff]
        %v2870 = vld [vmem:[%s2856 + $0x68] sm:$0xff]
        %v2871 = vld [vmem:[%s2856 + $0x70] sm:$0xff]
        %v2872 = vld [vmem:[%s2856 + $0x78] sm:$0xff]
        %2873 = vmatprep.subr.mxu0 0.0
        %2874 = vmatpush1.msra.mxu0 %v2857
        %2875 = vmatprep.subr.mxu0 0.0
        %2876 = vmatpush1.msra.mxu0 %v2858
        %2877 = vmatprep.subr.mxu0 0.0
        %2878 = vmatpush1.msra.mxu0 %v2859
        %2879 = vmatprep.subr.mxu0 0.0
        %2880 = vmatpush1.msra.mxu0 %v2860
        %2881 = vmatprep.subr.mxu0 0.0
        %2882 = vmatpush1.msra.mxu0 %v2861
        %2883 = vmatprep.subr.mxu0 0.0
        %2884 = vmatpush1.msra.mxu0 %v2862
        %2885 = vmatprep.subr.mxu0 0.0
        %2886 = vmatpush1.msra.mxu0 %v2863
        %2887 = vmatprep.subr.mxu0 0.0
        %2888 = vmatpush1.msra.mxu0 %v2864
        %2889 = vmatprep.subr.mxu0 0.0
        %2890 = vmatpush1.msra.mxu0 %v2865
        %2891 = vmatprep.subr.mxu0 0.0
        %2892 = vmatpush1.msra.mxu0 %v2866
        %2893 = vmatprep.subr.mxu0 0.0
        %2894 = vmatpush1.msra.mxu0 %v2867
        %2895 = vmatprep.subr.mxu0 0.0
        %2896 = vmatpush1.msra.mxu0 %v2868
        %2897 = vmatprep.subr.mxu0 0.0
        %2898 = vmatpush1.msra.mxu0 %v2869
        %2899 = vmatprep.subr.mxu0 0.0
        %2900 = vmatpush1.msra.mxu0 %v2870
        %2901 = vmatprep.subr.mxu0 0.0
        %2902 = vmatpush1.msra.mxu0 %v2871
        %2903 = vmatprep.subr.mxu0 0.0
        %2904 = vmatpush1.msra.mxu0 %v2872
        %2905 = vmatprep.subr.mxu0 0.0
        %2906 = vmatpush1.msra.mxu0 0.0
        %2907 = vmatprep.subr.mxu0 0.0
        %2908 = vmatpush1.msra.mxu0 0.0
        %2909 = vmatprep.subr.mxu0 0.0
        %2910 = vmatpush1.msra.mxu0 0.0
        %2911 = vmatprep.subr.mxu0 0.0
        %2912 = vmatpush1.msra.mxu0 0.0
        %2913 = vmatprep.subr.mxu0 0.0
        %2914 = vmatpush1.msra.mxu0 0.0
        %2915 = vmatprep.subr.mxu0 0.0
        %2916 = vmatpush1.msra.mxu0 0.0
        %2917 = vmatprep.subr.mxu0 0.0
        %2918 = vmatpush1.msra.mxu0 0.0
        %2919 = vmatprep.subr.mxu0 0.0
        %2920 = vmatpush1.msra.mxu0 0.0
        %2921 = vmatprep.subr.mxu0 0.0
        %2922 = vmatpush1.msra.mxu0 0.0
        %2923 = vmatprep.subr.mxu0 0.0
        %2924 = vmatpush1.msra.mxu0 0.0
        %2925 = vmatprep.subr.mxu0 0.0
        %2926 = vmatpush1.msra.mxu0 0.0
        %2927 = vmatprep.subr.mxu0 0.0
        %2928 = vmatpush1.msra.mxu0 0.0
        %2929 = vmatprep.subr.mxu0 0.0
        %2930 = vmatpush1.msra.mxu0 0.0
        %2931 = vmatprep.subr.mxu0 0.0
        %2932 = vmatpush1.msra.mxu0 0.0
        %2933 = vmatprep.subr.mxu0 0.0
        %2934 = vmatpush1.msra.mxu0 0.0
        %2935 = vmatprep.subr.mxu0 0.0
        %2936 = vmatpush1.msra.mxu0 0.0
        %2937 = vmatprep.mubr.f32.mxu0 0.0
        %2938 = vmatmul.mubr.f32.gmra.mrb[0].mxu0 %v2824
        %v2939 = vpop.f32.mrb[0].mxu0
        %v2940 = vadd.f32 0.0, %v2939
        %v2941 = vpop.f32.mrb[0].mxu0
        %2942 = vmatprep.mubr.f32.mxu0 0.0
        %2943 = vmatmul.mubr.f32.gmra.mrb[0].mxu0 %v2825
        %v2944 = vpop.f32.mrb[0].mxu0
        %v2945 = vadd.f32 0.0, %v2944
        %v2946 = vpop.f32.mrb[0].mxu0
        %2947 = vmatprep.mubr.f32.mxu0 0.0
        %2948 = vmatmul.mubr.f32.gmra.mrb[0].mxu0 %v2826
        %v2949 = vpop.f32.mrb[0].mxu0
        %v2950 = vadd.f32 0.0, %v2949
        %v2951 = vpop.f32.mrb[0].mxu0
        %2952 = vmatprep.mubr.f32.mxu0 0.0
        %2953 = vmatmul.mubr.f32.gmra.mrb[0].mxu0 %v2827
        %v2954 = vpop.f32.mrb[0].mxu0
        %v2955 = vadd.f32 0.0, %v2954
        %v2956 = vpop.f32.mrb[0].mxu0
        %2957 = vmatprep.mubr.f32.mxu0 0.0
        %2958 = vmatmul.mubr.f32.gmra.mrb[0].mxu0 %v2828
        %v2959 = vpop.f32.mrb[0].mxu0
        %v2960 = vadd.f32 0.0, %v2959
        %v2961 = vpop.f32.mrb[0].mxu0
        %2962 = vmatprep.mubr.f32.mxu0 0.0
        %2963 = vmatmul.mubr.f32.gmra.mrb[0].mxu0 %v2829
        %v2964 = vpop.f32.mrb[0].mxu0
        %v2965 = vadd.f32 0.0, %v2964
        %v2966 = vpop.f32.mrb[0].mxu0
        %2967 = vmatprep.mubr.f32.mxu0 0.0
        %2968 = vmatmul.mubr.f32.gmra.mrb[0].mxu0 %v2830
        %v2969 = vpop.f32.mrb[0].mxu0
        %v2970 = vadd.f32 0.0, %v2969
        %v2971 = vpop.f32.mrb[0].mxu0
        %2972 = vmatprep.mubr.f32.mxu0 0.0
        %2973 = vmatmul.mubr.f32.gmra.mrb[0].mxu0 %v2831
        %v2974 = vpop.f32.mrb[0].mxu0
        %v2975 = vadd.f32 0.0, %v2974
        %v2976 = vpop.f32.mrb[0].mxu0
        %2977 = vmatprep.mubr.f32.mxu0 0.0
        %2978 = vmatmul.mubr.f32.gmra.mrb[0].mxu0 %v2832
        %v2979 = vpop.f32.mrb[0].mxu0
        %v2980 = vadd.f32 0.0, %v2979
        %v2981 = vpop.f32.mrb[0].mxu0
        %2982 = vmatprep.mubr.f32.mxu0 0.0
        %2983 = vmatmul.mubr.f32.gmra.mrb[0].mxu0 %v2833
        %v2984 = vpop.f32.mrb[0].mxu0
        %v2985 = vadd.f32 0.0, %v2984
        %v2986 = vpop.f32.mrb[0].mxu0
        %2987 = vmatprep.mubr.f32.mxu0 0.0
        %2988 = vmatmul.mubr.f32.gmra.mrb[0].mxu0 %v2834
        %v2989 = vpop.f32.mrb[0].mxu0
        %v2990 = vadd.f32 0.0, %v2989
        %v2991 = vpop.f32.mrb[0].mxu0
        %2992 = vmatprep.mubr.f32.mxu0 0.0
        %2993 = vmatmul.mubr.f32.gmra.mrb[0].mxu0 %v2835
        %v2994 = vpop.f32.mrb[0].mxu0
        %v2995 = vadd.f32 0.0, %v2994
        %v2996 = vpop.f32.mrb[0].mxu0
        %2997 = vmatprep.mubr.f32.mxu0 0.0
        %2998 = vmatmul.mubr.f32.gmra.mrb[0].mxu0 %v2836
        %v2999 = vpop.f32.mrb[0].mxu0
        %v3000 = vadd.f32 0.0, %v2999
        %v3001 = vpop.f32.mrb[0].mxu0
        %3002 = vmatprep.mubr.f32.mxu0 0.0
        %3003 = vmatmul.mubr.f32.gmra.mrb[0].mxu0 %v2837
        %v3004 = vpop.f32.mrb[0].mxu0
        %v3005 = vadd.f32 0.0, %v3004
        %v3006 = vpop.f32.mrb[0].mxu0
        %3007 = vmatprep.mubr.f32.mxu0 0.0
        %3008 = vmatmul.mubr.f32.gmra.mrb[0].mxu0 %v2838
        %v3009 = vpop.f32.mrb[0].mxu0
        %v3010 = vadd.f32 0.0, %v3009
        %v3011 = vpop.f32.mrb[0].mxu0
        %3012 = vmatprep.mubr.f32.mxu0 0.0
        %3013 = vmatmul.mubr.f32.gmra.mrb[0].mxu0 %v2839
        %v3014 = vpop.f32.mrb[0].mxu0
        %v3015 = vadd.f32 0.0, %v3014
        %v3016 = vpop.f32.mrb[0].mxu0
        %3017 = vmatprep.mubr.f32.mxu0 0.0
        %3018 = vmatmul.mubr.f32.gmra.mrb[0].mxu0 %v2840
        %v3019 = vpop.f32.mrb[0].mxu0
        %v3020 = vadd.f32 0.0, %v3019
        %v3021 = vpop.f32.mrb[0].mxu0
        %3022 = vmatprep.mubr.f32.mxu0 0.0
        %3023 = vmatmul.mubr.f32.gmra.mrb[0].mxu0 %v2841
        %v3024 = vpop.f32.mrb[0].mxu0
        %v3025 = vadd.f32 0.0, %v3024
        %v3026 = vpop.f32.mrb[0].mxu0
        %3027 = vmatprep.mubr.f32.mxu0 0.0
        %3028 = vmatmul.mubr.f32.gmra.mrb[0].mxu0 %v2842
        %v3029 = vpop.f32.mrb[0].mxu0
        %v3030 = vadd.f32 0.0, %v3029
        %v3031 = vpop.f32.mrb[0].mxu0
        %3032 = vmatprep.mubr.f32.mxu0 0.0
        %3033 = vmatmul.mubr.f32.gmra.mrb[0].mxu0 %v2843
        %v3034 = vpop.f32.mrb[0].mxu0
        %v3035 = vadd.f32 0.0, %v3034
        %v3036 = vpop.f32.mrb[0].mxu0
        %3037 = vmatprep.mubr.f32.mxu0 0.0
        %3038 = vmatmul.mubr.f32.gmra.mrb[0].mxu0 %v2844
        %v3039 = vpop.f32.mrb[0].mxu0
        %v3040 = vadd.f32 0.0, %v3039
        %v3041 = vpop.f32.mrb[0].mxu0
        %3042 = vmatprep.mubr.f32.mxu0 0.0
        %3043 = vmatmul.mubr.f32.gmra.mrb[0].mxu0 %v2845
        %v3044 = vpop.f32.mrb[0].mxu0
        %v3045 = vadd.f32 0.0, %v3044
        %v3046 = vpop.f32.mrb[0].mxu0
        %3047 = vmatprep.mubr.f32.mxu0 0.0
        %3048 = vmatmul.mubr.f32.gmra.mrb[0].mxu0 %v2846
        %v3049 = vpop.f32.mrb[0].mxu0
        %v3050 = vadd.f32 0.0, %v3049
        %v3051 = vpop.f32.mrb[0].mxu0
        %3052 = vmatprep.mubr.f32.mxu0 0.0
        %3053 = vmatmul.mubr.f32.gmra.mrb[0].mxu0 %v2847
        %v3054 = vpop.f32.mrb[0].mxu0
        %v3055 = vadd.f32 0.0, %v3054
        %v3056 = vpop.f32.mrb[0].mxu0
        %3057 = vmatprep.mubr.f32.mxu0 0.0
        %3058 = vmatmul.mubr.f32.gmra.mrb[0].mxu0 %v2848
        %v3059 = vpop.f32.mrb[0].mxu0
        %v3060 = vadd.f32 0.0, %v3059
        %v3061 = vpop.f32.mrb[0].mxu0
        %3062 = vmatprep.mubr.f32.mxu0 0.0
        %3063 = vmatmul.mubr.f32.gmra.mrb[0].mxu0 %v2849
        %v3064 = vpop.f32.mrb[0].mxu0
        %v3065 = vadd.f32 0.0, %v3064
        %v3066 = vpop.f32.mrb[0].mxu0
        %3067 = vmatprep.mubr.f32.mxu0 0.0
        %3068 = vmatmul.mubr.f32.gmra.mrb[0].mxu0 %v2850
        %v3069 = vpop.f32.mrb[0].mxu0
        %v3070 = vadd.f32 0.0, %v3069
        %v3071 = vpop.f32.mrb[0].mxu0
        %3072 = vmatprep.mubr.f32.mxu0 0.0
        %3073 = vmatmul.mubr.f32.gmra.mrb[0].mxu0 %v2851
        %v3074 = vpop.f32.mrb[0].mxu0
        %v3075 = vadd.f32 0.0, %v3074
        %v3076 = vpop.f32.mrb[0].mxu0
        %3077 = vmatprep.mubr.f32.mxu0 0.0
        %3078 = vmatmul.mubr.f32.gmra.mrb[0].mxu0 %v2852
        %v3079 = vpop.f32.mrb[0].mxu0
        %v3080 = vadd.f32 0.0, %v3079
        %v3081 = vpop.f32.mrb[0].mxu0
        %3082 = vmatprep.mubr.f32.mxu0 0.0
        %3083 = vmatmul.mubr.f32.gmra.mrb[0].mxu0 %v2853
        %v3084 = vpop.f32.mrb[0].mxu0
        %v3085 = vadd.f32 0.0, %v3084
        %v3086 = vpop.f32.mrb[0].mxu0
        %3087 = vmatprep.mubr.f32.mxu0 0.0
        %3088 = vmatmul.mubr.f32.gmra.mrb[0].mxu0 %v2854
        %v3089 = vpop.f32.mrb[0].mxu0
        %v3090 = vadd.f32 0.0, %v3089
        %v3091 = vpop.f32.mrb[0].mxu0
        %3092 = vmatprep.mubr.f32.mxu0 0.0
        %3093 = vmatmul.mubr.f32.gmra.mrb[0].mxu0 %v2855
        %v3094 = vpop.f32.mrb[0].mxu0
        %v3095 = vadd.f32 0.0, %v3094
        %v3096 = vpop.f32.mrb[0].mxu0
        %3097 = vdwg.mxu0
        %v3098 = vadd.f32 %v2792, %v2940
        %v3099 = vadd.f32 %v2793, %v2945
        %v3100 = vadd.f32 %v2794, %v2950
        %v3101 = vadd.f32 %v2795, %v2955
        %v3102 = vadd.f32 %v2796, %v2960
        %v3103 = vadd.f32 %v2797, %v2965
        %v3104 = vadd.f32 %v2798, %v2970
        %v3105 = vadd.f32 %v2799, %v2975
        %v3106 = vadd.f32 %v2800, %v2980
        %v3107 = vadd.f32 %v2801, %v2985
        %v3108 = vadd.f32 %v2802, %v2990
        %v3109 = vadd.f32 %v2803, %v2995
        %v3110 = vadd.f32 %v2804, %v3000
        %v3111 = vadd.f32 %v2805, %v3005
        %v3112 = vadd.f32 %v2806, %v3010
        %v3113 = vadd.f32 %v2807, %v3015
        %v3114 = vadd.f32 %v2808, %v3020
        %v3115 = vadd.f32 %v2809, %v3025
        %v3116 = vadd.f32 %v2810, %v3030
        %v3117 = vadd.f32 %v2811, %v3035
        %v3118 = vadd.f32 %v2812, %v3040
        %v3119 = vadd.f32 %v2813, %v3045
        %v3120 = vadd.f32 %v2814, %v3050
        %v3121 = vadd.f32 %v2815, %v3055
        %v3122 = vadd.f32 %v2816, %v3060
        %v3123 = vadd.f32 %v2817, %v3065
        %v3124 = vadd.f32 %v2818, %v3070
        %v3125 = vadd.f32 %v2819, %v3075
        %v3126 = vadd.f32 %v2820, %v3080
        %v3127 = vadd.f32 %v2821, %v3085
        %v3128 = vadd.f32 %v2822, %v3090
        %v3129 = vadd.f32 %v2823, %v3095
        %3130 = vst [vmem:[%s187] sm:$0xff] %v3098
        %3131 = vst [vmem:[%s187 + $0x8] sm:$0xff] %v3099
        %3132 = vst [vmem:[%s187 + $0x10] sm:$0xff] %v3100
        %3133 = vst [vmem:[%s187 + $0x18] sm:$0xff] %v3101
        %3134 = vst [vmem:[%s187 + $0x20] sm:$0xff] %v3102
        %3135 = vst [vmem:[%s187 + $0x28] sm:$0xff] %v3103
        %3136 = vst [vmem:[%s187 + $0x30] sm:$0xff] %v3104
        %3137 = vst [vmem:[%s187 + $0x38] sm:$0xff] %v3105
        %3138 = vst [vmem:[%s187 + $0x40] sm:$0xff] %v3106
        %3139 = vst [vmem:[%s187 + $0x48] sm:$0xff] %v3107
        %3140 = vst [vmem:[%s187 + $0x50] sm:$0xff] %v3108
        %3141 = vst [vmem:[%s187 + $0x58] sm:$0xff] %v3109
        %3142 = vst [vmem:[%s187 + $0x60] sm:$0xff] %v3110
        %3143 = vst [vmem:[%s187 + $0x68] sm:$0xff] %v3111
        %3144 = vst [vmem:[%s187 + $0x70] sm:$0xff] %v3112
        %3145 = vst [vmem:[%s187 + $0x78] sm:$0xff] %v3113
        %3146 = vst [vmem:[%s187 + $0x80] sm:$0xff] %v3114
        %3147 = vst [vmem:[%s187 + $0x88] sm:$0xff] %v3115
        %3148 = vst [vmem:[%s187 + $0x90] sm:$0xff] %v3116
        %3149 = vst [vmem:[%s187 + $0x98] sm:$0xff] %v3117
        %3150 = vst [vmem:[%s187 + $0xa0] sm:$0xff] %v3118
        %3151 = vst [vmem:[%s187 + $0xa8] sm:$0xff] %v3119
        %3152 = vst [vmem:[%s187 + $0xb0] sm:$0xff] %v3120
        %3153 = vst [vmem:[%s187 + $0xb8] sm:$0xff] %v3121
        %3154 = vst [vmem:[%s187 + $0xc0] sm:$0xff] %v3122
        %3155 = vst [vmem:[%s187 + $0xc8] sm:$0xff] %v3123
        %3156 = vst [vmem:[%s187 + $0xd0] sm:$0xff] %v3124
        %3157 = vst [vmem:[%s187 + $0xd8] sm:$0xff] %v3125
        %3158 = vst [vmem:[%s187 + $0xe0] sm:$0xff] %v3126
        %3159 = vst [vmem:[%s187 + $0xe8] sm:$0xff] %v3127
        %3160 = vst [vmem:[%s187 + $0xf0] sm:$0xff] %v3128
        %3161 = vst [vmem:[%s187 + $0xf8] sm:$0xff] %v3129
        %s3162 = sand.u32 %s113, 1
        %s3163 = sand.u32 %s113, 1
        %s3164 = smul.addr %s3163, 256
        %s3165 = scalar_lea.vmem [#allocation3], %s3164
        // Predicated region
        $region37: #{dense_block_forward.7} parent=35 // pred_check
          %p3166 = pneg %p123
        $region38: #{dense_block_forward.7} parent=35 // pred_check_branch
          %3168 = sbr.rel (%p3166) target = $region40
        $region39: #{dense_block_forward.7} parent=35 // pred_region
          %s3169 = smul.addr %s16, 96
          %s3170 = sadd.s32 2, %s3169
          %s3171 = smul.addr %s3170, 8
          %s3172 = scalar_lea.vmem %s5, %s3171
          // Predicated region
          $region41: #{dense_block_forward.7} parent=39 // pred_check
            _
          $region42: #{dense_block_forward.7} parent=39 // pred_check_branch
            %3174 = sbr.rel (0) target = $region44
          $region43: #{dense_block_forward.7} parent=39 // pred_region
            // Predicated region
            $region45: #{dense_block_forward.7} parent=43 // pred_check
              _
            $region46: #{dense_block_forward.7} parent=43 // pred_check_branch
              %3176 = sbr.rel (0) target = $region48
            $region47: #{dense_block_forward.7} parent=43 // pred_region
              // Predicated region
              $region60: #{dense_block_forward.7} parent=47 // pred_check
                _
              $region61: #{dense_block_forward.7} parent=47 // pred_check_branch
                %3253 = sbr.rel (0) target = $region63
              $region62: #{dense_block_forward.7} parent=47 // pred_region
                loop: start=0, step=1, limit=1
                $region64: #{dense_block_forward.7} parent=62 // loop_pre_header
                  _
                $region65: #{dense_block_forward.7} parent=62 // loop_header
                  %s3255 = sphi 0, %s3259
                  %p3256 = scmp.ge.s32.totalorder %s3255, 1
                  %s3260 = sphi %s3165, %s3165
                  %s3261 = sphi %s3172, %s3172
                $region66: #{dense_block_forward.7} parent=62 // loop_header_branch
                  %3258 = sbr.rel (%p3256) target = $region70
                $region67: #{dense_block_forward.7} parent=62 // loop_body
                  %v3262 = vld [vmem:[%s3260] sm:$0xff]
                  %3263 = vst [vmem:[%s3261] sm:$0xff] %v3262
                  %v3264 = vld [vmem:[%s3260 + $0x8] sm:$0xff]
                  %3265 = vst [vmem:[%s3261 + $0x18] sm:$0xff] %v3264
                  %v3266 = vld [vmem:[%s3260 + $0x10] sm:$0xff]
                  %3267 = vst [vmem:[%s3261 + $0x30] sm:$0xff] %v3266
                  %v3268 = vld [vmem:[%s3260 + $0x18] sm:$0xff]
                  %3269 = vst [vmem:[%s3261 + $0x48] sm:$0xff] %v3268
                  %v3270 = vld [vmem:[%s3260 + $0x20] sm:$0xff]
                  %3271 = vst [vmem:[%s3261 + $0x60] sm:$0xff] %v3270
                  %v3272 = vld [vmem:[%s3260 + $0x28] sm:$0xff]
                  %3273 = vst [vmem:[%s3261 + $0x78] sm:$0xff] %v3272
                  %v3274 = vld [vmem:[%s3260 + $0x30] sm:$0xff]
                  %3275 = vst [vmem:[%s3261 + $0x90] sm:$0xff] %v3274
                  %v3276 = vld [vmem:[%s3260 + $0x38] sm:$0xff]
                  %3277 = vst [vmem:[%s3261 + $0xa8] sm:$0xff] %v3276
                  %v3278 = vld [vmem:[%s3260 + $0x40] sm:$0xff]
                  %3279 = vst [vmem:[%s3261 + $0xc0] sm:$0xff] %v3278
                  %v3280 = vld [vmem:[%s3260 + $0x48] sm:$0xff]
                  %3281 = vst [vmem:[%s3261 + $0xd8] sm:$0xff] %v3280
                  %v3282 = vld [vmem:[%s3260 + $0x50] sm:$0xff]
                  %3283 = vst [vmem:[%s3261 + $0xf0] sm:$0xff] %v3282
                  %v3284 = vld [vmem:[%s3260 + $0x58] sm:$0xff]
                  %3285 = vst [vmem:[%s3261 + $0x108] sm:$0xff] %v3284
                  %v3286 = vld [vmem:[%s3260 + $0x60] sm:$0xff]
                  %3287 = vst [vmem:[%s3261 + $0x120] sm:$0xff] %v3286
                  %v3288 = vld [vmem:[%s3260 + $0x68] sm:$0xff]
                  %3289 = vst [vmem:[%s3261 + $0x138] sm:$0xff] %v3288
                  %v3290 = vld [vmem:[%s3260 + $0x70] sm:$0xff]
                  %3291 = vst [vmem:[%s3261 + $0x150] sm:$0xff] %v3290
                  %v3292 = vld [vmem:[%s3260 + $0x78] sm:$0xff]
                  %3293 = vst [vmem:[%s3261 + $0x168] sm:$0xff] %v3292
                  %v3294 = vld [vmem:[%s3260 + $0x80] sm:$0xff]
                  %3295 = vst [vmem:[%s3261 + $0x180] sm:$0xff] %v3294
                  %v3296 = vld [vmem:[%s3260 + $0x88] sm:$0xff]
                  %3297 = vst [vmem:[%s3261 + $0x198] sm:$0xff] %v3296
                  %v3298 = vld [vmem:[%s3260 + $0x90] sm:$0xff]
                  %3299 = vst [vmem:[%s3261 + $0x1b0] sm:$0xff] %v3298
                  %v3300 = vld [vmem:[%s3260 + $0x98] sm:$0xff]
                  %3301 = vst [vmem:[%s3261 + $0x1c8] sm:$0xff] %v3300
                  %v3302 = vld [vmem:[%s3260 + $0xa0] sm:$0xff]
                  %3303 = vst [vmem:[%s3261 + $0x1e0] sm:$0xff] %v3302
                  %v3304 = vld [vmem:[%s3260 + $0xa8] sm:$0xff]
                  %3305 = vst [vmem:[%s3261 + $0x1f8] sm:$0xff] %v3304
                  %v3306 = vld [vmem:[%s3260 + $0xb0] sm:$0xff]
                  %3307 = vst [vmem:[%s3261 + $0x210] sm:$0xff] %v3306
                  %v3308 = vld [vmem:[%s3260 + $0xb8] sm:$0xff]
                  %3309 = vst [vmem:[%s3261 + $0x228] sm:$0xff] %v3308
                  %v3310 = vld [vmem:[%s3260 + $0xc0] sm:$0xff]
                  %3311 = vst [vmem:[%s3261 + $0x240] sm:$0xff] %v3310
                  %v3312 = vld [vmem:[%s3260 + $0xc8] sm:$0xff]
                  %3313 = vst [vmem:[%s3261 + $0x258] sm:$0xff] %v3312
                  %v3314 = vld [vmem:[%s3260 + $0xd0] sm:$0xff]
                  %3315 = vst [vmem:[%s3261 + $0x270] sm:$0xff] %v3314
                  %v3316 = vld [vmem:[%s3260 + $0xd8] sm:$0xff]
                  %3317 = vst [vmem:[%s3261 + $0x288] sm:$0xff] %v3316
                  %v3318 = vld [vmem:[%s3260 + $0xe0] sm:$0xff]
                  %3319 = vst [vmem:[%s3261 + $0x2a0] sm:$0xff] %v3318
                  %v3320 = vld [vmem:[%s3260 + $0xe8] sm:$0xff]
                  %3321 = vst [vmem:[%s3261 + $0x2b8] sm:$0xff] %v3320
                  %v3322 = vld [vmem:[%s3260 + $0xf0] sm:$0xff]
                  %3323 = vst [vmem:[%s3261 + $0x2d0] sm:$0xff] %v3322
                  %v3324 = vld [vmem:[%s3260 + $0xf8] sm:$0xff]
                  %3325 = vst [vmem:[%s3261 + $0x2e8] sm:$0xff] %v3324
                $region68: #{dense_block_forward.7} parent=62 // loop_footer
                  %s3259 = sadd.s32 1, %s3255
                $region69: #{dense_block_forward.7} parent=62 // loop_footer_branch
                  %3254 = sbr.rel target = $region65
                $region70: #{dense_block_forward.7} parent=62 // loop_exit
                  _
              $region63: #{dense_block_forward.7} parent=47 // pred_fallthru
                _
              // Predicated region
              $region71: #{dense_block_forward.7} parent=47 // pred_check
                _
              $region72: #{dense_block_forward.7} parent=47 // pred_check_branch
                %3327 = sbr.rel target = $region74
              $region73: #{dense_block_forward.7} parent=47 // pred_region
                _
              $region74: #{dense_block_forward.7} parent=47 // pred_fallthru
                _
            $region48: #{dense_block_forward.7} parent=43 // pred_fallthru
              _
            // Predicated region
            $region49: #{dense_block_forward.7} parent=43 // pred_check
              _
            $region50: #{dense_block_forward.7} parent=43 // pred_check_branch
              %3178 = sbr.rel target = $region52
            $region51: #{dense_block_forward.7} parent=43 // pred_region
              loop: start=0, step=1, limit=1
              $region53: #{dense_block_forward.7} parent=51 // loop_pre_header
                _
              $region54: #{dense_block_forward.7} parent=51 // loop_header
                %s3181 = sphi 0, %s3185
                %p3182 = scmp.ge.s32.totalorder %s3181, 1
                %s3186 = sphi %s3165, %s3165
                %s3187 = sphi %s3172, %s3172
              $region55: #{dense_block_forward.7} parent=51 // loop_header_branch
                %3184 = sbr.rel (%p3182) target = $region59
              $region56: #{dense_block_forward.7} parent=51 // loop_body
                %v3188 = vld [vmem:[%s3186] sm:$0xff]
                %3189 = vst [vmem:[%s3187] sm:$0xff] %v3188
                %v3190 = vld [vmem:[%s3186 + $0x8] sm:$0xff]
                %3191 = vst [vmem:[%s3187 + $0x18] sm:$0xff] %v3190
                %v3192 = vld [vmem:[%s3186 + $0x10] sm:$0xff]
                %3193 = vst [vmem:[%s3187 + $0x30] sm:$0xff] %v3192
                %v3194 = vld [vmem:[%s3186 + $0x18] sm:$0xff]
                %3195 = vst [vmem:[%s3187 + $0x48] sm:$0xff] %v3194
                %v3196 = vld [vmem:[%s3186 + $0x20] sm:$0xff]
                %3197 = vst [vmem:[%s3187 + $0x60] sm:$0xff] %v3196
                %v3198 = vld [vmem:[%s3186 + $0x28] sm:$0xff]
                %3199 = vst [vmem:[%s3187 + $0x78] sm:$0xff] %v3198
                %v3200 = vld [vmem:[%s3186 + $0x30] sm:$0xff]
                %3201 = vst [vmem:[%s3187 + $0x90] sm:$0xff] %v3200
                %v3202 = vld [vmem:[%s3186 + $0x38] sm:$0xff]
                %3203 = vst [vmem:[%s3187 + $0xa8] sm:$0xff] %v3202
                %v3204 = vld [vmem:[%s3186 + $0x40] sm:$0xff]
                %3205 = vst [vmem:[%s3187 + $0xc0] sm:$0xff] %v3204
                %v3206 = vld [vmem:[%s3186 + $0x48] sm:$0xff]
                %3207 = vst [vmem:[%s3187 + $0xd8] sm:$0xff] %v3206
                %v3208 = vld [vmem:[%s3186 + $0x50] sm:$0xff]
                %3209 = vst [vmem:[%s3187 + $0xf0] sm:$0xff] %v3208
                %v3210 = vld [vmem:[%s3186 + $0x58] sm:$0xff]
                %3211 = vst [vmem:[%s3187 + $0x108] sm:$0xff] %v3210
                %v3212 = vld [vmem:[%s3186 + $0x60] sm:$0xff]
                %3213 = vst [vmem:[%s3187 + $0x120] sm:$0xff] %v3212
                %v3214 = vld [vmem:[%s3186 + $0x68] sm:$0xff]
                %3215 = vst [vmem:[%s3187 + $0x138] sm:$0xff] %v3214
                %v3216 = vld [vmem:[%s3186 + $0x70] sm:$0xff]
                %3217 = vst [vmem:[%s3187 + $0x150] sm:$0xff] %v3216
                %v3218 = vld [vmem:[%s3186 + $0x78] sm:$0xff]
                %3219 = vst [vmem:[%s3187 + $0x168] sm:$0xff] %v3218
                %v3220 = vld [vmem:[%s3186 + $0x80] sm:$0xff]
                %3221 = vst [vmem:[%s3187 + $0x180] sm:$0xff] %v3220
                %v3222 = vld [vmem:[%s3186 + $0x88] sm:$0xff]
                %3223 = vst [vmem:[%s3187 + $0x198] sm:$0xff] %v3222
                %v3224 = vld [vmem:[%s3186 + $0x90] sm:$0xff]
                %3225 = vst [vmem:[%s3187 + $0x1b0] sm:$0xff] %v3224
                %v3226 = vld [vmem:[%s3186 + $0x98] sm:$0xff]
                %3227 = vst [vmem:[%s3187 + $0x1c8] sm:$0xff] %v3226
                %v3228 = vld [vmem:[%s3186 + $0xa0] sm:$0xff]
                %3229 = vst [vmem:[%s3187 + $0x1e0] sm:$0xff] %v3228
                %v3230 = vld [vmem:[%s3186 + $0xa8] sm:$0xff]
                %3231 = vst [vmem:[%s3187 + $0x1f8] sm:$0xff] %v3230
                %v3232 = vld [vmem:[%s3186 + $0xb0] sm:$0xff]
                %3233 = vst [vmem:[%s3187 + $0x210] sm:$0xff] %v3232
                %v3234 = vld [vmem:[%s3186 + $0xb8] sm:$0xff]
                %3235 = vst [vmem:[%s3187 + $0x228] sm:$0xff] %v3234
                %v3236 = vld [vmem:[%s3186 + $0xc0] sm:$0xff]
                %3237 = vst [vmem:[%s3187 + $0x240] sm:$0xff] %v3236
                %v3238 = vld [vmem:[%s3186 + $0xc8] sm:$0xff]
                %3239 = vst [vmem:[%s3187 + $0x258] sm:$0xff] %v3238
                %v3240 = vld [vmem:[%s3186 + $0xd0] sm:$0xff]
                %3241 = vst [vmem:[%s3187 + $0x270] sm:$0xff] %v3240
                %v3242 = vld [vmem:[%s3186 + $0xd8] sm:$0xff]
                %3243 = vst [vmem:[%s3187 + $0x288] sm:$0xff] %v3242
                %v3244 = vld [vmem:[%s3186 + $0xe0] sm:$0xff]
                %3245 = vst [vmem:[%s3187 + $0x2a0] sm:$0xff] %v3244
                %v3246 = vld [vmem:[%s3186 + $0xe8] sm:$0xff]
                %3247 = vst [vmem:[%s3187 + $0x2b8] sm:$0xff] %v3246
                %v3248 = vld [vmem:[%s3186 + $0xf0] sm:$0xff]
                %3249 = vst [vmem:[%s3187 + $0x2d0] sm:$0xff] %v3248
                %v3250 = vld [vmem:[%s3186 + $0xf8] sm:$0xff]
                %3251 = vst [vmem:[%s3187 + $0x2e8] sm:$0xff] %v3250
              $region57: #{dense_block_forward.7} parent=51 // loop_footer
                %s3185 = sadd.s32 1, %s3181
              $region58: #{dense_block_forward.7} parent=51 // loop_footer_branch
                %3180 = sbr.rel target = $region54
              $region59: #{dense_block_forward.7} parent=51 // loop_exit
                _
            $region52: #{dense_block_forward.7} parent=43 // pred_fallthru
              _
          $region44: #{dense_block_forward.7} parent=39 // pred_fallthru
            _
          %3328 = vnop
        $region40: #{dense_block_forward.7} parent=35 // pred_fallthru
          _
      $region36: #{dense_block_forward.7} parent=5 // pred_fallthru
        _
      %p3329 = scmp.le.s32.totalorder 2, %s11
      // Predicated region
      $region75: #{dense_block_forward.7} parent=5 // pred_check
        %p3330 = pneg %p3329
      $region76: #{dense_block_forward.7} parent=5 // pred_check_branch
        %3332 = sbr.rel (%p3330) target = $region78
      $region77: #{dense_block_forward.7} parent=5 // pred_region
        %s3333 = ssub.s32 %s11, 2
        // Predicated region
        $region79: #{dense_block_forward.7} parent=77 // pred_check
          %p3334 = pneg %p129
        $region80: #{dense_block_forward.7} parent=77 // pred_check_branch
          %3336 = sbr.rel (%p3334) target = $region82
        $region81: #{dense_block_forward.7} parent=77 // pred_region
          %s3337 = sand.u32 %s114, 1
          %s3338 = sand.u32 %s114, 1
          %s3339 = smul.addr %s3338, 256
          %s3340 = scalar_lea.vmem [#allocation3], %s3339
        $region82: #{dense_block_forward.7} parent=77 // pred_fallthru
          _
      $region78: #{dense_block_forward.7} parent=5 // pred_fallthru
        _
    $region6: #{dense_block_forward.7} parent=1 // loop_footer
      %s15 = sadd.s32 1, %s11
    $region7: #{dense_block_forward.7} parent=1 // loop_footer_branch
      %10 = sbr.rel target = $region3
    $region8: #{dense_block_forward.7} parent=1 // loop_exit
      _

</llo_original>
